<compile_context>
chip_gen: v5e
topology: v5e:2x2
jax: 0.10.0
libtpu: 0.0.40
codegen_flags: <defaults>
</compile_context>

<pallas_src>
import functools

import numpy as np
import jax
import jax.numpy as jnp
from jax import lax
from jax.experimental import pallas as pl
from jax.experimental.pallas import tpu as pltpu

PRIMITIVES = [
    "none", "max_pool_3x3", "avg_pool_3x3", "skip_connect",
    "sep_conv_3x3", "sep_conv_5x5", "dil_conv_3x3", "dil_conv_5x5",
]

_VMEM = pl.BlockSpec(memory_space=pltpu.MemorySpace.VMEM)
_SMEM = pl.BlockSpec(memory_space=pltpu.MemorySpace.SMEM)
_BN_EPS = 1e-5


# ------------------------- in-kernel building blocks -------------------------

def _bn_normalize(y):
    # training-mode BatchNorm2d(affine=False): per-channel batch stats, biased var.
    mean = jnp.mean(y, axis=1, keepdims=True)
    yc = y - mean
    var = jnp.mean(yc * yc, axis=1, keepdims=True)
    return yc * lax.rsqrt(var + _BN_EPS)


def _shifted(x, s):
    # out[c, m] = x[c, (m + orig_shift) mod M]  (boundaries handled by masks)
    return x if s == 0 else pltpu.roll(x, shift=s, axis=1)


def _depthwise(xr, mask_ref, dw_ref, shifts):
    # xr: (C, M) (already ReLU'd); mask_ref: (k2, 1, M) 0/1; dw_ref: (k2, C, 1)
    acc = None
    for t, s in enumerate(shifts):
        term = _shifted(xr, s) * mask_ref[t] * dw_ref[t]
        acc = term if acc is None else acc + term
    return acc


def _dw_pw_bn(x, mask_ref, dw_ref, pw_ref, shifts):
    # ReLU -> depthwise (groups=C) -> pointwise 1x1 -> BN(affine=False)
    acc = _depthwise(jnp.maximum(x, 0.0), mask_ref, dw_ref, shifts)
    y = jnp.dot(pw_ref[...], acc, preferred_element_type=jnp.float32)   # (C, M)
    return _bn_normalize(y)


# --------------------------------- kernels ------------------------------------

def _rcb_kernel(x_ref, w_ref, o_ref):
    # ReLUConvBN(kernel=1, affine=False): x (Cin, M), w (Cout, Cin) -> o (Cout, M)
    x = jnp.maximum(x_ref[...], 0.0)
    y = jnp.dot(w_ref[...], x, preferred_element_type=jnp.float32)
    o_ref[...] = _bn_normalize(y)


def _edge_kernel(w_ref, x_ref, m33_ref, m55_ref, m33d2_ref, m55d2_ref, inv_ref,
                 s3dw1_ref, s3pw1_ref, s3dw2_ref, s3pw2_ref,
                 s5dw1_ref, s5pw1_ref, s5dw2_ref, s5pw2_ref,
                 d3dw_ref, d3pw_ref, d5dw_ref, d5pw_ref,
                 o_ref, *, sh33, sh55, sh33d2, sh55d2, include_skip):
    # Whole MixedOp for one edge, fused, including the architecture-weighted sum.
    x = x_ref[...]                                             # (C, M)

    # max_pool_3x3 + BN (padding never wins via additive -1e30 on invalid taps)
    mp = None
    for t, s in enumerate(sh33):
        xt = _shifted(x, s) + (m33_ref[t] - 1.0) * 1e30
        mp = xt if mp is None else jnp.maximum(mp, xt)
    mp = _bn_normalize(mp)

    # avg_pool_3x3 (count_include_pad=False) + BN
    ap = None
    for t, s in enumerate(sh33):
        term = _shifted(x, s) * m33_ref[t]
        ap = term if ap is None else ap + term
    ap = _bn_normalize(ap * inv_ref[...])

    # sep_conv_3x3 / sep_conv_5x5 (two relu->dw->pw->BN blocks each, fully fused)
    y3 = _dw_pw_bn(x, m33_ref, s3dw1_ref, s3pw1_ref, sh33)
    y3 = _dw_pw_bn(y3, m33_ref, s3dw2_ref, s3pw2_ref, sh33)
    y5 = _dw_pw_bn(x, m55_ref, s5dw1_ref, s5pw1_ref, sh55)
    y5 = _dw_pw_bn(y5, m55_ref, s5dw2_ref, s5pw2_ref, sh55)

    # dil_conv_3x3 / dil_conv_5x5
    d3 = _dw_pw_bn(x, m33d2_ref, d3dw_ref, d3pw_ref, sh33d2)
    d5 = _dw_pw_bn(x, m55d2_ref, d5dw_ref, d5pw_ref, sh55d2)

    # architecture-weighted sum ('none' contributes exactly 0 and is dropped)
    acc = (w_ref[1] * mp + w_ref[2] * ap +
           w_ref[4] * y3 + w_ref[5] * y5 +
           w_ref[6] * d3 + w_ref[7] * d5)
    if include_skip:                                           # 'skip_connect'
        acc = acc + w_ref[3] * x
    o_ref[...] = acc


def _sum_kernel(*refs):
    # sum of n (C, M) arrays (per-step accumulation across edges)
    o_ref = refs[-1]
    acc = refs[0][...]
    for r in refs[1:-1]:
        acc = acc + r[...]
    o_ref[...] = acc


# -------------------- static tap geometry (shifts + masks) --------------------

def _tap_geometry(k, d, p, h, w):
    """Row-major (ky, kx) taps; returns (flat shifts, valid masks (k*k, h*w))."""
    hh = np.arange(h).reshape(h, 1)
    ww = np.arange(w).reshape(1, w)
    shifts, masks = [], []
    for ky in range(k):
        for kx in range(k):
            dy = ky * d - p
            dx = kx * d - p
            shifts.append(dy * w + dx)
            valid = ((hh + dy >= 0) & (hh + dy < h) &
                     (ww + dx >= 0) & (ww + dx < w)).astype(np.float32)
            masks.append(valid.reshape(-1))
    return shifts, np.stack(masks, axis=0)


@functools.lru_cache(maxsize=None)
def _tap_shifts(k, d, p, h, w, n):
    m = n * h * w
    shifts, _ = _tap_geometry(k, d, p, h, w)
    return tuple(int((-s) % m) for s in shifts)


@functools.lru_cache(maxsize=None)
def _edge_consts(n, h, w):
    m = n * h * w
    consts = {}
    for name, (k, d, p) in {"m33": (3, 1, 1), "m55": (5, 1, 2),
                            "m33d2": (3, 2, 2), "m55d2": (5, 2, 4)}.items():
        _, vm = _tap_geometry(k, d, p, h, w)               # (k2, h*w)
        consts[name] = jnp.asarray(np.tile(vm, (1, n)).reshape(k * k, 1, m))
    _, vm33 = _tap_geometry(3, 1, 1, h, w)
    cnt = vm33.sum(axis=0)                                 # valid taps per pixel
    consts["inv"] = jnp.asarray(
        np.tile((1.0 / cnt).astype(np.float32), n).reshape(1, m))
    return consts


# ------------------------- cached pallas_call builders -------------------------

@functools.lru_cache(maxsize=None)
def _rcb_call(cin, cout, m):
    return pl.pallas_call(
        _rcb_kernel,
        out_shape=jax.ShapeDtypeStruct((cout, m), jnp.float32),
        in_specs=[_VMEM, _VMEM], out_specs=_VMEM)


@functools.lru_cache(maxsize=None)
def _edge_call(c, n, h, w, include_skip):
    m = n * h * w
    kern = functools.partial(
        _edge_kernel,
        sh33=_tap_shifts(3, 1, 1, h, w, n),
        sh55=_tap_shifts(5, 1, 2, h, w, n),
        sh33d2=_tap_shifts(3, 2, 2, h, w, n),
        sh55d2=_tap_shifts(5, 2, 4, h, w, n),
        include_skip=include_skip)
    return pl.pallas_call(
        kern,
        out_shape=jax.ShapeDtypeStruct((c, m), jnp.float32),
        in_specs=[_SMEM] + [_VMEM] * 18,
        out_specs=_VMEM)


@functools.lru_cache(maxsize=None)
def _sum_call(n_terms, c, m):
    return pl.pallas_call(
        _sum_kernel,
        out_shape=jax.ShapeDtypeStruct((c, m), jnp.float32),
        in_specs=[_VMEM] * n_terms, out_specs=_VMEM)


# ----------------------------------- glue --------------------------------------

def cell_forward(s0, s1, weights, params, *, steps, multiplier, fix_edge4_noskip):
    # TODO(synk): reduction-cell path (stride-2 ops / FactorizedReduce) not implemented.
    n, c_pp, h, w = s0.shape
    c_prev = s1.shape[1]
    c = params["pre0"].shape[0]
    m = n * h * w
    consts = _edge_consts(n, h, w)

    def to_cm(x):                      # NCHW -> channel-major (Cin, N*H*W)
        ci = x.shape[1]
        return jnp.transpose(x, (1, 0, 2, 3)).reshape(ci, m)

    s0m = _rcb_call(c_pp, c, m)(to_cm(s0), params["pre0"])     # preprocess0
    s1m = _rcb_call(c_prev, c, m)(to_cm(s1), params["pre1"])   # preprocess1

    states = [s0m, s1m]
    offset = 0
    count = 0
    for _ in range(steps):
        contribs = []
        for j, hstate in enumerate(states):
            edge = offset + j
            # MixedOp: skip op 3 ('skip_connect') on cell-edge counter == 4
            include_skip = not (fix_edge4_noskip and count == 4)
            ep = params["edges"][edge]
            fn = _edge_call(c, n, h, w, include_skip)
            contribs.append(fn(
                weights[edge], hstate,
                consts["m33"], consts["m55"], consts["m33d2"], consts["m55d2"],
                consts["inv"],
                ep["sep3"]["dw1"], ep["sep3"]["pw1"], ep["sep3"]["dw2"], ep["sep3"]["pw2"],
                ep["sep5"]["dw1"], ep["sep5"]["pw1"], ep["sep5"]["dw2"], ep["sep5"]["pw2"],
                ep["dil3"]["dw"], ep["dil3"]["pw"],
                ep["dil5"]["dw"], ep["dil5"]["pw"]))
            count += 1
        offset += len(states)
        if len(contribs) == 1:
            states.append(contribs[0])
        else:
            states.append(_sum_call(len(contribs), c, m)(*contribs))

    out = jnp.concatenate(states[-multiplier:], axis=0)        # (mult*C, M)
    out = out.reshape(multiplier * c, n, h, w)
    return jnp.transpose(out, (1, 0, 2, 3))                    # NCHW


cell_forward_jit = jax.jit(
    cell_forward, static_argnames=("steps", "multiplier", "fix_edge4_noskip"))


# ------------------------------- parameter init ---------------------------------

def init_cell_params(key, c_pp, c_prev, c, num_edges):
    keys = iter(jax.random.split(key, 2 + num_edges * 12))

    def nrm(shape):
        return 0.1 * jax.random.normal(next(keys), shape, jnp.float32)

    # pointwise weights stored as (Cout, Cin); depthwise taps as (k*k, C, 1)
    # with tap index = ky*k + kx (row-major, matching PyTorch conv weight order).
    params = {"pre0": nrm((c, c_pp)), "pre1": nrm((c, c_prev)), "edges": []}
    for _ in range(num_edges):
        params["edges"].append({
            "sep3": dict(dw1=nrm((9, c, 1)), pw1=nrm((c, c)),
                         dw2=nrm((9, c, 1)), pw2=nrm((c, c))),
            "sep5": dict(dw1=nrm((25, c, 1)), pw1=nrm((c, c)),
                         dw2=nrm((25, c, 1)), pw2=nrm((c, c))),
            "dil3": dict(dw=nrm((9, c, 1)), pw=nrm((c, c))),
            "dil5": dict(dw=nrm((25, c, 1)), pw=nrm((c, c))),
        })
    return params


# ------------------------------------ main ---------------------------------------

if __name__ == "__main__":
    N, C_pp, C_prev, C, H, W = 2, 16, 16, 8, 8, 8
    steps, multiplier = 2, 2                       # 5 edges -> exercises fix_edge4_noskip
    num_edges = sum(2 + i for i in range(steps))

    key = jax.random.PRNGKey(0)
    k0, k1, k2, kp = jax.random.split(key, 4)
    s0 = jax.random.normal(k0, (N, C_pp, H, W), jnp.float32)
    s1 = jax.random.normal(k1, (N, C_prev, H, W), jnp.float32)
    alphas = jax.random.normal(k2, (num_edges, len(PRIMITIVES)), jnp.float32)
    weights = jax.nn.softmax(alphas, axis=-1)
    params = init_cell_params(kp, C_pp, C_prev, C, num_edges)

    out = cell_forward_jit(s0, s1, weights, params,
                           steps=steps, multiplier=multiplier,
                           fix_edge4_noskip=True)
    jax.block_until_ready(out)
    assert out.shape == (N, multiplier * C, H, W), out.shape
    assert bool(jnp.all(jnp.isfinite(out)))
    print("KERNEL_OK")
</pallas_src>

<mosaic_0001>
module attributes {stable_mosaic.version = 11 : i64} {
  func.func @_rcb_kernel(%arg0: memref<16x128xf32, #tpu.memory_space<vmem>>, %arg1: memref<8x16xf32, #tpu.memory_space<vmem>>, %arg2: memref<8x128xf32, #tpu.memory_space<vmem>>) attributes {dimension_semantics = [], scalar_prefetch = 0 : i64, scratch_operands = 0 : i64, tpu.core_type = #tpu.core_type<tc>} {
    %c0 = arith.constant 0 : index
    %c0_0 = arith.constant 0 : index
    %0 = vector.load %arg0[%c0, %c0_0] : memref<16x128xf32, #tpu.memory_space<vmem>>, vector<16x128xf32>
    %cst = arith.constant 0.000000e+00 : f32
    %1 = vector.broadcast %cst : f32 to vector<16x128xf32>
    %2 = arith.maximumf %0, %1 : vector<16x128xf32>
    %c0_1 = arith.constant 0 : index
    %c0_2 = arith.constant 0 : index
    %3 = vector.load %arg1[%c0_1, %c0_2] : memref<8x16xf32, #tpu.memory_space<vmem>>, vector<8x16xf32>
    %cst_3 = arith.constant dense<0.000000e+00> : vector<8x128xf32>
    %4 = tpu.matmul %3, %2, %cst_3 {dimension_numbers = #tpu.dot_dimension_numbers<[1], [0], [0], [1], [0, 0, 1, 1], [], []>} : vector<8x16xf32>, vector<16x128xf32>, vector<8x128xf32> -> vector<8x128xf32>
    %cst_4 = arith.constant dense<0.000000e+00> : vector<8xf32>
    %5 = vector.multi_reduction <add>, %4, %cst_4 [1] : vector<8x128xf32> to vector<8xf32>
    %6 = vector.shape_cast %5 : vector<8xf32> to vector<8x1xf32>
    %cst_5 = arith.constant 1.280000e+02 : f32
    %7 = vector.broadcast %cst_5 : f32 to vector<8x1xf32>
    %8 = arith.divf %6, %7 : vector<8x1xf32>
    %9 = vector.broadcast %8 : vector<8x1xf32> to vector<8x128xf32>
    %10 = arith.subf %4, %9 : vector<8x128xf32>
    %11 = arith.mulf %10, %10 : vector<8x128xf32>
    %cst_6 = arith.constant dense<0.000000e+00> : vector<8xf32>
    %12 = vector.multi_reduction <add>, %11, %cst_6 [1] : vector<8x128xf32> to vector<8xf32>
    %13 = vector.shape_cast %12 : vector<8xf32> to vector<8x1xf32>
    %cst_7 = arith.constant 1.280000e+02 : f32
    %14 = vector.broadcast %cst_7 : f32 to vector<8x1xf32>
    %15 = arith.divf %13, %14 : vector<8x1xf32>
    %cst_8 = arith.constant 9.99999974E-6 : f32
    %16 = vector.broadcast %cst_8 : f32 to vector<8x1xf32>
    %17 = arith.addf %15, %16 : vector<8x1xf32>
    %18 = math.rsqrt %17 : vector<8x1xf32>
    %19 = vector.broadcast %18 : vector<8x1xf32> to vector<8x128xf32>
    %20 = arith.mulf %10, %19 : vector<8x128xf32>
    %c0_9 = arith.constant 0 : index
    %c0_10 = arith.constant 0 : index
    %21 = vector.load %arg2[%c0_9, %c0_10] : memref<8x128xf32, #tpu.memory_space<vmem>>, vector<8x128xf32>
    tpu.vector_store %arg2[%c0_9, %c0_10], %20 {strides = array<i32>} : memref<8x128xf32, #tpu.memory_space<vmem>>, vector<8x128xf32>,
    return
  }
}

module attributes {stable_mosaic.version = 11 : i64} {
  func.func @_sum_kernel(%arg0: memref<8x128xf32, #tpu.memory_space<vmem>>, %arg1: memref<8x128xf32, #tpu.memory_space<vmem>>, %arg2: memref<8x128xf32, #tpu.memory_space<vmem>>) attributes {dimension_semantics = [], scalar_prefetch = 0 : i64, scratch_operands = 0 : i64, tpu.core_type = #tpu.core_type<tc>} {
    %c0 = arith.constant 0 : index
    %c0_0 = arith.constant 0 : index
    %0 = vector.load %arg0[%c0, %c0_0] : memref<8x128xf32, #tpu.memory_space<vmem>>, vector<8x128xf32>
    %c0_1 = arith.constant 0 : index
    %c0_2 = arith.constant 0 : index
    %1 = vector.load %arg1[%c0_1, %c0_2] : memref<8x128xf32, #tpu.memory_space<vmem>>, vector<8x128xf32>
    %2 = arith.addf %0, %1 : vector<8x128xf32>
    %c0_3 = arith.constant 0 : index
    %c0_4 = arith.constant 0 : index
    %3 = vector.load %arg2[%c0_3, %c0_4] : memref<8x128xf32, #tpu.memory_space<vmem>>, vector<8x128xf32>
    tpu.vector_store %arg2[%c0_3, %c0_4], %2 {strides = array<i32>} : memref<8x128xf32, #tpu.memory_space<vmem>>, vector<8x128xf32>,
    return
  }
}

module attributes {stable_mosaic.version = 11 : i64} {
  func.func @_edge_kernel(%arg0: memref<8xf32, #tpu.memory_space<smem>>, %arg1: memref<8x128xf32, #tpu.memory_space<vmem>>, %arg2: memref<9x1x128xf32, #tpu.memory_space<vmem>>, %arg3: memref<25x1x128xf32, #tpu.memory_space<vmem>>, %arg4: memref<9x1x128xf32, #tpu.memory_space<vmem>>, %arg5: memref<25x1x128xf32, #tpu.memory_space<vmem>>, %arg6: memref<1x128xf32, #tpu.memory_space<vmem>>, %arg7: memref<9x8x1xf32, #tpu.memory_space<vmem>>, %arg8: memref<8x8xf32, #tpu.memory_space<vmem>>, %arg9: memref<9x8x1xf32, #tpu.memory_space<vmem>>, %arg10: memref<8x8xf32, #tpu.memory_space<vmem>>, %arg11: memref<25x8x1xf32, #tpu.memory_space<vmem>>, %arg12: memref<8x8xf32, #tpu.memory_space<vmem>>, %arg13: memref<25x8x1xf32, #tpu.memory_space<vmem>>, %arg14: memref<8x8xf32, #tpu.memory_space<vmem>>, %arg15: memref<9x8x1xf32, #tpu.memory_space<vmem>>, %arg16: memref<8x8xf32, #tpu.memory_space<vmem>>, %arg17: memref<25x8x1xf32, #tpu.memory_space<vmem>>, %arg18: memref<8x8xf32, #tpu.memory_space<vmem>>, %arg19: memref<8x128xf32, #tpu.memory_space<vmem>>) attributes {dimension_semantics = [], scalar_prefetch = 0 : i64, scratch_operands = 0 : i64, tpu.core_type = #tpu.core_type<tc>} {
    %c0 = arith.constant 0 : index
    %c0_0 = arith.constant 0 : index
    %0 = vector.load %arg1[%c0, %c0_0] : memref<8x128xf32, #tpu.memory_space<vmem>>, vector<8x128xf32>
    %c9_i32 = arith.constant 9 : i32
    %1 = tpu.dynamic_rotate %0 by %c9_i32 dim 1 : vector<8x128xf32>, i32 -> vector<8x128xf32>
    %c0_1 = arith.constant 0 : index
    %c0_2 = arith.constant 0 : index
    %c0_3 = arith.constant 0 : index
    %2 = vector.load %arg2[%c0_1, %c0_2, %c0_3] : memref<9x1x128xf32, #tpu.memory_space<vmem>>, vector<1x1x128xf32>
    %3 = vector.shape_cast %2 : vector<1x1x128xf32> to vector<1x128xf32>
    %cst = arith.constant 1.000000e+00 : f32
    %4 = vector.broadcast %cst : f32 to vector<1x128xf32>
    %5 = arith.subf %3, %4 : vector<1x128xf32>
    %cst_4 = arith.constant 1.000000e+30 : f32
    %6 = vector.broadcast %cst_4 : f32 to vector<1x128xf32>
    %7 = arith.mulf %5, %6 : vector<1x128xf32>
    %8 = vector.broadcast %7 : vector<1x128xf32> to vector<8x128xf32>
    %9 = arith.addf %1, %8 : vector<8x128xf32>
    %c8_i32 = arith.constant 8 : i32
    %10 = tpu.dynamic_rotate %0 by %c8_i32 dim 1 : vector<8x128xf32>, i32 -> vector<8x128xf32>
    %c1 = arith.constant 1 : index
    %c0_5 = arith.constant 0 : index
    %c0_6 = arith.constant 0 : index
    %11 = vector.load %arg2[%c1, %c0_5, %c0_6] : memref<9x1x128xf32, #tpu.memory_space<vmem>>, vector<1x1x128xf32>
    %12 = vector.shape_cast %11 : vector<1x1x128xf32> to vector<1x128xf32>
    %cst_7 = arith.constant 1.000000e+00 : f32
    %13 = vector.broadcast %cst_7 : f32 to vector<1x128xf32>
    %14 = arith.subf %12, %13 : vector<1x128xf32>
    %cst_8 = arith.constant 1.000000e+30 : f32
    %15 = vector.broadcast %cst_8 : f32 to vector<1x128xf32>
    %16 = arith.mulf %14, %15 : vector<1x128xf32>
    %17 = vector.broadcast %16 : vector<1x128xf32> to vector<8x128xf32>
    %18 = arith.addf %10, %17 : vector<8x128xf32>
    %19 = arith.maximumf %9, %18 : vector<8x128xf32>
    %c7_i32 = arith.constant 7 : i32
    %20 = tpu.dynamic_rotate %0 by %c7_i32 dim 1 : vector<8x128xf32>, i32 -> vector<8x128xf32>
    %c2 = arith.constant 2 : index
    %c0_9 = arith.constant 0 : index
    %c0_10 = arith.constant 0 : index
    %21 = vector.load %arg2[%c2, %c0_9, %c0_10] : memref<9x1x128xf32, #tpu.memory_space<vmem>>, vector<1x1x128xf32>
    %22 = vector.shape_cast %21 : vector<1x1x128xf32> to vector<1x128xf32>
    %cst_11 = arith.constant 1.000000e+00 : f32
    %23 = vector.broadcast %cst_11 : f32 to vector<1x128xf32>
    %24 = arith.subf %22, %23 : vector<1x128xf32>
    %cst_12 = arith.constant 1.000000e+30 : f32
    %25 = vector.broadcast %cst_12 : f32 to vector<1x128xf32>
    %26 = arith.mulf %24, %25 : vector<1x128xf32>
    %27 = vector.broadcast %26 : vector<1x128xf32> to vector<8x128xf32>
    %28 = arith.addf %20, %27 : vector<8x128xf32>
    %29 = arith.maximumf %19, %28 : vector<8x128xf32>
    %c1_i32 = arith.constant 1 : i32
    %30 = tpu.dynamic_rotate %0 by %c1_i32 dim 1 : vector<8x128xf32>, i32 -> vector<8x128xf32>
    %c3 = arith.constant 3 : index
    %c0_13 = arith.constant 0 : index
    %c0_14 = arith.constant 0 : index
    %31 = vector.load %arg2[%c3, %c0_13, %c0_14] : memref<9x1x128xf32, #tpu.memory_space<vmem>>, vector<1x1x128xf32>
    %32 = vector.shape_cast %31 : vector<1x1x128xf32> to vector<1x128xf32>
    %cst_15 = arith.constant 1.000000e+00 : f32
    %33 = vector.broadcast %cst_15 : f32 to vector<1x128xf32>
    %34 = arith.subf %32, %33 : vector<1x128xf32>
    %cst_16 = arith.constant 1.000000e+30 : f32
    %35 = vector.broadcast %cst_16 : f32 to vector<1x128xf32>
    %36 = arith.mulf %34, %35 : vector<1x128xf32>
    %37 = vector.broadcast %36 : vector<1x128xf32> to vector<8x128xf32>
    %38 = arith.addf %30, %37 : vector<8x128xf32>
    %39 = arith.maximumf %29, %38 : vector<8x128xf32>
    %c4 = arith.constant 4 : index
    %c0_17 = arith.constant 0 : index
    %c0_18 = arith.constant 0 : index
    %40 = vector.load %arg2[%c4, %c0_17, %c0_18] : memref<9x1x128xf32, #tpu.memory_space<vmem>>, vector<1x1x128xf32>
    %41 = vector.shape_cast %40 : vector<1x1x128xf32> to vector<1x128xf32>
    %cst_19 = arith.constant 1.000000e+00 : f32
    %42 = vector.broadcast %cst_19 : f32 to vector<1x128xf32>
    %43 = arith.subf %41, %42 : vector<1x128xf32>
    %cst_20 = arith.constant 1.000000e+30 : f32
    %44 = vector.broadcast %cst_20 : f32 to vector<1x128xf32>
    %45 = arith.mulf %43, %44 : vector<1x128xf32>
    %46 = vector.broadcast %45 : vector<1x128xf32> to vector<8x128xf32>
    %47 = arith.addf %0, %46 : vector<8x128xf32>
    %48 = arith.maximumf %39, %47 : vector<8x128xf32>
    %c127_i32 = arith.constant 127 : i32
    %49 = tpu.dynamic_rotate %0 by %c127_i32 dim 1 : vector<8x128xf32>, i32 -> vector<8x128xf32>
    %c5 = arith.constant 5 : index
    %c0_21 = arith.constant 0 : index
    %c0_22 = arith.constant 0 : index
    %50 = vector.load %arg2[%c5, %c0_21, %c0_22] : memref<9x1x128xf32, #tpu.memory_space<vmem>>, vector<1x1x128xf32>
    %51 = vector.shape_cast %50 : vector<1x1x128xf32> to vector<1x128xf32>
    %cst_23 = arith.constant 1.000000e+00 : f32
    %52 = vector.broadcast %cst_23 : f32 to vector<1x128xf32>
    %53 = arith.subf %51, %52 : vector<1x128xf32>
    %cst_24 = arith.constant 1.000000e+30 : f32
    %54 = vector.broadcast %cst_24 : f32 to vector<1x128xf32>
    %55 = arith.mulf %53, %54 : vector<1x128xf32>
    %56 = vector.broadcast %55 : vector<1x128xf32> to vector<8x128xf32>
    %57 = arith.addf %49, %56 : vector<8x128xf32>
    %58 = arith.maximumf %48, %57 : vector<8x128xf32>
    %c121_i32 = arith.constant 121 : i32
    %59 = tpu.dynamic_rotate %0 by %c121_i32 dim 1 : vector<8x128xf32>, i32 -> vector<8x128xf32>
    %c6 = arith.constant 6 : index
    %c0_25 = arith.constant 0 : index
    %c0_26 = arith.constant 0 : index
    %60 = vector.load %arg2[%c6, %c0_25, %c0_26] : memref<9x1x128xf32, #tpu.memory_space<vmem>>, vector<1x1x128xf32>
    %61 = vector.shape_cast %60 : vector<1x1x128xf32> to vector<1x128xf32>
    %cst_27 = arith.constant 1.000000e+00 : f32
    %62 = vector.broadcast %cst_27 : f32 to vector<1x128xf32>
    %63 = arith.subf %61, %62 : vector<1x128xf32>
    %cst_28 = arith.constant 1.000000e+30 : f32
    %64 = vector.broadcast %cst_28 : f32 to vector<1x128xf32>
    %65 = arith.mulf %63, %64 : vector<1x128xf32>
    %66 = vector.broadcast %65 : vector<1x128xf32> to vector<8x128xf32>
    %67 = arith.addf %59, %66 : vector<8x128xf32>
    %68 = arith.maximumf %58, %67 : vector<8x128xf32>
    %c120_i32 = arith.constant 120 : i32
    %69 = tpu.dynamic_rotate %0 by %c120_i32 dim 1 : vector<8x128xf32>, i32 -> vector<8x128xf32>
    %c7 = arith.constant 7 : index
    %c0_29 = arith.constant 0 : index
    %c0_30 = arith.constant 0 : index
    %70 = vector.load %arg2[%c7, %c0_29, %c0_30] : memref<9x1x128xf32, #tpu.memory_space<vmem>>, vector<1x1x128xf32>
    %71 = vector.shape_cast %70 : vector<1x1x128xf32> to vector<1x128xf32>
    %cst_31 = arith.constant 1.000000e+00 : f32
    %72 = vector.broadcast %cst_31 : f32 to vector<1x128xf32>
    %73 = arith.subf %71, %72 : vector<1x128xf32>
    %cst_32 = arith.constant 1.000000e+30 : f32
    %74 = vector.broadcast %cst_32 : f32 to vector<1x128xf32>
    %75 = arith.mulf %73, %74 : vector<1x128xf32>
    %76 = vector.broadcast %75 : vector<1x128xf32> to vector<8x128xf32>
    %77 = arith.addf %69, %76 : vector<8x128xf32>
    %78 = arith.maximumf %68, %77 : vector<8x128xf32>
    %c119_i32 = arith.constant 119 : i32
    %79 = tpu.dynamic_rotate %0 by %c119_i32 dim 1 : vector<8x128xf32>, i32 -> vector<8x128xf32>
    %c8 = arith.constant 8 : index
    %c0_33 = arith.constant 0 : index
    %c0_34 = arith.constant 0 : index
    %80 = vector.load %arg2[%c8, %c0_33, %c0_34] : memref<9x1x128xf32, #tpu.memory_space<vmem>>, vector<1x1x128xf32>
    %81 = vector.shape_cast %80 : vector<1x1x128xf32> to vector<1x128xf32>
    %cst_35 = arith.constant 1.000000e+00 : f32
    %82 = vector.broadcast %cst_35 : f32 to vector<1x128xf32>
    %83 = arith.subf %81, %82 : vector<1x128xf32>
    %cst_36 = arith.constant 1.000000e+30 : f32
    %84 = vector.broadcast %cst_36 : f32 to vector<1x128xf32>
    %85 = arith.mulf %83, %84 : vector<1x128xf32>
    %86 = vector.broadcast %85 : vector<1x128xf32> to vector<8x128xf32>
    %87 = arith.addf %79, %86 : vector<8x128xf32>
    %88 = arith.maximumf %78, %87 : vector<8x128xf32>
    %cst_37 = arith.constant dense<0.000000e+00> : vector<8xf32>
    %89 = vector.multi_reduction <add>, %88, %cst_37 [1] : vector<8x128xf32> to vector<8xf32>
    %90 = vector.shape_cast %89 : vector<8xf32> to vector<8x1xf32>
    %cst_38 = arith.constant 1.280000e+02 : f32
    %91 = vector.broadcast %cst_38 : f32 to vector<8x1xf32>
    %92 = arith.divf %90, %91 : vector<8x1xf32>
    %93 = vector.broadcast %92 : vector<8x1xf32> to vector<8x128xf32>
    %94 = arith.subf %88, %93 : vector<8x128xf32>
    %95 = arith.mulf %94, %94 : vector<8x128xf32>
    %cst_39 = arith.constant dense<0.000000e+00> : vector<8xf32>
    %96 = vector.multi_reduction <add>, %95, %cst_39 [1] : vector<8x128xf32> to vector<8xf32>
    %97 = vector.shape_cast %96 : vector<8xf32> to vector<8x1xf32>
    %cst_40 = arith.constant 1.280000e+02 : f32
    %98 = vector.broadcast %cst_40 : f32 to vector<8x1xf32>
    %99 = arith.divf %97, %98 : vector<8x1xf32>
    %cst_41 = arith.constant 9.99999974E-6 : f32
    %100 = vector.broadcast %cst_41 : f32 to vector<8x1xf32>
    %101 = arith.addf %99, %100 : vector<8x1xf32>
    %102 = math.rsqrt %101 : vector<8x1xf32>
    %103 = vector.broadcast %102 : vector<8x1xf32> to vector<8x128xf32>
    %104 = arith.mulf %94, %103 : vector<8x128xf32>
    %c9_i32_42 = arith.constant 9 : i32
    %105 = tpu.dynamic_rotate %0 by %c9_i32_42 dim 1 : vector<8x128xf32>, i32 -> vector<8x128xf32>
    %c0_43 = arith.constant 0 : index
    %c0_44 = arith.constant 0 : index
    %c0_45 = arith.constant 0 : index
    %106 = vector.load %arg2[%c0_43, %c0_44, %c0_45] : memref<9x1x128xf32, #tpu.memory_space<vmem>>, vector<1x1x128xf32>
    %107 = vector.shape_cast %106 : vector<1x1x128xf32> to vector<1x128xf32>
    %108 = vector.broadcast %107 : vector<1x128xf32> to vector<8x128xf32>
    %109 = arith.mulf %105, %108 : vector<8x128xf32>
    %c8_i32_46 = arith.constant 8 : i32
    %110 = tpu.dynamic_rotate %0 by %c8_i32_46 dim 1 : vector<8x128xf32>, i32 -> vector<8x128xf32>
    %c1_47 = arith.constant 1 : index
    %c0_48 = arith.constant 0 : index
    %c0_49 = arith.constant 0 : index
    %111 = vector.load %arg2[%c1_47, %c0_48, %c0_49] : memref<9x1x128xf32, #tpu.memory_space<vmem>>, vector<1x1x128xf32>
    %112 = vector.shape_cast %111 : vector<1x1x128xf32> to vector<1x128xf32>
    %113 = vector.broadcast %112 : vector<1x128xf32> to vector<8x128xf32>
    %114 = arith.mulf %110, %113 : vector<8x128xf32>
    %115 = arith.addf %109, %114 : vector<8x128xf32>
    %c7_i32_50 = arith.constant 7 : i32
    %116 = tpu.dynamic_rotate %0 by %c7_i32_50 dim 1 : vector<8x128xf32>, i32 -> vector<8x128xf32>
    %c2_51 = arith.constant 2 : index
    %c0_52 = arith.constant 0 : index
    %c0_53 = arith.constant 0 : index
    %117 = vector.load %arg2[%c2_51, %c0_52, %c0_53] : memref<9x1x128xf32, #tpu.memory_space<vmem>>, vector<1x1x128xf32>
    %118 = vector.shape_cast %117 : vector<1x1x128xf32> to vector<1x128xf32>
    %119 = vector.broadcast %118 : vector<1x128xf32> to vector<8x128xf32>
    %120 = arith.mulf %116, %119 : vector<8x128xf32>
    %121 = arith.addf %115, %120 : vector<8x128xf32>
    %c1_i32_54 = arith.constant 1 : i32
    %122 = tpu.dynamic_rotate %0 by %c1_i32_54 dim 1 : vector<8x128xf32>, i32 -> vector<8x128xf32>
    %c3_55 = arith.constant 3 : index
    %c0_56 = arith.constant 0 : index
    %c0_57 = arith.constant 0 : index
    %123 = vector.load %arg2[%c3_55, %c0_56, %c0_57] : memref<9x1x128xf32, #tpu.memory_space<vmem>>, vector<1x1x128xf32>
    %124 = vector.shape_cast %123 : vector<1x1x128xf32> to vector<1x128xf32>
    %125 = vector.broadcast %124 : vector<1x128xf32> to vector<8x128xf32>
    %126 = arith.mulf %122, %125 : vector<8x128xf32>
    %127 = arith.addf %121, %126 : vector<8x128xf32>
    %c4_58 = arith.constant 4 : index
    %c0_59 = arith.constant 0 : index
    %c0_60 = arith.constant 0 : index
    %128 = vector.load %arg2[%c4_58, %c0_59, %c0_60] : memref<9x1x128xf32, #tpu.memory_space<vmem>>, vector<1x1x128xf32>
    %129 = vector.shape_cast %128 : vector<1x1x128xf32> to vector<1x128xf32>
    %130 = vector.broadcast %129 : vector<1x128xf32> to vector<8x128xf32>
    %131 = arith.mulf %0, %130 : vector<8x128xf32>
    %132 = arith.addf %127, %131 : vector<8x128xf32>
    %c127_i32_61 = arith.constant 127 : i32
    %133 = tpu.dynamic_rotate %0 by %c127_i32_61 dim 1 : vector<8x128xf32>, i32 -> vector<8x128xf32>
    %c5_62 = arith.constant 5 : index
    %c0_63 = arith.constant 0 : index
    %c0_64 = arith.constant 0 : index
    %134 = vector.load %arg2[%c5_62, %c0_63, %c0_64] : memref<9x1x128xf32, #tpu.memory_space<vmem>>, vector<1x1x128xf32>
    %135 = vector.shape_cast %134 : vector<1x1x128xf32> to vector<1x128xf32>
    %136 = vector.broadcast %135 : vector<1x128xf32> to vector<8x128xf32>
    %137 = arith.mulf %133, %136 : vector<8x128xf32>
    %138 = arith.addf %132, %137 : vector<8x128xf32>
    %c121_i32_65 = arith.constant 121 : i32
    %139 = tpu.dynamic_rotate %0 by %c121_i32_65 dim 1 : vector<8x128xf32>, i32 -> vector<8x128xf32>
    %c6_66 = arith.constant 6 : index
    %c0_67 = arith.constant 0 : index
    %c0_68 = arith.constant 0 : index
    %140 = vector.load %arg2[%c6_66, %c0_67, %c0_68] : memref<9x1x128xf32, #tpu.memory_space<vmem>>, vector<1x1x128xf32>
    %141 = vector.shape_cast %140 : vector<1x1x128xf32> to vector<1x128xf32>
    %142 = vector.broadcast %141 : vector<1x128xf32> to vector<8x128xf32>
    %143 = arith.mulf %139, %142 : vector<8x128xf32>
    %144 = arith.addf %138, %143 : vector<8x128xf32>
    %c120_i32_69 = arith.constant 120 : i32
    %145 = tpu.dynamic_rotate %0 by %c120_i32_69 dim 1 : vector<8x128xf32>, i32 -> vector<8x128xf32>
    %c7_70 = arith.constant 7 : index
    %c0_71 = arith.constant 0 : index
    %c0_72 = arith.constant 0 : index
    %146 = vector.load %arg2[%c7_70, %c0_71, %c0_72] : memref<9x1x128xf32, #tpu.memory_space<vmem>>, vector<1x1x128xf32>
    %147 = vector.shape_cast %146 : vector<1x1x128xf32> to vector<1x128xf32>
    %148 = vector.broadcast %147 : vector<1x128xf32> to vector<8x128xf32>
    %149 = arith.mulf %145, %148 : vector<8x128xf32>
    %150 = arith.addf %144, %149 : vector<8x128xf32>
    %c119_i32_73 = arith.constant 119 : i32
    %151 = tpu.dynamic_rotate %0 by %c119_i32_73 dim 1 : vector<8x128xf32>, i32 -> vector<8x128xf32>
    %c8_74 = arith.constant 8 : index
    %c0_75 = arith.constant 0 : index
    %c0_76 = arith.constant 0 : index
    %152 = vector.load %arg2[%c8_74, %c0_75, %c0_76] : memref<9x1x128xf32, #tpu.memory_space<vmem>>, vector<1x1x128xf32>
    %153 = vector.shape_cast %152 : vector<1x1x128xf32> to vector<1x128xf32>
    %154 = vector.broadcast %153 : vector<1x128xf32> to vector<8x128xf32>
    %155 = arith.mulf %151, %154 : vector<8x128xf32>
    %156 = arith.addf %150, %155 : vector<8x128xf32>
    %c0_77 = arith.constant 0 : index
    %c0_78 = arith.constant 0 : index
    %157 = vector.load %arg6[%c0_77, %c0_78] : memref<1x128xf32, #tpu.memory_space<vmem>>, vector<1x128xf32>
    %158 = vector.broadcast %157 : vector<1x128xf32> to vector<8x128xf32>
    %159 = arith.mulf %156, %158 : vector<8x128xf32>
    %cst_79 = arith.constant dense<0.000000e+00> : vector<8xf32>
    %160 = vector.multi_reduction <add>, %159, %cst_79 [1] : vector<8x128xf32> to vector<8xf32>
    %161 = vector.shape_cast %160 : vector<8xf32> to vector<8x1xf32>
    %cst_80 = arith.constant 1.280000e+02 : f32
    %162 = vector.broadcast %cst_80 : f32 to vector<8x1xf32>
    %163 = arith.divf %161, %162 : vector<8x1xf32>
    %164 = vector.broadcast %163 : vector<8x1xf32> to vector<8x128xf32>
    %165 = arith.subf %159, %164 : vector<8x128xf32>
    %166 = arith.mulf %165, %165 : vector<8x128xf32>
    %cst_81 = arith.constant dense<0.000000e+00> : vector<8xf32>
    %167 = vector.multi_reduction <add>, %166, %cst_81 [1] : vector<8x128xf32> to vector<8xf32>
    %168 = vector.shape_cast %167 : vector<8xf32> to vector<8x1xf32>
    %cst_82 = arith.constant 1.280000e+02 : f32
    %169 = vector.broadcast %cst_82 : f32 to vector<8x1xf32>
    %170 = arith.divf %168, %169 : vector<8x1xf32>
    %cst_83 = arith.constant 9.99999974E-6 : f32
    %171 = vector.broadcast %cst_83 : f32 to vector<8x1xf32>
    %172 = arith.addf %170, %171 : vector<8x1xf32>
    %173 = math.rsqrt %172 : vector<8x1xf32>
    %174 = vector.broadcast %173 : vector<8x1xf32> to vector<8x128xf32>
    %175 = arith.mulf %165, %174 : vector<8x128xf32>
    %cst_84 = arith.constant 0.000000e+00 : f32
    %176 = vector.broadcast %cst_84 : f32 to vector<8x128xf32>
    %177 = arith.maximumf %0, %176 : vector<8x128xf32>
    %c9_i32_85 = arith.constant 9 : i32
    %178 = tpu.dynamic_rotate %177 by %c9_i32_85 dim 1 : vector<8x128xf32>, i32 -> vector<8x128xf32>
    %c0_86 = arith.constant 0 : index
    %c0_87 = arith.constant 0 : index
    %c0_88 = arith.constant 0 : index
    %179 = vector.load %arg2[%c0_86, %c0_87, %c0_88] : memref<9x1x128xf32, #tpu.memory_space<vmem>>, vector<1x1x128xf32>
    %180 = vector.shape_cast %179 : vector<1x1x128xf32> to vector<1x128xf32>
    %181 = vector.broadcast %180 : vector<1x128xf32> to vector<8x128xf32>
    %182 = arith.mulf %178, %181 : vector<8x128xf32>
    %c0_89 = arith.constant 0 : index
    %c0_90 = arith.constant 0 : index
    %c0_91 = arith.constant 0 : index
    %183 = vector.load %arg7[%c0_89, %c0_90, %c0_91] : memref<9x8x1xf32, #tpu.memory_space<vmem>>, vector<1x8x1xf32>
    %184 = vector.shape_cast %183 : vector<1x8x1xf32> to vector<8x1xf32>
    %185 = vector.broadcast %184 : vector<8x1xf32> to vector<8x128xf32>
    %186 = arith.mulf %182, %185 : vector<8x128xf32>
    %c8_i32_92 = arith.constant 8 : i32
    %187 = tpu.dynamic_rotate %177 by %c8_i32_92 dim 1 : vector<8x128xf32>, i32 -> vector<8x128xf32>
    %c1_93 = arith.constant 1 : index
    %c0_94 = arith.constant 0 : index
    %c0_95 = arith.constant 0 : index
    %188 = vector.load %arg2[%c1_93, %c0_94, %c0_95] : memref<9x1x128xf32, #tpu.memory_space<vmem>>, vector<1x1x128xf32>
    %189 = vector.shape_cast %188 : vector<1x1x128xf32> to vector<1x128xf32>
    %190 = vector.broadcast %189 : vector<1x128xf32> to vector<8x128xf32>
    %191 = arith.mulf %187, %190 : vector<8x128xf32>
    %c1_96 = arith.constant 1 : index
    %c0_97 = arith.constant 0 : index
    %c0_98 = arith.constant 0 : index
    %192 = vector.load %arg7[%c1_96, %c0_97, %c0_98] : memref<9x8x1xf32, #tpu.memory_space<vmem>>, vector<1x8x1xf32>
    %193 = vector.shape_cast %192 : vector<1x8x1xf32> to vector<8x1xf32>
    %194 = vector.broadcast %193 : vector<8x1xf32> to vector<8x128xf32>
    %195 = arith.mulf %191, %194 : vector<8x128xf32>
    %196 = arith.addf %186, %195 : vector<8x128xf32>
    %c7_i32_99 = arith.constant 7 : i32
    %197 = tpu.dynamic_rotate %177 by %c7_i32_99 dim 1 : vector<8x128xf32>, i32 -> vector<8x128xf32>
    %c2_100 = arith.constant 2 : index
    %c0_101 = arith.constant 0 : index
    %c0_102 = arith.constant 0 : index
    %198 = vector.load %arg2[%c2_100, %c0_101, %c0_102] : memref<9x1x128xf32, #tpu.memory_space<vmem>>, vector<1x1x128xf32>
    %199 = vector.shape_cast %198 : vector<1x1x128xf32> to vector<1x128xf32>
    %200 = vector.broadcast %199 : vector<1x128xf32> to vector<8x128xf32>
    %201 = arith.mulf %197, %200 : vector<8x128xf32>
    %c2_103 = arith.constant 2 : index
    %c0_104 = arith.constant 0 : index
    %c0_105 = arith.constant 0 : index
    %202 = vector.load %arg7[%c2_103, %c0_104, %c0_105] : memref<9x8x1xf32, #tpu.memory_space<vmem>>, vector<1x8x1xf32>
    %203 = vector.shape_cast %202 : vector<1x8x1xf32> to vector<8x1xf32>
    %204 = vector.broadcast %203 : vector<8x1xf32> to vector<8x128xf32>
    %205 = arith.mulf %201, %204 : vector<8x128xf32>
    %206 = arith.addf %196, %205 : vector<8x128xf32>
    %c1_i32_106 = arith.constant 1 : i32
    %207 = tpu.dynamic_rotate %177 by %c1_i32_106 dim 1 : vector<8x128xf32>, i32 -> vector<8x128xf32>
    %c3_107 = arith.constant 3 : index
    %c0_108 = arith.constant 0 : index
    %c0_109 = arith.constant 0 : index
    %208 = vector.load %arg2[%c3_107, %c0_108, %c0_109] : memref<9x1x128xf32, #tpu.memory_space<vmem>>, vector<1x1x128xf32>
    %209 = vector.shape_cast %208 : vector<1x1x128xf32> to vector<1x128xf32>
    %210 = vector.broadcast %209 : vector<1x128xf32> to vector<8x128xf32>
    %211 = arith.mulf %207, %210 : vector<8x128xf32>
    %c3_110 = arith.constant 3 : index
    %c0_111 = arith.constant 0 : index
    %c0_112 = arith.constant 0 : index
    %212 = vector.load %arg7[%c3_110, %c0_111, %c0_112] : memref<9x8x1xf32, #tpu.memory_space<vmem>>, vector<1x8x1xf32>
    %213 = vector.shape_cast %212 : vector<1x8x1xf32> to vector<8x1xf32>
    %214 = vector.broadcast %213 : vector<8x1xf32> to vector<8x128xf32>
    %215 = arith.mulf %211, %214 : vector<8x128xf32>
    %216 = arith.addf %206, %215 : vector<8x128xf32>
    %c4_113 = arith.constant 4 : index
    %c0_114 = arith.constant 0 : index
    %c0_115 = arith.constant 0 : index
    %217 = vector.load %arg2[%c4_113, %c0_114, %c0_115] : memref<9x1x128xf32, #tpu.memory_space<vmem>>, vector<1x1x128xf32>
    %218 = vector.shape_cast %217 : vector<1x1x128xf32> to vector<1x128xf32>
    %219 = vector.broadcast %218 : vector<1x128xf32> to vector<8x128xf32>
    %220 = arith.mulf %177, %219 : vector<8x128xf32>
    %c4_116 = arith.constant 4 : index
    %c0_117 = arith.constant 0 : index
    %c0_118 = arith.constant 0 : index
    %221 = vector.load %arg7[%c4_116, %c0_117, %c0_118] : memref<9x8x1xf32, #tpu.memory_space<vmem>>, vector<1x8x1xf32>
    %222 = vector.shape_cast %221 : vector<1x8x1xf32> to vector<8x1xf32>
    %223 = vector.broadcast %222 : vector<8x1xf32> to vector<8x128xf32>
    %224 = arith.mulf %220, %223 : vector<8x128xf32>
    %225 = arith.addf %216, %224 : vector<8x128xf32>
    %c127_i32_119 = arith.constant 127 : i32
    %226 = tpu.dynamic_rotate %177 by %c127_i32_119 dim 1 : vector<8x128xf32>, i32 -> vector<8x128xf32>
    %c5_120 = arith.constant 5 : index
    %c0_121 = arith.constant 0 : index
    %c0_122 = arith.constant 0 : index
    %227 = vector.load %arg2[%c5_120, %c0_121, %c0_122] : memref<9x1x128xf32, #tpu.memory_space<vmem>>, vector<1x1x128xf32>
    %228 = vector.shape_cast %227 : vector<1x1x128xf32> to vector<1x128xf32>
    %229 = vector.broadcast %228 : vector<1x128xf32> to vector<8x128xf32>
    %230 = arith.mulf %226, %229 : vector<8x128xf32>
    %c5_123 = arith.constant 5 : index
    %c0_124 = arith.constant 0 : index
    %c0_125 = arith.constant 0 : index
    %231 = vector.load %arg7[%c5_123, %c0_124, %c0_125] : memref<9x8x1xf32, #tpu.memory_space<vmem>>, vector<1x8x1xf32>
    %232 = vector.shape_cast %231 : vector<1x8x1xf32> to vector<8x1xf32>
    %233 = vector.broadcast %232 : vector<8x1xf32> to vector<8x128xf32>
    %234 = arith.mulf %230, %233 : vector<8x128xf32>
    %235 = arith.addf %225, %234 : vector<8x128xf32>
    %c121_i32_126 = arith.constant 121 : i32
    %236 = tpu.dynamic_rotate %177 by %c121_i32_126 dim 1 : vector<8x128xf32>, i32 -> vector<8x128xf32>
    %c6_127 = arith.constant 6 : index
    %c0_128 = arith.constant 0 : index
    %c0_129 = arith.constant 0 : index
    %237 = vector.load %arg2[%c6_127, %c0_128, %c0_129] : memref<9x1x128xf32, #tpu.memory_space<vmem>>, vector<1x1x128xf32>
    %238 = vector.shape_cast %237 : vector<1x1x128xf32> to vector<1x128xf32>
    %239 = vector.broadcast %238 : vector<1x128xf32> to vector<8x128xf32>
    %240 = arith.mulf %236, %239 : vector<8x128xf32>
    %c6_130 = arith.constant 6 : index
    %c0_131 = arith.constant 0 : index
    %c0_132 = arith.constant 0 : index
    %241 = vector.load %arg7[%c6_130, %c0_131, %c0_132] : memref<9x8x1xf32, #tpu.memory_space<vmem>>, vector<1x8x1xf32>
    %242 = vector.shape_cast %241 : vector<1x8x1xf32> to vector<8x1xf32>
    %243 = vector.broadcast %242 : vector<8x1xf32> to vector<8x128xf32>
    %244 = arith.mulf %240, %243 : vector<8x128xf32>
    %245 = arith.addf %235, %244 : vector<8x128xf32>
    %c120_i32_133 = arith.constant 120 : i32
    %246 = tpu.dynamic_rotate %177 by %c120_i32_133 dim 1 : vector<8x128xf32>, i32 -> vector<8x128xf32>
    %c7_134 = arith.constant 7 : index
    %c0_135 = arith.constant 0 : index
    %c0_136 = arith.constant 0 : index
    %247 = vector.load %arg2[%c7_134, %c0_135, %c0_136] : memref<9x1x128xf32, #tpu.memory_space<vmem>>, vector<1x1x128xf32>
    %248 = vector.shape_cast %247 : vector<1x1x128xf32> to vector<1x128xf32>
    %249 = vector.broadcast %248 : vector<1x128xf32> to vector<8x128xf32>
    %250 = arith.mulf %246, %249 : vector<8x128xf32>
    %c7_137 = arith.constant 7 : index
    %c0_138 = arith.constant 0 : index
    %c0_139 = arith.constant 0 : index
    %251 = vector.load %arg7[%c7_137, %c0_138, %c0_139] : memref<9x8x1xf32, #tpu.memory_space<vmem>>, vector<1x8x1xf32>
    %252 = vector.shape_cast %251 : vector<1x8x1xf32> to vector<8x1xf32>
    %253 = vector.broadcast %252 : vector<8x1xf32> to vector<8x128xf32>
    %254 = arith.mulf %250, %253 : vector<8x128xf32>
    %255 = arith.addf %245, %254 : vector<8x128xf32>
    %c119_i32_140 = arith.constant 119 : i32
    %256 = tpu.dynamic_rotate %177 by %c119_i32_140 dim 1 : vector<8x128xf32>, i32 -> vector<8x128xf32>
    %c8_141 = arith.constant 8 : index
    %c0_142 = arith.constant 0 : index
    %c0_143 = arith.constant 0 : index
    %257 = vector.load %arg2[%c8_141, %c0_142, %c0_143] : memref<9x1x128xf32, #tpu.memory_space<vmem>>, vector<1x1x128xf32>
    %258 = vector.shape_cast %257 : vector<1x1x128xf32> to vector<1x128xf32>
    %259 = vector.broadcast %258 : vector<1x128xf32> to vector<8x128xf32>
    %260 = arith.mulf %256, %259 : vector<8x128xf32>
    %c8_144 = arith.constant 8 : index
    %c0_145 = arith.constant 0 : index
    %c0_146 = arith.constant 0 : index
    %261 = vector.load %arg7[%c8_144, %c0_145, %c0_146] : memref<9x8x1xf32, #tpu.memory_space<vmem>>, vector<1x8x1xf32>
    %262 = vector.shape_cast %261 : vector<1x8x1xf32> to vector<8x1xf32>
    %263 = vector.broadcast %262 : vector<8x1xf32> to vector<8x128xf32>
    %264 = arith.mulf %260, %263 : vector<8x128xf32>
    %265 = arith.addf %255, %264 : vector<8x128xf32>
    %c0_147 = arith.constant 0 : index
    %c0_148 = arith.constant 0 : index
    %266 = vector.load %arg8[%c0_147, %c0_148] : memref<8x8xf32, #tpu.memory_space<vmem>>, vector<8x8xf32>
    %cst_149 = arith.constant dense<0.000000e+00> : vector<8x128xf32>
    %267 = tpu.matmul %266, %265, %cst_149 {dimension_numbers = #tpu.dot_dimension_numbers<[1], [0], [0], [1], [0, 0, 1, 1], [], []>} : vector<8x8xf32>, vector<8x128xf32>, vector<8x128xf32> -> vector<8x128xf32>
    %cst_150 = arith.constant dense<0.000000e+00> : vector<8xf32>
    %268 = vector.multi_reduction <add>, %267, %cst_150 [1] : vector<8x128xf32> to vector<8xf32>
    %269 = vector.shape_cast %268 : vector<8xf32> to vector<8x1xf32>
    %cst_151 = arith.constant 1.280000e+02 : f32
    %270 = vector.broadcast %cst_151 : f32 to vector<8x1xf32>
    %271 = arith.divf %269, %270 : vector<8x1xf32>
    %272 = vector.broadcast %271 : vector<8x1xf32> to vector<8x128xf32>
    %273 = arith.subf %267, %272 : vector<8x128xf32>
    %274 = arith.mulf %273, %273 : vector<8x128xf32>
    %cst_152 = arith.constant dense<0.000000e+00> : vector<8xf32>
    %275 = vector.multi_reduction <add>, %274, %cst_152 [1] : vector<8x128xf32> to vector<8xf32>
    %276 = vector.shape_cast %275 : vector<8xf32> to vector<8x1xf32>
    %cst_153 = arith.constant 1.280000e+02 : f32
    %277 = vector.broadcast %cst_153 : f32 to vector<8x1xf32>
    %278 = arith.divf %276, %277 : vector<8x1xf32>
    %cst_154 = arith.constant 9.99999974E-6 : f32
    %279 = vector.broadcast %cst_154 : f32 to vector<8x1xf32>
    %280 = arith.addf %278, %279 : vector<8x1xf32>
    %281 = math.rsqrt %280 : vector<8x1xf32>
    %282 = vector.broadcast %281 : vector<8x1xf32> to vector<8x128xf32>
    %283 = arith.mulf %273, %282 : vector<8x128xf32>
    %cst_155 = arith.constant 0.000000e+00 : f32
    %284 = vector.broadcast %cst_155 : f32 to vector<8x128xf32>
    %285 = arith.maximumf %283, %284 : vector<8x128xf32>
    %c9_i32_156 = arith.constant 9 : i32
    %286 = tpu.dynamic_rotate %285 by %c9_i32_156 dim 1 : vector<8x128xf32>, i32 -> vector<8x128xf32>
    %c0_157 = arith.constant 0 : index
    %c0_158 = arith.constant 0 : index
    %c0_159 = arith.constant 0 : index
    %287 = vector.load %arg2[%c0_157, %c0_158, %c0_159] : memref<9x1x128xf32, #tpu.memory_space<vmem>>, vector<1x1x128xf32>
    %288 = vector.shape_cast %287 : vector<1x1x128xf32> to vector<1x128xf32>
    %289 = vector.broadcast %288 : vector<1x128xf32> to vector<8x128xf32>
    %290 = arith.mulf %286, %289 : vector<8x128xf32>
    %c0_160 = arith.constant 0 : index
    %c0_161 = arith.constant 0 : index
    %c0_162 = arith.constant 0 : index
    %291 = vector.load %arg9[%c0_160, %c0_161, %c0_162] : memref<9x8x1xf32, #tpu.memory_space<vmem>>, vector<1x8x1xf32>
    %292 = vector.shape_cast %291 : vector<1x8x1xf32> to vector<8x1xf32>
    %293 = vector.broadcast %292 : vector<8x1xf32> to vector<8x128xf32>
    %294 = arith.mulf %290, %293 : vector<8x128xf32>
    %c8_i32_163 = arith.constant 8 : i32
    %295 = tpu.dynamic_rotate %285 by %c8_i32_163 dim 1 : vector<8x128xf32>, i32 -> vector<8x128xf32>
    %c1_164 = arith.constant 1 : index
    %c0_165 = arith.constant 0 : index
    %c0_166 = arith.constant 0 : index
    %296 = vector.load %arg2[%c1_164, %c0_165, %c0_166] : memref<9x1x128xf32, #tpu.memory_space<vmem>>, vector<1x1x128xf32>
    %297 = vector.shape_cast %296 : vector<1x1x128xf32> to vector<1x128xf32>
    %298 = vector.broadcast %297 : vector<1x128xf32> to vector<8x128xf32>
    %299 = arith.mulf %295, %298 : vector<8x128xf32>
    %c1_167 = arith.constant 1 : index
    %c0_168 = arith.constant 0 : index
    %c0_169 = arith.constant 0 : index
    %300 = vector.load %arg9[%c1_167, %c0_168, %c0_169] : memref<9x8x1xf32, #tpu.memory_space<vmem>>, vector<1x8x1xf32>
    %301 = vector.shape_cast %300 : vector<1x8x1xf32> to vector<8x1xf32>
    %302 = vector.broadcast %301 : vector<8x1xf32> to vector<8x128xf32>
    %303 = arith.mulf %299, %302 : vector<8x128xf32>
    %304 = arith.addf %294, %303 : vector<8x128xf32>
    %c7_i32_170 = arith.constant 7 : i32
    %305 = tpu.dynamic_rotate %285 by %c7_i32_170 dim 1 : vector<8x128xf32>, i32 -> vector<8x128xf32>
    %c2_171 = arith.constant 2 : index
    %c0_172 = arith.constant 0 : index
    %c0_173 = arith.constant 0 : index
    %306 = vector.load %arg2[%c2_171, %c0_172, %c0_173] : memref<9x1x128xf32, #tpu.memory_space<vmem>>, vector<1x1x128xf32>
    %307 = vector.shape_cast %306 : vector<1x1x128xf32> to vector<1x128xf32>
    %308 = vector.broadcast %307 : vector<1x128xf32> to vector<8x128xf32>
    %309 = arith.mulf %305, %308 : vector<8x128xf32>
    %c2_174 = arith.constant 2 : index
    %c0_175 = arith.constant 0 : index
    %c0_176 = arith.constant 0 : index
    %310 = vector.load %arg9[%c2_174, %c0_175, %c0_176] : memref<9x8x1xf32, #tpu.memory_space<vmem>>, vector<1x8x1xf32>
    %311 = vector.shape_cast %310 : vector<1x8x1xf32> to vector<8x1xf32>
    %312 = vector.broadcast %311 : vector<8x1xf32> to vector<8x128xf32>
    %313 = arith.mulf %309, %312 : vector<8x128xf32>
    %314 = arith.addf %304, %313 : vector<8x128xf32>
    %c1_i32_177 = arith.constant 1 : i32
    %315 = tpu.dynamic_rotate %285 by %c1_i32_177 dim 1 : vector<8x128xf32>, i32 -> vector<8x128xf32>
    %c3_178 = arith.constant 3 : index
    %c0_179 = arith.constant 0 : index
    %c0_180 = arith.constant 0 : index
    %316 = vector.load %arg2[%c3_178, %c0_179, %c0_180] : memref<9x1x128xf32, #tpu.memory_space<vmem>>, vector<1x1x128xf32>
    %317 = vector.shape_cast %316 : vector<1x1x128xf32> to vector<1x128xf32>
    %318 = vector.broadcast %317 : vector<1x128xf32> to vector<8x128xf32>
    %319 = arith.mulf %315, %318 : vector<8x128xf32>
    %c3_181 = arith.constant 3 : index
    %c0_182 = arith.constant 0 : index
    %c0_183 = arith.constant 0 : index
    %320 = vector.load %arg9[%c3_181, %c0_182, %c0_183] : memref<9x8x1xf32, #tpu.memory_space<vmem>>, vector<1x8x1xf32>
    %321 = vector.shape_cast %320 : vector<1x8x1xf32> to vector<8x1xf32>
    %322 = vector.broadcast %321 : vector<8x1xf32> to vector<8x128xf32>
    %323 = arith.mulf %319, %322 : vector<8x128xf32>
    %324 = arith.addf %314, %323 : vector<8x128xf32>
    %c4_184 = arith.constant 4 : index
    %c0_185 = arith.constant 0 : index
    %c0_186 = arith.constant 0 : index
    %325 = vector.load %arg2[%c4_184, %c0_185, %c0_186] : memref<9x1x128xf32, #tpu.memory_space<vmem>>, vector<1x1x128xf32>
    %326 = vector.shape_cast %325 : vector<1x1x128xf32> to vector<1x128xf32>
    %327 = vector.broadcast %326 : vector<1x128xf32> to vector<8x128xf32>
    %328 = arith.mulf %285, %327 : vector<8x128xf32>
    %c4_187 = arith.constant 4 : index
    %c0_188 = arith.constant 0 : index
    %c0_189 = arith.constant 0 : index
    %329 = vector.load %arg9[%c4_187, %c0_188, %c0_189] : memref<9x8x1xf32, #tpu.memory_space<vmem>>, vector<1x8x1xf32>
    %330 = vector.shape_cast %329 : vector<1x8x1xf32> to vector<8x1xf32>
    %331 = vector.broadcast %330 : vector<8x1xf32> to vector<8x128xf32>
    %332 = arith.mulf %328, %331 : vector<8x128xf32>
    %333 = arith.addf %324, %332 : vector<8x128xf32>
    %c127_i32_190 = arith.constant 127 : i32
    %334 = tpu.dynamic_rotate %285 by %c127_i32_190 dim 1 : vector<8x128xf32>, i32 -> vector<8x128xf32>
    %c5_191 = arith.constant 5 : index
    %c0_192 = arith.constant 0 : index
    %c0_193 = arith.constant 0 : index
    %335 = vector.load %arg2[%c5_191, %c0_192, %c0_193] : memref<9x1x128xf32, #tpu.memory_space<vmem>>, vector<1x1x128xf32>
    %336 = vector.shape_cast %335 : vector<1x1x128xf32> to vector<1x128xf32>
    %337 = vector.broadcast %336 : vector<1x128xf32> to vector<8x128xf32>
    %338 = arith.mulf %334, %337 : vector<8x128xf32>
    %c5_194 = arith.constant 5 : index
    %c0_195 = arith.constant 0 : index
    %c0_196 = arith.constant 0 : index
    %339 = vector.load %arg9[%c5_194, %c0_195, %c0_196] : memref<9x8x1xf32, #tpu.memory_space<vmem>>, vector<1x8x1xf32>
    %340 = vector.shape_cast %339 : vector<1x8x1xf32> to vector<8x1xf32>
    %341 = vector.broadcast %340 : vector<8x1xf32> to vector<8x128xf32>
    %342 = arith.mulf %338, %341 : vector<8x128xf32>
    %343 = arith.addf %333, %342 : vector<8x128xf32>
    %c121_i32_197 = arith.constant 121 : i32
    %344 = tpu.dynamic_rotate %285 by %c121_i32_197 dim 1 : vector<8x128xf32>, i32 -> vector<8x128xf32>
    %c6_198 = arith.constant 6 : index
    %c0_199 = arith.constant 0 : index
    %c0_200 = arith.constant 0 : index
    %345 = vector.load %arg2[%c6_198, %c0_199, %c0_200] : memref<9x1x128xf32, #tpu.memory_space<vmem>>, vector<1x1x128xf32>
    %346 = vector.shape_cast %345 : vector<1x1x128xf32> to vector<1x128xf32>
    %347 = vector.broadcast %346 : vector<1x128xf32> to vector<8x128xf32>
    %348 = arith.mulf %344, %347 : vector<8x128xf32>
    %c6_201 = arith.constant 6 : index
    %c0_202 = arith.constant 0 : index
    %c0_203 = arith.constant 0 : index
    %349 = vector.load %arg9[%c6_201, %c0_202, %c0_203] : memref<9x8x1xf32, #tpu.memory_space<vmem>>, vector<1x8x1xf32>
    %350 = vector.shape_cast %349 : vector<1x8x1xf32> to vector<8x1xf32>
    %351 = vector.broadcast %350 : vector<8x1xf32> to vector<8x128xf32>
    %352 = arith.mulf %348, %351 : vector<8x128xf32>
    %353 = arith.addf %343, %352 : vector<8x128xf32>
    %c120_i32_204 = arith.constant 120 : i32
    %354 = tpu.dynamic_rotate %285 by %c120_i32_204 dim 1 : vector<8x128xf32>, i32 -> vector<8x128xf32>
    %c7_205 = arith.constant 7 : index
    %c0_206 = arith.constant 0 : index
    %c0_207 = arith.constant 0 : index
    %355 = vector.load %arg2[%c7_205, %c0_206, %c0_207] : memref<9x1x128xf32, #tpu.memory_space<vmem>>, vector<1x1x128xf32>
    %356 = vector.shape_cast %355 : vector<1x1x128xf32> to vector<1x128xf32>
    %357 = vector.broadcast %356 : vector<1x128xf32> to vector<8x128xf32>
    %358 = arith.mulf %354, %357 : vector<8x128xf32>
    %c7_208 = arith.constant 7 : index
    %c0_209 = arith.constant 0 : index
    %c0_210 = arith.constant 0 : index
    %359 = vector.load %arg9[%c7_208, %c0_209, %c0_210] : memref<9x8x1xf32, #tpu.memory_space<vmem>>, vector<1x8x1xf32>
    %360 = vector.shape_cast %359 : vector<1x8x1xf32> to vector<8x1xf32>
    %361 = vector.broadcast %360 : vector<8x1xf32> to vector<8x128xf32>
    %362 = arith.mulf %358, %361 : vector<8x128xf32>
    %363 = arith.addf %353, %362 : vector<8x128xf32>
    %c119_i32_211 = arith.constant 119 : i32
    %364 = tpu.dynamic_rotate %285 by %c119_i32_211 dim 1 : vector<8x128xf32>, i32 -> vector<8x128xf32>
    %c8_212 = arith.constant 8 : index
    %c0_213 = arith.constant 0 : index
    %c0_214 = arith.constant 0 : index
    %365 = vector.load %arg2[%c8_212, %c0_213, %c0_214] : memref<9x1x128xf32, #tpu.memory_space<vmem>>, vector<1x1x128xf32>
    %366 = vector.shape_cast %365 : vector<1x1x128xf32> to vector<1x128xf32>
    %367 = vector.broadcast %366 : vector<1x128xf32> to vector<8x128xf32>
    %368 = arith.mulf %364, %367 : vector<8x128xf32>
    %c8_215 = arith.constant 8 : index
    %c0_216 = arith.constant 0 : index
    %c0_217 = arith.constant 0 : index
    %369 = vector.load %arg9[%c8_215, %c0_216, %c0_217] : memref<9x8x1xf32, #tpu.memory_space<vmem>>, vector<1x8x1xf32>
    %370 = vector.shape_cast %369 : vector<1x8x1xf32> to vector<8x1xf32>
    %371 = vector.broadcast %370 : vector<8x1xf32> to vector<8x128xf32>
    %372 = arith.mulf %368, %371 : vector<8x128xf32>
    %373 = arith.addf %363, %372 : vector<8x128xf32>
    %c0_218 = arith.constant 0 : index
    %c0_219 = arith.constant 0 : index
    %374 = vector.load %arg10[%c0_218, %c0_219] : memref<8x8xf32, #tpu.memory_space<vmem>>, vector<8x8xf32>
    %cst_220 = arith.constant dense<0.000000e+00> : vector<8x128xf32>
    %375 = tpu.matmul %374, %373, %cst_220 {dimension_numbers = #tpu.dot_dimension_numbers<[1], [0], [0], [1], [0, 0, 1, 1], [], []>} : vector<8x8xf32>, vector<8x128xf32>, vector<8x128xf32> -> vector<8x128xf32>
    %cst_221 = arith.constant dense<0.000000e+00> : vector<8xf32>
    %376 = vector.multi_reduction <add>, %375, %cst_221 [1] : vector<8x128xf32> to vector<8xf32>
    %377 = vector.shape_cast %376 : vector<8xf32> to vector<8x1xf32>
    %cst_222 = arith.constant 1.280000e+02 : f32
    %378 = vector.broadcast %cst_222 : f32 to vector<8x1xf32>
    %379 = arith.divf %377, %378 : vector<8x1xf32>
    %380 = vector.broadcast %379 : vector<8x1xf32> to vector<8x128xf32>
    %381 = arith.subf %375, %380 : vector<8x128xf32>
    %382 = arith.mulf %381, %381 : vector<8x128xf32>
    %cst_223 = arith.constant dense<0.000000e+00> : vector<8xf32>
    %383 = vector.multi_reduction <add>, %382, %cst_223 [1] : vector<8x128xf32> to vector<8xf32>
    %384 = vector.shape_cast %383 : vector<8xf32> to vector<8x1xf32>
    %cst_224 = arith.constant 1.280000e+02 : f32
    %385 = vector.broadcast %cst_224 : f32 to vector<8x1xf32>
    %386 = arith.divf %384, %385 : vector<8x1xf32>
    %cst_225 = arith.constant 9.99999974E-6 : f32
    %387 = vector.broadcast %cst_225 : f32 to vector<8x1xf32>
    %388 = arith.addf %386, %387 : vector<8x1xf32>
    %389 = math.rsqrt %388 : vector<8x1xf32>
    %390 = vector.broadcast %389 : vector<8x1xf32> to vector<8x128xf32>
    %391 = arith.mulf %381, %390 : vector<8x128xf32>
    %cst_226 = arith.constant 0.000000e+00 : f32
    %392 = vector.broadcast %cst_226 : f32 to vector<8x128xf32>
    %393 = arith.maximumf %0, %392 : vector<8x128xf32>
    %c18_i32 = arith.constant 18 : i32
    %394 = tpu.dynamic_rotate %393 by %c18_i32 dim 1 : vector<8x128xf32>, i32 -> vector<8x128xf32>
    %c0_227 = arith.constant 0 : index
    %c0_228 = arith.constant 0 : index
    %c0_229 = arith.constant 0 : index
    %395 = vector.load %arg3[%c0_227, %c0_228, %c0_229] : memref<25x1x128xf32, #tpu.memory_space<vmem>>, vector<1x1x128xf32>
    %396 = vector.shape_cast %395 : vector<1x1x128xf32> to vector<1x128xf32>
    %397 = vector.broadcast %396 : vector<1x128xf32> to vector<8x128xf32>
    %398 = arith.mulf %394, %397 : vector<8x128xf32>
    %c0_230 = arith.constant 0 : index
    %c0_231 = arith.constant 0 : index
    %c0_232 = arith.constant 0 : index
    %399 = vector.load %arg11[%c0_230, %c0_231, %c0_232] : memref<25x8x1xf32, #tpu.memory_space<vmem>>, vector<1x8x1xf32>
    %400 = vector.shape_cast %399 : vector<1x8x1xf32> to vector<8x1xf32>
    %401 = vector.broadcast %400 : vector<8x1xf32> to vector<8x128xf32>
    %402 = arith.mulf %398, %401 : vector<8x128xf32>
    %c17_i32 = arith.constant 17 : i32
    %403 = tpu.dynamic_rotate %393 by %c17_i32 dim 1 : vector<8x128xf32>, i32 -> vector<8x128xf32>
    %c1_233 = arith.constant 1 : index
    %c0_234 = arith.constant 0 : index
    %c0_235 = arith.constant 0 : index
    %404 = vector.load %arg3[%c1_233, %c0_234, %c0_235] : memref<25x1x128xf32, #tpu.memory_space<vmem>>, vector<1x1x128xf32>
    %405 = vector.shape_cast %404 : vector<1x1x128xf32> to vector<1x128xf32>
    %406 = vector.broadcast %405 : vector<1x128xf32> to vector<8x128xf32>
    %407 = arith.mulf %403, %406 : vector<8x128xf32>
    %c1_236 = arith.constant 1 : index
    %c0_237 = arith.constant 0 : index
    %c0_238 = arith.constant 0 : index
    %408 = vector.load %arg11[%c1_236, %c0_237, %c0_238] : memref<25x8x1xf32, #tpu.memory_space<vmem>>, vector<1x8x1xf32>
    %409 = vector.shape_cast %408 : vector<1x8x1xf32> to vector<8x1xf32>
    %410 = vector.broadcast %409 : vector<8x1xf32> to vector<8x128xf32>
    %411 = arith.mulf %407, %410 : vector<8x128xf32>
    %412 = arith.addf %402, %411 : vector<8x128xf32>
    %c16_i32 = arith.constant 16 : i32
    %413 = tpu.dynamic_rotate %393 by %c16_i32 dim 1 : vector<8x128xf32>, i32 -> vector<8x128xf32>
    %c2_239 = arith.constant 2 : index
    %c0_240 = arith.constant 0 : index
    %c0_241 = arith.constant 0 : index
    %414 = vector.load %arg3[%c2_239, %c0_240, %c0_241] : memref<25x1x128xf32, #tpu.memory_space<vmem>>, vector<1x1x128xf32>
    %415 = vector.shape_cast %414 : vector<1x1x128xf32> to vector<1x128xf32>
    %416 = vector.broadcast %415 : vector<1x128xf32> to vector<8x128xf32>
    %417 = arith.mulf %413, %416 : vector<8x128xf32>
    %c2_242 = arith.constant 2 : index
    %c0_243 = arith.constant 0 : index
    %c0_244 = arith.constant 0 : index
    %418 = vector.load %arg11[%c2_242, %c0_243, %c0_244] : memref<25x8x1xf32, #tpu.memory_space<vmem>>, vector<1x8x1xf32>
    %419 = vector.shape_cast %418 : vector<1x8x1xf32> to vector<8x1xf32>
    %420 = vector.broadcast %419 : vector<8x1xf32> to vector<8x128xf32>
    %421 = arith.mulf %417, %420 : vector<8x128xf32>
    %422 = arith.addf %412, %421 : vector<8x128xf32>
    %c15_i32 = arith.constant 15 : i32
    %423 = tpu.dynamic_rotate %393 by %c15_i32 dim 1 : vector<8x128xf32>, i32 -> vector<8x128xf32>
    %c3_245 = arith.constant 3 : index
    %c0_246 = arith.constant 0 : index
    %c0_247 = arith.constant 0 : index
    %424 = vector.load %arg3[%c3_245, %c0_246, %c0_247] : memref<25x1x128xf32, #tpu.memory_space<vmem>>, vector<1x1x128xf32>
    %425 = vector.shape_cast %424 : vector<1x1x128xf32> to vector<1x128xf32>
    %426 = vector.broadcast %425 : vector<1x128xf32> to vector<8x128xf32>
    %427 = arith.mulf %423, %426 : vector<8x128xf32>
    %c3_248 = arith.constant 3 : index
    %c0_249 = arith.constant 0 : index
    %c0_250 = arith.constant 0 : index
    %428 = vector.load %arg11[%c3_248, %c0_249, %c0_250] : memref<25x8x1xf32, #tpu.memory_space<vmem>>, vector<1x8x1xf32>
    %429 = vector.shape_cast %428 : vector<1x8x1xf32> to vector<8x1xf32>
    %430 = vector.broadcast %429 : vector<8x1xf32> to vector<8x128xf32>
    %431 = arith.mulf %427, %430 : vector<8x128xf32>
    %432 = arith.addf %422, %431 : vector<8x128xf32>
    %c14_i32 = arith.constant 14 : i32
    %433 = tpu.dynamic_rotate %393 by %c14_i32 dim 1 : vector<8x128xf32>, i32 -> vector<8x128xf32>
    %c4_251 = arith.constant 4 : index
    %c0_252 = arith.constant 0 : index
    %c0_253 = arith.constant 0 : index
    %434 = vector.load %arg3[%c4_251, %c0_252, %c0_253] : memref<25x1x128xf32, #tpu.memory_space<vmem>>, vector<1x1x128xf32>
    %435 = vector.shape_cast %434 : vector<1x1x128xf32> to vector<1x128xf32>
    %436 = vector.broadcast %435 : vector<1x128xf32> to vector<8x128xf32>
    %437 = arith.mulf %433, %436 : vector<8x128xf32>
    %c4_254 = arith.constant 4 : index
    %c0_255 = arith.constant 0 : index
    %c0_256 = arith.constant 0 : index
    %438 = vector.load %arg11[%c4_254, %c0_255, %c0_256] : memref<25x8x1xf32, #tpu.memory_space<vmem>>, vector<1x8x1xf32>
    %439 = vector.shape_cast %438 : vector<1x8x1xf32> to vector<8x1xf32>
    %440 = vector.broadcast %439 : vector<8x1xf32> to vector<8x128xf32>
    %441 = arith.mulf %437, %440 : vector<8x128xf32>
    %442 = arith.addf %432, %441 : vector<8x128xf32>
    %c10_i32 = arith.constant 10 : i32
    %443 = tpu.dynamic_rotate %393 by %c10_i32 dim 1 : vector<8x128xf32>, i32 -> vector<8x128xf32>
    %c5_257 = arith.constant 5 : index
    %c0_258 = arith.constant 0 : index
    %c0_259 = arith.constant 0 : index
    %444 = vector.load %arg3[%c5_257, %c0_258, %c0_259] : memref<25x1x128xf32, #tpu.memory_space<vmem>>, vector<1x1x128xf32>
    %445 = vector.shape_cast %444 : vector<1x1x128xf32> to vector<1x128xf32>
    %446 = vector.broadcast %445 : vector<1x128xf32> to vector<8x128xf32>
    %447 = arith.mulf %443, %446 : vector<8x128xf32>
    %c5_260 = arith.constant 5 : index
    %c0_261 = arith.constant 0 : index
    %c0_262 = arith.constant 0 : index
    %448 = vector.load %arg11[%c5_260, %c0_261, %c0_262] : memref<25x8x1xf32, #tpu.memory_space<vmem>>, vector<1x8x1xf32>
    %449 = vector.shape_cast %448 : vector<1x8x1xf32> to vector<8x1xf32>
    %450 = vector.broadcast %449 : vector<8x1xf32> to vector<8x128xf32>
    %451 = arith.mulf %447, %450 : vector<8x128xf32>
    %452 = arith.addf %442, %451 : vector<8x128xf32>
    %c9_i32_263 = arith.constant 9 : i32
    %453 = tpu.dynamic_rotate %393 by %c9_i32_263 dim 1 : vector<8x128xf32>, i32 -> vector<8x128xf32>
    %c6_264 = arith.constant 6 : index
    %c0_265 = arith.constant 0 : index
    %c0_266 = arith.constant 0 : index
    %454 = vector.load %arg3[%c6_264, %c0_265, %c0_266] : memref<25x1x128xf32, #tpu.memory_space<vmem>>, vector<1x1x128xf32>
    %455 = vector.shape_cast %454 : vector<1x1x128xf32> to vector<1x128xf32>
    %456 = vector.broadcast %455 : vector<1x128xf32> to vector<8x128xf32>
    %457 = arith.mulf %453, %456 : vector<8x128xf32>
    %c6_267 = arith.constant 6 : index
    %c0_268 = arith.constant 0 : index
    %c0_269 = arith.constant 0 : index
    %458 = vector.load %arg11[%c6_267, %c0_268, %c0_269] : memref<25x8x1xf32, #tpu.memory_space<vmem>>, vector<1x8x1xf32>
    %459 = vector.shape_cast %458 : vector<1x8x1xf32> to vector<8x1xf32>
    %460 = vector.broadcast %459 : vector<8x1xf32> to vector<8x128xf32>
    %461 = arith.mulf %457, %460 : vector<8x128xf32>
    %462 = arith.addf %452, %461 : vector<8x128xf32>
    %c8_i32_270 = arith.constant 8 : i32
    %463 = tpu.dynamic_rotate %393 by %c8_i32_270 dim 1 : vector<8x128xf32>, i32 -> vector<8x128xf32>
    %c7_271 = arith.constant 7 : index
    %c0_272 = arith.constant 0 : index
    %c0_273 = arith.constant 0 : index
    %464 = vector.load %arg3[%c7_271, %c0_272, %c0_273] : memref<25x1x128xf32, #tpu.memory_space<vmem>>, vector<1x1x128xf32>
    %465 = vector.shape_cast %464 : vector<1x1x128xf32> to vector<1x128xf32>
    %466 = vector.broadcast %465 : vector<1x128xf32> to vector<8x128xf32>
    %467 = arith.mulf %463, %466 : vector<8x128xf32>
    %c7_274 = arith.constant 7 : index
    %c0_275 = arith.constant 0 : index
    %c0_276 = arith.constant 0 : index
    %468 = vector.load %arg11[%c7_274, %c0_275, %c0_276] : memref<25x8x1xf32, #tpu.memory_space<vmem>>, vector<1x8x1xf32>
    %469 = vector.shape_cast %468 : vector<1x8x1xf32> to vector<8x1xf32>
    %470 = vector.broadcast %469 : vector<8x1xf32> to vector<8x128xf32>
    %471 = arith.mulf %467, %470 : vector<8x128xf32>
    %472 = arith.addf %462, %471 : vector<8x128xf32>
    %c7_i32_277 = arith.constant 7 : i32
    %473 = tpu.dynamic_rotate %393 by %c7_i32_277 dim 1 : vector<8x128xf32>, i32 -> vector<8x128xf32>
    %c8_278 = arith.constant 8 : index
    %c0_279 = arith.constant 0 : index
    %c0_280 = arith.constant 0 : index
    %474 = vector.load %arg3[%c8_278, %c0_279, %c0_280] : memref<25x1x128xf32, #tpu.memory_space<vmem>>, vector<1x1x128xf32>
    %475 = vector.shape_cast %474 : vector<1x1x128xf32> to vector<1x128xf32>
    %476 = vector.broadcast %475 : vector<1x128xf32> to vector<8x128xf32>
    %477 = arith.mulf %473, %476 : vector<8x128xf32>
    %c8_281 = arith.constant 8 : index
    %c0_282 = arith.constant 0 : index
    %c0_283 = arith.constant 0 : index
    %478 = vector.load %arg11[%c8_281, %c0_282, %c0_283] : memref<25x8x1xf32, #tpu.memory_space<vmem>>, vector<1x8x1xf32>
    %479 = vector.shape_cast %478 : vector<1x8x1xf32> to vector<8x1xf32>
    %480 = vector.broadcast %479 : vector<8x1xf32> to vector<8x128xf32>
    %481 = arith.mulf %477, %480 : vector<8x128xf32>
    %482 = arith.addf %472, %481 : vector<8x128xf32>
    %c6_i32 = arith.constant 6 : i32
    %483 = tpu.dynamic_rotate %393 by %c6_i32 dim 1 : vector<8x128xf32>, i32 -> vector<8x128xf32>
    %c9 = arith.constant 9 : index
    %c0_284 = arith.constant 0 : index
    %c0_285 = arith.constant 0 : index
    %484 = vector.load %arg3[%c9, %c0_284, %c0_285] : memref<25x1x128xf32, #tpu.memory_space<vmem>>, vector<1x1x128xf32>
    %485 = vector.shape_cast %484 : vector<1x1x128xf32> to vector<1x128xf32>
    %486 = vector.broadcast %485 : vector<1x128xf32> to vector<8x128xf32>
    %487 = arith.mulf %483, %486 : vector<8x128xf32>
    %c9_286 = arith.constant 9 : index
    %c0_287 = arith.constant 0 : index
    %c0_288 = arith.constant 0 : index
    %488 = vector.load %arg11[%c9_286, %c0_287, %c0_288] : memref<25x8x1xf32, #tpu.memory_space<vmem>>, vector<1x8x1xf32>
    %489 = vector.shape_cast %488 : vector<1x8x1xf32> to vector<8x1xf32>
    %490 = vector.broadcast %489 : vector<8x1xf32> to vector<8x128xf32>
    %491 = arith.mulf %487, %490 : vector<8x128xf32>
    %492 = arith.addf %482, %491 : vector<8x128xf32>
    %c2_i32 = arith.constant 2 : i32
    %493 = tpu.dynamic_rotate %393 by %c2_i32 dim 1 : vector<8x128xf32>, i32 -> vector<8x128xf32>
    %c10 = arith.constant 10 : index
    %c0_289 = arith.constant 0 : index
    %c0_290 = arith.constant 0 : index
    %494 = vector.load %arg3[%c10, %c0_289, %c0_290] : memref<25x1x128xf32, #tpu.memory_space<vmem>>, vector<1x1x128xf32>
    %495 = vector.shape_cast %494 : vector<1x1x128xf32> to vector<1x128xf32>
    %496 = vector.broadcast %495 : vector<1x128xf32> to vector<8x128xf32>
    %497 = arith.mulf %493, %496 : vector<8x128xf32>
    %c10_291 = arith.constant 10 : index
    %c0_292 = arith.constant 0 : index
    %c0_293 = arith.constant 0 : index
    %498 = vector.load %arg11[%c10_291, %c0_292, %c0_293] : memref<25x8x1xf32, #tpu.memory_space<vmem>>, vector<1x8x1xf32>
    %499 = vector.shape_cast %498 : vector<1x8x1xf32> to vector<8x1xf32>
    %500 = vector.broadcast %499 : vector<8x1xf32> to vector<8x128xf32>
    %501 = arith.mulf %497, %500 : vector<8x128xf32>
    %502 = arith.addf %492, %501 : vector<8x128xf32>
    %c1_i32_294 = arith.constant 1 : i32
    %503 = tpu.dynamic_rotate %393 by %c1_i32_294 dim 1 : vector<8x128xf32>, i32 -> vector<8x128xf32>
    %c11 = arith.constant 11 : index
    %c0_295 = arith.constant 0 : index
    %c0_296 = arith.constant 0 : index
    %504 = vector.load %arg3[%c11, %c0_295, %c0_296] : memref<25x1x128xf32, #tpu.memory_space<vmem>>, vector<1x1x128xf32>
    %505 = vector.shape_cast %504 : vector<1x1x128xf32> to vector<1x128xf32>
    %506 = vector.broadcast %505 : vector<1x128xf32> to vector<8x128xf32>
    %507 = arith.mulf %503, %506 : vector<8x128xf32>
    %c11_297 = arith.constant 11 : index
    %c0_298 = arith.constant 0 : index
    %c0_299 = arith.constant 0 : index
    %508 = vector.load %arg11[%c11_297, %c0_298, %c0_299] : memref<25x8x1xf32, #tpu.memory_space<vmem>>, vector<1x8x1xf32>
    %509 = vector.shape_cast %508 : vector<1x8x1xf32> to vector<8x1xf32>
    %510 = vector.broadcast %509 : vector<8x1xf32> to vector<8x128xf32>
    %511 = arith.mulf %507, %510 : vector<8x128xf32>
    %512 = arith.addf %502, %511 : vector<8x128xf32>
    %c12 = arith.constant 12 : index
    %c0_300 = arith.constant 0 : index
    %c0_301 = arith.constant 0 : index
    %513 = vector.load %arg3[%c12, %c0_300, %c0_301] : memref<25x1x128xf32, #tpu.memory_space<vmem>>, vector<1x1x128xf32>
    %514 = vector.shape_cast %513 : vector<1x1x128xf32> to vector<1x128xf32>
    %515 = vector.broadcast %514 : vector<1x128xf32> to vector<8x128xf32>
    %516 = arith.mulf %393, %515 : vector<8x128xf32>
    %c12_302 = arith.constant 12 : index
    %c0_303 = arith.constant 0 : index
    %c0_304 = arith.constant 0 : index
    %517 = vector.load %arg11[%c12_302, %c0_303, %c0_304] : memref<25x8x1xf32, #tpu.memory_space<vmem>>, vector<1x8x1xf32>
    %518 = vector.shape_cast %517 : vector<1x8x1xf32> to vector<8x1xf32>
    %519 = vector.broadcast %518 : vector<8x1xf32> to vector<8x128xf32>
    %520 = arith.mulf %516, %519 : vector<8x128xf32>
    %521 = arith.addf %512, %520 : vector<8x128xf32>
    %c127_i32_305 = arith.constant 127 : i32
    %522 = tpu.dynamic_rotate %393 by %c127_i32_305 dim 1 : vector<8x128xf32>, i32 -> vector<8x128xf32>
    %c13 = arith.constant 13 : index
    %c0_306 = arith.constant 0 : index
    %c0_307 = arith.constant 0 : index
    %523 = vector.load %arg3[%c13, %c0_306, %c0_307] : memref<25x1x128xf32, #tpu.memory_space<vmem>>, vector<1x1x128xf32>
    %524 = vector.shape_cast %523 : vector<1x1x128xf32> to vector<1x128xf32>
    %525 = vector.broadcast %524 : vector<1x128xf32> to vector<8x128xf32>
    %526 = arith.mulf %522, %525 : vector<8x128xf32>
    %c13_308 = arith.constant 13 : index
    %c0_309 = arith.constant 0 : index
    %c0_310 = arith.constant 0 : index
    %527 = vector.load %arg11[%c13_308, %c0_309, %c0_310] : memref<25x8x1xf32, #tpu.memory_space<vmem>>, vector<1x8x1xf32>
    %528 = vector.shape_cast %527 : vector<1x8x1xf32> to vector<8x1xf32>
    %529 = vector.broadcast %528 : vector<8x1xf32> to vector<8x128xf32>
    %530 = arith.mulf %526, %529 : vector<8x128xf32>
    %531 = arith.addf %521, %530 : vector<8x128xf32>
    %c126_i32 = arith.constant 126 : i32
    %532 = tpu.dynamic_rotate %393 by %c126_i32 dim 1 : vector<8x128xf32>, i32 -> vector<8x128xf32>
    %c14 = arith.constant 14 : index
    %c0_311 = arith.constant 0 : index
    %c0_312 = arith.constant 0 : index
    %533 = vector.load %arg3[%c14, %c0_311, %c0_312] : memref<25x1x128xf32, #tpu.memory_space<vmem>>, vector<1x1x128xf32>
    %534 = vector.shape_cast %533 : vector<1x1x128xf32> to vector<1x128xf32>
    %535 = vector.broadcast %534 : vector<1x128xf32> to vector<8x128xf32>
    %536 = arith.mulf %532, %535 : vector<8x128xf32>
    %c14_313 = arith.constant 14 : index
    %c0_314 = arith.constant 0 : index
    %c0_315 = arith.constant 0 : index
    %537 = vector.load %arg11[%c14_313, %c0_314, %c0_315] : memref<25x8x1xf32, #tpu.memory_space<vmem>>, vector<1x8x1xf32>
    %538 = vector.shape_cast %537 : vector<1x8x1xf32> to vector<8x1xf32>
    %539 = vector.broadcast %538 : vector<8x1xf32> to vector<8x128xf32>
    %540 = arith.mulf %536, %539 : vector<8x128xf32>
    %541 = arith.addf %531, %540 : vector<8x128xf32>
    %c122_i32 = arith.constant 122 : i32
    %542 = tpu.dynamic_rotate %393 by %c122_i32 dim 1 : vector<8x128xf32>, i32 -> vector<8x128xf32>
    %c15 = arith.constant 15 : index
    %c0_316 = arith.constant 0 : index
    %c0_317 = arith.constant 0 : index
    %543 = vector.load %arg3[%c15, %c0_316, %c0_317] : memref<25x1x128xf32, #tpu.memory_space<vmem>>, vector<1x1x128xf32>
    %544 = vector.shape_cast %543 : vector<1x1x128xf32> to vector<1x128xf32>
    %545 = vector.broadcast %544 : vector<1x128xf32> to vector<8x128xf32>
    %546 = arith.mulf %542, %545 : vector<8x128xf32>
    %c15_318 = arith.constant 15 : index
    %c0_319 = arith.constant 0 : index
    %c0_320 = arith.constant 0 : index
    %547 = vector.load %arg11[%c15_318, %c0_319, %c0_320] : memref<25x8x1xf32, #tpu.memory_space<vmem>>, vector<1x8x1xf32>
    %548 = vector.shape_cast %547 : vector<1x8x1xf32> to vector<8x1xf32>
    %549 = vector.broadcast %548 : vector<8x1xf32> to vector<8x128xf32>
    %550 = arith.mulf %546, %549 : vector<8x128xf32>
    %551 = arith.addf %541, %550 : vector<8x128xf32>
    %c121_i32_321 = arith.constant 121 : i32
    %552 = tpu.dynamic_rotate %393 by %c121_i32_321 dim 1 : vector<8x128xf32>, i32 -> vector<8x128xf32>
    %c16 = arith.constant 16 : index
    %c0_322 = arith.constant 0 : index
    %c0_323 = arith.constant 0 : index
    %553 = vector.load %arg3[%c16, %c0_322, %c0_323] : memref<25x1x128xf32, #tpu.memory_space<vmem>>, vector<1x1x128xf32>
    %554 = vector.shape_cast %553 : vector<1x1x128xf32> to vector<1x128xf32>
    %555 = vector.broadcast %554 : vector<1x128xf32> to vector<8x128xf32>
    %556 = arith.mulf %552, %555 : vector<8x128xf32>
    %c16_324 = arith.constant 16 : index
    %c0_325 = arith.constant 0 : index
    %c0_326 = arith.constant 0 : index
    %557 = vector.load %arg11[%c16_324, %c0_325, %c0_326] : memref<25x8x1xf32, #tpu.memory_space<vmem>>, vector<1x8x1xf32>
    %558 = vector.shape_cast %557 : vector<1x8x1xf32> to vector<8x1xf32>
    %559 = vector.broadcast %558 : vector<8x1xf32> to vector<8x128xf32>
    %560 = arith.mulf %556, %559 : vector<8x128xf32>
    %561 = arith.addf %551, %560 : vector<8x128xf32>
    %c120_i32_327 = arith.constant 120 : i32
    %562 = tpu.dynamic_rotate %393 by %c120_i32_327 dim 1 : vector<8x128xf32>, i32 -> vector<8x128xf32>
    %c17 = arith.constant 17 : index
    %c0_328 = arith.constant 0 : index
    %c0_329 = arith.constant 0 : index
    %563 = vector.load %arg3[%c17, %c0_328, %c0_329] : memref<25x1x128xf32, #tpu.memory_space<vmem>>, vector<1x1x128xf32>
    %564 = vector.shape_cast %563 : vector<1x1x128xf32> to vector<1x128xf32>
    %565 = vector.broadcast %564 : vector<1x128xf32> to vector<8x128xf32>
    %566 = arith.mulf %562, %565 : vector<8x128xf32>
    %c17_330 = arith.constant 17 : index
    %c0_331 = arith.constant 0 : index
    %c0_332 = arith.constant 0 : index
    %567 = vector.load %arg11[%c17_330, %c0_331, %c0_332] : memref<25x8x1xf32, #tpu.memory_space<vmem>>, vector<1x8x1xf32>
    %568 = vector.shape_cast %567 : vector<1x8x1xf32> to vector<8x1xf32>
    %569 = vector.broadcast %568 : vector<8x1xf32> to vector<8x128xf32>
    %570 = arith.mulf %566, %569 : vector<8x128xf32>
    %571 = arith.addf %561, %570 : vector<8x128xf32>
    %c119_i32_333 = arith.constant 119 : i32
    %572 = tpu.dynamic_rotate %393 by %c119_i32_333 dim 1 : vector<8x128xf32>, i32 -> vector<8x128xf32>
    %c18 = arith.constant 18 : index
    %c0_334 = arith.constant 0 : index
    %c0_335 = arith.constant 0 : index
    %573 = vector.load %arg3[%c18, %c0_334, %c0_335] : memref<25x1x128xf32, #tpu.memory_space<vmem>>, vector<1x1x128xf32>
    %574 = vector.shape_cast %573 : vector<1x1x128xf32> to vector<1x128xf32>
    %575 = vector.broadcast %574 : vector<1x128xf32> to vector<8x128xf32>
    %576 = arith.mulf %572, %575 : vector<8x128xf32>
    %c18_336 = arith.constant 18 : index
    %c0_337 = arith.constant 0 : index
    %c0_338 = arith.constant 0 : index
    %577 = vector.load %arg11[%c18_336, %c0_337, %c0_338] : memref<25x8x1xf32, #tpu.memory_space<vmem>>, vector<1x8x1xf32>
    %578 = vector.shape_cast %577 : vector<1x8x1xf32> to vector<8x1xf32>
    %579 = vector.broadcast %578 : vector<8x1xf32> to vector<8x128xf32>
    %580 = arith.mulf %576, %579 : vector<8x128xf32>
    %581 = arith.addf %571, %580 : vector<8x128xf32>
    %c118_i32 = arith.constant 118 : i32
    %582 = tpu.dynamic_rotate %393 by %c118_i32 dim 1 : vector<8x128xf32>, i32 -> vector<8x128xf32>
    %c19 = arith.constant 19 : index
    %c0_339 = arith.constant 0 : index
    %c0_340 = arith.constant 0 : index
    %583 = vector.load %arg3[%c19, %c0_339, %c0_340] : memref<25x1x128xf32, #tpu.memory_space<vmem>>, vector<1x1x128xf32>
    %584 = vector.shape_cast %583 : vector<1x1x128xf32> to vector<1x128xf32>
    %585 = vector.broadcast %584 : vector<1x128xf32> to vector<8x128xf32>
    %586 = arith.mulf %582, %585 : vector<8x128xf32>
    %c19_341 = arith.constant 19 : index
    %c0_342 = arith.constant 0 : index
    %c0_343 = arith.constant 0 : index
    %587 = vector.load %arg11[%c19_341, %c0_342, %c0_343] : memref<25x8x1xf32, #tpu.memory_space<vmem>>, vector<1x8x1xf32>
    %588 = vector.shape_cast %587 : vector<1x8x1xf32> to vector<8x1xf32>
    %589 = vector.broadcast %588 : vector<8x1xf32> to vector<8x128xf32>
    %590 = arith.mulf %586, %589 : vector<8x128xf32>
    %591 = arith.addf %581, %590 : vector<8x128xf32>
    %c114_i32 = arith.constant 114 : i32
    %592 = tpu.dynamic_rotate %393 by %c114_i32 dim 1 : vector<8x128xf32>, i32 -> vector<8x128xf32>
    %c20 = arith.constant 20 : index
    %c0_344 = arith.constant 0 : index
    %c0_345 = arith.constant 0 : index
    %593 = vector.load %arg3[%c20, %c0_344, %c0_345] : memref<25x1x128xf32, #tpu.memory_space<vmem>>, vector<1x1x128xf32>
    %594 = vector.shape_cast %593 : vector<1x1x128xf32> to vector<1x128xf32>
    %595 = vector.broadcast %594 : vector<1x128xf32> to vector<8x128xf32>
    %596 = arith.mulf %592, %595 : vector<8x128xf32>
    %c20_346 = arith.constant 20 : index
    %c0_347 = arith.constant 0 : index
    %c0_348 = arith.constant 0 : index
    %597 = vector.load %arg11[%c20_346, %c0_347, %c0_348] : memref<25x8x1xf32, #tpu.memory_space<vmem>>, vector<1x8x1xf32>
    %598 = vector.shape_cast %597 : vector<1x8x1xf32> to vector<8x1xf32>
    %599 = vector.broadcast %598 : vector<8x1xf32> to vector<8x128xf32>
    %600 = arith.mulf %596, %599 : vector<8x128xf32>
    %601 = arith.addf %591, %600 : vector<8x128xf32>
    %c113_i32 = arith.constant 113 : i32
    %602 = tpu.dynamic_rotate %393 by %c113_i32 dim 1 : vector<8x128xf32>, i32 -> vector<8x128xf32>
    %c21 = arith.constant 21 : index
    %c0_349 = arith.constant 0 : index
    %c0_350 = arith.constant 0 : index
    %603 = vector.load %arg3[%c21, %c0_349, %c0_350] : memref<25x1x128xf32, #tpu.memory_space<vmem>>, vector<1x1x128xf32>
    %604 = vector.shape_cast %603 : vector<1x1x128xf32> to vector<1x128xf32>
    %605 = vector.broadcast %604 : vector<1x128xf32> to vector<8x128xf32>
    %606 = arith.mulf %602, %605 : vector<8x128xf32>
    %c21_351 = arith.constant 21 : index
    %c0_352 = arith.constant 0 : index
    %c0_353 = arith.constant 0 : index
    %607 = vector.load %arg11[%c21_351, %c0_352, %c0_353] : memref<25x8x1xf32, #tpu.memory_space<vmem>>, vector<1x8x1xf32>
    %608 = vector.shape_cast %607 : vector<1x8x1xf32> to vector<8x1xf32>
    %609 = vector.broadcast %608 : vector<8x1xf32> to vector<8x128xf32>
    %610 = arith.mulf %606, %609 : vector<8x128xf32>
    %611 = arith.addf %601, %610 : vector<8x128xf32>
    %c112_i32 = arith.constant 112 : i32
    %612 = tpu.dynamic_rotate %393 by %c112_i32 dim 1 : vector<8x128xf32>, i32 -> vector<8x128xf32>
    %c22 = arith.constant 22 : index
    %c0_354 = arith.constant 0 : index
    %c0_355 = arith.constant 0 : index
    %613 = vector.load %arg3[%c22, %c0_354, %c0_355] : memref<25x1x128xf32, #tpu.memory_space<vmem>>, vector<1x1x128xf32>
    %614 = vector.shape_cast %613 : vector<1x1x128xf32> to vector<1x128xf32>
    %615 = vector.broadcast %614 : vector<1x128xf32> to vector<8x128xf32>
    %616 = arith.mulf %612, %615 : vector<8x128xf32>
    %c22_356 = arith.constant 22 : index
    %c0_357 = arith.constant 0 : index
    %c0_358 = arith.constant 0 : index
    %617 = vector.load %arg11[%c22_356, %c0_357, %c0_358] : memref<25x8x1xf32, #tpu.memory_space<vmem>>, vector<1x8x1xf32>
    %618 = vector.shape_cast %617 : vector<1x8x1xf32> to vector<8x1xf32>
    %619 = vector.broadcast %618 : vector<8x1xf32> to vector<8x128xf32>
    %620 = arith.mulf %616, %619 : vector<8x128xf32>
    %621 = arith.addf %611, %620 : vector<8x128xf32>
    %c111_i32 = arith.constant 111 : i32
    %622 = tpu.dynamic_rotate %393 by %c111_i32 dim 1 : vector<8x128xf32>, i32 -> vector<8x128xf32>
    %c23 = arith.constant 23 : index
    %c0_359 = arith.constant 0 : index
    %c0_360 = arith.constant 0 : index
    %623 = vector.load %arg3[%c23, %c0_359, %c0_360] : memref<25x1x128xf32, #tpu.memory_space<vmem>>, vector<1x1x128xf32>
    %624 = vector.shape_cast %623 : vector<1x1x128xf32> to vector<1x128xf32>
    %625 = vector.broadcast %624 : vector<1x128xf32> to vector<8x128xf32>
    %626 = arith.mulf %622, %625 : vector<8x128xf32>
    %c23_361 = arith.constant 23 : index
    %c0_362 = arith.constant 0 : index
    %c0_363 = arith.constant 0 : index
    %627 = vector.load %arg11[%c23_361, %c0_362, %c0_363] : memref<25x8x1xf32, #tpu.memory_space<vmem>>, vector<1x8x1xf32>
    %628 = vector.shape_cast %627 : vector<1x8x1xf32> to vector<8x1xf32>
    %629 = vector.broadcast %628 : vector<8x1xf32> to vector<8x128xf32>
    %630 = arith.mulf %626, %629 : vector<8x128xf32>
    %631 = arith.addf %621, %630 : vector<8x128xf32>
    %c110_i32 = arith.constant 110 : i32
    %632 = tpu.dynamic_rotate %393 by %c110_i32 dim 1 : vector<8x128xf32>, i32 -> vector<8x128xf32>
    %c24 = arith.constant 24 : index
    %c0_364 = arith.constant 0 : index
    %c0_365 = arith.constant 0 : index
    %633 = vector.load %arg3[%c24, %c0_364, %c0_365] : memref<25x1x128xf32, #tpu.memory_space<vmem>>, vector<1x1x128xf32>
    %634 = vector.shape_cast %633 : vector<1x1x128xf32> to vector<1x128xf32>
    %635 = vector.broadcast %634 : vector<1x128xf32> to vector<8x128xf32>
    %636 = arith.mulf %632, %635 : vector<8x128xf32>
    %c24_366 = arith.constant 24 : index
    %c0_367 = arith.constant 0 : index
    %c0_368 = arith.constant 0 : index
    %637 = vector.load %arg11[%c24_366, %c0_367, %c0_368] : memref<25x8x1xf32, #tpu.memory_space<vmem>>, vector<1x8x1xf32>
    %638 = vector.shape_cast %637 : vector<1x8x1xf32> to vector<8x1xf32>
    %639 = vector.broadcast %638 : vector<8x1xf32> to vector<8x128xf32>
    %640 = arith.mulf %636, %639 : vector<8x128xf32>
    %641 = arith.addf %631, %640 : vector<8x128xf32>
    %c0_369 = arith.constant 0 : index
    %c0_370 = arith.constant 0 : index
    %642 = vector.load %arg12[%c0_369, %c0_370] : memref<8x8xf32, #tpu.memory_space<vmem>>, vector<8x8xf32>
    %cst_371 = arith.constant dense<0.000000e+00> : vector<8x128xf32>
    %643 = tpu.matmul %642, %641, %cst_371 {dimension_numbers = #tpu.dot_dimension_numbers<[1], [0], [0], [1], [0, 0, 1, 1], [], []>} : vector<8x8xf32>, vector<8x128xf32>, vector<8x128xf32> -> vector<8x128xf32>
    %cst_372 = arith.constant dense<0.000000e+00> : vector<8xf32>
    %644 = vector.multi_reduction <add>, %643, %cst_372 [1] : vector<8x128xf32> to vector<8xf32>
    %645 = vector.shape_cast %644 : vector<8xf32> to vector<8x1xf32>
    %cst_373 = arith.constant 1.280000e+02 : f32
    %646 = vector.broadcast %cst_373 : f32 to vector<8x1xf32>
    %647 = arith.divf %645, %646 : vector<8x1xf32>
    %648 = vector.broadcast %647 : vector<8x1xf32> to vector<8x128xf32>
    %649 = arith.subf %643, %648 : vector<8x128xf32>
    %650 = arith.mulf %649, %649 : vector<8x128xf32>
    %cst_374 = arith.constant dense<0.000000e+00> : vector<8xf32>
    %651 = vector.multi_reduction <add>, %650, %cst_374 [1] : vector<8x128xf32> to vector<8xf32>
    %652 = vector.shape_cast %651 : vector<8xf32> to vector<8x1xf32>
    %cst_375 = arith.constant 1.280000e+02 : f32
    %653 = vector.broadcast %cst_375 : f32 to vector<8x1xf32>
    %654 = arith.divf %652, %653 : vector<8x1xf32>
    %cst_376 = arith.constant 9.99999974E-6 : f32
    %655 = vector.broadcast %cst_376 : f32 to vector<8x1xf32>
    %656 = arith.addf %654, %655 : vector<8x1xf32>
    %657 = math.rsqrt %656 : vector<8x1xf32>
    %658 = vector.broadcast %657 : vector<8x1xf32> to vector<8x128xf32>
    %659 = arith.mulf %649, %658 : vector<8x128xf32>
    %cst_377 = arith.constant 0.000000e+00 : f32
    %660 = vector.broadcast %cst_377 : f32 to vector<8x128xf32>
    %661 = arith.maximumf %659, %660 : vector<8x128xf32>
    %c18_i32_378 = arith.constant 18 : i32
    %662 = tpu.dynamic_rotate %661 by %c18_i32_378 dim 1 : vector<8x128xf32>, i32 -> vector<8x128xf32>
    %c0_379 = arith.constant 0 : index
    %c0_380 = arith.constant 0 : index
    %c0_381 = arith.constant 0 : index
    %663 = vector.load %arg3[%c0_379, %c0_380, %c0_381] : memref<25x1x128xf32, #tpu.memory_space<vmem>>, vector<1x1x128xf32>
    %664 = vector.shape_cast %663 : vector<1x1x128xf32> to vector<1x128xf32>
    %665 = vector.broadcast %664 : vector<1x128xf32> to vector<8x128xf32>
    %666 = arith.mulf %662, %665 : vector<8x128xf32>
    %c0_382 = arith.constant 0 : index
    %c0_383 = arith.constant 0 : index
    %c0_384 = arith.constant 0 : index
    %667 = vector.load %arg13[%c0_382, %c0_383, %c0_384] : memref<25x8x1xf32, #tpu.memory_space<vmem>>, vector<1x8x1xf32>
    %668 = vector.shape_cast %667 : vector<1x8x1xf32> to vector<8x1xf32>
    %669 = vector.broadcast %668 : vector<8x1xf32> to vector<8x128xf32>
    %670 = arith.mulf %666, %669 : vector<8x128xf32>
    %c17_i32_385 = arith.constant 17 : i32
    %671 = tpu.dynamic_rotate %661 by %c17_i32_385 dim 1 : vector<8x128xf32>, i32 -> vector<8x128xf32>
    %c1_386 = arith.constant 1 : index
    %c0_387 = arith.constant 0 : index
    %c0_388 = arith.constant 0 : index
    %672 = vector.load %arg3[%c1_386, %c0_387, %c0_388] : memref<25x1x128xf32, #tpu.memory_space<vmem>>, vector<1x1x128xf32>
    %673 = vector.shape_cast %672 : vector<1x1x128xf32> to vector<1x128xf32>
    %674 = vector.broadcast %673 : vector<1x128xf32> to vector<8x128xf32>
    %675 = arith.mulf %671, %674 : vector<8x128xf32>
    %c1_389 = arith.constant 1 : index
    %c0_390 = arith.constant 0 : index
    %c0_391 = arith.constant 0 : index
    %676 = vector.load %arg13[%c1_389, %c0_390, %c0_391] : memref<25x8x1xf32, #tpu.memory_space<vmem>>, vector<1x8x1xf32>
    %677 = vector.shape_cast %676 : vector<1x8x1xf32> to vector<8x1xf32>
    %678 = vector.broadcast %677 : vector<8x1xf32> to vector<8x128xf32>
    %679 = arith.mulf %675, %678 : vector<8x128xf32>
    %680 = arith.addf %670, %679 : vector<8x128xf32>
    %c16_i32_392 = arith.constant 16 : i32
    %681 = tpu.dynamic_rotate %661 by %c16_i32_392 dim 1 : vector<8x128xf32>, i32 -> vector<8x128xf32>
    %c2_393 = arith.constant 2 : index
    %c0_394 = arith.constant 0 : index
    %c0_395 = arith.constant 0 : index
    %682 = vector.load %arg3[%c2_393, %c0_394, %c0_395] : memref<25x1x128xf32, #tpu.memory_space<vmem>>, vector<1x1x128xf32>
    %683 = vector.shape_cast %682 : vector<1x1x128xf32> to vector<1x128xf32>
    %684 = vector.broadcast %683 : vector<1x128xf32> to vector<8x128xf32>
    %685 = arith.mulf %681, %684 : vector<8x128xf32>
    %c2_396 = arith.constant 2 : index
    %c0_397 = arith.constant 0 : index
    %c0_398 = arith.constant 0 : index
    %686 = vector.load %arg13[%c2_396, %c0_397, %c0_398] : memref<25x8x1xf32, #tpu.memory_space<vmem>>, vector<1x8x1xf32>
    %687 = vector.shape_cast %686 : vector<1x8x1xf32> to vector<8x1xf32>
    %688 = vector.broadcast %687 : vector<8x1xf32> to vector<8x128xf32>
    %689 = arith.mulf %685, %688 : vector<8x128xf32>
    %690 = arith.addf %680, %689 : vector<8x128xf32>
    %c15_i32_399 = arith.constant 15 : i32
    %691 = tpu.dynamic_rotate %661 by %c15_i32_399 dim 1 : vector<8x128xf32>, i32 -> vector<8x128xf32>
    %c3_400 = arith.constant 3 : index
    %c0_401 = arith.constant 0 : index
    %c0_402 = arith.constant 0 : index
    %692 = vector.load %arg3[%c3_400, %c0_401, %c0_402] : memref<25x1x128xf32, #tpu.memory_space<vmem>>, vector<1x1x128xf32>
    %693 = vector.shape_cast %692 : vector<1x1x128xf32> to vector<1x128xf32>
    %694 = vector.broadcast %693 : vector<1x128xf32> to vector<8x128xf32>
    %695 = arith.mulf %691, %694 : vector<8x128xf32>
    %c3_403 = arith.constant 3 : index
    %c0_404 = arith.constant 0 : index
    %c0_405 = arith.constant 0 : index
    %696 = vector.load %arg13[%c3_403, %c0_404, %c0_405] : memref<25x8x1xf32, #tpu.memory_space<vmem>>, vector<1x8x1xf32>
    %697 = vector.shape_cast %696 : vector<1x8x1xf32> to vector<8x1xf32>
    %698 = vector.broadcast %697 : vector<8x1xf32> to vector<8x128xf32>
    %699 = arith.mulf %695, %698 : vector<8x128xf32>
    %700 = arith.addf %690, %699 : vector<8x128xf32>
    %c14_i32_406 = arith.constant 14 : i32
    %701 = tpu.dynamic_rotate %661 by %c14_i32_406 dim 1 : vector<8x128xf32>, i32 -> vector<8x128xf32>
    %c4_407 = arith.constant 4 : index
    %c0_408 = arith.constant 0 : index
    %c0_409 = arith.constant 0 : index
    %702 = vector.load %arg3[%c4_407, %c0_408, %c0_409] : memref<25x1x128xf32, #tpu.memory_space<vmem>>, vector<1x1x128xf32>
    %703 = vector.shape_cast %702 : vector<1x1x128xf32> to vector<1x128xf32>
    %704 = vector.broadcast %703 : vector<1x128xf32> to vector<8x128xf32>
    %705 = arith.mulf %701, %704 : vector<8x128xf32>
    %c4_410 = arith.constant 4 : index
    %c0_411 = arith.constant 0 : index
    %c0_412 = arith.constant 0 : index
    %706 = vector.load %arg13[%c4_410, %c0_411, %c0_412] : memref<25x8x1xf32, #tpu.memory_space<vmem>>, vector<1x8x1xf32>
    %707 = vector.shape_cast %706 : vector<1x8x1xf32> to vector<8x1xf32>
    %708 = vector.broadcast %707 : vector<8x1xf32> to vector<8x128xf32>
    %709 = arith.mulf %705, %708 : vector<8x128xf32>
    %710 = arith.addf %700, %709 : vector<8x128xf32>
    %c10_i32_413 = arith.constant 10 : i32
    %711 = tpu.dynamic_rotate %661 by %c10_i32_413 dim 1 : vector<8x128xf32>, i32 -> vector<8x128xf32>
    %c5_414 = arith.constant 5 : index
    %c0_415 = arith.constant 0 : index
    %c0_416 = arith.constant 0 : index
    %712 = vector.load %arg3[%c5_414, %c0_415, %c0_416] : memref<25x1x128xf32, #tpu.memory_space<vmem>>, vector<1x1x128xf32>
    %713 = vector.shape_cast %712 : vector<1x1x128xf32> to vector<1x128xf32>
    %714 = vector.broadcast %713 : vector<1x128xf32> to vector<8x128xf32>
    %715 = arith.mulf %711, %714 : vector<8x128xf32>
    %c5_417 = arith.constant 5 : index
    %c0_418 = arith.constant 0 : index
    %c0_419 = arith.constant 0 : index
    %716 = vector.load %arg13[%c5_417, %c0_418, %c0_419] : memref<25x8x1xf32, #tpu.memory_space<vmem>>, vector<1x8x1xf32>
    %717 = vector.shape_cast %716 : vector<1x8x1xf32> to vector<8x1xf32>
    %718 = vector.broadcast %717 : vector<8x1xf32> to vector<8x128xf32>
    %719 = arith.mulf %715, %718 : vector<8x128xf32>
    %720 = arith.addf %710, %719 : vector<8x128xf32>
    %c9_i32_420 = arith.constant 9 : i32
    %721 = tpu.dynamic_rotate %661 by %c9_i32_420 dim 1 : vector<8x128xf32>, i32 -> vector<8x128xf32>
    %c6_421 = arith.constant 6 : index
    %c0_422 = arith.constant 0 : index
    %c0_423 = arith.constant 0 : index
    %722 = vector.load %arg3[%c6_421, %c0_422, %c0_423] : memref<25x1x128xf32, #tpu.memory_space<vmem>>, vector<1x1x128xf32>
    %723 = vector.shape_cast %722 : vector<1x1x128xf32> to vector<1x128xf32>
    %724 = vector.broadcast %723 : vector<1x128xf32> to vector<8x128xf32>
    %725 = arith.mulf %721, %724 : vector<8x128xf32>
    %c6_424 = arith.constant 6 : index
    %c0_425 = arith.constant 0 : index
    %c0_426 = arith.constant 0 : index
    %726 = vector.load %arg13[%c6_424, %c0_425, %c0_426] : memref<25x8x1xf32, #tpu.memory_space<vmem>>, vector<1x8x1xf32>
    %727 = vector.shape_cast %726 : vector<1x8x1xf32> to vector<8x1xf32>
    %728 = vector.broadcast %727 : vector<8x1xf32> to vector<8x128xf32>
    %729 = arith.mulf %725, %728 : vector<8x128xf32>
    %730 = arith.addf %720, %729 : vector<8x128xf32>
    %c8_i32_427 = arith.constant 8 : i32
    %731 = tpu.dynamic_rotate %661 by %c8_i32_427 dim 1 : vector<8x128xf32>, i32 -> vector<8x128xf32>
    %c7_428 = arith.constant 7 : index
    %c0_429 = arith.constant 0 : index
    %c0_430 = arith.constant 0 : index
    %732 = vector.load %arg3[%c7_428, %c0_429, %c0_430] : memref<25x1x128xf32, #tpu.memory_space<vmem>>, vector<1x1x128xf32>
    %733 = vector.shape_cast %732 : vector<1x1x128xf32> to vector<1x128xf32>
    %734 = vector.broadcast %733 : vector<1x128xf32> to vector<8x128xf32>
    %735 = arith.mulf %731, %734 : vector<8x128xf32>
    %c7_431 = arith.constant 7 : index
    %c0_432 = arith.constant 0 : index
    %c0_433 = arith.constant 0 : index
    %736 = vector.load %arg13[%c7_431, %c0_432, %c0_433] : memref<25x8x1xf32, #tpu.memory_space<vmem>>, vector<1x8x1xf32>
    %737 = vector.shape_cast %736 : vector<1x8x1xf32> to vector<8x1xf32>
    %738 = vector.broadcast %737 : vector<8x1xf32> to vector<8x128xf32>
    %739 = arith.mulf %735, %738 : vector<8x128xf32>
    %740 = arith.addf %730, %739 : vector<8x128xf32>
    %c7_i32_434 = arith.constant 7 : i32
    %741 = tpu.dynamic_rotate %661 by %c7_i32_434 dim 1 : vector<8x128xf32>, i32 -> vector<8x128xf32>
    %c8_435 = arith.constant 8 : index
    %c0_436 = arith.constant 0 : index
    %c0_437 = arith.constant 0 : index
    %742 = vector.load %arg3[%c8_435, %c0_436, %c0_437] : memref<25x1x128xf32, #tpu.memory_space<vmem>>, vector<1x1x128xf32>
    %743 = vector.shape_cast %742 : vector<1x1x128xf32> to vector<1x128xf32>
    %744 = vector.broadcast %743 : vector<1x128xf32> to vector<8x128xf32>
    %745 = arith.mulf %741, %744 : vector<8x128xf32>
    %c8_438 = arith.constant 8 : index
    %c0_439 = arith.constant 0 : index
    %c0_440 = arith.constant 0 : index
    %746 = vector.load %arg13[%c8_438, %c0_439, %c0_440] : memref<25x8x1xf32, #tpu.memory_space<vmem>>, vector<1x8x1xf32>
    %747 = vector.shape_cast %746 : vector<1x8x1xf32> to vector<8x1xf32>
    %748 = vector.broadcast %747 : vector<8x1xf32> to vector<8x128xf32>
    %749 = arith.mulf %745, %748 : vector<8x128xf32>
    %750 = arith.addf %740, %749 : vector<8x128xf32>
    %c6_i32_441 = arith.constant 6 : i32
    %751 = tpu.dynamic_rotate %661 by %c6_i32_441 dim 1 : vector<8x128xf32>, i32 -> vector<8x128xf32>
    %c9_442 = arith.constant 9 : index
    %c0_443 = arith.constant 0 : index
    %c0_444 = arith.constant 0 : index
    %752 = vector.load %arg3[%c9_442, %c0_443, %c0_444] : memref<25x1x128xf32, #tpu.memory_space<vmem>>, vector<1x1x128xf32>
    %753 = vector.shape_cast %752 : vector<1x1x128xf32> to vector<1x128xf32>
    %754 = vector.broadcast %753 : vector<1x128xf32> to vector<8x128xf32>
    %755 = arith.mulf %751, %754 : vector<8x128xf32>
    %c9_445 = arith.constant 9 : index
    %c0_446 = arith.constant 0 : index
    %c0_447 = arith.constant 0 : index
    %756 = vector.load %arg13[%c9_445, %c0_446, %c0_447] : memref<25x8x1xf32, #tpu.memory_space<vmem>>, vector<1x8x1xf32>
    %757 = vector.shape_cast %756 : vector<1x8x1xf32> to vector<8x1xf32>
    %758 = vector.broadcast %757 : vector<8x1xf32> to vector<8x128xf32>
    %759 = arith.mulf %755, %758 : vector<8x128xf32>
    %760 = arith.addf %750, %759 : vector<8x128xf32>
    %c2_i32_448 = arith.constant 2 : i32
    %761 = tpu.dynamic_rotate %661 by %c2_i32_448 dim 1 : vector<8x128xf32>, i32 -> vector<8x128xf32>
    %c10_449 = arith.constant 10 : index
    %c0_450 = arith.constant 0 : index
    %c0_451 = arith.constant 0 : index
    %762 = vector.load %arg3[%c10_449, %c0_450, %c0_451] : memref<25x1x128xf32, #tpu.memory_space<vmem>>, vector<1x1x128xf32>
    %763 = vector.shape_cast %762 : vector<1x1x128xf32> to vector<1x128xf32>
    %764 = vector.broadcast %763 : vector<1x128xf32> to vector<8x128xf32>
    %765 = arith.mulf %761, %764 : vector<8x128xf32>
    %c10_452 = arith.constant 10 : index
    %c0_453 = arith.constant 0 : index
    %c0_454 = arith.constant 0 : index
    %766 = vector.load %arg13[%c10_452, %c0_453, %c0_454] : memref<25x8x1xf32, #tpu.memory_space<vmem>>, vector<1x8x1xf32>
    %767 = vector.shape_cast %766 : vector<1x8x1xf32> to vector<8x1xf32>
    %768 = vector.broadcast %767 : vector<8x1xf32> to vector<8x128xf32>
    %769 = arith.mulf %765, %768 : vector<8x128xf32>
    %770 = arith.addf %760, %769 : vector<8x128xf32>
    %c1_i32_455 = arith.constant 1 : i32
    %771 = tpu.dynamic_rotate %661 by %c1_i32_455 dim 1 : vector<8x128xf32>, i32 -> vector<8x128xf32>
    %c11_456 = arith.constant 11 : index
    %c0_457 = arith.constant 0 : index
    %c0_458 = arith.constant 0 : index
    %772 = vector.load %arg3[%c11_456, %c0_457, %c0_458] : memref<25x1x128xf32, #tpu.memory_space<vmem>>, vector<1x1x128xf32>
    %773 = vector.shape_cast %772 : vector<1x1x128xf32> to vector<1x128xf32>
    %774 = vector.broadcast %773 : vector<1x128xf32> to vector<8x128xf32>
    %775 = arith.mulf %771, %774 : vector<8x128xf32>
    %c11_459 = arith.constant 11 : index
    %c0_460 = arith.constant 0 : index
    %c0_461 = arith.constant 0 : index
    %776 = vector.load %arg13[%c11_459, %c0_460, %c0_461] : memref<25x8x1xf32, #tpu.memory_space<vmem>>, vector<1x8x1xf32>
    %777 = vector.shape_cast %776 : vector<1x8x1xf32> to vector<8x1xf32>
    %778 = vector.broadcast %777 : vector<8x1xf32> to vector<8x128xf32>
    %779 = arith.mulf %775, %778 : vector<8x128xf32>
    %780 = arith.addf %770, %779 : vector<8x128xf32>
    %c12_462 = arith.constant 12 : index
    %c0_463 = arith.constant 0 : index
    %c0_464 = arith.constant 0 : index
    %781 = vector.load %arg3[%c12_462, %c0_463, %c0_464] : memref<25x1x128xf32, #tpu.memory_space<vmem>>, vector<1x1x128xf32>
    %782 = vector.shape_cast %781 : vector<1x1x128xf32> to vector<1x128xf32>
    %783 = vector.broadcast %782 : vector<1x128xf32> to vector<8x128xf32>
    %784 = arith.mulf %661, %783 : vector<8x128xf32>
    %c12_465 = arith.constant 12 : index
    %c0_466 = arith.constant 0 : index
    %c0_467 = arith.constant 0 : index
    %785 = vector.load %arg13[%c12_465, %c0_466, %c0_467] : memref<25x8x1xf32, #tpu.memory_space<vmem>>, vector<1x8x1xf32>
    %786 = vector.shape_cast %785 : vector<1x8x1xf32> to vector<8x1xf32>
    %787 = vector.broadcast %786 : vector<8x1xf32> to vector<8x128xf32>
    %788 = arith.mulf %784, %787 : vector<8x128xf32>
    %789 = arith.addf %780, %788 : vector<8x128xf32>
    %c127_i32_468 = arith.constant 127 : i32
    %790 = tpu.dynamic_rotate %661 by %c127_i32_468 dim 1 : vector<8x128xf32>, i32 -> vector<8x128xf32>
    %c13_469 = arith.constant 13 : index
    %c0_470 = arith.constant 0 : index
    %c0_471 = arith.constant 0 : index
    %791 = vector.load %arg3[%c13_469, %c0_470, %c0_471] : memref<25x1x128xf32, #tpu.memory_space<vmem>>, vector<1x1x128xf32>
    %792 = vector.shape_cast %791 : vector<1x1x128xf32> to vector<1x128xf32>
    %793 = vector.broadcast %792 : vector<1x128xf32> to vector<8x128xf32>
    %794 = arith.mulf %790, %793 : vector<8x128xf32>
    %c13_472 = arith.constant 13 : index
    %c0_473 = arith.constant 0 : index
    %c0_474 = arith.constant 0 : index
    %795 = vector.load %arg13[%c13_472, %c0_473, %c0_474] : memref<25x8x1xf32, #tpu.memory_space<vmem>>, vector<1x8x1xf32>
    %796 = vector.shape_cast %795 : vector<1x8x1xf32> to vector<8x1xf32>
    %797 = vector.broadcast %796 : vector<8x1xf32> to vector<8x128xf32>
    %798 = arith.mulf %794, %797 : vector<8x128xf32>
    %799 = arith.addf %789, %798 : vector<8x128xf32>
    %c126_i32_475 = arith.constant 126 : i32
    %800 = tpu.dynamic_rotate %661 by %c126_i32_475 dim 1 : vector<8x128xf32>, i32 -> vector<8x128xf32>
    %c14_476 = arith.constant 14 : index
    %c0_477 = arith.constant 0 : index
    %c0_478 = arith.constant 0 : index
    %801 = vector.load %arg3[%c14_476, %c0_477, %c0_478] : memref<25x1x128xf32, #tpu.memory_space<vmem>>, vector<1x1x128xf32>
    %802 = vector.shape_cast %801 : vector<1x1x128xf32> to vector<1x128xf32>
    %803 = vector.broadcast %802 : vector<1x128xf32> to vector<8x128xf32>
    %804 = arith.mulf %800, %803 : vector<8x128xf32>
    %c14_479 = arith.constant 14 : index
    %c0_480 = arith.constant 0 : index
    %c0_481 = arith.constant 0 : index
    %805 = vector.load %arg13[%c14_479, %c0_480, %c0_481] : memref<25x8x1xf32, #tpu.memory_space<vmem>>, vector<1x8x1xf32>
    %806 = vector.shape_cast %805 : vector<1x8x1xf32> to vector<8x1xf32>
    %807 = vector.broadcast %806 : vector<8x1xf32> to vector<8x128xf32>
    %808 = arith.mulf %804, %807 : vector<8x128xf32>
    %809 = arith.addf %799, %808 : vector<8x128xf32>
    %c122_i32_482 = arith.constant 122 : i32
    %810 = tpu.dynamic_rotate %661 by %c122_i32_482 dim 1 : vector<8x128xf32>, i32 -> vector<8x128xf32>
    %c15_483 = arith.constant 15 : index
    %c0_484 = arith.constant 0 : index
    %c0_485 = arith.constant 0 : index
    %811 = vector.load %arg3[%c15_483, %c0_484, %c0_485] : memref<25x1x128xf32, #tpu.memory_space<vmem>>, vector<1x1x128xf32>
    %812 = vector.shape_cast %811 : vector<1x1x128xf32> to vector<1x128xf32>
    %813 = vector.broadcast %812 : vector<1x128xf32> to vector<8x128xf32>
    %814 = arith.mulf %810, %813 : vector<8x128xf32>
    %c15_486 = arith.constant 15 : index
    %c0_487 = arith.constant 0 : index
    %c0_488 = arith.constant 0 : index
    %815 = vector.load %arg13[%c15_486, %c0_487, %c0_488] : memref<25x8x1xf32, #tpu.memory_space<vmem>>, vector<1x8x1xf32>
    %816 = vector.shape_cast %815 : vector<1x8x1xf32> to vector<8x1xf32>
    %817 = vector.broadcast %816 : vector<8x1xf32> to vector<8x128xf32>
    %818 = arith.mulf %814, %817 : vector<8x128xf32>
    %819 = arith.addf %809, %818 : vector<8x128xf32>
    %c121_i32_489 = arith.constant 121 : i32
    %820 = tpu.dynamic_rotate %661 by %c121_i32_489 dim 1 : vector<8x128xf32>, i32 -> vector<8x128xf32>
    %c16_490 = arith.constant 16 : index
    %c0_491 = arith.constant 0 : index
    %c0_492 = arith.constant 0 : index
    %821 = vector.load %arg3[%c16_490, %c0_491, %c0_492] : memref<25x1x128xf32, #tpu.memory_space<vmem>>, vector<1x1x128xf32>
    %822 = vector.shape_cast %821 : vector<1x1x128xf32> to vector<1x128xf32>
    %823 = vector.broadcast %822 : vector<1x128xf32> to vector<8x128xf32>
    %824 = arith.mulf %820, %823 : vector<8x128xf32>
    %c16_493 = arith.constant 16 : index
    %c0_494 = arith.constant 0 : index
    %c0_495 = arith.constant 0 : index
    %825 = vector.load %arg13[%c16_493, %c0_494, %c0_495] : memref<25x8x1xf32, #tpu.memory_space<vmem>>, vector<1x8x1xf32>
    %826 = vector.shape_cast %825 : vector<1x8x1xf32> to vector<8x1xf32>
    %827 = vector.broadcast %826 : vector<8x1xf32> to vector<8x128xf32>
    %828 = arith.mulf %824, %827 : vector<8x128xf32>
    %829 = arith.addf %819, %828 : vector<8x128xf32>
    %c120_i32_496 = arith.constant 120 : i32
    %830 = tpu.dynamic_rotate %661 by %c120_i32_496 dim 1 : vector<8x128xf32>, i32 -> vector<8x128xf32>
    %c17_497 = arith.constant 17 : index
    %c0_498 = arith.constant 0 : index
    %c0_499 = arith.constant 0 : index
    %831 = vector.load %arg3[%c17_497, %c0_498, %c0_499] : memref<25x1x128xf32, #tpu.memory_space<vmem>>, vector<1x1x128xf32>
    %832 = vector.shape_cast %831 : vector<1x1x128xf32> to vector<1x128xf32>
    %833 = vector.broadcast %832 : vector<1x128xf32> to vector<8x128xf32>
    %834 = arith.mulf %830, %833 : vector<8x128xf32>
    %c17_500 = arith.constant 17 : index
    %c0_501 = arith.constant 0 : index
    %c0_502 = arith.constant 0 : index
    %835 = vector.load %arg13[%c17_500, %c0_501, %c0_502] : memref<25x8x1xf32, #tpu.memory_space<vmem>>, vector<1x8x1xf32>
    %836 = vector.shape_cast %835 : vector<1x8x1xf32> to vector<8x1xf32>
    %837 = vector.broadcast %836 : vector<8x1xf32> to vector<8x128xf32>
    %838 = arith.mulf %834, %837 : vector<8x128xf32>
    %839 = arith.addf %829, %838 : vector<8x128xf32>
    %c119_i32_503 = arith.constant 119 : i32
    %840 = tpu.dynamic_rotate %661 by %c119_i32_503 dim 1 : vector<8x128xf32>, i32 -> vector<8x128xf32>
    %c18_504 = arith.constant 18 : index
    %c0_505 = arith.constant 0 : index
    %c0_506 = arith.constant 0 : index
    %841 = vector.load %arg3[%c18_504, %c0_505, %c0_506] : memref<25x1x128xf32, #tpu.memory_space<vmem>>, vector<1x1x128xf32>
    %842 = vector.shape_cast %841 : vector<1x1x128xf32> to vector<1x128xf32>
    %843 = vector.broadcast %842 : vector<1x128xf32> to vector<8x128xf32>
    %844 = arith.mulf %840, %843 : vector<8x128xf32>
    %c18_507 = arith.constant 18 : index
    %c0_508 = arith.constant 0 : index
    %c0_509 = arith.constant 0 : index
    %845 = vector.load %arg13[%c18_507, %c0_508, %c0_509] : memref<25x8x1xf32, #tpu.memory_space<vmem>>, vector<1x8x1xf32>
    %846 = vector.shape_cast %845 : vector<1x8x1xf32> to vector<8x1xf32>
    %847 = vector.broadcast %846 : vector<8x1xf32> to vector<8x128xf32>
    %848 = arith.mulf %844, %847 : vector<8x128xf32>
    %849 = arith.addf %839, %848 : vector<8x128xf32>
    %c118_i32_510 = arith.constant 118 : i32
    %850 = tpu.dynamic_rotate %661 by %c118_i32_510 dim 1 : vector<8x128xf32>, i32 -> vector<8x128xf32>
    %c19_511 = arith.constant 19 : index
    %c0_512 = arith.constant 0 : index
    %c0_513 = arith.constant 0 : index
    %851 = vector.load %arg3[%c19_511, %c0_512, %c0_513] : memref<25x1x128xf32, #tpu.memory_space<vmem>>, vector<1x1x128xf32>
    %852 = vector.shape_cast %851 : vector<1x1x128xf32> to vector<1x128xf32>
    %853 = vector.broadcast %852 : vector<1x128xf32> to vector<8x128xf32>
    %854 = arith.mulf %850, %853 : vector<8x128xf32>
    %c19_514 = arith.constant 19 : index
    %c0_515 = arith.constant 0 : index
    %c0_516 = arith.constant 0 : index
    %855 = vector.load %arg13[%c19_514, %c0_515, %c0_516] : memref<25x8x1xf32, #tpu.memory_space<vmem>>, vector<1x8x1xf32>
    %856 = vector.shape_cast %855 : vector<1x8x1xf32> to vector<8x1xf32>
    %857 = vector.broadcast %856 : vector<8x1xf32> to vector<8x128xf32>
    %858 = arith.mulf %854, %857 : vector<8x128xf32>
    %859 = arith.addf %849, %858 : vector<8x128xf32>
    %c114_i32_517 = arith.constant 114 : i32
    %860 = tpu.dynamic_rotate %661 by %c114_i32_517 dim 1 : vector<8x128xf32>, i32 -> vector<8x128xf32>
    %c20_518 = arith.constant 20 : index
    %c0_519 = arith.constant 0 : index
    %c0_520 = arith.constant 0 : index
    %861 = vector.load %arg3[%c20_518, %c0_519, %c0_520] : memref<25x1x128xf32, #tpu.memory_space<vmem>>, vector<1x1x128xf32>
    %862 = vector.shape_cast %861 : vector<1x1x128xf32> to vector<1x128xf32>
    %863 = vector.broadcast %862 : vector<1x128xf32> to vector<8x128xf32>
    %864 = arith.mulf %860, %863 : vector<8x128xf32>
    %c20_521 = arith.constant 20 : index
    %c0_522 = arith.constant 0 : index
    %c0_523 = arith.constant 0 : index
    %865 = vector.load %arg13[%c20_521, %c0_522, %c0_523] : memref<25x8x1xf32, #tpu.memory_space<vmem>>, vector<1x8x1xf32>
    %866 = vector.shape_cast %865 : vector<1x8x1xf32> to vector<8x1xf32>
    %867 = vector.broadcast %866 : vector<8x1xf32> to vector<8x128xf32>
    %868 = arith.mulf %864, %867 : vector<8x128xf32>
    %869 = arith.addf %859, %868 : vector<8x128xf32>
    %c113_i32_524 = arith.constant 113 : i32
    %870 = tpu.dynamic_rotate %661 by %c113_i32_524 dim 1 : vector<8x128xf32>, i32 -> vector<8x128xf32>
    %c21_525 = arith.constant 21 : index
    %c0_526 = arith.constant 0 : index
    %c0_527 = arith.constant 0 : index
    %871 = vector.load %arg3[%c21_525, %c0_526, %c0_527] : memref<25x1x128xf32, #tpu.memory_space<vmem>>, vector<1x1x128xf32>
    %872 = vector.shape_cast %871 : vector<1x1x128xf32> to vector<1x128xf32>
    %873 = vector.broadcast %872 : vector<1x128xf32> to vector<8x128xf32>
    %874 = arith.mulf %870, %873 : vector<8x128xf32>
    %c21_528 = arith.constant 21 : index
    %c0_529 = arith.constant 0 : index
    %c0_530 = arith.constant 0 : index
    %875 = vector.load %arg13[%c21_528, %c0_529, %c0_530] : memref<25x8x1xf32, #tpu.memory_space<vmem>>, vector<1x8x1xf32>
    %876 = vector.shape_cast %875 : vector<1x8x1xf32> to vector<8x1xf32>
    %877 = vector.broadcast %876 : vector<8x1xf32> to vector<8x128xf32>
    %878 = arith.mulf %874, %877 : vector<8x128xf32>
    %879 = arith.addf %869, %878 : vector<8x128xf32>
    %c112_i32_531 = arith.constant 112 : i32
    %880 = tpu.dynamic_rotate %661 by %c112_i32_531 dim 1 : vector<8x128xf32>, i32 -> vector<8x128xf32>
    %c22_532 = arith.constant 22 : index
    %c0_533 = arith.constant 0 : index
    %c0_534 = arith.constant 0 : index
    %881 = vector.load %arg3[%c22_532, %c0_533, %c0_534] : memref<25x1x128xf32, #tpu.memory_space<vmem>>, vector<1x1x128xf32>
    %882 = vector.shape_cast %881 : vector<1x1x128xf32> to vector<1x128xf32>
    %883 = vector.broadcast %882 : vector<1x128xf32> to vector<8x128xf32>
    %884 = arith.mulf %880, %883 : vector<8x128xf32>
    %c22_535 = arith.constant 22 : index
    %c0_536 = arith.constant 0 : index
    %c0_537 = arith.constant 0 : index
    %885 = vector.load %arg13[%c22_535, %c0_536, %c0_537] : memref<25x8x1xf32, #tpu.memory_space<vmem>>, vector<1x8x1xf32>
    %886 = vector.shape_cast %885 : vector<1x8x1xf32> to vector<8x1xf32>
    %887 = vector.broadcast %886 : vector<8x1xf32> to vector<8x128xf32>
    %888 = arith.mulf %884, %887 : vector<8x128xf32>
    %889 = arith.addf %879, %888 : vector<8x128xf32>
    %c111_i32_538 = arith.constant 111 : i32
    %890 = tpu.dynamic_rotate %661 by %c111_i32_538 dim 1 : vector<8x128xf32>, i32 -> vector<8x128xf32>
    %c23_539 = arith.constant 23 : index
    %c0_540 = arith.constant 0 : index
    %c0_541 = arith.constant 0 : index
    %891 = vector.load %arg3[%c23_539, %c0_540, %c0_541] : memref<25x1x128xf32, #tpu.memory_space<vmem>>, vector<1x1x128xf32>
    %892 = vector.shape_cast %891 : vector<1x1x128xf32> to vector<1x128xf32>
    %893 = vector.broadcast %892 : vector<1x128xf32> to vector<8x128xf32>
    %894 = arith.mulf %890, %893 : vector<8x128xf32>
    %c23_542 = arith.constant 23 : index
    %c0_543 = arith.constant 0 : index
    %c0_544 = arith.constant 0 : index
    %895 = vector.load %arg13[%c23_542, %c0_543, %c0_544] : memref<25x8x1xf32, #tpu.memory_space<vmem>>, vector<1x8x1xf32>
    %896 = vector.shape_cast %895 : vector<1x8x1xf32> to vector<8x1xf32>
    %897 = vector.broadcast %896 : vector<8x1xf32> to vector<8x128xf32>
    %898 = arith.mulf %894, %897 : vector<8x128xf32>
    %899 = arith.addf %889, %898 : vector<8x128xf32>
    %c110_i32_545 = arith.constant 110 : i32
    %900 = tpu.dynamic_rotate %661 by %c110_i32_545 dim 1 : vector<8x128xf32>, i32 -> vector<8x128xf32>
    %c24_546 = arith.constant 24 : index
    %c0_547 = arith.constant 0 : index
    %c0_548 = arith.constant 0 : index
    %901 = vector.load %arg3[%c24_546, %c0_547, %c0_548] : memref<25x1x128xf32, #tpu.memory_space<vmem>>, vector<1x1x128xf32>
    %902 = vector.shape_cast %901 : vector<1x1x128xf32> to vector<1x128xf32>
    %903 = vector.broadcast %902 : vector<1x128xf32> to vector<8x128xf32>
    %904 = arith.mulf %900, %903 : vector<8x128xf32>
    %c24_549 = arith.constant 24 : index
    %c0_550 = arith.constant 0 : index
    %c0_551 = arith.constant 0 : index
    %905 = vector.load %arg13[%c24_549, %c0_550, %c0_551] : memref<25x8x1xf32, #tpu.memory_space<vmem>>, vector<1x8x1xf32>
    %906 = vector.shape_cast %905 : vector<1x8x1xf32> to vector<8x1xf32>
    %907 = vector.broadcast %906 : vector<8x1xf32> to vector<8x128xf32>
    %908 = arith.mulf %904, %907 : vector<8x128xf32>
    %909 = arith.addf %899, %908 : vector<8x128xf32>
    %c0_552 = arith.constant 0 : index
    %c0_553 = arith.constant 0 : index
    %910 = vector.load %arg14[%c0_552, %c0_553] : memref<8x8xf32, #tpu.memory_space<vmem>>, vector<8x8xf32>
    %cst_554 = arith.constant dense<0.000000e+00> : vector<8x128xf32>
    %911 = tpu.matmul %910, %909, %cst_554 {dimension_numbers = #tpu.dot_dimension_numbers<[1], [0], [0], [1], [0, 0, 1, 1], [], []>} : vector<8x8xf32>, vector<8x128xf32>, vector<8x128xf32> -> vector<8x128xf32>
    %cst_555 = arith.constant dense<0.000000e+00> : vector<8xf32>
    %912 = vector.multi_reduction <add>, %911, %cst_555 [1] : vector<8x128xf32> to vector<8xf32>
    %913 = vector.shape_cast %912 : vector<8xf32> to vector<8x1xf32>
    %cst_556 = arith.constant 1.280000e+02 : f32
    %914 = vector.broadcast %cst_556 : f32 to vector<8x1xf32>
    %915 = arith.divf %913, %914 : vector<8x1xf32>
    %916 = vector.broadcast %915 : vector<8x1xf32> to vector<8x128xf32>
    %917 = arith.subf %911, %916 : vector<8x128xf32>
    %918 = arith.mulf %917, %917 : vector<8x128xf32>
    %cst_557 = arith.constant dense<0.000000e+00> : vector<8xf32>
    %919 = vector.multi_reduction <add>, %918, %cst_557 [1] : vector<8x128xf32> to vector<8xf32>
    %920 = vector.shape_cast %919 : vector<8xf32> to vector<8x1xf32>
    %cst_558 = arith.constant 1.280000e+02 : f32
    %921 = vector.broadcast %cst_558 : f32 to vector<8x1xf32>
    %922 = arith.divf %920, %921 : vector<8x1xf32>
    %cst_559 = arith.constant 9.99999974E-6 : f32
    %923 = vector.broadcast %cst_559 : f32 to vector<8x1xf32>
    %924 = arith.addf %922, %923 : vector<8x1xf32>
    %925 = math.rsqrt %924 : vector<8x1xf32>
    %926 = vector.broadcast %925 : vector<8x1xf32> to vector<8x128xf32>
    %927 = arith.mulf %917, %926 : vector<8x128xf32>
    %cst_560 = arith.constant 0.000000e+00 : f32
    %928 = vector.broadcast %cst_560 : f32 to vector<8x128xf32>
    %929 = arith.maximumf %0, %928 : vector<8x128xf32>
    %c18_i32_561 = arith.constant 18 : i32
    %930 = tpu.dynamic_rotate %929 by %c18_i32_561 dim 1 : vector<8x128xf32>, i32 -> vector<8x128xf32>
    %c0_562 = arith.constant 0 : index
    %c0_563 = arith.constant 0 : index
    %c0_564 = arith.constant 0 : index
    %931 = vector.load %arg4[%c0_562, %c0_563, %c0_564] : memref<9x1x128xf32, #tpu.memory_space<vmem>>, vector<1x1x128xf32>
    %932 = vector.shape_cast %931 : vector<1x1x128xf32> to vector<1x128xf32>
    %933 = vector.broadcast %932 : vector<1x128xf32> to vector<8x128xf32>
    %934 = arith.mulf %930, %933 : vector<8x128xf32>
    %c0_565 = arith.constant 0 : index
    %c0_566 = arith.constant 0 : index
    %c0_567 = arith.constant 0 : index
    %935 = vector.load %arg15[%c0_565, %c0_566, %c0_567] : memref<9x8x1xf32, #tpu.memory_space<vmem>>, vector<1x8x1xf32>
    %936 = vector.shape_cast %935 : vector<1x8x1xf32> to vector<8x1xf32>
    %937 = vector.broadcast %936 : vector<8x1xf32> to vector<8x128xf32>
    %938 = arith.mulf %934, %937 : vector<8x128xf32>
    %c16_i32_568 = arith.constant 16 : i32
    %939 = tpu.dynamic_rotate %929 by %c16_i32_568 dim 1 : vector<8x128xf32>, i32 -> vector<8x128xf32>
    %c1_569 = arith.constant 1 : index
    %c0_570 = arith.constant 0 : index
    %c0_571 = arith.constant 0 : index
    %940 = vector.load %arg4[%c1_569, %c0_570, %c0_571] : memref<9x1x128xf32, #tpu.memory_space<vmem>>, vector<1x1x128xf32>
    %941 = vector.shape_cast %940 : vector<1x1x128xf32> to vector<1x128xf32>
    %942 = vector.broadcast %941 : vector<1x128xf32> to vector<8x128xf32>
    %943 = arith.mulf %939, %942 : vector<8x128xf32>
    %c1_572 = arith.constant 1 : index
    %c0_573 = arith.constant 0 : index
    %c0_574 = arith.constant 0 : index
    %944 = vector.load %arg15[%c1_572, %c0_573, %c0_574] : memref<9x8x1xf32, #tpu.memory_space<vmem>>, vector<1x8x1xf32>
    %945 = vector.shape_cast %944 : vector<1x8x1xf32> to vector<8x1xf32>
    %946 = vector.broadcast %945 : vector<8x1xf32> to vector<8x128xf32>
    %947 = arith.mulf %943, %946 : vector<8x128xf32>
    %948 = arith.addf %938, %947 : vector<8x128xf32>
    %c14_i32_575 = arith.constant 14 : i32
    %949 = tpu.dynamic_rotate %929 by %c14_i32_575 dim 1 : vector<8x128xf32>, i32 -> vector<8x128xf32>
    %c2_576 = arith.constant 2 : index
    %c0_577 = arith.constant 0 : index
    %c0_578 = arith.constant 0 : index
    %950 = vector.load %arg4[%c2_576, %c0_577, %c0_578] : memref<9x1x128xf32, #tpu.memory_space<vmem>>, vector<1x1x128xf32>
    %951 = vector.shape_cast %950 : vector<1x1x128xf32> to vector<1x128xf32>
    %952 = vector.broadcast %951 : vector<1x128xf32> to vector<8x128xf32>
    %953 = arith.mulf %949, %952 : vector<8x128xf32>
    %c2_579 = arith.constant 2 : index
    %c0_580 = arith.constant 0 : index
    %c0_581 = arith.constant 0 : index
    %954 = vector.load %arg15[%c2_579, %c0_580, %c0_581] : memref<9x8x1xf32, #tpu.memory_space<vmem>>, vector<1x8x1xf32>
    %955 = vector.shape_cast %954 : vector<1x8x1xf32> to vector<8x1xf32>
    %956 = vector.broadcast %955 : vector<8x1xf32> to vector<8x128xf32>
    %957 = arith.mulf %953, %956 : vector<8x128xf32>
    %958 = arith.addf %948, %957 : vector<8x128xf32>
    %c2_i32_582 = arith.constant 2 : i32
    %959 = tpu.dynamic_rotate %929 by %c2_i32_582 dim 1 : vector<8x128xf32>, i32 -> vector<8x128xf32>
    %c3_583 = arith.constant 3 : index
    %c0_584 = arith.constant 0 : index
    %c0_585 = arith.constant 0 : index
    %960 = vector.load %arg4[%c3_583, %c0_584, %c0_585] : memref<9x1x128xf32, #tpu.memory_space<vmem>>, vector<1x1x128xf32>
    %961 = vector.shape_cast %960 : vector<1x1x128xf32> to vector<1x128xf32>
    %962 = vector.broadcast %961 : vector<1x128xf32> to vector<8x128xf32>
    %963 = arith.mulf %959, %962 : vector<8x128xf32>
    %c3_586 = arith.constant 3 : index
    %c0_587 = arith.constant 0 : index
    %c0_588 = arith.constant 0 : index
    %964 = vector.load %arg15[%c3_586, %c0_587, %c0_588] : memref<9x8x1xf32, #tpu.memory_space<vmem>>, vector<1x8x1xf32>
    %965 = vector.shape_cast %964 : vector<1x8x1xf32> to vector<8x1xf32>
    %966 = vector.broadcast %965 : vector<8x1xf32> to vector<8x128xf32>
    %967 = arith.mulf %963, %966 : vector<8x128xf32>
    %968 = arith.addf %958, %967 : vector<8x128xf32>
    %c4_589 = arith.constant 4 : index
    %c0_590 = arith.constant 0 : index
    %c0_591 = arith.constant 0 : index
    %969 = vector.load %arg4[%c4_589, %c0_590, %c0_591] : memref<9x1x128xf32, #tpu.memory_space<vmem>>, vector<1x1x128xf32>
    %970 = vector.shape_cast %969 : vector<1x1x128xf32> to vector<1x128xf32>
    %971 = vector.broadcast %970 : vector<1x128xf32> to vector<8x128xf32>
    %972 = arith.mulf %929, %971 : vector<8x128xf32>
    %c4_592 = arith.constant 4 : index
    %c0_593 = arith.constant 0 : index
    %c0_594 = arith.constant 0 : index
    %973 = vector.load %arg15[%c4_592, %c0_593, %c0_594] : memref<9x8x1xf32, #tpu.memory_space<vmem>>, vector<1x8x1xf32>
    %974 = vector.shape_cast %973 : vector<1x8x1xf32> to vector<8x1xf32>
    %975 = vector.broadcast %974 : vector<8x1xf32> to vector<8x128xf32>
    %976 = arith.mulf %972, %975 : vector<8x128xf32>
    %977 = arith.addf %968, %976 : vector<8x128xf32>
    %c126_i32_595 = arith.constant 126 : i32
    %978 = tpu.dynamic_rotate %929 by %c126_i32_595 dim 1 : vector<8x128xf32>, i32 -> vector<8x128xf32>
    %c5_596 = arith.constant 5 : index
    %c0_597 = arith.constant 0 : index
    %c0_598 = arith.constant 0 : index
    %979 = vector.load %arg4[%c5_596, %c0_597, %c0_598] : memref<9x1x128xf32, #tpu.memory_space<vmem>>, vector<1x1x128xf32>
    %980 = vector.shape_cast %979 : vector<1x1x128xf32> to vector<1x128xf32>
    %981 = vector.broadcast %980 : vector<1x128xf32> to vector<8x128xf32>
    %982 = arith.mulf %978, %981 : vector<8x128xf32>
    %c5_599 = arith.constant 5 : index
    %c0_600 = arith.constant 0 : index
    %c0_601 = arith.constant 0 : index
    %983 = vector.load %arg15[%c5_599, %c0_600, %c0_601] : memref<9x8x1xf32, #tpu.memory_space<vmem>>, vector<1x8x1xf32>
    %984 = vector.shape_cast %983 : vector<1x8x1xf32> to vector<8x1xf32>
    %985 = vector.broadcast %984 : vector<8x1xf32> to vector<8x128xf32>
    %986 = arith.mulf %982, %985 : vector<8x128xf32>
    %987 = arith.addf %977, %986 : vector<8x128xf32>
    %c114_i32_602 = arith.constant 114 : i32
    %988 = tpu.dynamic_rotate %929 by %c114_i32_602 dim 1 : vector<8x128xf32>, i32 -> vector<8x128xf32>
    %c6_603 = arith.constant 6 : index
    %c0_604 = arith.constant 0 : index
    %c0_605 = arith.constant 0 : index
    %989 = vector.load %arg4[%c6_603, %c0_604, %c0_605] : memref<9x1x128xf32, #tpu.memory_space<vmem>>, vector<1x1x128xf32>
    %990 = vector.shape_cast %989 : vector<1x1x128xf32> to vector<1x128xf32>
    %991 = vector.broadcast %990 : vector<1x128xf32> to vector<8x128xf32>
    %992 = arith.mulf %988, %991 : vector<8x128xf32>
    %c6_606 = arith.constant 6 : index
    %c0_607 = arith.constant 0 : index
    %c0_608 = arith.constant 0 : index
    %993 = vector.load %arg15[%c6_606, %c0_607, %c0_608] : memref<9x8x1xf32, #tpu.memory_space<vmem>>, vector<1x8x1xf32>
    %994 = vector.shape_cast %993 : vector<1x8x1xf32> to vector<8x1xf32>
    %995 = vector.broadcast %994 : vector<8x1xf32> to vector<8x128xf32>
    %996 = arith.mulf %992, %995 : vector<8x128xf32>
    %997 = arith.addf %987, %996 : vector<8x128xf32>
    %c112_i32_609 = arith.constant 112 : i32
    %998 = tpu.dynamic_rotate %929 by %c112_i32_609 dim 1 : vector<8x128xf32>, i32 -> vector<8x128xf32>
    %c7_610 = arith.constant 7 : index
    %c0_611 = arith.constant 0 : index
    %c0_612 = arith.constant 0 : index
    %999 = vector.load %arg4[%c7_610, %c0_611, %c0_612] : memref<9x1x128xf32, #tpu.memory_space<vmem>>, vector<1x1x128xf32>
    %1000 = vector.shape_cast %999 : vector<1x1x128xf32> to vector<1x128xf32>
    %1001 = vector.broadcast %1000 : vector<1x128xf32> to vector<8x128xf32>
    %1002 = arith.mulf %998, %1001 : vector<8x128xf32>
    %c7_613 = arith.constant 7 : index
    %c0_614 = arith.constant 0 : index
    %c0_615 = arith.constant 0 : index
    %1003 = vector.load %arg15[%c7_613, %c0_614, %c0_615] : memref<9x8x1xf32, #tpu.memory_space<vmem>>, vector<1x8x1xf32>
    %1004 = vector.shape_cast %1003 : vector<1x8x1xf32> to vector<8x1xf32>
    %1005 = vector.broadcast %1004 : vector<8x1xf32> to vector<8x128xf32>
    %1006 = arith.mulf %1002, %1005 : vector<8x128xf32>
    %1007 = arith.addf %997, %1006 : vector<8x128xf32>
    %c110_i32_616 = arith.constant 110 : i32
    %1008 = tpu.dynamic_rotate %929 by %c110_i32_616 dim 1 : vector<8x128xf32>, i32 -> vector<8x128xf32>
    %c8_617 = arith.constant 8 : index
    %c0_618 = arith.constant 0 : index
    %c0_619 = arith.constant 0 : index
    %1009 = vector.load %arg4[%c8_617, %c0_618, %c0_619] : memref<9x1x128xf32, #tpu.memory_space<vmem>>, vector<1x1x128xf32>
    %1010 = vector.shape_cast %1009 : vector<1x1x128xf32> to vector<1x128xf32>
    %1011 = vector.broadcast %1010 : vector<1x128xf32> to vector<8x128xf32>
    %1012 = arith.mulf %1008, %1011 : vector<8x128xf32>
    %c8_620 = arith.constant 8 : index
    %c0_621 = arith.constant 0 : index
    %c0_622 = arith.constant 0 : index
    %1013 = vector.load %arg15[%c8_620, %c0_621, %c0_622] : memref<9x8x1xf32, #tpu.memory_space<vmem>>, vector<1x8x1xf32>
    %1014 = vector.shape_cast %1013 : vector<1x8x1xf32> to vector<8x1xf32>
    %1015 = vector.broadcast %1014 : vector<8x1xf32> to vector<8x128xf32>
    %1016 = arith.mulf %1012, %1015 : vector<8x128xf32>
    %1017 = arith.addf %1007, %1016 : vector<8x128xf32>
    %c0_623 = arith.constant 0 : index
    %c0_624 = arith.constant 0 : index
    %1018 = vector.load %arg16[%c0_623, %c0_624] : memref<8x8xf32, #tpu.memory_space<vmem>>, vector<8x8xf32>
    %cst_625 = arith.constant dense<0.000000e+00> : vector<8x128xf32>
    %1019 = tpu.matmul %1018, %1017, %cst_625 {dimension_numbers = #tpu.dot_dimension_numbers<[1], [0], [0], [1], [0, 0, 1, 1], [], []>} : vector<8x8xf32>, vector<8x128xf32>, vector<8x128xf32> -> vector<8x128xf32>
    %cst_626 = arith.constant dense<0.000000e+00> : vector<8xf32>
    %1020 = vector.multi_reduction <add>, %1019, %cst_626 [1] : vector<8x128xf32> to vector<8xf32>
    %1021 = vector.shape_cast %1020 : vector<8xf32> to vector<8x1xf32>
    %cst_627 = arith.constant 1.280000e+02 : f32
    %1022 = vector.broadcast %cst_627 : f32 to vector<8x1xf32>
    %1023 = arith.divf %1021, %1022 : vector<8x1xf32>
    %1024 = vector.broadcast %1023 : vector<8x1xf32> to vector<8x128xf32>
    %1025 = arith.subf %1019, %1024 : vector<8x128xf32>
    %1026 = arith.mulf %1025, %1025 : vector<8x128xf32>
    %cst_628 = arith.constant dense<0.000000e+00> : vector<8xf32>
    %1027 = vector.multi_reduction <add>, %1026, %cst_628 [1] : vector<8x128xf32> to vector<8xf32>
    %1028 = vector.shape_cast %1027 : vector<8xf32> to vector<8x1xf32>
    %cst_629 = arith.constant 1.280000e+02 : f32
    %1029 = vector.broadcast %cst_629 : f32 to vector<8x1xf32>
    %1030 = arith.divf %1028, %1029 : vector<8x1xf32>
    %cst_630 = arith.constant 9.99999974E-6 : f32
    %1031 = vector.broadcast %cst_630 : f32 to vector<8x1xf32>
    %1032 = arith.addf %1030, %1031 : vector<8x1xf32>
    %1033 = math.rsqrt %1032 : vector<8x1xf32>
    %1034 = vector.broadcast %1033 : vector<8x1xf32> to vector<8x128xf32>
    %1035 = arith.mulf %1025, %1034 : vector<8x128xf32>
    %cst_631 = arith.constant 0.000000e+00 : f32
    %1036 = vector.broadcast %cst_631 : f32 to vector<8x128xf32>
    %1037 = arith.maximumf %0, %1036 : vector<8x128xf32>
    %c36_i32 = arith.constant 36 : i32
    %1038 = tpu.dynamic_rotate %1037 by %c36_i32 dim 1 : vector<8x128xf32>, i32 -> vector<8x128xf32>
    %c0_632 = arith.constant 0 : index
    %c0_633 = arith.constant 0 : index
    %c0_634 = arith.constant 0 : index
    %1039 = vector.load %arg5[%c0_632, %c0_633, %c0_634] : memref<25x1x128xf32, #tpu.memory_space<vmem>>, vector<1x1x128xf32>
    %1040 = vector.shape_cast %1039 : vector<1x1x128xf32> to vector<1x128xf32>
    %1041 = vector.broadcast %1040 : vector<1x128xf32> to vector<8x128xf32>
    %1042 = arith.mulf %1038, %1041 : vector<8x128xf32>
    %c0_635 = arith.constant 0 : index
    %c0_636 = arith.constant 0 : index
    %c0_637 = arith.constant 0 : index
    %1043 = vector.load %arg17[%c0_635, %c0_636, %c0_637] : memref<25x8x1xf32, #tpu.memory_space<vmem>>, vector<1x8x1xf32>
    %1044 = vector.shape_cast %1043 : vector<1x8x1xf32> to vector<8x1xf32>
    %1045 = vector.broadcast %1044 : vector<8x1xf32> to vector<8x128xf32>
    %1046 = arith.mulf %1042, %1045 : vector<8x128xf32>
    %c34_i32 = arith.constant 34 : i32
    %1047 = tpu.dynamic_rotate %1037 by %c34_i32 dim 1 : vector<8x128xf32>, i32 -> vector<8x128xf32>
    %c1_638 = arith.constant 1 : index
    %c0_639 = arith.constant 0 : index
    %c0_640 = arith.constant 0 : index
    %1048 = vector.load %arg5[%c1_638, %c0_639, %c0_640] : memref<25x1x128xf32, #tpu.memory_space<vmem>>, vector<1x1x128xf32>
    %1049 = vector.shape_cast %1048 : vector<1x1x128xf32> to vector<1x128xf32>
    %1050 = vector.broadcast %1049 : vector<1x128xf32> to vector<8x128xf32>
    %1051 = arith.mulf %1047, %1050 : vector<8x128xf32>
    %c1_641 = arith.constant 1 : index
    %c0_642 = arith.constant 0 : index
    %c0_643 = arith.constant 0 : index
    %1052 = vector.load %arg17[%c1_641, %c0_642, %c0_643] : memref<25x8x1xf32, #tpu.memory_space<vmem>>, vector<1x8x1xf32>
    %1053 = vector.shape_cast %1052 : vector<1x8x1xf32> to vector<8x1xf32>
    %1054 = vector.broadcast %1053 : vector<8x1xf32> to vector<8x128xf32>
    %1055 = arith.mulf %1051, %1054 : vector<8x128xf32>
    %1056 = arith.addf %1046, %1055 : vector<8x128xf32>
    %c32_i32 = arith.constant 32 : i32
    %1057 = tpu.dynamic_rotate %1037 by %c32_i32 dim 1 : vector<8x128xf32>, i32 -> vector<8x128xf32>
    %c2_644 = arith.constant 2 : index
    %c0_645 = arith.constant 0 : index
    %c0_646 = arith.constant 0 : index
    %1058 = vector.load %arg5[%c2_644, %c0_645, %c0_646] : memref<25x1x128xf32, #tpu.memory_space<vmem>>, vector<1x1x128xf32>
    %1059 = vector.shape_cast %1058 : vector<1x1x128xf32> to vector<1x128xf32>
    %1060 = vector.broadcast %1059 : vector<1x128xf32> to vector<8x128xf32>
    %1061 = arith.mulf %1057, %1060 : vector<8x128xf32>
    %c2_647 = arith.constant 2 : index
    %c0_648 = arith.constant 0 : index
    %c0_649 = arith.constant 0 : index
    %1062 = vector.load %arg17[%c2_647, %c0_648, %c0_649] : memref<25x8x1xf32, #tpu.memory_space<vmem>>, vector<1x8x1xf32>
    %1063 = vector.shape_cast %1062 : vector<1x8x1xf32> to vector<8x1xf32>
    %1064 = vector.broadcast %1063 : vector<8x1xf32> to vector<8x128xf32>
    %1065 = arith.mulf %1061, %1064 : vector<8x128xf32>
    %1066 = arith.addf %1056, %1065 : vector<8x128xf32>
    %c30_i32 = arith.constant 30 : i32
    %1067 = tpu.dynamic_rotate %1037 by %c30_i32 dim 1 : vector<8x128xf32>, i32 -> vector<8x128xf32>
    %c3_650 = arith.constant 3 : index
    %c0_651 = arith.constant 0 : index
    %c0_652 = arith.constant 0 : index
    %1068 = vector.load %arg5[%c3_650, %c0_651, %c0_652] : memref<25x1x128xf32, #tpu.memory_space<vmem>>, vector<1x1x128xf32>
    %1069 = vector.shape_cast %1068 : vector<1x1x128xf32> to vector<1x128xf32>
    %1070 = vector.broadcast %1069 : vector<1x128xf32> to vector<8x128xf32>
    %1071 = arith.mulf %1067, %1070 : vector<8x128xf32>
    %c3_653 = arith.constant 3 : index
    %c0_654 = arith.constant 0 : index
    %c0_655 = arith.constant 0 : index
    %1072 = vector.load %arg17[%c3_653, %c0_654, %c0_655] : memref<25x8x1xf32, #tpu.memory_space<vmem>>, vector<1x8x1xf32>
    %1073 = vector.shape_cast %1072 : vector<1x8x1xf32> to vector<8x1xf32>
    %1074 = vector.broadcast %1073 : vector<8x1xf32> to vector<8x128xf32>
    %1075 = arith.mulf %1071, %1074 : vector<8x128xf32>
    %1076 = arith.addf %1066, %1075 : vector<8x128xf32>
    %c28_i32 = arith.constant 28 : i32
    %1077 = tpu.dynamic_rotate %1037 by %c28_i32 dim 1 : vector<8x128xf32>, i32 -> vector<8x128xf32>
    %c4_656 = arith.constant 4 : index
    %c0_657 = arith.constant 0 : index
    %c0_658 = arith.constant 0 : index
    %1078 = vector.load %arg5[%c4_656, %c0_657, %c0_658] : memref<25x1x128xf32, #tpu.memory_space<vmem>>, vector<1x1x128xf32>
    %1079 = vector.shape_cast %1078 : vector<1x1x128xf32> to vector<1x128xf32>
    %1080 = vector.broadcast %1079 : vector<1x128xf32> to vector<8x128xf32>
    %1081 = arith.mulf %1077, %1080 : vector<8x128xf32>
    %c4_659 = arith.constant 4 : index
    %c0_660 = arith.constant 0 : index
    %c0_661 = arith.constant 0 : index
    %1082 = vector.load %arg17[%c4_659, %c0_660, %c0_661] : memref<25x8x1xf32, #tpu.memory_space<vmem>>, vector<1x8x1xf32>
    %1083 = vector.shape_cast %1082 : vector<1x8x1xf32> to vector<8x1xf32>
    %1084 = vector.broadcast %1083 : vector<8x1xf32> to vector<8x128xf32>
    %1085 = arith.mulf %1081, %1084 : vector<8x128xf32>
    %1086 = arith.addf %1076, %1085 : vector<8x128xf32>
    %c20_i32 = arith.constant 20 : i32
    %1087 = tpu.dynamic_rotate %1037 by %c20_i32 dim 1 : vector<8x128xf32>, i32 -> vector<8x128xf32>
    %c5_662 = arith.constant 5 : index
    %c0_663 = arith.constant 0 : index
    %c0_664 = arith.constant 0 : index
    %1088 = vector.load %arg5[%c5_662, %c0_663, %c0_664] : memref<25x1x128xf32, #tpu.memory_space<vmem>>, vector<1x1x128xf32>
    %1089 = vector.shape_cast %1088 : vector<1x1x128xf32> to vector<1x128xf32>
    %1090 = vector.broadcast %1089 : vector<1x128xf32> to vector<8x128xf32>
    %1091 = arith.mulf %1087, %1090 : vector<8x128xf32>
    %c5_665 = arith.constant 5 : index
    %c0_666 = arith.constant 0 : index
    %c0_667 = arith.constant 0 : index
    %1092 = vector.load %arg17[%c5_665, %c0_666, %c0_667] : memref<25x8x1xf32, #tpu.memory_space<vmem>>, vector<1x8x1xf32>
    %1093 = vector.shape_cast %1092 : vector<1x8x1xf32> to vector<8x1xf32>
    %1094 = vector.broadcast %1093 : vector<8x1xf32> to vector<8x128xf32>
    %1095 = arith.mulf %1091, %1094 : vector<8x128xf32>
    %1096 = arith.addf %1086, %1095 : vector<8x128xf32>
    %c18_i32_668 = arith.constant 18 : i32
    %1097 = tpu.dynamic_rotate %1037 by %c18_i32_668 dim 1 : vector<8x128xf32>, i32 -> vector<8x128xf32>
    %c6_669 = arith.constant 6 : index
    %c0_670 = arith.constant 0 : index
    %c0_671 = arith.constant 0 : index
    %1098 = vector.load %arg5[%c6_669, %c0_670, %c0_671] : memref<25x1x128xf32, #tpu.memory_space<vmem>>, vector<1x1x128xf32>
    %1099 = vector.shape_cast %1098 : vector<1x1x128xf32> to vector<1x128xf32>
    %1100 = vector.broadcast %1099 : vector<1x128xf32> to vector<8x128xf32>
    %1101 = arith.mulf %1097, %1100 : vector<8x128xf32>
    %c6_672 = arith.constant 6 : index
    %c0_673 = arith.constant 0 : index
    %c0_674 = arith.constant 0 : index
    %1102 = vector.load %arg17[%c6_672, %c0_673, %c0_674] : memref<25x8x1xf32, #tpu.memory_space<vmem>>, vector<1x8x1xf32>
    %1103 = vector.shape_cast %1102 : vector<1x8x1xf32> to vector<8x1xf32>
    %1104 = vector.broadcast %1103 : vector<8x1xf32> to vector<8x128xf32>
    %1105 = arith.mulf %1101, %1104 : vector<8x128xf32>
    %1106 = arith.addf %1096, %1105 : vector<8x128xf32>
    %c16_i32_675 = arith.constant 16 : i32
    %1107 = tpu.dynamic_rotate %1037 by %c16_i32_675 dim 1 : vector<8x128xf32>, i32 -> vector<8x128xf32>
    %c7_676 = arith.constant 7 : index
    %c0_677 = arith.constant 0 : index
    %c0_678 = arith.constant 0 : index
    %1108 = vector.load %arg5[%c7_676, %c0_677, %c0_678] : memref<25x1x128xf32, #tpu.memory_space<vmem>>, vector<1x1x128xf32>
    %1109 = vector.shape_cast %1108 : vector<1x1x128xf32> to vector<1x128xf32>
    %1110 = vector.broadcast %1109 : vector<1x128xf32> to vector<8x128xf32>
    %1111 = arith.mulf %1107, %1110 : vector<8x128xf32>
    %c7_679 = arith.constant 7 : index
    %c0_680 = arith.constant 0 : index
    %c0_681 = arith.constant 0 : index
    %1112 = vector.load %arg17[%c7_679, %c0_680, %c0_681] : memref<25x8x1xf32, #tpu.memory_space<vmem>>, vector<1x8x1xf32>
    %1113 = vector.shape_cast %1112 : vector<1x8x1xf32> to vector<8x1xf32>
    %1114 = vector.broadcast %1113 : vector<8x1xf32> to vector<8x128xf32>
    %1115 = arith.mulf %1111, %1114 : vector<8x128xf32>
    %1116 = arith.addf %1106, %1115 : vector<8x128xf32>
    %c14_i32_682 = arith.constant 14 : i32
    %1117 = tpu.dynamic_rotate %1037 by %c14_i32_682 dim 1 : vector<8x128xf32>, i32 -> vector<8x128xf32>
    %c8_683 = arith.constant 8 : index
    %c0_684 = arith.constant 0 : index
    %c0_685 = arith.constant 0 : index
    %1118 = vector.load %arg5[%c8_683, %c0_684, %c0_685] : memref<25x1x128xf32, #tpu.memory_space<vmem>>, vector<1x1x128xf32>
    %1119 = vector.shape_cast %1118 : vector<1x1x128xf32> to vector<1x128xf32>
    %1120 = vector.broadcast %1119 : vector<1x128xf32> to vector<8x128xf32>
    %1121 = arith.mulf %1117, %1120 : vector<8x128xf32>
    %c8_686 = arith.constant 8 : index
    %c0_687 = arith.constant 0 : index
    %c0_688 = arith.constant 0 : index
    %1122 = vector.load %arg17[%c8_686, %c0_687, %c0_688] : memref<25x8x1xf32, #tpu.memory_space<vmem>>, vector<1x8x1xf32>
    %1123 = vector.shape_cast %1122 : vector<1x8x1xf32> to vector<8x1xf32>
    %1124 = vector.broadcast %1123 : vector<8x1xf32> to vector<8x128xf32>
    %1125 = arith.mulf %1121, %1124 : vector<8x128xf32>
    %1126 = arith.addf %1116, %1125 : vector<8x128xf32>
    %c12_i32 = arith.constant 12 : i32
    %1127 = tpu.dynamic_rotate %1037 by %c12_i32 dim 1 : vector<8x128xf32>, i32 -> vector<8x128xf32>
    %c9_689 = arith.constant 9 : index
    %c0_690 = arith.constant 0 : index
    %c0_691 = arith.constant 0 : index
    %1128 = vector.load %arg5[%c9_689, %c0_690, %c0_691] : memref<25x1x128xf32, #tpu.memory_space<vmem>>, vector<1x1x128xf32>
    %1129 = vector.shape_cast %1128 : vector<1x1x128xf32> to vector<1x128xf32>
    %1130 = vector.broadcast %1129 : vector<1x128xf32> to vector<8x128xf32>
    %1131 = arith.mulf %1127, %1130 : vector<8x128xf32>
    %c9_692 = arith.constant 9 : index
    %c0_693 = arith.constant 0 : index
    %c0_694 = arith.constant 0 : index
    %1132 = vector.load %arg17[%c9_692, %c0_693, %c0_694] : memref<25x8x1xf32, #tpu.memory_space<vmem>>, vector<1x8x1xf32>
    %1133 = vector.shape_cast %1132 : vector<1x8x1xf32> to vector<8x1xf32>
    %1134 = vector.broadcast %1133 : vector<8x1xf32> to vector<8x128xf32>
    %1135 = arith.mulf %1131, %1134 : vector<8x128xf32>
    %1136 = arith.addf %1126, %1135 : vector<8x128xf32>
    %c4_i32 = arith.constant 4 : i32
    %1137 = tpu.dynamic_rotate %1037 by %c4_i32 dim 1 : vector<8x128xf32>, i32 -> vector<8x128xf32>
    %c10_695 = arith.constant 10 : index
    %c0_696 = arith.constant 0 : index
    %c0_697 = arith.constant 0 : index
    %1138 = vector.load %arg5[%c10_695, %c0_696, %c0_697] : memref<25x1x128xf32, #tpu.memory_space<vmem>>, vector<1x1x128xf32>
    %1139 = vector.shape_cast %1138 : vector<1x1x128xf32> to vector<1x128xf32>
    %1140 = vector.broadcast %1139 : vector<1x128xf32> to vector<8x128xf32>
    %1141 = arith.mulf %1137, %1140 : vector<8x128xf32>
    %c10_698 = arith.constant 10 : index
    %c0_699 = arith.constant 0 : index
    %c0_700 = arith.constant 0 : index
    %1142 = vector.load %arg17[%c10_698, %c0_699, %c0_700] : memref<25x8x1xf32, #tpu.memory_space<vmem>>, vector<1x8x1xf32>
    %1143 = vector.shape_cast %1142 : vector<1x8x1xf32> to vector<8x1xf32>
    %1144 = vector.broadcast %1143 : vector<8x1xf32> to vector<8x128xf32>
    %1145 = arith.mulf %1141, %1144 : vector<8x128xf32>
    %1146 = arith.addf %1136, %1145 : vector<8x128xf32>
    %c2_i32_701 = arith.constant 2 : i32
    %1147 = tpu.dynamic_rotate %1037 by %c2_i32_701 dim 1 : vector<8x128xf32>, i32 -> vector<8x128xf32>
    %c11_702 = arith.constant 11 : index
    %c0_703 = arith.constant 0 : index
    %c0_704 = arith.constant 0 : index
    %1148 = vector.load %arg5[%c11_702, %c0_703, %c0_704] : memref<25x1x128xf32, #tpu.memory_space<vmem>>, vector<1x1x128xf32>
    %1149 = vector.shape_cast %1148 : vector<1x1x128xf32> to vector<1x128xf32>
    %1150 = vector.broadcast %1149 : vector<1x128xf32> to vector<8x128xf32>
    %1151 = arith.mulf %1147, %1150 : vector<8x128xf32>
    %c11_705 = arith.constant 11 : index
    %c0_706 = arith.constant 0 : index
    %c0_707 = arith.constant 0 : index
    %1152 = vector.load %arg17[%c11_705, %c0_706, %c0_707] : memref<25x8x1xf32, #tpu.memory_space<vmem>>, vector<1x8x1xf32>
    %1153 = vector.shape_cast %1152 : vector<1x8x1xf32> to vector<8x1xf32>
    %1154 = vector.broadcast %1153 : vector<8x1xf32> to vector<8x128xf32>
    %1155 = arith.mulf %1151, %1154 : vector<8x128xf32>
    %1156 = arith.addf %1146, %1155 : vector<8x128xf32>
    %c12_708 = arith.constant 12 : index
    %c0_709 = arith.constant 0 : index
    %c0_710 = arith.constant 0 : index
    %1157 = vector.load %arg5[%c12_708, %c0_709, %c0_710] : memref<25x1x128xf32, #tpu.memory_space<vmem>>, vector<1x1x128xf32>
    %1158 = vector.shape_cast %1157 : vector<1x1x128xf32> to vector<1x128xf32>
    %1159 = vector.broadcast %1158 : vector<1x128xf32> to vector<8x128xf32>
    %1160 = arith.mulf %1037, %1159 : vector<8x128xf32>
    %c12_711 = arith.constant 12 : index
    %c0_712 = arith.constant 0 : index
    %c0_713 = arith.constant 0 : index
    %1161 = vector.load %arg17[%c12_711, %c0_712, %c0_713] : memref<25x8x1xf32, #tpu.memory_space<vmem>>, vector<1x8x1xf32>
    %1162 = vector.shape_cast %1161 : vector<1x8x1xf32> to vector<8x1xf32>
    %1163 = vector.broadcast %1162 : vector<8x1xf32> to vector<8x128xf32>
    %1164 = arith.mulf %1160, %1163 : vector<8x128xf32>
    %1165 = arith.addf %1156, %1164 : vector<8x128xf32>
    %c126_i32_714 = arith.constant 126 : i32
    %1166 = tpu.dynamic_rotate %1037 by %c126_i32_714 dim 1 : vector<8x128xf32>, i32 -> vector<8x128xf32>
    %c13_715 = arith.constant 13 : index
    %c0_716 = arith.constant 0 : index
    %c0_717 = arith.constant 0 : index
    %1167 = vector.load %arg5[%c13_715, %c0_716, %c0_717] : memref<25x1x128xf32, #tpu.memory_space<vmem>>, vector<1x1x128xf32>
    %1168 = vector.shape_cast %1167 : vector<1x1x128xf32> to vector<1x128xf32>
    %1169 = vector.broadcast %1168 : vector<1x128xf32> to vector<8x128xf32>
    %1170 = arith.mulf %1166, %1169 : vector<8x128xf32>
    %c13_718 = arith.constant 13 : index
    %c0_719 = arith.constant 0 : index
    %c0_720 = arith.constant 0 : index
    %1171 = vector.load %arg17[%c13_718, %c0_719, %c0_720] : memref<25x8x1xf32, #tpu.memory_space<vmem>>, vector<1x8x1xf32>
    %1172 = vector.shape_cast %1171 : vector<1x8x1xf32> to vector<8x1xf32>
    %1173 = vector.broadcast %1172 : vector<8x1xf32> to vector<8x128xf32>
    %1174 = arith.mulf %1170, %1173 : vector<8x128xf32>
    %1175 = arith.addf %1165, %1174 : vector<8x128xf32>
    %c124_i32 = arith.constant 124 : i32
    %1176 = tpu.dynamic_rotate %1037 by %c124_i32 dim 1 : vector<8x128xf32>, i32 -> vector<8x128xf32>
    %c14_721 = arith.constant 14 : index
    %c0_722 = arith.constant 0 : index
    %c0_723 = arith.constant 0 : index
    %1177 = vector.load %arg5[%c14_721, %c0_722, %c0_723] : memref<25x1x128xf32, #tpu.memory_space<vmem>>, vector<1x1x128xf32>
    %1178 = vector.shape_cast %1177 : vector<1x1x128xf32> to vector<1x128xf32>
    %1179 = vector.broadcast %1178 : vector<1x128xf32> to vector<8x128xf32>
    %1180 = arith.mulf %1176, %1179 : vector<8x128xf32>
    %c14_724 = arith.constant 14 : index
    %c0_725 = arith.constant 0 : index
    %c0_726 = arith.constant 0 : index
    %1181 = vector.load %arg17[%c14_724, %c0_725, %c0_726] : memref<25x8x1xf32, #tpu.memory_space<vmem>>, vector<1x8x1xf32>
    %1182 = vector.shape_cast %1181 : vector<1x8x1xf32> to vector<8x1xf32>
    %1183 = vector.broadcast %1182 : vector<8x1xf32> to vector<8x128xf32>
    %1184 = arith.mulf %1180, %1183 : vector<8x128xf32>
    %1185 = arith.addf %1175, %1184 : vector<8x128xf32>
    %c116_i32 = arith.constant 116 : i32
    %1186 = tpu.dynamic_rotate %1037 by %c116_i32 dim 1 : vector<8x128xf32>, i32 -> vector<8x128xf32>
    %c15_727 = arith.constant 15 : index
    %c0_728 = arith.constant 0 : index
    %c0_729 = arith.constant 0 : index
    %1187 = vector.load %arg5[%c15_727, %c0_728, %c0_729] : memref<25x1x128xf32, #tpu.memory_space<vmem>>, vector<1x1x128xf32>
    %1188 = vector.shape_cast %1187 : vector<1x1x128xf32> to vector<1x128xf32>
    %1189 = vector.broadcast %1188 : vector<1x128xf32> to vector<8x128xf32>
    %1190 = arith.mulf %1186, %1189 : vector<8x128xf32>
    %c15_730 = arith.constant 15 : index
    %c0_731 = arith.constant 0 : index
    %c0_732 = arith.constant 0 : index
    %1191 = vector.load %arg17[%c15_730, %c0_731, %c0_732] : memref<25x8x1xf32, #tpu.memory_space<vmem>>, vector<1x8x1xf32>
    %1192 = vector.shape_cast %1191 : vector<1x8x1xf32> to vector<8x1xf32>
    %1193 = vector.broadcast %1192 : vector<8x1xf32> to vector<8x128xf32>
    %1194 = arith.mulf %1190, %1193 : vector<8x128xf32>
    %1195 = arith.addf %1185, %1194 : vector<8x128xf32>
    %c114_i32_733 = arith.constant 114 : i32
    %1196 = tpu.dynamic_rotate %1037 by %c114_i32_733 dim 1 : vector<8x128xf32>, i32 -> vector<8x128xf32>
    %c16_734 = arith.constant 16 : index
    %c0_735 = arith.constant 0 : index
    %c0_736 = arith.constant 0 : index
    %1197 = vector.load %arg5[%c16_734, %c0_735, %c0_736] : memref<25x1x128xf32, #tpu.memory_space<vmem>>, vector<1x1x128xf32>
    %1198 = vector.shape_cast %1197 : vector<1x1x128xf32> to vector<1x128xf32>
    %1199 = vector.broadcast %1198 : vector<1x128xf32> to vector<8x128xf32>
    %1200 = arith.mulf %1196, %1199 : vector<8x128xf32>
    %c16_737 = arith.constant 16 : index
    %c0_738 = arith.constant 0 : index
    %c0_739 = arith.constant 0 : index
    %1201 = vector.load %arg17[%c16_737, %c0_738, %c0_739] : memref<25x8x1xf32, #tpu.memory_space<vmem>>, vector<1x8x1xf32>
    %1202 = vector.shape_cast %1201 : vector<1x8x1xf32> to vector<8x1xf32>
    %1203 = vector.broadcast %1202 : vector<8x1xf32> to vector<8x128xf32>
    %1204 = arith.mulf %1200, %1203 : vector<8x128xf32>
    %1205 = arith.addf %1195, %1204 : vector<8x128xf32>
    %c112_i32_740 = arith.constant 112 : i32
    %1206 = tpu.dynamic_rotate %1037 by %c112_i32_740 dim 1 : vector<8x128xf32>, i32 -> vector<8x128xf32>
    %c17_741 = arith.constant 17 : index
    %c0_742 = arith.constant 0 : index
    %c0_743 = arith.constant 0 : index
    %1207 = vector.load %arg5[%c17_741, %c0_742, %c0_743] : memref<25x1x128xf32, #tpu.memory_space<vmem>>, vector<1x1x128xf32>
    %1208 = vector.shape_cast %1207 : vector<1x1x128xf32> to vector<1x128xf32>
    %1209 = vector.broadcast %1208 : vector<1x128xf32> to vector<8x128xf32>
    %1210 = arith.mulf %1206, %1209 : vector<8x128xf32>
    %c17_744 = arith.constant 17 : index
    %c0_745 = arith.constant 0 : index
    %c0_746 = arith.constant 0 : index
    %1211 = vector.load %arg17[%c17_744, %c0_745, %c0_746] : memref<25x8x1xf32, #tpu.memory_space<vmem>>, vector<1x8x1xf32>
    %1212 = vector.shape_cast %1211 : vector<1x8x1xf32> to vector<8x1xf32>
    %1213 = vector.broadcast %1212 : vector<8x1xf32> to vector<8x128xf32>
    %1214 = arith.mulf %1210, %1213 : vector<8x128xf32>
    %1215 = arith.addf %1205, %1214 : vector<8x128xf32>
    %c110_i32_747 = arith.constant 110 : i32
    %1216 = tpu.dynamic_rotate %1037 by %c110_i32_747 dim 1 : vector<8x128xf32>, i32 -> vector<8x128xf32>
    %c18_748 = arith.constant 18 : index
    %c0_749 = arith.constant 0 : index
    %c0_750 = arith.constant 0 : index
    %1217 = vector.load %arg5[%c18_748, %c0_749, %c0_750] : memref<25x1x128xf32, #tpu.memory_space<vmem>>, vector<1x1x128xf32>
    %1218 = vector.shape_cast %1217 : vector<1x1x128xf32> to vector<1x128xf32>
    %1219 = vector.broadcast %1218 : vector<1x128xf32> to vector<8x128xf32>
    %1220 = arith.mulf %1216, %1219 : vector<8x128xf32>
    %c18_751 = arith.constant 18 : index
    %c0_752 = arith.constant 0 : index
    %c0_753 = arith.constant 0 : index
    %1221 = vector.load %arg17[%c18_751, %c0_752, %c0_753] : memref<25x8x1xf32, #tpu.memory_space<vmem>>, vector<1x8x1xf32>
    %1222 = vector.shape_cast %1221 : vector<1x8x1xf32> to vector<8x1xf32>
    %1223 = vector.broadcast %1222 : vector<8x1xf32> to vector<8x128xf32>
    %1224 = arith.mulf %1220, %1223 : vector<8x128xf32>
    %1225 = arith.addf %1215, %1224 : vector<8x128xf32>
    %c108_i32 = arith.constant 108 : i32
    %1226 = tpu.dynamic_rotate %1037 by %c108_i32 dim 1 : vector<8x128xf32>, i32 -> vector<8x128xf32>
    %c19_754 = arith.constant 19 : index
    %c0_755 = arith.constant 0 : index
    %c0_756 = arith.constant 0 : index
    %1227 = vector.load %arg5[%c19_754, %c0_755, %c0_756] : memref<25x1x128xf32, #tpu.memory_space<vmem>>, vector<1x1x128xf32>
    %1228 = vector.shape_cast %1227 : vector<1x1x128xf32> to vector<1x128xf32>
    %1229 = vector.broadcast %1228 : vector<1x128xf32> to vector<8x128xf32>
    %1230 = arith.mulf %1226, %1229 : vector<8x128xf32>
    %c19_757 = arith.constant 19 : index
    %c0_758 = arith.constant 0 : index
    %c0_759 = arith.constant 0 : index
    %1231 = vector.load %arg17[%c19_757, %c0_758, %c0_759] : memref<25x8x1xf32, #tpu.memory_space<vmem>>, vector<1x8x1xf32>
    %1232 = vector.shape_cast %1231 : vector<1x8x1xf32> to vector<8x1xf32>
    %1233 = vector.broadcast %1232 : vector<8x1xf32> to vector<8x128xf32>
    %1234 = arith.mulf %1230, %1233 : vector<8x128xf32>
    %1235 = arith.addf %1225, %1234 : vector<8x128xf32>
    %c100_i32 = arith.constant 100 : i32
    %1236 = tpu.dynamic_rotate %1037 by %c100_i32 dim 1 : vector<8x128xf32>, i32 -> vector<8x128xf32>
    %c20_760 = arith.constant 20 : index
    %c0_761 = arith.constant 0 : index
    %c0_762 = arith.constant 0 : index
    %1237 = vector.load %arg5[%c20_760, %c0_761, %c0_762] : memref<25x1x128xf32, #tpu.memory_space<vmem>>, vector<1x1x128xf32>
    %1238 = vector.shape_cast %1237 : vector<1x1x128xf32> to vector<1x128xf32>
    %1239 = vector.broadcast %1238 : vector<1x128xf32> to vector<8x128xf32>
    %1240 = arith.mulf %1236, %1239 : vector<8x128xf32>
    %c20_763 = arith.constant 20 : index
    %c0_764 = arith.constant 0 : index
    %c0_765 = arith.constant 0 : index
    %1241 = vector.load %arg17[%c20_763, %c0_764, %c0_765] : memref<25x8x1xf32, #tpu.memory_space<vmem>>, vector<1x8x1xf32>
    %1242 = vector.shape_cast %1241 : vector<1x8x1xf32> to vector<8x1xf32>
    %1243 = vector.broadcast %1242 : vector<8x1xf32> to vector<8x128xf32>
    %1244 = arith.mulf %1240, %1243 : vector<8x128xf32>
    %1245 = arith.addf %1235, %1244 : vector<8x128xf32>
    %c98_i32 = arith.constant 98 : i32
    %1246 = tpu.dynamic_rotate %1037 by %c98_i32 dim 1 : vector<8x128xf32>, i32 -> vector<8x128xf32>
    %c21_766 = arith.constant 21 : index
    %c0_767 = arith.constant 0 : index
    %c0_768 = arith.constant 0 : index
    %1247 = vector.load %arg5[%c21_766, %c0_767, %c0_768] : memref<25x1x128xf32, #tpu.memory_space<vmem>>, vector<1x1x128xf32>
    %1248 = vector.shape_cast %1247 : vector<1x1x128xf32> to vector<1x128xf32>
    %1249 = vector.broadcast %1248 : vector<1x128xf32> to vector<8x128xf32>
    %1250 = arith.mulf %1246, %1249 : vector<8x128xf32>
    %c21_769 = arith.constant 21 : index
    %c0_770 = arith.constant 0 : index
    %c0_771 = arith.constant 0 : index
    %1251 = vector.load %arg17[%c21_769, %c0_770, %c0_771] : memref<25x8x1xf32, #tpu.memory_space<vmem>>, vector<1x8x1xf32>
    %1252 = vector.shape_cast %1251 : vector<1x8x1xf32> to vector<8x1xf32>
    %1253 = vector.broadcast %1252 : vector<8x1xf32> to vector<8x128xf32>
    %1254 = arith.mulf %1250, %1253 : vector<8x128xf32>
    %1255 = arith.addf %1245, %1254 : vector<8x128xf32>
    %c96_i32 = arith.constant 96 : i32
    %1256 = tpu.dynamic_rotate %1037 by %c96_i32 dim 1 : vector<8x128xf32>, i32 -> vector<8x128xf32>
    %c22_772 = arith.constant 22 : index
    %c0_773 = arith.constant 0 : index
    %c0_774 = arith.constant 0 : index
    %1257 = vector.load %arg5[%c22_772, %c0_773, %c0_774] : memref<25x1x128xf32, #tpu.memory_space<vmem>>, vector<1x1x128xf32>
    %1258 = vector.shape_cast %1257 : vector<1x1x128xf32> to vector<1x128xf32>
    %1259 = vector.broadcast %1258 : vector<1x128xf32> to vector<8x128xf32>
    %1260 = arith.mulf %1256, %1259 : vector<8x128xf32>
    %c22_775 = arith.constant 22 : index
    %c0_776 = arith.constant 0 : index
    %c0_777 = arith.constant 0 : index
    %1261 = vector.load %arg17[%c22_775, %c0_776, %c0_777] : memref<25x8x1xf32, #tpu.memory_space<vmem>>, vector<1x8x1xf32>
    %1262 = vector.shape_cast %1261 : vector<1x8x1xf32> to vector<8x1xf32>
    %1263 = vector.broadcast %1262 : vector<8x1xf32> to vector<8x128xf32>
    %1264 = arith.mulf %1260, %1263 : vector<8x128xf32>
    %1265 = arith.addf %1255, %1264 : vector<8x128xf32>
    %c94_i32 = arith.constant 94 : i32
    %1266 = tpu.dynamic_rotate %1037 by %c94_i32 dim 1 : vector<8x128xf32>, i32 -> vector<8x128xf32>
    %c23_778 = arith.constant 23 : index
    %c0_779 = arith.constant 0 : index
    %c0_780 = arith.constant 0 : index
    %1267 = vector.load %arg5[%c23_778, %c0_779, %c0_780] : memref<25x1x128xf32, #tpu.memory_space<vmem>>, vector<1x1x128xf32>
    %1268 = vector.shape_cast %1267 : vector<1x1x128xf32> to vector<1x128xf32>
    %1269 = vector.broadcast %1268 : vector<1x128xf32> to vector<8x128xf32>
    %1270 = arith.mulf %1266, %1269 : vector<8x128xf32>
    %c23_781 = arith.constant 23 : index
    %c0_782 = arith.constant 0 : index
    %c0_783 = arith.constant 0 : index
    %1271 = vector.load %arg17[%c23_781, %c0_782, %c0_783] : memref<25x8x1xf32, #tpu.memory_space<vmem>>, vector<1x8x1xf32>
    %1272 = vector.shape_cast %1271 : vector<1x8x1xf32> to vector<8x1xf32>
    %1273 = vector.broadcast %1272 : vector<8x1xf32> to vector<8x128xf32>
    %1274 = arith.mulf %1270, %1273 : vector<8x128xf32>
    %1275 = arith.addf %1265, %1274 : vector<8x128xf32>
    %c92_i32 = arith.constant 92 : i32
    %1276 = tpu.dynamic_rotate %1037 by %c92_i32 dim 1 : vector<8x128xf32>, i32 -> vector<8x128xf32>
    %c24_784 = arith.constant 24 : index
    %c0_785 = arith.constant 0 : index
    %c0_786 = arith.constant 0 : index
    %1277 = vector.load %arg5[%c24_784, %c0_785, %c0_786] : memref<25x1x128xf32, #tpu.memory_space<vmem>>, vector<1x1x128xf32>
    %1278 = vector.shape_cast %1277 : vector<1x1x128xf32> to vector<1x128xf32>
    %1279 = vector.broadcast %1278 : vector<1x128xf32> to vector<8x128xf32>
    %1280 = arith.mulf %1276, %1279 : vector<8x128xf32>
    %c24_787 = arith.constant 24 : index
    %c0_788 = arith.constant 0 : index
    %c0_789 = arith.constant 0 : index
    %1281 = vector.load %arg17[%c24_787, %c0_788, %c0_789] : memref<25x8x1xf32, #tpu.memory_space<vmem>>, vector<1x8x1xf32>
    %1282 = vector.shape_cast %1281 : vector<1x8x1xf32> to vector<8x1xf32>
    %1283 = vector.broadcast %1282 : vector<8x1xf32> to vector<8x128xf32>
    %1284 = arith.mulf %1280, %1283 : vector<8x128xf32>
    %1285 = arith.addf %1275, %1284 : vector<8x128xf32>
    %c0_790 = arith.constant 0 : index
    %c0_791 = arith.constant 0 : index
    %1286 = vector.load %arg18[%c0_790, %c0_791] : memref<8x8xf32, #tpu.memory_space<vmem>>, vector<8x8xf32>
    %cst_792 = arith.constant dense<0.000000e+00> : vector<8x128xf32>
    %1287 = tpu.matmul %1286, %1285, %cst_792 {dimension_numbers = #tpu.dot_dimension_numbers<[1], [0], [0], [1], [0, 0, 1, 1], [], []>} : vector<8x8xf32>, vector<8x128xf32>, vector<8x128xf32> -> vector<8x128xf32>
    %cst_793 = arith.constant dense<0.000000e+00> : vector<8xf32>
    %1288 = vector.multi_reduction <add>, %1287, %cst_793 [1] : vector<8x128xf32> to vector<8xf32>
    %1289 = vector.shape_cast %1288 : vector<8xf32> to vector<8x1xf32>
    %cst_794 = arith.constant 1.280000e+02 : f32
    %1290 = vector.broadcast %cst_794 : f32 to vector<8x1xf32>
    %1291 = arith.divf %1289, %1290 : vector<8x1xf32>
    %1292 = vector.broadcast %1291 : vector<8x1xf32> to vector<8x128xf32>
    %1293 = arith.subf %1287, %1292 : vector<8x128xf32>
    %1294 = arith.mulf %1293, %1293 : vector<8x128xf32>
    %cst_795 = arith.constant dense<0.000000e+00> : vector<8xf32>
    %1295 = vector.multi_reduction <add>, %1294, %cst_795 [1] : vector<8x128xf32> to vector<8xf32>
    %1296 = vector.shape_cast %1295 : vector<8xf32> to vector<8x1xf32>
    %cst_796 = arith.constant 1.280000e+02 : f32
    %1297 = vector.broadcast %cst_796 : f32 to vector<8x1xf32>
    %1298 = arith.divf %1296, %1297 : vector<8x1xf32>
    %cst_797 = arith.constant 9.99999974E-6 : f32
    %1299 = vector.broadcast %cst_797 : f32 to vector<8x1xf32>
    %1300 = arith.addf %1298, %1299 : vector<8x1xf32>
    %1301 = math.rsqrt %1300 : vector<8x1xf32>
    %1302 = vector.broadcast %1301 : vector<8x1xf32> to vector<8x128xf32>
    %1303 = arith.mulf %1293, %1302 : vector<8x128xf32>
    %c1_798 = arith.constant 1 : index
    %1304 = memref.load %arg0[%c1_798] : memref<8xf32, #tpu.memory_space<smem>>
    %1305 = vector.broadcast %1304 : f32 to vector<8x128xf32>
    %1306 = arith.mulf %1305, %104 : vector<8x128xf32>
    %c2_799 = arith.constant 2 : index
    %1307 = memref.load %arg0[%c2_799] : memref<8xf32, #tpu.memory_space<smem>>
    %1308 = vector.broadcast %1307 : f32 to vector<8x128xf32>
    %1309 = arith.mulf %1308, %175 : vector<8x128xf32>
    %1310 = arith.addf %1306, %1309 : vector<8x128xf32>
    %c4_800 = arith.constant 4 : index
    %1311 = memref.load %arg0[%c4_800] : memref<8xf32, #tpu.memory_space<smem>>
    %1312 = vector.broadcast %1311 : f32 to vector<8x128xf32>
    %1313 = arith.mulf %1312, %391 : vector<8x128xf32>
    %1314 = arith.addf %1310, %1313 : vector<8x128xf32>
    %c5_801 = arith.constant 5 : index
    %1315 = memref.load %arg0[%c5_801] : memref<8xf32, #tpu.memory_space<smem>>
    %1316 = vector.broadcast %1315 : f32 to vector<8x128xf32>
    %1317 = arith.mulf %1316, %927 : vector<8x128xf32>
    %1318 = arith.addf %1314, %1317 : vector<8x128xf32>
    %c6_802 = arith.constant 6 : index
    %1319 = memref.load %arg0[%c6_802] : memref<8xf32, #tpu.memory_space<smem>>
    %1320 = vector.broadcast %1319 : f32 to vector<8x128xf32>
    %1321 = arith.mulf %1320, %1035 : vector<8x128xf32>
    %1322 = arith.addf %1318, %1321 : vector<8x128xf32>
    %c7_803 = arith.constant 7 : index
    %1323 = memref.load %arg0[%c7_803] : memref<8xf32, #tpu.memory_space<smem>>
    %1324 = vector.broadcast %1323 : f32 to vector<8x128xf32>
    %1325 = arith.mulf %1324, %1303 : vector<8x128xf32>
    %1326 = arith.addf %1322, %1325 : vector<8x128xf32>
    %c3_804 = arith.constant 3 : index
    %1327 = memref.load %arg0[%c3_804] : memref<8xf32, #tpu.memory_space<smem>>
    %1328 = vector.broadcast %1327 : f32 to vector<8x128xf32>
    %1329 = arith.mulf %1328, %0 : vector<8x128xf32>
    %1330 = arith.addf %1326, %1329 : vector<8x128xf32>
    %c0_805 = arith.constant 0 : index
    %c0_806 = arith.constant 0 : index
    %1331 = vector.load %arg19[%c0_805, %c0_806] : memref<8x128xf32, #tpu.memory_space<vmem>>, vector<8x128xf32>
    tpu.vector_store %arg19[%c0_805, %c0_806], %1330 {strides = array<i32>} : memref<8x128xf32, #tpu.memory_space<vmem>>, vector<8x128xf32>,
    return
  }
}

module attributes {stable_mosaic.version = 11 : i64} {
  func.func @_edge_kernel(%arg0: memref<8xf32, #tpu.memory_space<smem>>, %arg1: memref<8x128xf32, #tpu.memory_space<vmem>>, %arg2: memref<9x1x128xf32, #tpu.memory_space<vmem>>, %arg3: memref<25x1x128xf32, #tpu.memory_space<vmem>>, %arg4: memref<9x1x128xf32, #tpu.memory_space<vmem>>, %arg5: memref<25x1x128xf32, #tpu.memory_space<vmem>>, %arg6: memref<1x128xf32, #tpu.memory_space<vmem>>, %arg7: memref<9x8x1xf32, #tpu.memory_space<vmem>>, %arg8: memref<8x8xf32, #tpu.memory_space<vmem>>, %arg9: memref<9x8x1xf32, #tpu.memory_space<vmem>>, %arg10: memref<8x8xf32, #tpu.memory_space<vmem>>, %arg11: memref<25x8x1xf32, #tpu.memory_space<vmem>>, %arg12: memref<8x8xf32, #tpu.memory_space<vmem>>, %arg13: memref<25x8x1xf32, #tpu.memory_space<vmem>>, %arg14: memref<8x8xf32, #tpu.memory_space<vmem>>, %arg15: memref<9x8x1xf32, #tpu.memory_space<vmem>>, %arg16: memref<8x8xf32, #tpu.memory_space<vmem>>, %arg17: memref<25x8x1xf32, #tpu.memory_space<vmem>>, %arg18: memref<8x8xf32, #tpu.memory_space<vmem>>, %arg19: memref<8x128xf32, #tpu.memory_space<vmem>>) attributes {dimension_semantics = [], scalar_prefetch = 0 : i64, scratch_operands = 0 : i64, tpu.core_type = #tpu.core_type<tc>} {
    %c0 = arith.constant 0 : index
    %c0_0 = arith.constant 0 : index
    %0 = vector.load %arg1[%c0, %c0_0] : memref<8x128xf32, #tpu.memory_space<vmem>>, vector<8x128xf32>
    %c9_i32 = arith.constant 9 : i32
    %1 = tpu.dynamic_rotate %0 by %c9_i32 dim 1 : vector<8x128xf32>, i32 -> vector<8x128xf32>
    %c0_1 = arith.constant 0 : index
    %c0_2 = arith.constant 0 : index
    %c0_3 = arith.constant 0 : index
    %2 = vector.load %arg2[%c0_1, %c0_2, %c0_3] : memref<9x1x128xf32, #tpu.memory_space<vmem>>, vector<1x1x128xf32>
    %3 = vector.shape_cast %2 : vector<1x1x128xf32> to vector<1x128xf32>
    %cst = arith.constant 1.000000e+00 : f32
    %4 = vector.broadcast %cst : f32 to vector<1x128xf32>
    %5 = arith.subf %3, %4 : vector<1x128xf32>
    %cst_4 = arith.constant 1.000000e+30 : f32
    %6 = vector.broadcast %cst_4 : f32 to vector<1x128xf32>
    %7 = arith.mulf %5, %6 : vector<1x128xf32>
    %8 = vector.broadcast %7 : vector<1x128xf32> to vector<8x128xf32>
    %9 = arith.addf %1, %8 : vector<8x128xf32>
    %c8_i32 = arith.constant 8 : i32
    %10 = tpu.dynamic_rotate %0 by %c8_i32 dim 1 : vector<8x128xf32>, i32 -> vector<8x128xf32>
    %c1 = arith.constant 1 : index
    %c0_5 = arith.constant 0 : index
    %c0_6 = arith.constant 0 : index
    %11 = vector.load %arg2[%c1, %c0_5, %c0_6] : memref<9x1x128xf32, #tpu.memory_space<vmem>>, vector<1x1x128xf32>
    %12 = vector.shape_cast %11 : vector<1x1x128xf32> to vector<1x128xf32>
    %cst_7 = arith.constant 1.000000e+00 : f32
    %13 = vector.broadcast %cst_7 : f32 to vector<1x128xf32>
    %14 = arith.subf %12, %13 : vector<1x128xf32>
    %cst_8 = arith.constant 1.000000e+30 : f32
    %15 = vector.broadcast %cst_8 : f32 to vector<1x128xf32>
    %16 = arith.mulf %14, %15 : vector<1x128xf32>
    %17 = vector.broadcast %16 : vector<1x128xf32> to vector<8x128xf32>
    %18 = arith.addf %10, %17 : vector<8x128xf32>
    %19 = arith.maximumf %9, %18 : vector<8x128xf32>
    %c7_i32 = arith.constant 7 : i32
    %20 = tpu.dynamic_rotate %0 by %c7_i32 dim 1 : vector<8x128xf32>, i32 -> vector<8x128xf32>
    %c2 = arith.constant 2 : index
    %c0_9 = arith.constant 0 : index
    %c0_10 = arith.constant 0 : index
    %21 = vector.load %arg2[%c2, %c0_9, %c0_10] : memref<9x1x128xf32, #tpu.memory_space<vmem>>, vector<1x1x128xf32>
    %22 = vector.shape_cast %21 : vector<1x1x128xf32> to vector<1x128xf32>
    %cst_11 = arith.constant 1.000000e+00 : f32
    %23 = vector.broadcast %cst_11 : f32 to vector<1x128xf32>
    %24 = arith.subf %22, %23 : vector<1x128xf32>
    %cst_12 = arith.constant 1.000000e+30 : f32
    %25 = vector.broadcast %cst_12 : f32 to vector<1x128xf32>
    %26 = arith.mulf %24, %25 : vector<1x128xf32>
    %27 = vector.broadcast %26 : vector<1x128xf32> to vector<8x128xf32>
    %28 = arith.addf %20, %27 : vector<8x128xf32>
    %29 = arith.maximumf %19, %28 : vector<8x128xf32>
    %c1_i32 = arith.constant 1 : i32
    %30 = tpu.dynamic_rotate %0 by %c1_i32 dim 1 : vector<8x128xf32>, i32 -> vector<8x128xf32>
    %c3 = arith.constant 3 : index
    %c0_13 = arith.constant 0 : index
    %c0_14 = arith.constant 0 : index
    %31 = vector.load %arg2[%c3, %c0_13, %c0_14] : memref<9x1x128xf32, #tpu.memory_space<vmem>>, vector<1x1x128xf32>
    %32 = vector.shape_cast %31 : vector<1x1x128xf32> to vector<1x128xf32>
    %cst_15 = arith.constant 1.000000e+00 : f32
    %33 = vector.broadcast %cst_15 : f32 to vector<1x128xf32>
    %34 = arith.subf %32, %33 : vector<1x128xf32>
    %cst_16 = arith.constant 1.000000e+30 : f32
    %35 = vector.broadcast %cst_16 : f32 to vector<1x128xf32>
    %36 = arith.mulf %34, %35 : vector<1x128xf32>
    %37 = vector.broadcast %36 : vector<1x128xf32> to vector<8x128xf32>
    %38 = arith.addf %30, %37 : vector<8x128xf32>
    %39 = arith.maximumf %29, %38 : vector<8x128xf32>
    %c4 = arith.constant 4 : index
    %c0_17 = arith.constant 0 : index
    %c0_18 = arith.constant 0 : index
    %40 = vector.load %arg2[%c4, %c0_17, %c0_18] : memref<9x1x128xf32, #tpu.memory_space<vmem>>, vector<1x1x128xf32>
    %41 = vector.shape_cast %40 : vector<1x1x128xf32> to vector<1x128xf32>
    %cst_19 = arith.constant 1.000000e+00 : f32
    %42 = vector.broadcast %cst_19 : f32 to vector<1x128xf32>
    %43 = arith.subf %41, %42 : vector<1x128xf32>
    %cst_20 = arith.constant 1.000000e+30 : f32
    %44 = vector.broadcast %cst_20 : f32 to vector<1x128xf32>
    %45 = arith.mulf %43, %44 : vector<1x128xf32>
    %46 = vector.broadcast %45 : vector<1x128xf32> to vector<8x128xf32>
    %47 = arith.addf %0, %46 : vector<8x128xf32>
    %48 = arith.maximumf %39, %47 : vector<8x128xf32>
    %c127_i32 = arith.constant 127 : i32
    %49 = tpu.dynamic_rotate %0 by %c127_i32 dim 1 : vector<8x128xf32>, i32 -> vector<8x128xf32>
    %c5 = arith.constant 5 : index
    %c0_21 = arith.constant 0 : index
    %c0_22 = arith.constant 0 : index
    %50 = vector.load %arg2[%c5, %c0_21, %c0_22] : memref<9x1x128xf32, #tpu.memory_space<vmem>>, vector<1x1x128xf32>
    %51 = vector.shape_cast %50 : vector<1x1x128xf32> to vector<1x128xf32>
    %cst_23 = arith.constant 1.000000e+00 : f32
    %52 = vector.broadcast %cst_23 : f32 to vector<1x128xf32>
    %53 = arith.subf %51, %52 : vector<1x128xf32>
    %cst_24 = arith.constant 1.000000e+30 : f32
    %54 = vector.broadcast %cst_24 : f32 to vector<1x128xf32>
    %55 = arith.mulf %53, %54 : vector<1x128xf32>
    %56 = vector.broadcast %55 : vector<1x128xf32> to vector<8x128xf32>
    %57 = arith.addf %49, %56 : vector<8x128xf32>
    %58 = arith.maximumf %48, %57 : vector<8x128xf32>
    %c121_i32 = arith.constant 121 : i32
    %59 = tpu.dynamic_rotate %0 by %c121_i32 dim 1 : vector<8x128xf32>, i32 -> vector<8x128xf32>
    %c6 = arith.constant 6 : index
    %c0_25 = arith.constant 0 : index
    %c0_26 = arith.constant 0 : index
    %60 = vector.load %arg2[%c6, %c0_25, %c0_26] : memref<9x1x128xf32, #tpu.memory_space<vmem>>, vector<1x1x128xf32>
    %61 = vector.shape_cast %60 : vector<1x1x128xf32> to vector<1x128xf32>
    %cst_27 = arith.constant 1.000000e+00 : f32
    %62 = vector.broadcast %cst_27 : f32 to vector<1x128xf32>
    %63 = arith.subf %61, %62 : vector<1x128xf32>
    %cst_28 = arith.constant 1.000000e+30 : f32
    %64 = vector.broadcast %cst_28 : f32 to vector<1x128xf32>
    %65 = arith.mulf %63, %64 : vector<1x128xf32>
    %66 = vector.broadcast %65 : vector<1x128xf32> to vector<8x128xf32>
    %67 = arith.addf %59, %66 : vector<8x128xf32>
    %68 = arith.maximumf %58, %67 : vector<8x128xf32>
    %c120_i32 = arith.constant 120 : i32
    %69 = tpu.dynamic_rotate %0 by %c120_i32 dim 1 : vector<8x128xf32>, i32 -> vector<8x128xf32>
    %c7 = arith.constant 7 : index
    %c0_29 = arith.constant 0 : index
    %c0_30 = arith.constant 0 : index
    %70 = vector.load %arg2[%c7, %c0_29, %c0_30] : memref<9x1x128xf32, #tpu.memory_space<vmem>>, vector<1x1x128xf32>
    %71 = vector.shape_cast %70 : vector<1x1x128xf32> to vector<1x128xf32>
    %cst_31 = arith.constant 1.000000e+00 : f32
    %72 = vector.broadcast %cst_31 : f32 to vector<1x128xf32>
    %73 = arith.subf %71, %72 : vector<1x128xf32>
    %cst_32 = arith.constant 1.000000e+30 : f32
    %74 = vector.broadcast %cst_32 : f32 to vector<1x128xf32>
    %75 = arith.mulf %73, %74 : vector<1x128xf32>
    %76 = vector.broadcast %75 : vector<1x128xf32> to vector<8x128xf32>
    %77 = arith.addf %69, %76 : vector<8x128xf32>
    %78 = arith.maximumf %68, %77 : vector<8x128xf32>
    %c119_i32 = arith.constant 119 : i32
    %79 = tpu.dynamic_rotate %0 by %c119_i32 dim 1 : vector<8x128xf32>, i32 -> vector<8x128xf32>
    %c8 = arith.constant 8 : index
    %c0_33 = arith.constant 0 : index
    %c0_34 = arith.constant 0 : index
    %80 = vector.load %arg2[%c8, %c0_33, %c0_34] : memref<9x1x128xf32, #tpu.memory_space<vmem>>, vector<1x1x128xf32>
    %81 = vector.shape_cast %80 : vector<1x1x128xf32> to vector<1x128xf32>
    %cst_35 = arith.constant 1.000000e+00 : f32
    %82 = vector.broadcast %cst_35 : f32 to vector<1x128xf32>
    %83 = arith.subf %81, %82 : vector<1x128xf32>
    %cst_36 = arith.constant 1.000000e+30 : f32
    %84 = vector.broadcast %cst_36 : f32 to vector<1x128xf32>
    %85 = arith.mulf %83, %84 : vector<1x128xf32>
    %86 = vector.broadcast %85 : vector<1x128xf32> to vector<8x128xf32>
    %87 = arith.addf %79, %86 : vector<8x128xf32>
    %88 = arith.maximumf %78, %87 : vector<8x128xf32>
    %cst_37 = arith.constant dense<0.000000e+00> : vector<8xf32>
    %89 = vector.multi_reduction <add>, %88, %cst_37 [1] : vector<8x128xf32> to vector<8xf32>
    %90 = vector.shape_cast %89 : vector<8xf32> to vector<8x1xf32>
    %cst_38 = arith.constant 1.280000e+02 : f32
    %91 = vector.broadcast %cst_38 : f32 to vector<8x1xf32>
    %92 = arith.divf %90, %91 : vector<8x1xf32>
    %93 = vector.broadcast %92 : vector<8x1xf32> to vector<8x128xf32>
    %94 = arith.subf %88, %93 : vector<8x128xf32>
    %95 = arith.mulf %94, %94 : vector<8x128xf32>
    %cst_39 = arith.constant dense<0.000000e+00> : vector<8xf32>
    %96 = vector.multi_reduction <add>, %95, %cst_39 [1] : vector<8x128xf32> to vector<8xf32>
    %97 = vector.shape_cast %96 : vector<8xf32> to vector<8x1xf32>
    %cst_40 = arith.constant 1.280000e+02 : f32
    %98 = vector.broadcast %cst_40 : f32 to vector<8x1xf32>
    %99 = arith.divf %97, %98 : vector<8x1xf32>
    %cst_41 = arith.constant 9.99999974E-6 : f32
    %100 = vector.broadcast %cst_41 : f32 to vector<8x1xf32>
    %101 = arith.addf %99, %100 : vector<8x1xf32>
    %102 = math.rsqrt %101 : vector<8x1xf32>
    %103 = vector.broadcast %102 : vector<8x1xf32> to vector<8x128xf32>
    %104 = arith.mulf %94, %103 : vector<8x128xf32>
    %c9_i32_42 = arith.constant 9 : i32
    %105 = tpu.dynamic_rotate %0 by %c9_i32_42 dim 1 : vector<8x128xf32>, i32 -> vector<8x128xf32>
    %c0_43 = arith.constant 0 : index
    %c0_44 = arith.constant 0 : index
    %c0_45 = arith.constant 0 : index
    %106 = vector.load %arg2[%c0_43, %c0_44, %c0_45] : memref<9x1x128xf32, #tpu.memory_space<vmem>>, vector<1x1x128xf32>
    %107 = vector.shape_cast %106 : vector<1x1x128xf32> to vector<1x128xf32>
    %108 = vector.broadcast %107 : vector<1x128xf32> to vector<8x128xf32>
    %109 = arith.mulf %105, %108 : vector<8x128xf32>
    %c8_i32_46 = arith.constant 8 : i32
    %110 = tpu.dynamic_rotate %0 by %c8_i32_46 dim 1 : vector<8x128xf32>, i32 -> vector<8x128xf32>
    %c1_47 = arith.constant 1 : index
    %c0_48 = arith.constant 0 : index
    %c0_49 = arith.constant 0 : index
    %111 = vector.load %arg2[%c1_47, %c0_48, %c0_49] : memref<9x1x128xf32, #tpu.memory_space<vmem>>, vector<1x1x128xf32>
    %112 = vector.shape_cast %111 : vector<1x1x128xf32> to vector<1x128xf32>
    %113 = vector.broadcast %112 : vector<1x128xf32> to vector<8x128xf32>
    %114 = arith.mulf %110, %113 : vector<8x128xf32>
    %115 = arith.addf %109, %114 : vector<8x128xf32>
    %c7_i32_50 = arith.constant 7 : i32
    %116 = tpu.dynamic_rotate %0 by %c7_i32_50 dim 1 : vector<8x128xf32>, i32 -> vector<8x128xf32>
    %c2_51 = arith.constant 2 : index
    %c0_52 = arith.constant 0 : index
    %c0_53 = arith.constant 0 : index
    %117 = vector.load %arg2[%c2_51, %c0_52, %c0_53] : memref<9x1x128xf32, #tpu.memory_space<vmem>>, vector<1x1x128xf32>
    %118 = vector.shape_cast %117 : vector<1x1x128xf32> to vector<1x128xf32>
    %119 = vector.broadcast %118 : vector<1x128xf32> to vector<8x128xf32>
    %120 = arith.mulf %116, %119 : vector<8x128xf32>
    %121 = arith.addf %115, %120 : vector<8x128xf32>
    %c1_i32_54 = arith.constant 1 : i32
    %122 = tpu.dynamic_rotate %0 by %c1_i32_54 dim 1 : vector<8x128xf32>, i32 -> vector<8x128xf32>
    %c3_55 = arith.constant 3 : index
    %c0_56 = arith.constant 0 : index
    %c0_57 = arith.constant 0 : index
    %123 = vector.load %arg2[%c3_55, %c0_56, %c0_57] : memref<9x1x128xf32, #tpu.memory_space<vmem>>, vector<1x1x128xf32>
    %124 = vector.shape_cast %123 : vector<1x1x128xf32> to vector<1x128xf32>
    %125 = vector.broadcast %124 : vector<1x128xf32> to vector<8x128xf32>
    %126 = arith.mulf %122, %125 : vector<8x128xf32>
    %127 = arith.addf %121, %126 : vector<8x128xf32>
    %c4_58 = arith.constant 4 : index
    %c0_59 = arith.constant 0 : index
    %c0_60 = arith.constant 0 : index
    %128 = vector.load %arg2[%c4_58, %c0_59, %c0_60] : memref<9x1x128xf32, #tpu.memory_space<vmem>>, vector<1x1x128xf32>
    %129 = vector.shape_cast %128 : vector<1x1x128xf32> to vector<1x128xf32>
    %130 = vector.broadcast %129 : vector<1x128xf32> to vector<8x128xf32>
    %131 = arith.mulf %0, %130 : vector<8x128xf32>
    %132 = arith.addf %127, %131 : vector<8x128xf32>
    %c127_i32_61 = arith.constant 127 : i32
    %133 = tpu.dynamic_rotate %0 by %c127_i32_61 dim 1 : vector<8x128xf32>, i32 -> vector<8x128xf32>
    %c5_62 = arith.constant 5 : index
    %c0_63 = arith.constant 0 : index
    %c0_64 = arith.constant 0 : index
    %134 = vector.load %arg2[%c5_62, %c0_63, %c0_64] : memref<9x1x128xf32, #tpu.memory_space<vmem>>, vector<1x1x128xf32>
    %135 = vector.shape_cast %134 : vector<1x1x128xf32> to vector<1x128xf32>
    %136 = vector.broadcast %135 : vector<1x128xf32> to vector<8x128xf32>
    %137 = arith.mulf %133, %136 : vector<8x128xf32>
    %138 = arith.addf %132, %137 : vector<8x128xf32>
    %c121_i32_65 = arith.constant 121 : i32
    %139 = tpu.dynamic_rotate %0 by %c121_i32_65 dim 1 : vector<8x128xf32>, i32 -> vector<8x128xf32>
    %c6_66 = arith.constant 6 : index
    %c0_67 = arith.constant 0 : index
    %c0_68 = arith.constant 0 : index
    %140 = vector.load %arg2[%c6_66, %c0_67, %c0_68] : memref<9x1x128xf32, #tpu.memory_space<vmem>>, vector<1x1x128xf32>
    %141 = vector.shape_cast %140 : vector<1x1x128xf32> to vector<1x128xf32>
    %142 = vector.broadcast %141 : vector<1x128xf32> to vector<8x128xf32>
    %143 = arith.mulf %139, %142 : vector<8x128xf32>
    %144 = arith.addf %138, %143 : vector<8x128xf32>
    %c120_i32_69 = arith.constant 120 : i32
    %145 = tpu.dynamic_rotate %0 by %c120_i32_69 dim 1 : vector<8x128xf32>, i32 -> vector<8x128xf32>
    %c7_70 = arith.constant 7 : index
    %c0_71 = arith.constant 0 : index
    %c0_72 = arith.constant 0 : index
    %146 = vector.load %arg2[%c7_70, %c0_71, %c0_72] : memref<9x1x128xf32, #tpu.memory_space<vmem>>, vector<1x1x128xf32>
    %147 = vector.shape_cast %146 : vector<1x1x128xf32> to vector<1x128xf32>
    %148 = vector.broadcast %147 : vector<1x128xf32> to vector<8x128xf32>
    %149 = arith.mulf %145, %148 : vector<8x128xf32>
    %150 = arith.addf %144, %149 : vector<8x128xf32>
    %c119_i32_73 = arith.constant 119 : i32
    %151 = tpu.dynamic_rotate %0 by %c119_i32_73 dim 1 : vector<8x128xf32>, i32 -> vector<8x128xf32>
    %c8_74 = arith.constant 8 : index
    %c0_75 = arith.constant 0 : index
    %c0_76 = arith.constant 0 : index
    %152 = vector.load %arg2[%c8_74, %c0_75, %c0_76] : memref<9x1x128xf32, #tpu.memory_space<vmem>>, vector<1x1x128xf32>
    %153 = vector.shape_cast %152 : vector<1x1x128xf32> to vector<1x128xf32>
    %154 = vector.broadcast %153 : vector<1x128xf32> to vector<8x128xf32>
    %155 = arith.mulf %151, %154 : vector<8x128xf32>
    %156 = arith.addf %150, %155 : vector<8x128xf32>
    %c0_77 = arith.constant 0 : index
    %c0_78 = arith.constant 0 : index
    %157 = vector.load %arg6[%c0_77, %c0_78] : memref<1x128xf32, #tpu.memory_space<vmem>>, vector<1x128xf32>
    %158 = vector.broadcast %157 : vector<1x128xf32> to vector<8x128xf32>
    %159 = arith.mulf %156, %158 : vector<8x128xf32>
    %cst_79 = arith.constant dense<0.000000e+00> : vector<8xf32>
    %160 = vector.multi_reduction <add>, %159, %cst_79 [1] : vector<8x128xf32> to vector<8xf32>
    %161 = vector.shape_cast %160 : vector<8xf32> to vector<8x1xf32>
    %cst_80 = arith.constant 1.280000e+02 : f32
    %162 = vector.broadcast %cst_80 : f32 to vector<8x1xf32>
    %163 = arith.divf %161, %162 : vector<8x1xf32>
    %164 = vector.broadcast %163 : vector<8x1xf32> to vector<8x128xf32>
    %165 = arith.subf %159, %164 : vector<8x128xf32>
    %166 = arith.mulf %165, %165 : vector<8x128xf32>
    %cst_81 = arith.constant dense<0.000000e+00> : vector<8xf32>
    %167 = vector.multi_reduction <add>, %166, %cst_81 [1] : vector<8x128xf32> to vector<8xf32>
    %168 = vector.shape_cast %167 : vector<8xf32> to vector<8x1xf32>
    %cst_82 = arith.constant 1.280000e+02 : f32
    %169 = vector.broadcast %cst_82 : f32 to vector<8x1xf32>
    %170 = arith.divf %168, %169 : vector<8x1xf32>
    %cst_83 = arith.constant 9.99999974E-6 : f32
    %171 = vector.broadcast %cst_83 : f32 to vector<8x1xf32>
    %172 = arith.addf %170, %171 : vector<8x1xf32>
    %173 = math.rsqrt %172 : vector<8x1xf32>
    %174 = vector.broadcast %173 : vector<8x1xf32> to vector<8x128xf32>
    %175 = arith.mulf %165, %174 : vector<8x128xf32>
    %cst_84 = arith.constant 0.000000e+00 : f32
    %176 = vector.broadcast %cst_84 : f32 to vector<8x128xf32>
    %177 = arith.maximumf %0, %176 : vector<8x128xf32>
    %c9_i32_85 = arith.constant 9 : i32
    %178 = tpu.dynamic_rotate %177 by %c9_i32_85 dim 1 : vector<8x128xf32>, i32 -> vector<8x128xf32>
    %c0_86 = arith.constant 0 : index
    %c0_87 = arith.constant 0 : index
    %c0_88 = arith.constant 0 : index
    %179 = vector.load %arg2[%c0_86, %c0_87, %c0_88] : memref<9x1x128xf32, #tpu.memory_space<vmem>>, vector<1x1x128xf32>
    %180 = vector.shape_cast %179 : vector<1x1x128xf32> to vector<1x128xf32>
    %181 = vector.broadcast %180 : vector<1x128xf32> to vector<8x128xf32>
    %182 = arith.mulf %178, %181 : vector<8x128xf32>
    %c0_89 = arith.constant 0 : index
    %c0_90 = arith.constant 0 : index
    %c0_91 = arith.constant 0 : index
    %183 = vector.load %arg7[%c0_89, %c0_90, %c0_91] : memref<9x8x1xf32, #tpu.memory_space<vmem>>, vector<1x8x1xf32>
    %184 = vector.shape_cast %183 : vector<1x8x1xf32> to vector<8x1xf32>
    %185 = vector.broadcast %184 : vector<8x1xf32> to vector<8x128xf32>
    %186 = arith.mulf %182, %185 : vector<8x128xf32>
    %c8_i32_92 = arith.constant 8 : i32
    %187 = tpu.dynamic_rotate %177 by %c8_i32_92 dim 1 : vector<8x128xf32>, i32 -> vector<8x128xf32>
    %c1_93 = arith.constant 1 : index
    %c0_94 = arith.constant 0 : index
    %c0_95 = arith.constant 0 : index
    %188 = vector.load %arg2[%c1_93, %c0_94, %c0_95] : memref<9x1x128xf32, #tpu.memory_space<vmem>>, vector<1x1x128xf32>
    %189 = vector.shape_cast %188 : vector<1x1x128xf32> to vector<1x128xf32>
    %190 = vector.broadcast %189 : vector<1x128xf32> to vector<8x128xf32>
    %191 = arith.mulf %187, %190 : vector<8x128xf32>
    %c1_96 = arith.constant 1 : index
    %c0_97 = arith.constant 0 : index
    %c0_98 = arith.constant 0 : index
    %192 = vector.load %arg7[%c1_96, %c0_97, %c0_98] : memref<9x8x1xf32, #tpu.memory_space<vmem>>, vector<1x8x1xf32>
    %193 = vector.shape_cast %192 : vector<1x8x1xf32> to vector<8x1xf32>
    %194 = vector.broadcast %193 : vector<8x1xf32> to vector<8x128xf32>
    %195 = arith.mulf %191, %194 : vector<8x128xf32>
    %196 = arith.addf %186, %195 : vector<8x128xf32>
    %c7_i32_99 = arith.constant 7 : i32
    %197 = tpu.dynamic_rotate %177 by %c7_i32_99 dim 1 : vector<8x128xf32>, i32 -> vector<8x128xf32>
    %c2_100 = arith.constant 2 : index
    %c0_101 = arith.constant 0 : index
    %c0_102 = arith.constant 0 : index
    %198 = vector.load %arg2[%c2_100, %c0_101, %c0_102] : memref<9x1x128xf32, #tpu.memory_space<vmem>>, vector<1x1x128xf32>
    %199 = vector.shape_cast %198 : vector<1x1x128xf32> to vector<1x128xf32>
    %200 = vector.broadcast %199 : vector<1x128xf32> to vector<8x128xf32>
    %201 = arith.mulf %197, %200 : vector<8x128xf32>
    %c2_103 = arith.constant 2 : index
    %c0_104 = arith.constant 0 : index
    %c0_105 = arith.constant 0 : index
    %202 = vector.load %arg7[%c2_103, %c0_104, %c0_105] : memref<9x8x1xf32, #tpu.memory_space<vmem>>, vector<1x8x1xf32>
    %203 = vector.shape_cast %202 : vector<1x8x1xf32> to vector<8x1xf32>
    %204 = vector.broadcast %203 : vector<8x1xf32> to vector<8x128xf32>
    %205 = arith.mulf %201, %204 : vector<8x128xf32>
    %206 = arith.addf %196, %205 : vector<8x128xf32>
    %c1_i32_106 = arith.constant 1 : i32
    %207 = tpu.dynamic_rotate %177 by %c1_i32_106 dim 1 : vector<8x128xf32>, i32 -> vector<8x128xf32>
    %c3_107 = arith.constant 3 : index
    %c0_108 = arith.constant 0 : index
    %c0_109 = arith.constant 0 : index
    %208 = vector.load %arg2[%c3_107, %c0_108, %c0_109] : memref<9x1x128xf32, #tpu.memory_space<vmem>>, vector<1x1x128xf32>
    %209 = vector.shape_cast %208 : vector<1x1x128xf32> to vector<1x128xf32>
    %210 = vector.broadcast %209 : vector<1x128xf32> to vector<8x128xf32>
    %211 = arith.mulf %207, %210 : vector<8x128xf32>
    %c3_110 = arith.constant 3 : index
    %c0_111 = arith.constant 0 : index
    %c0_112 = arith.constant 0 : index
    %212 = vector.load %arg7[%c3_110, %c0_111, %c0_112] : memref<9x8x1xf32, #tpu.memory_space<vmem>>, vector<1x8x1xf32>
    %213 = vector.shape_cast %212 : vector<1x8x1xf32> to vector<8x1xf32>
    %214 = vector.broadcast %213 : vector<8x1xf32> to vector<8x128xf32>
    %215 = arith.mulf %211, %214 : vector<8x128xf32>
    %216 = arith.addf %206, %215 : vector<8x128xf32>
    %c4_113 = arith.constant 4 : index
    %c0_114 = arith.constant 0 : index
    %c0_115 = arith.constant 0 : index
    %217 = vector.load %arg2[%c4_113, %c0_114, %c0_115] : memref<9x1x128xf32, #tpu.memory_space<vmem>>, vector<1x1x128xf32>
    %218 = vector.shape_cast %217 : vector<1x1x128xf32> to vector<1x128xf32>
    %219 = vector.broadcast %218 : vector<1x128xf32> to vector<8x128xf32>
    %220 = arith.mulf %177, %219 : vector<8x128xf32>
    %c4_116 = arith.constant 4 : index
    %c0_117 = arith.constant 0 : index
    %c0_118 = arith.constant 0 : index
    %221 = vector.load %arg7[%c4_116, %c0_117, %c0_118] : memref<9x8x1xf32, #tpu.memory_space<vmem>>, vector<1x8x1xf32>
    %222 = vector.shape_cast %221 : vector<1x8x1xf32> to vector<8x1xf32>
    %223 = vector.broadcast %222 : vector<8x1xf32> to vector<8x128xf32>
    %224 = arith.mulf %220, %223 : vector<8x128xf32>
    %225 = arith.addf %216, %224 : vector<8x128xf32>
    %c127_i32_119 = arith.constant 127 : i32
    %226 = tpu.dynamic_rotate %177 by %c127_i32_119 dim 1 : vector<8x128xf32>, i32 -> vector<8x128xf32>
    %c5_120 = arith.constant 5 : index
    %c0_121 = arith.constant 0 : index
    %c0_122 = arith.constant 0 : index
    %227 = vector.load %arg2[%c5_120, %c0_121, %c0_122] : memref<9x1x128xf32, #tpu.memory_space<vmem>>, vector<1x1x128xf32>
    %228 = vector.shape_cast %227 : vector<1x1x128xf32> to vector<1x128xf32>
    %229 = vector.broadcast %228 : vector<1x128xf32> to vector<8x128xf32>
    %230 = arith.mulf %226, %229 : vector<8x128xf32>
    %c5_123 = arith.constant 5 : index
    %c0_124 = arith.constant 0 : index
    %c0_125 = arith.constant 0 : index
    %231 = vector.load %arg7[%c5_123, %c0_124, %c0_125] : memref<9x8x1xf32, #tpu.memory_space<vmem>>, vector<1x8x1xf32>
    %232 = vector.shape_cast %231 : vector<1x8x1xf32> to vector<8x1xf32>
    %233 = vector.broadcast %232 : vector<8x1xf32> to vector<8x128xf32>
    %234 = arith.mulf %230, %233 : vector<8x128xf32>
    %235 = arith.addf %225, %234 : vector<8x128xf32>
    %c121_i32_126 = arith.constant 121 : i32
    %236 = tpu.dynamic_rotate %177 by %c121_i32_126 dim 1 : vector<8x128xf32>, i32 -> vector<8x128xf32>
    %c6_127 = arith.constant 6 : index
    %c0_128 = arith.constant 0 : index
    %c0_129 = arith.constant 0 : index
    %237 = vector.load %arg2[%c6_127, %c0_128, %c0_129] : memref<9x1x128xf32, #tpu.memory_space<vmem>>, vector<1x1x128xf32>
    %238 = vector.shape_cast %237 : vector<1x1x128xf32> to vector<1x128xf32>
    %239 = vector.broadcast %238 : vector<1x128xf32> to vector<8x128xf32>
    %240 = arith.mulf %236, %239 : vector<8x128xf32>
    %c6_130 = arith.constant 6 : index
    %c0_131 = arith.constant 0 : index
    %c0_132 = arith.constant 0 : index
    %241 = vector.load %arg7[%c6_130, %c0_131, %c0_132] : memref<9x8x1xf32, #tpu.memory_space<vmem>>, vector<1x8x1xf32>
    %242 = vector.shape_cast %241 : vector<1x8x1xf32> to vector<8x1xf32>
    %243 = vector.broadcast %242 : vector<8x1xf32> to vector<8x128xf32>
    %244 = arith.mulf %240, %243 : vector<8x128xf32>
    %245 = arith.addf %235, %244 : vector<8x128xf32>
    %c120_i32_133 = arith.constant 120 : i32
    %246 = tpu.dynamic_rotate %177 by %c120_i32_133 dim 1 : vector<8x128xf32>, i32 -> vector<8x128xf32>
    %c7_134 = arith.constant 7 : index
    %c0_135 = arith.constant 0 : index
    %c0_136 = arith.constant 0 : index
    %247 = vector.load %arg2[%c7_134, %c0_135, %c0_136] : memref<9x1x128xf32, #tpu.memory_space<vmem>>, vector<1x1x128xf32>
    %248 = vector.shape_cast %247 : vector<1x1x128xf32> to vector<1x128xf32>
    %249 = vector.broadcast %248 : vector<1x128xf32> to vector<8x128xf32>
    %250 = arith.mulf %246, %249 : vector<8x128xf32>
    %c7_137 = arith.constant 7 : index
    %c0_138 = arith.constant 0 : index
    %c0_139 = arith.constant 0 : index
    %251 = vector.load %arg7[%c7_137, %c0_138, %c0_139] : memref<9x8x1xf32, #tpu.memory_space<vmem>>, vector<1x8x1xf32>
    %252 = vector.shape_cast %251 : vector<1x8x1xf32> to vector<8x1xf32>
    %253 = vector.broadcast %252 : vector<8x1xf32> to vector<8x128xf32>
    %254 = arith.mulf %250, %253 : vector<8x128xf32>
    %255 = arith.addf %245, %254 : vector<8x128xf32>
    %c119_i32_140 = arith.constant 119 : i32
    %256 = tpu.dynamic_rotate %177 by %c119_i32_140 dim 1 : vector<8x128xf32>, i32 -> vector<8x128xf32>
    %c8_141 = arith.constant 8 : index
    %c0_142 = arith.constant 0 : index
    %c0_143 = arith.constant 0 : index
    %257 = vector.load %arg2[%c8_141, %c0_142, %c0_143] : memref<9x1x128xf32, #tpu.memory_space<vmem>>, vector<1x1x128xf32>
    %258 = vector.shape_cast %257 : vector<1x1x128xf32> to vector<1x128xf32>
    %259 = vector.broadcast %258 : vector<1x128xf32> to vector<8x128xf32>
    %260 = arith.mulf %256, %259 : vector<8x128xf32>
    %c8_144 = arith.constant 8 : index
    %c0_145 = arith.constant 0 : index
    %c0_146 = arith.constant 0 : index
    %261 = vector.load %arg7[%c8_144, %c0_145, %c0_146] : memref<9x8x1xf32, #tpu.memory_space<vmem>>, vector<1x8x1xf32>
    %262 = vector.shape_cast %261 : vector<1x8x1xf32> to vector<8x1xf32>
    %263 = vector.broadcast %262 : vector<8x1xf32> to vector<8x128xf32>
    %264 = arith.mulf %260, %263 : vector<8x128xf32>
    %265 = arith.addf %255, %264 : vector<8x128xf32>
    %c0_147 = arith.constant 0 : index
    %c0_148 = arith.constant 0 : index
    %266 = vector.load %arg8[%c0_147, %c0_148] : memref<8x8xf32, #tpu.memory_space<vmem>>, vector<8x8xf32>
    %cst_149 = arith.constant dense<0.000000e+00> : vector<8x128xf32>
    %267 = tpu.matmul %266, %265, %cst_149 {dimension_numbers = #tpu.dot_dimension_numbers<[1], [0], [0], [1], [0, 0, 1, 1], [], []>} : vector<8x8xf32>, vector<8x128xf32>, vector<8x128xf32> -> vector<8x128xf32>
    %cst_150 = arith.constant dense<0.000000e+00> : vector<8xf32>
    %268 = vector.multi_reduction <add>, %267, %cst_150 [1] : vector<8x128xf32> to vector<8xf32>
    %269 = vector.shape_cast %268 : vector<8xf32> to vector<8x1xf32>
    %cst_151 = arith.constant 1.280000e+02 : f32
    %270 = vector.broadcast %cst_151 : f32 to vector<8x1xf32>
    %271 = arith.divf %269, %270 : vector<8x1xf32>
    %272 = vector.broadcast %271 : vector<8x1xf32> to vector<8x128xf32>
    %273 = arith.subf %267, %272 : vector<8x128xf32>
    %274 = arith.mulf %273, %273 : vector<8x128xf32>
    %cst_152 = arith.constant dense<0.000000e+00> : vector<8xf32>
    %275 = vector.multi_reduction <add>, %274, %cst_152 [1] : vector<8x128xf32> to vector<8xf32>
    %276 = vector.shape_cast %275 : vector<8xf32> to vector<8x1xf32>
    %cst_153 = arith.constant 1.280000e+02 : f32
    %277 = vector.broadcast %cst_153 : f32 to vector<8x1xf32>
    %278 = arith.divf %276, %277 : vector<8x1xf32>
    %cst_154 = arith.constant 9.99999974E-6 : f32
    %279 = vector.broadcast %cst_154 : f32 to vector<8x1xf32>
    %280 = arith.addf %278, %279 : vector<8x1xf32>
    %281 = math.rsqrt %280 : vector<8x1xf32>
    %282 = vector.broadcast %281 : vector<8x1xf32> to vector<8x128xf32>
    %283 = arith.mulf %273, %282 : vector<8x128xf32>
    %cst_155 = arith.constant 0.000000e+00 : f32
    %284 = vector.broadcast %cst_155 : f32 to vector<8x128xf32>
    %285 = arith.maximumf %283, %284 : vector<8x128xf32>
    %c9_i32_156 = arith.constant 9 : i32
    %286 = tpu.dynamic_rotate %285 by %c9_i32_156 dim 1 : vector<8x128xf32>, i32 -> vector<8x128xf32>
    %c0_157 = arith.constant 0 : index
    %c0_158 = arith.constant 0 : index
    %c0_159 = arith.constant 0 : index
    %287 = vector.load %arg2[%c0_157, %c0_158, %c0_159] : memref<9x1x128xf32, #tpu.memory_space<vmem>>, vector<1x1x128xf32>
    %288 = vector.shape_cast %287 : vector<1x1x128xf32> to vector<1x128xf32>
    %289 = vector.broadcast %288 : vector<1x128xf32> to vector<8x128xf32>
    %290 = arith.mulf %286, %289 : vector<8x128xf32>
    %c0_160 = arith.constant 0 : index
    %c0_161 = arith.constant 0 : index
    %c0_162 = arith.constant 0 : index
    %291 = vector.load %arg9[%c0_160, %c0_161, %c0_162] : memref<9x8x1xf32, #tpu.memory_space<vmem>>, vector<1x8x1xf32>
    %292 = vector.shape_cast %291 : vector<1x8x1xf32> to vector<8x1xf32>
    %293 = vector.broadcast %292 : vector<8x1xf32> to vector<8x128xf32>
    %294 = arith.mulf %290, %293 : vector<8x128xf32>
    %c8_i32_163 = arith.constant 8 : i32
    %295 = tpu.dynamic_rotate %285 by %c8_i32_163 dim 1 : vector<8x128xf32>, i32 -> vector<8x128xf32>
    %c1_164 = arith.constant 1 : index
    %c0_165 = arith.constant 0 : index
    %c0_166 = arith.constant 0 : index
    %296 = vector.load %arg2[%c1_164, %c0_165, %c0_166] : memref<9x1x128xf32, #tpu.memory_space<vmem>>, vector<1x1x128xf32>
    %297 = vector.shape_cast %296 : vector<1x1x128xf32> to vector<1x128xf32>
    %298 = vector.broadcast %297 : vector<1x128xf32> to vector<8x128xf32>
    %299 = arith.mulf %295, %298 : vector<8x128xf32>
    %c1_167 = arith.constant 1 : index
    %c0_168 = arith.constant 0 : index
    %c0_169 = arith.constant 0 : index
    %300 = vector.load %arg9[%c1_167, %c0_168, %c0_169] : memref<9x8x1xf32, #tpu.memory_space<vmem>>, vector<1x8x1xf32>
    %301 = vector.shape_cast %300 : vector<1x8x1xf32> to vector<8x1xf32>
    %302 = vector.broadcast %301 : vector<8x1xf32> to vector<8x128xf32>
    %303 = arith.mulf %299, %302 : vector<8x128xf32>
    %304 = arith.addf %294, %303 : vector<8x128xf32>
    %c7_i32_170 = arith.constant 7 : i32
    %305 = tpu.dynamic_rotate %285 by %c7_i32_170 dim 1 : vector<8x128xf32>, i32 -> vector<8x128xf32>
    %c2_171 = arith.constant 2 : index
    %c0_172 = arith.constant 0 : index
    %c0_173 = arith.constant 0 : index
    %306 = vector.load %arg2[%c2_171, %c0_172, %c0_173] : memref<9x1x128xf32, #tpu.memory_space<vmem>>, vector<1x1x128xf32>
    %307 = vector.shape_cast %306 : vector<1x1x128xf32> to vector<1x128xf32>
    %308 = vector.broadcast %307 : vector<1x128xf32> to vector<8x128xf32>
    %309 = arith.mulf %305, %308 : vector<8x128xf32>
    %c2_174 = arith.constant 2 : index
    %c0_175 = arith.constant 0 : index
    %c0_176 = arith.constant 0 : index
    %310 = vector.load %arg9[%c2_174, %c0_175, %c0_176] : memref<9x8x1xf32, #tpu.memory_space<vmem>>, vector<1x8x1xf32>
    %311 = vector.shape_cast %310 : vector<1x8x1xf32> to vector<8x1xf32>
    %312 = vector.broadcast %311 : vector<8x1xf32> to vector<8x128xf32>
    %313 = arith.mulf %309, %312 : vector<8x128xf32>
    %314 = arith.addf %304, %313 : vector<8x128xf32>
    %c1_i32_177 = arith.constant 1 : i32
    %315 = tpu.dynamic_rotate %285 by %c1_i32_177 dim 1 : vector<8x128xf32>, i32 -> vector<8x128xf32>
    %c3_178 = arith.constant 3 : index
    %c0_179 = arith.constant 0 : index
    %c0_180 = arith.constant 0 : index
    %316 = vector.load %arg2[%c3_178, %c0_179, %c0_180] : memref<9x1x128xf32, #tpu.memory_space<vmem>>, vector<1x1x128xf32>
    %317 = vector.shape_cast %316 : vector<1x1x128xf32> to vector<1x128xf32>
    %318 = vector.broadcast %317 : vector<1x128xf32> to vector<8x128xf32>
    %319 = arith.mulf %315, %318 : vector<8x128xf32>
    %c3_181 = arith.constant 3 : index
    %c0_182 = arith.constant 0 : index
    %c0_183 = arith.constant 0 : index
    %320 = vector.load %arg9[%c3_181, %c0_182, %c0_183] : memref<9x8x1xf32, #tpu.memory_space<vmem>>, vector<1x8x1xf32>
    %321 = vector.shape_cast %320 : vector<1x8x1xf32> to vector<8x1xf32>
    %322 = vector.broadcast %321 : vector<8x1xf32> to vector<8x128xf32>
    %323 = arith.mulf %319, %322 : vector<8x128xf32>
    %324 = arith.addf %314, %323 : vector<8x128xf32>
    %c4_184 = arith.constant 4 : index
    %c0_185 = arith.constant 0 : index
    %c0_186 = arith.constant 0 : index
    %325 = vector.load %arg2[%c4_184, %c0_185, %c0_186] : memref<9x1x128xf32, #tpu.memory_space<vmem>>, vector<1x1x128xf32>
    %326 = vector.shape_cast %325 : vector<1x1x128xf32> to vector<1x128xf32>
    %327 = vector.broadcast %326 : vector<1x128xf32> to vector<8x128xf32>
    %328 = arith.mulf %285, %327 : vector<8x128xf32>
    %c4_187 = arith.constant 4 : index
    %c0_188 = arith.constant 0 : index
    %c0_189 = arith.constant 0 : index
    %329 = vector.load %arg9[%c4_187, %c0_188, %c0_189] : memref<9x8x1xf32, #tpu.memory_space<vmem>>, vector<1x8x1xf32>
    %330 = vector.shape_cast %329 : vector<1x8x1xf32> to vector<8x1xf32>
    %331 = vector.broadcast %330 : vector<8x1xf32> to vector<8x128xf32>
    %332 = arith.mulf %328, %331 : vector<8x128xf32>
    %333 = arith.addf %324, %332 : vector<8x128xf32>
    %c127_i32_190 = arith.constant 127 : i32
    %334 = tpu.dynamic_rotate %285 by %c127_i32_190 dim 1 : vector<8x128xf32>, i32 -> vector<8x128xf32>
    %c5_191 = arith.constant 5 : index
    %c0_192 = arith.constant 0 : index
    %c0_193 = arith.constant 0 : index
    %335 = vector.load %arg2[%c5_191, %c0_192, %c0_193] : memref<9x1x128xf32, #tpu.memory_space<vmem>>, vector<1x1x128xf32>
    %336 = vector.shape_cast %335 : vector<1x1x128xf32> to vector<1x128xf32>
    %337 = vector.broadcast %336 : vector<1x128xf32> to vector<8x128xf32>
    %338 = arith.mulf %334, %337 : vector<8x128xf32>
    %c5_194 = arith.constant 5 : index
    %c0_195 = arith.constant 0 : index
    %c0_196 = arith.constant 0 : index
    %339 = vector.load %arg9[%c5_194, %c0_195, %c0_196] : memref<9x8x1xf32, #tpu.memory_space<vmem>>, vector<1x8x1xf32>
    %340 = vector.shape_cast %339 : vector<1x8x1xf32> to vector<8x1xf32>
    %341 = vector.broadcast %340 : vector<8x1xf32> to vector<8x128xf32>
    %342 = arith.mulf %338, %341 : vector<8x128xf32>
    %343 = arith.addf %333, %342 : vector<8x128xf32>
    %c121_i32_197 = arith.constant 121 : i32
    %344 = tpu.dynamic_rotate %285 by %c121_i32_197 dim 1 : vector<8x128xf32>, i32 -> vector<8x128xf32>
    %c6_198 = arith.constant 6 : index
    %c0_199 = arith.constant 0 : index
    %c0_200 = arith.constant 0 : index
    %345 = vector.load %arg2[%c6_198, %c0_199, %c0_200] : memref<9x1x128xf32, #tpu.memory_space<vmem>>, vector<1x1x128xf32>
    %346 = vector.shape_cast %345 : vector<1x1x128xf32> to vector<1x128xf32>
    %347 = vector.broadcast %346 : vector<1x128xf32> to vector<8x128xf32>
    %348 = arith.mulf %344, %347 : vector<8x128xf32>
    %c6_201 = arith.constant 6 : index
    %c0_202 = arith.constant 0 : index
    %c0_203 = arith.constant 0 : index
    %349 = vector.load %arg9[%c6_201, %c0_202, %c0_203] : memref<9x8x1xf32, #tpu.memory_space<vmem>>, vector<1x8x1xf32>
    %350 = vector.shape_cast %349 : vector<1x8x1xf32> to vector<8x1xf32>
    %351 = vector.broadcast %350 : vector<8x1xf32> to vector<8x128xf32>
    %352 = arith.mulf %348, %351 : vector<8x128xf32>
    %353 = arith.addf %343, %352 : vector<8x128xf32>
    %c120_i32_204 = arith.constant 120 : i32
    %354 = tpu.dynamic_rotate %285 by %c120_i32_204 dim 1 : vector<8x128xf32>, i32 -> vector<8x128xf32>
    %c7_205 = arith.constant 7 : index
    %c0_206 = arith.constant 0 : index
    %c0_207 = arith.constant 0 : index
    %355 = vector.load %arg2[%c7_205, %c0_206, %c0_207] : memref<9x1x128xf32, #tpu.memory_space<vmem>>, vector<1x1x128xf32>
    %356 = vector.shape_cast %355 : vector<1x1x128xf32> to vector<1x128xf32>
    %357 = vector.broadcast %356 : vector<1x128xf32> to vector<8x128xf32>
    %358 = arith.mulf %354, %357 : vector<8x128xf32>
    %c7_208 = arith.constant 7 : index
    %c0_209 = arith.constant 0 : index
    %c0_210 = arith.constant 0 : index
    %359 = vector.load %arg9[%c7_208, %c0_209, %c0_210] : memref<9x8x1xf32, #tpu.memory_space<vmem>>, vector<1x8x1xf32>
    %360 = vector.shape_cast %359 : vector<1x8x1xf32> to vector<8x1xf32>
    %361 = vector.broadcast %360 : vector<8x1xf32> to vector<8x128xf32>
    %362 = arith.mulf %358, %361 : vector<8x128xf32>
    %363 = arith.addf %353, %362 : vector<8x128xf32>
    %c119_i32_211 = arith.constant 119 : i32
    %364 = tpu.dynamic_rotate %285 by %c119_i32_211 dim 1 : vector<8x128xf32>, i32 -> vector<8x128xf32>
    %c8_212 = arith.constant 8 : index
    %c0_213 = arith.constant 0 : index
    %c0_214 = arith.constant 0 : index
    %365 = vector.load %arg2[%c8_212, %c0_213, %c0_214] : memref<9x1x128xf32, #tpu.memory_space<vmem>>, vector<1x1x128xf32>
    %366 = vector.shape_cast %365 : vector<1x1x128xf32> to vector<1x128xf32>
    %367 = vector.broadcast %366 : vector<1x128xf32> to vector<8x128xf32>
    %368 = arith.mulf %364, %367 : vector<8x128xf32>
    %c8_215 = arith.constant 8 : index
    %c0_216 = arith.constant 0 : index
    %c0_217 = arith.constant 0 : index
    %369 = vector.load %arg9[%c8_215, %c0_216, %c0_217] : memref<9x8x1xf32, #tpu.memory_space<vmem>>, vector<1x8x1xf32>
    %370 = vector.shape_cast %369 : vector<1x8x1xf32> to vector<8x1xf32>
    %371 = vector.broadcast %370 : vector<8x1xf32> to vector<8x128xf32>
    %372 = arith.mulf %368, %371 : vector<8x128xf32>
    %373 = arith.addf %363, %372 : vector<8x128xf32>
    %c0_218 = arith.constant 0 : index
    %c0_219 = arith.constant 0 : index
    %374 = vector.load %arg10[%c0_218, %c0_219] : memref<8x8xf32, #tpu.memory_space<vmem>>, vector<8x8xf32>
    %cst_220 = arith.constant dense<0.000000e+00> : vector<8x128xf32>
    %375 = tpu.matmul %374, %373, %cst_220 {dimension_numbers = #tpu.dot_dimension_numbers<[1], [0], [0], [1], [0, 0, 1, 1], [], []>} : vector<8x8xf32>, vector<8x128xf32>, vector<8x128xf32> -> vector<8x128xf32>
    %cst_221 = arith.constant dense<0.000000e+00> : vector<8xf32>
    %376 = vector.multi_reduction <add>, %375, %cst_221 [1] : vector<8x128xf32> to vector<8xf32>
    %377 = vector.shape_cast %376 : vector<8xf32> to vector<8x1xf32>
    %cst_222 = arith.constant 1.280000e+02 : f32
    %378 = vector.broadcast %cst_222 : f32 to vector<8x1xf32>
    %379 = arith.divf %377, %378 : vector<8x1xf32>
    %380 = vector.broadcast %379 : vector<8x1xf32> to vector<8x128xf32>
    %381 = arith.subf %375, %380 : vector<8x128xf32>
    %382 = arith.mulf %381, %381 : vector<8x128xf32>
    %cst_223 = arith.constant dense<0.000000e+00> : vector<8xf32>
    %383 = vector.multi_reduction <add>, %382, %cst_223 [1] : vector<8x128xf32> to vector<8xf32>
    %384 = vector.shape_cast %383 : vector<8xf32> to vector<8x1xf32>
    %cst_224 = arith.constant 1.280000e+02 : f32
    %385 = vector.broadcast %cst_224 : f32 to vector<8x1xf32>
    %386 = arith.divf %384, %385 : vector<8x1xf32>
    %cst_225 = arith.constant 9.99999974E-6 : f32
    %387 = vector.broadcast %cst_225 : f32 to vector<8x1xf32>
    %388 = arith.addf %386, %387 : vector<8x1xf32>
    %389 = math.rsqrt %388 : vector<8x1xf32>
    %390 = vector.broadcast %389 : vector<8x1xf32> to vector<8x128xf32>
    %391 = arith.mulf %381, %390 : vector<8x128xf32>
    %cst_226 = arith.constant 0.000000e+00 : f32
    %392 = vector.broadcast %cst_226 : f32 to vector<8x128xf32>
    %393 = arith.maximumf %0, %392 : vector<8x128xf32>
    %c18_i32 = arith.constant 18 : i32
    %394 = tpu.dynamic_rotate %393 by %c18_i32 dim 1 : vector<8x128xf32>, i32 -> vector<8x128xf32>
    %c0_227 = arith.constant 0 : index
    %c0_228 = arith.constant 0 : index
    %c0_229 = arith.constant 0 : index
    %395 = vector.load %arg3[%c0_227, %c0_228, %c0_229] : memref<25x1x128xf32, #tpu.memory_space<vmem>>, vector<1x1x128xf32>
    %396 = vector.shape_cast %395 : vector<1x1x128xf32> to vector<1x128xf32>
    %397 = vector.broadcast %396 : vector<1x128xf32> to vector<8x128xf32>
    %398 = arith.mulf %394, %397 : vector<8x128xf32>
    %c0_230 = arith.constant 0 : index
    %c0_231 = arith.constant 0 : index
    %c0_232 = arith.constant 0 : index
    %399 = vector.load %arg11[%c0_230, %c0_231, %c0_232] : memref<25x8x1xf32, #tpu.memory_space<vmem>>, vector<1x8x1xf32>
    %400 = vector.shape_cast %399 : vector<1x8x1xf32> to vector<8x1xf32>
    %401 = vector.broadcast %400 : vector<8x1xf32> to vector<8x128xf32>
    %402 = arith.mulf %398, %401 : vector<8x128xf32>
    %c17_i32 = arith.constant 17 : i32
    %403 = tpu.dynamic_rotate %393 by %c17_i32 dim 1 : vector<8x128xf32>, i32 -> vector<8x128xf32>
    %c1_233 = arith.constant 1 : index
    %c0_234 = arith.constant 0 : index
    %c0_235 = arith.constant 0 : index
    %404 = vector.load %arg3[%c1_233, %c0_234, %c0_235] : memref<25x1x128xf32, #tpu.memory_space<vmem>>, vector<1x1x128xf32>
    %405 = vector.shape_cast %404 : vector<1x1x128xf32> to vector<1x128xf32>
    %406 = vector.broadcast %405 : vector<1x128xf32> to vector<8x128xf32>
    %407 = arith.mulf %403, %406 : vector<8x128xf32>
    %c1_236 = arith.constant 1 : index
    %c0_237 = arith.constant 0 : index
    %c0_238 = arith.constant 0 : index
    %408 = vector.load %arg11[%c1_236, %c0_237, %c0_238] : memref<25x8x1xf32, #tpu.memory_space<vmem>>, vector<1x8x1xf32>
    %409 = vector.shape_cast %408 : vector<1x8x1xf32> to vector<8x1xf32>
    %410 = vector.broadcast %409 : vector<8x1xf32> to vector<8x128xf32>
    %411 = arith.mulf %407, %410 : vector<8x128xf32>
    %412 = arith.addf %402, %411 : vector<8x128xf32>
    %c16_i32 = arith.constant 16 : i32
    %413 = tpu.dynamic_rotate %393 by %c16_i32 dim 1 : vector<8x128xf32>, i32 -> vector<8x128xf32>
    %c2_239 = arith.constant 2 : index
    %c0_240 = arith.constant 0 : index
    %c0_241 = arith.constant 0 : index
    %414 = vector.load %arg3[%c2_239, %c0_240, %c0_241] : memref<25x1x128xf32, #tpu.memory_space<vmem>>, vector<1x1x128xf32>
    %415 = vector.shape_cast %414 : vector<1x1x128xf32> to vector<1x128xf32>
    %416 = vector.broadcast %415 : vector<1x128xf32> to vector<8x128xf32>
    %417 = arith.mulf %413, %416 : vector<8x128xf32>
    %c2_242 = arith.constant 2 : index
    %c0_243 = arith.constant 0 : index
    %c0_244 = arith.constant 0 : index
    %418 = vector.load %arg11[%c2_242, %c0_243, %c0_244] : memref<25x8x1xf32, #tpu.memory_space<vmem>>, vector<1x8x1xf32>
    %419 = vector.shape_cast %418 : vector<1x8x1xf32> to vector<8x1xf32>
    %420 = vector.broadcast %419 : vector<8x1xf32> to vector<8x128xf32>
    %421 = arith.mulf %417, %420 : vector<8x128xf32>
    %422 = arith.addf %412, %421 : vector<8x128xf32>
    %c15_i32 = arith.constant 15 : i32
    %423 = tpu.dynamic_rotate %393 by %c15_i32 dim 1 : vector<8x128xf32>, i32 -> vector<8x128xf32>
    %c3_245 = arith.constant 3 : index
    %c0_246 = arith.constant 0 : index
    %c0_247 = arith.constant 0 : index
    %424 = vector.load %arg3[%c3_245, %c0_246, %c0_247] : memref<25x1x128xf32, #tpu.memory_space<vmem>>, vector<1x1x128xf32>
    %425 = vector.shape_cast %424 : vector<1x1x128xf32> to vector<1x128xf32>
    %426 = vector.broadcast %425 : vector<1x128xf32> to vector<8x128xf32>
    %427 = arith.mulf %423, %426 : vector<8x128xf32>
    %c3_248 = arith.constant 3 : index
    %c0_249 = arith.constant 0 : index
    %c0_250 = arith.constant 0 : index
    %428 = vector.load %arg11[%c3_248, %c0_249, %c0_250] : memref<25x8x1xf32, #tpu.memory_space<vmem>>, vector<1x8x1xf32>
    %429 = vector.shape_cast %428 : vector<1x8x1xf32> to vector<8x1xf32>
    %430 = vector.broadcast %429 : vector<8x1xf32> to vector<8x128xf32>
    %431 = arith.mulf %427, %430 : vector<8x128xf32>
    %432 = arith.addf %422, %431 : vector<8x128xf32>
    %c14_i32 = arith.constant 14 : i32
    %433 = tpu.dynamic_rotate %393 by %c14_i32 dim 1 : vector<8x128xf32>, i32 -> vector<8x128xf32>
    %c4_251 = arith.constant 4 : index
    %c0_252 = arith.constant 0 : index
    %c0_253 = arith.constant 0 : index
    %434 = vector.load %arg3[%c4_251, %c0_252, %c0_253] : memref<25x1x128xf32, #tpu.memory_space<vmem>>, vector<1x1x128xf32>
    %435 = vector.shape_cast %434 : vector<1x1x128xf32> to vector<1x128xf32>
    %436 = vector.broadcast %435 : vector<1x128xf32> to vector<8x128xf32>
    %437 = arith.mulf %433, %436 : vector<8x128xf32>
    %c4_254 = arith.constant 4 : index
    %c0_255 = arith.constant 0 : index
    %c0_256 = arith.constant 0 : index
    %438 = vector.load %arg11[%c4_254, %c0_255, %c0_256] : memref<25x8x1xf32, #tpu.memory_space<vmem>>, vector<1x8x1xf32>
    %439 = vector.shape_cast %438 : vector<1x8x1xf32> to vector<8x1xf32>
    %440 = vector.broadcast %439 : vector<8x1xf32> to vector<8x128xf32>
    %441 = arith.mulf %437, %440 : vector<8x128xf32>
    %442 = arith.addf %432, %441 : vector<8x128xf32>
    %c10_i32 = arith.constant 10 : i32
    %443 = tpu.dynamic_rotate %393 by %c10_i32 dim 1 : vector<8x128xf32>, i32 -> vector<8x128xf32>
    %c5_257 = arith.constant 5 : index
    %c0_258 = arith.constant 0 : index
    %c0_259 = arith.constant 0 : index
    %444 = vector.load %arg3[%c5_257, %c0_258, %c0_259] : memref<25x1x128xf32, #tpu.memory_space<vmem>>, vector<1x1x128xf32>
    %445 = vector.shape_cast %444 : vector<1x1x128xf32> to vector<1x128xf32>
    %446 = vector.broadcast %445 : vector<1x128xf32> to vector<8x128xf32>
    %447 = arith.mulf %443, %446 : vector<8x128xf32>
    %c5_260 = arith.constant 5 : index
    %c0_261 = arith.constant 0 : index
    %c0_262 = arith.constant 0 : index
    %448 = vector.load %arg11[%c5_260, %c0_261, %c0_262] : memref<25x8x1xf32, #tpu.memory_space<vmem>>, vector<1x8x1xf32>
    %449 = vector.shape_cast %448 : vector<1x8x1xf32> to vector<8x1xf32>
    %450 = vector.broadcast %449 : vector<8x1xf32> to vector<8x128xf32>
    %451 = arith.mulf %447, %450 : vector<8x128xf32>
    %452 = arith.addf %442, %451 : vector<8x128xf32>
    %c9_i32_263 = arith.constant 9 : i32
    %453 = tpu.dynamic_rotate %393 by %c9_i32_263 dim 1 : vector<8x128xf32>, i32 -> vector<8x128xf32>
    %c6_264 = arith.constant 6 : index
    %c0_265 = arith.constant 0 : index
    %c0_266 = arith.constant 0 : index
    %454 = vector.load %arg3[%c6_264, %c0_265, %c0_266] : memref<25x1x128xf32, #tpu.memory_space<vmem>>, vector<1x1x128xf32>
    %455 = vector.shape_cast %454 : vector<1x1x128xf32> to vector<1x128xf32>
    %456 = vector.broadcast %455 : vector<1x128xf32> to vector<8x128xf32>
    %457 = arith.mulf %453, %456 : vector<8x128xf32>
    %c6_267 = arith.constant 6 : index
    %c0_268 = arith.constant 0 : index
    %c0_269 = arith.constant 0 : index
    %458 = vector.load %arg11[%c6_267, %c0_268, %c0_269] : memref<25x8x1xf32, #tpu.memory_space<vmem>>, vector<1x8x1xf32>
    %459 = vector.shape_cast %458 : vector<1x8x1xf32> to vector<8x1xf32>
    %460 = vector.broadcast %459 : vector<8x1xf32> to vector<8x128xf32>
    %461 = arith.mulf %457, %460 : vector<8x128xf32>
    %462 = arith.addf %452, %461 : vector<8x128xf32>
    %c8_i32_270 = arith.constant 8 : i32
    %463 = tpu.dynamic_rotate %393 by %c8_i32_270 dim 1 : vector<8x128xf32>, i32 -> vector<8x128xf32>
    %c7_271 = arith.constant 7 : index
    %c0_272 = arith.constant 0 : index
    %c0_273 = arith.constant 0 : index
    %464 = vector.load %arg3[%c7_271, %c0_272, %c0_273] : memref<25x1x128xf32, #tpu.memory_space<vmem>>, vector<1x1x128xf32>
    %465 = vector.shape_cast %464 : vector<1x1x128xf32> to vector<1x128xf32>
    %466 = vector.broadcast %465 : vector<1x128xf32> to vector<8x128xf32>
    %467 = arith.mulf %463, %466 : vector<8x128xf32>
    %c7_274 = arith.constant 7 : index
    %c0_275 = arith.constant 0 : index
    %c0_276 = arith.constant 0 : index
    %468 = vector.load %arg11[%c7_274, %c0_275, %c0_276] : memref<25x8x1xf32, #tpu.memory_space<vmem>>, vector<1x8x1xf32>
    %469 = vector.shape_cast %468 : vector<1x8x1xf32> to vector<8x1xf32>
    %470 = vector.broadcast %469 : vector<8x1xf32> to vector<8x128xf32>
    %471 = arith.mulf %467, %470 : vector<8x128xf32>
    %472 = arith.addf %462, %471 : vector<8x128xf32>
    %c7_i32_277 = arith.constant 7 : i32
    %473 = tpu.dynamic_rotate %393 by %c7_i32_277 dim 1 : vector<8x128xf32>, i32 -> vector<8x128xf32>
    %c8_278 = arith.constant 8 : index
    %c0_279 = arith.constant 0 : index
    %c0_280 = arith.constant 0 : index
    %474 = vector.load %arg3[%c8_278, %c0_279, %c0_280] : memref<25x1x128xf32, #tpu.memory_space<vmem>>, vector<1x1x128xf32>
    %475 = vector.shape_cast %474 : vector<1x1x128xf32> to vector<1x128xf32>
    %476 = vector.broadcast %475 : vector<1x128xf32> to vector<8x128xf32>
    %477 = arith.mulf %473, %476 : vector<8x128xf32>
    %c8_281 = arith.constant 8 : index
    %c0_282 = arith.constant 0 : index
    %c0_283 = arith.constant 0 : index
    %478 = vector.load %arg11[%c8_281, %c0_282, %c0_283] : memref<25x8x1xf32, #tpu.memory_space<vmem>>, vector<1x8x1xf32>
    %479 = vector.shape_cast %478 : vector<1x8x1xf32> to vector<8x1xf32>
    %480 = vector.broadcast %479 : vector<8x1xf32> to vector<8x128xf32>
    %481 = arith.mulf %477, %480 : vector<8x128xf32>
    %482 = arith.addf %472, %481 : vector<8x128xf32>
    %c6_i32 = arith.constant 6 : i32
    %483 = tpu.dynamic_rotate %393 by %c6_i32 dim 1 : vector<8x128xf32>, i32 -> vector<8x128xf32>
    %c9 = arith.constant 9 : index
    %c0_284 = arith.constant 0 : index
    %c0_285 = arith.constant 0 : index
    %484 = vector.load %arg3[%c9, %c0_284, %c0_285] : memref<25x1x128xf32, #tpu.memory_space<vmem>>, vector<1x1x128xf32>
    %485 = vector.shape_cast %484 : vector<1x1x128xf32> to vector<1x128xf32>
    %486 = vector.broadcast %485 : vector<1x128xf32> to vector<8x128xf32>
    %487 = arith.mulf %483, %486 : vector<8x128xf32>
    %c9_286 = arith.constant 9 : index
    %c0_287 = arith.constant 0 : index
    %c0_288 = arith.constant 0 : index
    %488 = vector.load %arg11[%c9_286, %c0_287, %c0_288] : memref<25x8x1xf32, #tpu.memory_space<vmem>>, vector<1x8x1xf32>
    %489 = vector.shape_cast %488 : vector<1x8x1xf32> to vector<8x1xf32>
    %490 = vector.broadcast %489 : vector<8x1xf32> to vector<8x128xf32>
    %491 = arith.mulf %487, %490 : vector<8x128xf32>
    %492 = arith.addf %482, %491 : vector<8x128xf32>
    %c2_i32 = arith.constant 2 : i32
    %493 = tpu.dynamic_rotate %393 by %c2_i32 dim 1 : vector<8x128xf32>, i32 -> vector<8x128xf32>
    %c10 = arith.constant 10 : index
    %c0_289 = arith.constant 0 : index
    %c0_290 = arith.constant 0 : index
    %494 = vector.load %arg3[%c10, %c0_289, %c0_290] : memref<25x1x128xf32, #tpu.memory_space<vmem>>, vector<1x1x128xf32>
    %495 = vector.shape_cast %494 : vector<1x1x128xf32> to vector<1x128xf32>
    %496 = vector.broadcast %495 : vector<1x128xf32> to vector<8x128xf32>
    %497 = arith.mulf %493, %496 : vector<8x128xf32>
    %c10_291 = arith.constant 10 : index
    %c0_292 = arith.constant 0 : index
    %c0_293 = arith.constant 0 : index
    %498 = vector.load %arg11[%c10_291, %c0_292, %c0_293] : memref<25x8x1xf32, #tpu.memory_space<vmem>>, vector<1x8x1xf32>
    %499 = vector.shape_cast %498 : vector<1x8x1xf32> to vector<8x1xf32>
    %500 = vector.broadcast %499 : vector<8x1xf32> to vector<8x128xf32>
    %501 = arith.mulf %497, %500 : vector<8x128xf32>
    %502 = arith.addf %492, %501 : vector<8x128xf32>
    %c1_i32_294 = arith.constant 1 : i32
    %503 = tpu.dynamic_rotate %393 by %c1_i32_294 dim 1 : vector<8x128xf32>, i32 -> vector<8x128xf32>
    %c11 = arith.constant 11 : index
    %c0_295 = arith.constant 0 : index
    %c0_296 = arith.constant 0 : index
    %504 = vector.load %arg3[%c11, %c0_295, %c0_296] : memref<25x1x128xf32, #tpu.memory_space<vmem>>, vector<1x1x128xf32>
    %505 = vector.shape_cast %504 : vector<1x1x128xf32> to vector<1x128xf32>
    %506 = vector.broadcast %505 : vector<1x128xf32> to vector<8x128xf32>
    %507 = arith.mulf %503, %506 : vector<8x128xf32>
    %c11_297 = arith.constant 11 : index
    %c0_298 = arith.constant 0 : index
    %c0_299 = arith.constant 0 : index
    %508 = vector.load %arg11[%c11_297, %c0_298, %c0_299] : memref<25x8x1xf32, #tpu.memory_space<vmem>>, vector<1x8x1xf32>
    %509 = vector.shape_cast %508 : vector<1x8x1xf32> to vector<8x1xf32>
    %510 = vector.broadcast %509 : vector<8x1xf32> to vector<8x128xf32>
    %511 = arith.mulf %507, %510 : vector<8x128xf32>
    %512 = arith.addf %502, %511 : vector<8x128xf32>
    %c12 = arith.constant 12 : index
    %c0_300 = arith.constant 0 : index
    %c0_301 = arith.constant 0 : index
    %513 = vector.load %arg3[%c12, %c0_300, %c0_301] : memref<25x1x128xf32, #tpu.memory_space<vmem>>, vector<1x1x128xf32>
    %514 = vector.shape_cast %513 : vector<1x1x128xf32> to vector<1x128xf32>
    %515 = vector.broadcast %514 : vector<1x128xf32> to vector<8x128xf32>
    %516 = arith.mulf %393, %515 : vector<8x128xf32>
    %c12_302 = arith.constant 12 : index
    %c0_303 = arith.constant 0 : index
    %c0_304 = arith.constant 0 : index
    %517 = vector.load %arg11[%c12_302, %c0_303, %c0_304] : memref<25x8x1xf32, #tpu.memory_space<vmem>>, vector<1x8x1xf32>
    %518 = vector.shape_cast %517 : vector<1x8x1xf32> to vector<8x1xf32>
    %519 = vector.broadcast %518 : vector<8x1xf32> to vector<8x128xf32>
    %520 = arith.mulf %516, %519 : vector<8x128xf32>
    %521 = arith.addf %512, %520 : vector<8x128xf32>
    %c127_i32_305 = arith.constant 127 : i32
    %522 = tpu.dynamic_rotate %393 by %c127_i32_305 dim 1 : vector<8x128xf32>, i32 -> vector<8x128xf32>
    %c13 = arith.constant 13 : index
    %c0_306 = arith.constant 0 : index
    %c0_307 = arith.constant 0 : index
    %523 = vector.load %arg3[%c13, %c0_306, %c0_307] : memref<25x1x128xf32, #tpu.memory_space<vmem>>, vector<1x1x128xf32>
    %524 = vector.shape_cast %523 : vector<1x1x128xf32> to vector<1x128xf32>
    %525 = vector.broadcast %524 : vector<1x128xf32> to vector<8x128xf32>
    %526 = arith.mulf %522, %525 : vector<8x128xf32>
    %c13_308 = arith.constant 13 : index
    %c0_309 = arith.constant 0 : index
    %c0_310 = arith.constant 0 : index
    %527 = vector.load %arg11[%c13_308, %c0_309, %c0_310] : memref<25x8x1xf32, #tpu.memory_space<vmem>>, vector<1x8x1xf32>
    %528 = vector.shape_cast %527 : vector<1x8x1xf32> to vector<8x1xf32>
    %529 = vector.broadcast %528 : vector<8x1xf32> to vector<8x128xf32>
    %530 = arith.mulf %526, %529 : vector<8x128xf32>
    %531 = arith.addf %521, %530 : vector<8x128xf32>
    %c126_i32 = arith.constant 126 : i32
    %532 = tpu.dynamic_rotate %393 by %c126_i32 dim 1 : vector<8x128xf32>, i32 -> vector<8x128xf32>
    %c14 = arith.constant 14 : index
    %c0_311 = arith.constant 0 : index
    %c0_312 = arith.constant 0 : index
    %533 = vector.load %arg3[%c14, %c0_311, %c0_312] : memref<25x1x128xf32, #tpu.memory_space<vmem>>, vector<1x1x128xf32>
    %534 = vector.shape_cast %533 : vector<1x1x128xf32> to vector<1x128xf32>
    %535 = vector.broadcast %534 : vector<1x128xf32> to vector<8x128xf32>
    %536 = arith.mulf %532, %535 : vector<8x128xf32>
    %c14_313 = arith.constant 14 : index
    %c0_314 = arith.constant 0 : index
    %c0_315 = arith.constant 0 : index
    %537 = vector.load %arg11[%c14_313, %c0_314, %c0_315] : memref<25x8x1xf32, #tpu.memory_space<vmem>>, vector<1x8x1xf32>
    %538 = vector.shape_cast %537 : vector<1x8x1xf32> to vector<8x1xf32>
    %539 = vector.broadcast %538 : vector<8x1xf32> to vector<8x128xf32>
    %540 = arith.mulf %536, %539 : vector<8x128xf32>
    %541 = arith.addf %531, %540 : vector<8x128xf32>
    %c122_i32 = arith.constant 122 : i32
    %542 = tpu.dynamic_rotate %393 by %c122_i32 dim 1 : vector<8x128xf32>, i32 -> vector<8x128xf32>
    %c15 = arith.constant 15 : index
    %c0_316 = arith.constant 0 : index
    %c0_317 = arith.constant 0 : index
    %543 = vector.load %arg3[%c15, %c0_316, %c0_317] : memref<25x1x128xf32, #tpu.memory_space<vmem>>, vector<1x1x128xf32>
    %544 = vector.shape_cast %543 : vector<1x1x128xf32> to vector<1x128xf32>
    %545 = vector.broadcast %544 : vector<1x128xf32> to vector<8x128xf32>
    %546 = arith.mulf %542, %545 : vector<8x128xf32>
    %c15_318 = arith.constant 15 : index
    %c0_319 = arith.constant 0 : index
    %c0_320 = arith.constant 0 : index
    %547 = vector.load %arg11[%c15_318, %c0_319, %c0_320] : memref<25x8x1xf32, #tpu.memory_space<vmem>>, vector<1x8x1xf32>
    %548 = vector.shape_cast %547 : vector<1x8x1xf32> to vector<8x1xf32>
    %549 = vector.broadcast %548 : vector<8x1xf32> to vector<8x128xf32>
    %550 = arith.mulf %546, %549 : vector<8x128xf32>
    %551 = arith.addf %541, %550 : vector<8x128xf32>
    %c121_i32_321 = arith.constant 121 : i32
    %552 = tpu.dynamic_rotate %393 by %c121_i32_321 dim 1 : vector<8x128xf32>, i32 -> vector<8x128xf32>
    %c16 = arith.constant 16 : index
    %c0_322 = arith.constant 0 : index
    %c0_323 = arith.constant 0 : index
    %553 = vector.load %arg3[%c16, %c0_322, %c0_323] : memref<25x1x128xf32, #tpu.memory_space<vmem>>, vector<1x1x128xf32>
    %554 = vector.shape_cast %553 : vector<1x1x128xf32> to vector<1x128xf32>
    %555 = vector.broadcast %554 : vector<1x128xf32> to vector<8x128xf32>
    %556 = arith.mulf %552, %555 : vector<8x128xf32>
    %c16_324 = arith.constant 16 : index
    %c0_325 = arith.constant 0 : index
    %c0_326 = arith.constant 0 : index
    %557 = vector.load %arg11[%c16_324, %c0_325, %c0_326] : memref<25x8x1xf32, #tpu.memory_space<vmem>>, vector<1x8x1xf32>
    %558 = vector.shape_cast %557 : vector<1x8x1xf32> to vector<8x1xf32>
    %559 = vector.broadcast %558 : vector<8x1xf32> to vector<8x128xf32>
    %560 = arith.mulf %556, %559 : vector<8x128xf32>
    %561 = arith.addf %551, %560 : vector<8x128xf32>
    %c120_i32_327 = arith.constant 120 : i32
    %562 = tpu.dynamic_rotate %393 by %c120_i32_327 dim 1 : vector<8x128xf32>, i32 -> vector<8x128xf32>
    %c17 = arith.constant 17 : index
    %c0_328 = arith.constant 0 : index
    %c0_329 = arith.constant 0 : index
    %563 = vector.load %arg3[%c17, %c0_328, %c0_329] : memref<25x1x128xf32, #tpu.memory_space<vmem>>, vector<1x1x128xf32>
    %564 = vector.shape_cast %563 : vector<1x1x128xf32> to vector<1x128xf32>
    %565 = vector.broadcast %564 : vector<1x128xf32> to vector<8x128xf32>
    %566 = arith.mulf %562, %565 : vector<8x128xf32>
    %c17_330 = arith.constant 17 : index
    %c0_331 = arith.constant 0 : index
    %c0_332 = arith.constant 0 : index
    %567 = vector.load %arg11[%c17_330, %c0_331, %c0_332] : memref<25x8x1xf32, #tpu.memory_space<vmem>>, vector<1x8x1xf32>
    %568 = vector.shape_cast %567 : vector<1x8x1xf32> to vector<8x1xf32>
    %569 = vector.broadcast %568 : vector<8x1xf32> to vector<8x128xf32>
    %570 = arith.mulf %566, %569 : vector<8x128xf32>
    %571 = arith.addf %561, %570 : vector<8x128xf32>
    %c119_i32_333 = arith.constant 119 : i32
    %572 = tpu.dynamic_rotate %393 by %c119_i32_333 dim 1 : vector<8x128xf32>, i32 -> vector<8x128xf32>
    %c18 = arith.constant 18 : index
    %c0_334 = arith.constant 0 : index
    %c0_335 = arith.constant 0 : index
    %573 = vector.load %arg3[%c18, %c0_334, %c0_335] : memref<25x1x128xf32, #tpu.memory_space<vmem>>, vector<1x1x128xf32>
    %574 = vector.shape_cast %573 : vector<1x1x128xf32> to vector<1x128xf32>
    %575 = vector.broadcast %574 : vector<1x128xf32> to vector<8x128xf32>
    %576 = arith.mulf %572, %575 : vector<8x128xf32>
    %c18_336 = arith.constant 18 : index
    %c0_337 = arith.constant 0 : index
    %c0_338 = arith.constant 0 : index
    %577 = vector.load %arg11[%c18_336, %c0_337, %c0_338] : memref<25x8x1xf32, #tpu.memory_space<vmem>>, vector<1x8x1xf32>
    %578 = vector.shape_cast %577 : vector<1x8x1xf32> to vector<8x1xf32>
    %579 = vector.broadcast %578 : vector<8x1xf32> to vector<8x128xf32>
    %580 = arith.mulf %576, %579 : vector<8x128xf32>
    %581 = arith.addf %571, %580 : vector<8x128xf32>
    %c118_i32 = arith.constant 118 : i32
    %582 = tpu.dynamic_rotate %393 by %c118_i32 dim 1 : vector<8x128xf32>, i32 -> vector<8x128xf32>
    %c19 = arith.constant 19 : index
    %c0_339 = arith.constant 0 : index
    %c0_340 = arith.constant 0 : index
    %583 = vector.load %arg3[%c19, %c0_339, %c0_340] : memref<25x1x128xf32, #tpu.memory_space<vmem>>, vector<1x1x128xf32>
    %584 = vector.shape_cast %583 : vector<1x1x128xf32> to vector<1x128xf32>
    %585 = vector.broadcast %584 : vector<1x128xf32> to vector<8x128xf32>
    %586 = arith.mulf %582, %585 : vector<8x128xf32>
    %c19_341 = arith.constant 19 : index
    %c0_342 = arith.constant 0 : index
    %c0_343 = arith.constant 0 : index
    %587 = vector.load %arg11[%c19_341, %c0_342, %c0_343] : memref<25x8x1xf32, #tpu.memory_space<vmem>>, vector<1x8x1xf32>
    %588 = vector.shape_cast %587 : vector<1x8x1xf32> to vector<8x1xf32>
    %589 = vector.broadcast %588 : vector<8x1xf32> to vector<8x128xf32>
    %590 = arith.mulf %586, %589 : vector<8x128xf32>
    %591 = arith.addf %581, %590 : vector<8x128xf32>
    %c114_i32 = arith.constant 114 : i32
    %592 = tpu.dynamic_rotate %393 by %c114_i32 dim 1 : vector<8x128xf32>, i32 -> vector<8x128xf32>
    %c20 = arith.constant 20 : index
    %c0_344 = arith.constant 0 : index
    %c0_345 = arith.constant 0 : index
    %593 = vector.load %arg3[%c20, %c0_344, %c0_345] : memref<25x1x128xf32, #tpu.memory_space<vmem>>, vector<1x1x128xf32>
    %594 = vector.shape_cast %593 : vector<1x1x128xf32> to vector<1x128xf32>
    %595 = vector.broadcast %594 : vector<1x128xf32> to vector<8x128xf32>
    %596 = arith.mulf %592, %595 : vector<8x128xf32>
    %c20_346 = arith.constant 20 : index
    %c0_347 = arith.constant 0 : index
    %c0_348 = arith.constant 0 : index
    %597 = vector.load %arg11[%c20_346, %c0_347, %c0_348] : memref<25x8x1xf32, #tpu.memory_space<vmem>>, vector<1x8x1xf32>
    %598 = vector.shape_cast %597 : vector<1x8x1xf32> to vector<8x1xf32>
    %599 = vector.broadcast %598 : vector<8x1xf32> to vector<8x128xf32>
    %600 = arith.mulf %596, %599 : vector<8x128xf32>
    %601 = arith.addf %591, %600 : vector<8x128xf32>
    %c113_i32 = arith.constant 113 : i32
    %602 = tpu.dynamic_rotate %393 by %c113_i32 dim 1 : vector<8x128xf32>, i32 -> vector<8x128xf32>
    %c21 = arith.constant 21 : index
    %c0_349 = arith.constant 0 : index
    %c0_350 = arith.constant 0 : index
    %603 = vector.load %arg3[%c21, %c0_349, %c0_350] : memref<25x1x128xf32, #tpu.memory_space<vmem>>, vector<1x1x128xf32>
    %604 = vector.shape_cast %603 : vector<1x1x128xf32> to vector<1x128xf32>
    %605 = vector.broadcast %604 : vector<1x128xf32> to vector<8x128xf32>
    %606 = arith.mulf %602, %605 : vector<8x128xf32>
    %c21_351 = arith.constant 21 : index
    %c0_352 = arith.constant 0 : index
    %c0_353 = arith.constant 0 : index
    %607 = vector.load %arg11[%c21_351, %c0_352, %c0_353] : memref<25x8x1xf32, #tpu.memory_space<vmem>>, vector<1x8x1xf32>
    %608 = vector.shape_cast %607 : vector<1x8x1xf32> to vector<8x1xf32>
    %609 = vector.broadcast %608 : vector<8x1xf32> to vector<8x128xf32>
    %610 = arith.mulf %606, %609 : vector<8x128xf32>
    %611 = arith.addf %601, %610 : vector<8x128xf32>
    %c112_i32 = arith.constant 112 : i32
    %612 = tpu.dynamic_rotate %393 by %c112_i32 dim 1 : vector<8x128xf32>, i32 -> vector<8x128xf32>
    %c22 = arith.constant 22 : index
    %c0_354 = arith.constant 0 : index
    %c0_355 = arith.constant 0 : index
    %613 = vector.load %arg3[%c22, %c0_354, %c0_355] : memref<25x1x128xf32, #tpu.memory_space<vmem>>, vector<1x1x128xf32>
    %614 = vector.shape_cast %613 : vector<1x1x128xf32> to vector<1x128xf32>
    %615 = vector.broadcast %614 : vector<1x128xf32> to vector<8x128xf32>
    %616 = arith.mulf %612, %615 : vector<8x128xf32>
    %c22_356 = arith.constant 22 : index
    %c0_357 = arith.constant 0 : index
    %c0_358 = arith.constant 0 : index
    %617 = vector.load %arg11[%c22_356, %c0_357, %c0_358] : memref<25x8x1xf32, #tpu.memory_space<vmem>>, vector<1x8x1xf32>
    %618 = vector.shape_cast %617 : vector<1x8x1xf32> to vector<8x1xf32>
    %619 = vector.broadcast %618 : vector<8x1xf32> to vector<8x128xf32>
    %620 = arith.mulf %616, %619 : vector<8x128xf32>
    %621 = arith.addf %611, %620 : vector<8x128xf32>
    %c111_i32 = arith.constant 111 : i32
    %622 = tpu.dynamic_rotate %393 by %c111_i32 dim 1 : vector<8x128xf32>, i32 -> vector<8x128xf32>
    %c23 = arith.constant 23 : index
    %c0_359 = arith.constant 0 : index
    %c0_360 = arith.constant 0 : index
    %623 = vector.load %arg3[%c23, %c0_359, %c0_360] : memref<25x1x128xf32, #tpu.memory_space<vmem>>, vector<1x1x128xf32>
    %624 = vector.shape_cast %623 : vector<1x1x128xf32> to vector<1x128xf32>
    %625 = vector.broadcast %624 : vector<1x128xf32> to vector<8x128xf32>
    %626 = arith.mulf %622, %625 : vector<8x128xf32>
    %c23_361 = arith.constant 23 : index
    %c0_362 = arith.constant 0 : index
    %c0_363 = arith.constant 0 : index
    %627 = vector.load %arg11[%c23_361, %c0_362, %c0_363] : memref<25x8x1xf32, #tpu.memory_space<vmem>>, vector<1x8x1xf32>
    %628 = vector.shape_cast %627 : vector<1x8x1xf32> to vector<8x1xf32>
    %629 = vector.broadcast %628 : vector<8x1xf32> to vector<8x128xf32>
    %630 = arith.mulf %626, %629 : vector<8x128xf32>
    %631 = arith.addf %621, %630 : vector<8x128xf32>
    %c110_i32 = arith.constant 110 : i32
    %632 = tpu.dynamic_rotate %393 by %c110_i32 dim 1 : vector<8x128xf32>, i32 -> vector<8x128xf32>
    %c24 = arith.constant 24 : index
    %c0_364 = arith.constant 0 : index
    %c0_365 = arith.constant 0 : index
    %633 = vector.load %arg3[%c24, %c0_364, %c0_365] : memref<25x1x128xf32, #tpu.memory_space<vmem>>, vector<1x1x128xf32>
    %634 = vector.shape_cast %633 : vector<1x1x128xf32> to vector<1x128xf32>
    %635 = vector.broadcast %634 : vector<1x128xf32> to vector<8x128xf32>
    %636 = arith.mulf %632, %635 : vector<8x128xf32>
    %c24_366 = arith.constant 24 : index
    %c0_367 = arith.constant 0 : index
    %c0_368 = arith.constant 0 : index
    %637 = vector.load %arg11[%c24_366, %c0_367, %c0_368] : memref<25x8x1xf32, #tpu.memory_space<vmem>>, vector<1x8x1xf32>
    %638 = vector.shape_cast %637 : vector<1x8x1xf32> to vector<8x1xf32>
    %639 = vector.broadcast %638 : vector<8x1xf32> to vector<8x128xf32>
    %640 = arith.mulf %636, %639 : vector<8x128xf32>
    %641 = arith.addf %631, %640 : vector<8x128xf32>
    %c0_369 = arith.constant 0 : index
    %c0_370 = arith.constant 0 : index
    %642 = vector.load %arg12[%c0_369, %c0_370] : memref<8x8xf32, #tpu.memory_space<vmem>>, vector<8x8xf32>
    %cst_371 = arith.constant dense<0.000000e+00> : vector<8x128xf32>
    %643 = tpu.matmul %642, %641, %cst_371 {dimension_numbers = #tpu.dot_dimension_numbers<[1], [0], [0], [1], [0, 0, 1, 1], [], []>} : vector<8x8xf32>, vector<8x128xf32>, vector<8x128xf32> -> vector<8x128xf32>
    %cst_372 = arith.constant dense<0.000000e+00> : vector<8xf32>
    %644 = vector.multi_reduction <add>, %643, %cst_372 [1] : vector<8x128xf32> to vector<8xf32>
    %645 = vector.shape_cast %644 : vector<8xf32> to vector<8x1xf32>
    %cst_373 = arith.constant 1.280000e+02 : f32
    %646 = vector.broadcast %cst_373 : f32 to vector<8x1xf32>
    %647 = arith.divf %645, %646 : vector<8x1xf32>
    %648 = vector.broadcast %647 : vector<8x1xf32> to vector<8x128xf32>
    %649 = arith.subf %643, %648 : vector<8x128xf32>
    %650 = arith.mulf %649, %649 : vector<8x128xf32>
    %cst_374 = arith.constant dense<0.000000e+00> : vector<8xf32>
    %651 = vector.multi_reduction <add>, %650, %cst_374 [1] : vector<8x128xf32> to vector<8xf32>
    %652 = vector.shape_cast %651 : vector<8xf32> to vector<8x1xf32>
    %cst_375 = arith.constant 1.280000e+02 : f32
    %653 = vector.broadcast %cst_375 : f32 to vector<8x1xf32>
    %654 = arith.divf %652, %653 : vector<8x1xf32>
    %cst_376 = arith.constant 9.99999974E-6 : f32
    %655 = vector.broadcast %cst_376 : f32 to vector<8x1xf32>
    %656 = arith.addf %654, %655 : vector<8x1xf32>
    %657 = math.rsqrt %656 : vector<8x1xf32>
    %658 = vector.broadcast %657 : vector<8x1xf32> to vector<8x128xf32>
    %659 = arith.mulf %649, %658 : vector<8x128xf32>
    %cst_377 = arith.constant 0.000000e+00 : f32
    %660 = vector.broadcast %cst_377 : f32 to vector<8x128xf32>
    %661 = arith.maximumf %659, %660 : vector<8x128xf32>
    %c18_i32_378 = arith.constant 18 : i32
    %662 = tpu.dynamic_rotate %661 by %c18_i32_378 dim 1 : vector<8x128xf32>, i32 -> vector<8x128xf32>
    %c0_379 = arith.constant 0 : index
    %c0_380 = arith.constant 0 : index
    %c0_381 = arith.constant 0 : index
    %663 = vector.load %arg3[%c0_379, %c0_380, %c0_381] : memref<25x1x128xf32, #tpu.memory_space<vmem>>, vector<1x1x128xf32>
    %664 = vector.shape_cast %663 : vector<1x1x128xf32> to vector<1x128xf32>
    %665 = vector.broadcast %664 : vector<1x128xf32> to vector<8x128xf32>
    %666 = arith.mulf %662, %665 : vector<8x128xf32>
    %c0_382 = arith.constant 0 : index
    %c0_383 = arith.constant 0 : index
    %c0_384 = arith.constant 0 : index
    %667 = vector.load %arg13[%c0_382, %c0_383, %c0_384] : memref<25x8x1xf32, #tpu.memory_space<vmem>>, vector<1x8x1xf32>
    %668 = vector.shape_cast %667 : vector<1x8x1xf32> to vector<8x1xf32>
    %669 = vector.broadcast %668 : vector<8x1xf32> to vector<8x128xf32>
    %670 = arith.mulf %666, %669 : vector<8x128xf32>
    %c17_i32_385 = arith.constant 17 : i32
    %671 = tpu.dynamic_rotate %661 by %c17_i32_385 dim 1 : vector<8x128xf32>, i32 -> vector<8x128xf32>
    %c1_386 = arith.constant 1 : index
    %c0_387 = arith.constant 0 : index
    %c0_388 = arith.constant 0 : index
    %672 = vector.load %arg3[%c1_386, %c0_387, %c0_388] : memref<25x1x128xf32, #tpu.memory_space<vmem>>, vector<1x1x128xf32>
    %673 = vector.shape_cast %672 : vector<1x1x128xf32> to vector<1x128xf32>
    %674 = vector.broadcast %673 : vector<1x128xf32> to vector<8x128xf32>
    %675 = arith.mulf %671, %674 : vector<8x128xf32>
    %c1_389 = arith.constant 1 : index
    %c0_390 = arith.constant 0 : index
    %c0_391 = arith.constant 0 : index
    %676 = vector.load %arg13[%c1_389, %c0_390, %c0_391] : memref<25x8x1xf32, #tpu.memory_space<vmem>>, vector<1x8x1xf32>
    %677 = vector.shape_cast %676 : vector<1x8x1xf32> to vector<8x1xf32>
    %678 = vector.broadcast %677 : vector<8x1xf32> to vector<8x128xf32>
    %679 = arith.mulf %675, %678 : vector<8x128xf32>
    %680 = arith.addf %670, %679 : vector<8x128xf32>
    %c16_i32_392 = arith.constant 16 : i32
    %681 = tpu.dynamic_rotate %661 by %c16_i32_392 dim 1 : vector<8x128xf32>, i32 -> vector<8x128xf32>
    %c2_393 = arith.constant 2 : index
    %c0_394 = arith.constant 0 : index
    %c0_395 = arith.constant 0 : index
    %682 = vector.load %arg3[%c2_393, %c0_394, %c0_395] : memref<25x1x128xf32, #tpu.memory_space<vmem>>, vector<1x1x128xf32>
    %683 = vector.shape_cast %682 : vector<1x1x128xf32> to vector<1x128xf32>
    %684 = vector.broadcast %683 : vector<1x128xf32> to vector<8x128xf32>
    %685 = arith.mulf %681, %684 : vector<8x128xf32>
    %c2_396 = arith.constant 2 : index
    %c0_397 = arith.constant 0 : index
    %c0_398 = arith.constant 0 : index
    %686 = vector.load %arg13[%c2_396, %c0_397, %c0_398] : memref<25x8x1xf32, #tpu.memory_space<vmem>>, vector<1x8x1xf32>
    %687 = vector.shape_cast %686 : vector<1x8x1xf32> to vector<8x1xf32>
    %688 = vector.broadcast %687 : vector<8x1xf32> to vector<8x128xf32>
    %689 = arith.mulf %685, %688 : vector<8x128xf32>
    %690 = arith.addf %680, %689 : vector<8x128xf32>
    %c15_i32_399 = arith.constant 15 : i32
    %691 = tpu.dynamic_rotate %661 by %c15_i32_399 dim 1 : vector<8x128xf32>, i32 -> vector<8x128xf32>
    %c3_400 = arith.constant 3 : index
    %c0_401 = arith.constant 0 : index
    %c0_402 = arith.constant 0 : index
    %692 = vector.load %arg3[%c3_400, %c0_401, %c0_402] : memref<25x1x128xf32, #tpu.memory_space<vmem>>, vector<1x1x128xf32>
    %693 = vector.shape_cast %692 : vector<1x1x128xf32> to vector<1x128xf32>
    %694 = vector.broadcast %693 : vector<1x128xf32> to vector<8x128xf32>
    %695 = arith.mulf %691, %694 : vector<8x128xf32>
    %c3_403 = arith.constant 3 : index
    %c0_404 = arith.constant 0 : index
    %c0_405 = arith.constant 0 : index
    %696 = vector.load %arg13[%c3_403, %c0_404, %c0_405] : memref<25x8x1xf32, #tpu.memory_space<vmem>>, vector<1x8x1xf32>
    %697 = vector.shape_cast %696 : vector<1x8x1xf32> to vector<8x1xf32>
    %698 = vector.broadcast %697 : vector<8x1xf32> to vector<8x128xf32>
    %699 = arith.mulf %695, %698 : vector<8x128xf32>
    %700 = arith.addf %690, %699 : vector<8x128xf32>
    %c14_i32_406 = arith.constant 14 : i32
    %701 = tpu.dynamic_rotate %661 by %c14_i32_406 dim 1 : vector<8x128xf32>, i32 -> vector<8x128xf32>
    %c4_407 = arith.constant 4 : index
    %c0_408 = arith.constant 0 : index
    %c0_409 = arith.constant 0 : index
    %702 = vector.load %arg3[%c4_407, %c0_408, %c0_409] : memref<25x1x128xf32, #tpu.memory_space<vmem>>, vector<1x1x128xf32>
    %703 = vector.shape_cast %702 : vector<1x1x128xf32> to vector<1x128xf32>
    %704 = vector.broadcast %703 : vector<1x128xf32> to vector<8x128xf32>
    %705 = arith.mulf %701, %704 : vector<8x128xf32>
    %c4_410 = arith.constant 4 : index
    %c0_411 = arith.constant 0 : index
    %c0_412 = arith.constant 0 : index
    %706 = vector.load %arg13[%c4_410, %c0_411, %c0_412] : memref<25x8x1xf32, #tpu.memory_space<vmem>>, vector<1x8x1xf32>
    %707 = vector.shape_cast %706 : vector<1x8x1xf32> to vector<8x1xf32>
    %708 = vector.broadcast %707 : vector<8x1xf32> to vector<8x128xf32>
    %709 = arith.mulf %705, %708 : vector<8x128xf32>
    %710 = arith.addf %700, %709 : vector<8x128xf32>
    %c10_i32_413 = arith.constant 10 : i32
    %711 = tpu.dynamic_rotate %661 by %c10_i32_413 dim 1 : vector<8x128xf32>, i32 -> vector<8x128xf32>
    %c5_414 = arith.constant 5 : index
    %c0_415 = arith.constant 0 : index
    %c0_416 = arith.constant 0 : index
    %712 = vector.load %arg3[%c5_414, %c0_415, %c0_416] : memref<25x1x128xf32, #tpu.memory_space<vmem>>, vector<1x1x128xf32>
    %713 = vector.shape_cast %712 : vector<1x1x128xf32> to vector<1x128xf32>
    %714 = vector.broadcast %713 : vector<1x128xf32> to vector<8x128xf32>
    %715 = arith.mulf %711, %714 : vector<8x128xf32>
    %c5_417 = arith.constant 5 : index
    %c0_418 = arith.constant 0 : index
    %c0_419 = arith.constant 0 : index
    %716 = vector.load %arg13[%c5_417, %c0_418, %c0_419] : memref<25x8x1xf32, #tpu.memory_space<vmem>>, vector<1x8x1xf32>
    %717 = vector.shape_cast %716 : vector<1x8x1xf32> to vector<8x1xf32>
    %718 = vector.broadcast %717 : vector<8x1xf32> to vector<8x128xf32>
    %719 = arith.mulf %715, %718 : vector<8x128xf32>
    %720 = arith.addf %710, %719 : vector<8x128xf32>
    %c9_i32_420 = arith.constant 9 : i32
    %721 = tpu.dynamic_rotate %661 by %c9_i32_420 dim 1 : vector<8x128xf32>, i32 -> vector<8x128xf32>
    %c6_421 = arith.constant 6 : index
    %c0_422 = arith.constant 0 : index
    %c0_423 = arith.constant 0 : index
    %722 = vector.load %arg3[%c6_421, %c0_422, %c0_423] : memref<25x1x128xf32, #tpu.memory_space<vmem>>, vector<1x1x128xf32>
    %723 = vector.shape_cast %722 : vector<1x1x128xf32> to vector<1x128xf32>
    %724 = vector.broadcast %723 : vector<1x128xf32> to vector<8x128xf32>
    %725 = arith.mulf %721, %724 : vector<8x128xf32>
    %c6_424 = arith.constant 6 : index
    %c0_425 = arith.constant 0 : index
    %c0_426 = arith.constant 0 : index
    %726 = vector.load %arg13[%c6_424, %c0_425, %c0_426] : memref<25x8x1xf32, #tpu.memory_space<vmem>>, vector<1x8x1xf32>
    %727 = vector.shape_cast %726 : vector<1x8x1xf32> to vector<8x1xf32>
    %728 = vector.broadcast %727 : vector<8x1xf32> to vector<8x128xf32>
    %729 = arith.mulf %725, %728 : vector<8x128xf32>
    %730 = arith.addf %720, %729 : vector<8x128xf32>
    %c8_i32_427 = arith.constant 8 : i32
    %731 = tpu.dynamic_rotate %661 by %c8_i32_427 dim 1 : vector<8x128xf32>, i32 -> vector<8x128xf32>
    %c7_428 = arith.constant 7 : index
    %c0_429 = arith.constant 0 : index
    %c0_430 = arith.constant 0 : index
    %732 = vector.load %arg3[%c7_428, %c0_429, %c0_430] : memref<25x1x128xf32, #tpu.memory_space<vmem>>, vector<1x1x128xf32>
    %733 = vector.shape_cast %732 : vector<1x1x128xf32> to vector<1x128xf32>
    %734 = vector.broadcast %733 : vector<1x128xf32> to vector<8x128xf32>
    %735 = arith.mulf %731, %734 : vector<8x128xf32>
    %c7_431 = arith.constant 7 : index
    %c0_432 = arith.constant 0 : index
    %c0_433 = arith.constant 0 : index
    %736 = vector.load %arg13[%c7_431, %c0_432, %c0_433] : memref<25x8x1xf32, #tpu.memory_space<vmem>>, vector<1x8x1xf32>
    %737 = vector.shape_cast %736 : vector<1x8x1xf32> to vector<8x1xf32>
    %738 = vector.broadcast %737 : vector<8x1xf32> to vector<8x128xf32>
    %739 = arith.mulf %735, %738 : vector<8x128xf32>
    %740 = arith.addf %730, %739 : vector<8x128xf32>
    %c7_i32_434 = arith.constant 7 : i32
    %741 = tpu.dynamic_rotate %661 by %c7_i32_434 dim 1 : vector<8x128xf32>, i32 -> vector<8x128xf32>
    %c8_435 = arith.constant 8 : index
    %c0_436 = arith.constant 0 : index
    %c0_437 = arith.constant 0 : index
    %742 = vector.load %arg3[%c8_435, %c0_436, %c0_437] : memref<25x1x128xf32, #tpu.memory_space<vmem>>, vector<1x1x128xf32>
    %743 = vector.shape_cast %742 : vector<1x1x128xf32> to vector<1x128xf32>
    %744 = vector.broadcast %743 : vector<1x128xf32> to vector<8x128xf32>
    %745 = arith.mulf %741, %744 : vector<8x128xf32>
    %c8_438 = arith.constant 8 : index
    %c0_439 = arith.constant 0 : index
    %c0_440 = arith.constant 0 : index
    %746 = vector.load %arg13[%c8_438, %c0_439, %c0_440] : memref<25x8x1xf32, #tpu.memory_space<vmem>>, vector<1x8x1xf32>
    %747 = vector.shape_cast %746 : vector<1x8x1xf32> to vector<8x1xf32>
    %748 = vector.broadcast %747 : vector<8x1xf32> to vector<8x128xf32>
    %749 = arith.mulf %745, %748 : vector<8x128xf32>
    %750 = arith.addf %740, %749 : vector<8x128xf32>
    %c6_i32_441 = arith.constant 6 : i32
    %751 = tpu.dynamic_rotate %661 by %c6_i32_441 dim 1 : vector<8x128xf32>, i32 -> vector<8x128xf32>
    %c9_442 = arith.constant 9 : index
    %c0_443 = arith.constant 0 : index
    %c0_444 = arith.constant 0 : index
    %752 = vector.load %arg3[%c9_442, %c0_443, %c0_444] : memref<25x1x128xf32, #tpu.memory_space<vmem>>, vector<1x1x128xf32>
    %753 = vector.shape_cast %752 : vector<1x1x128xf32> to vector<1x128xf32>
    %754 = vector.broadcast %753 : vector<1x128xf32> to vector<8x128xf32>
    %755 = arith.mulf %751, %754 : vector<8x128xf32>
    %c9_445 = arith.constant 9 : index
    %c0_446 = arith.constant 0 : index
    %c0_447 = arith.constant 0 : index
    %756 = vector.load %arg13[%c9_445, %c0_446, %c0_447] : memref<25x8x1xf32, #tpu.memory_space<vmem>>, vector<1x8x1xf32>
    %757 = vector.shape_cast %756 : vector<1x8x1xf32> to vector<8x1xf32>
    %758 = vector.broadcast %757 : vector<8x1xf32> to vector<8x128xf32>
    %759 = arith.mulf %755, %758 : vector<8x128xf32>
    %760 = arith.addf %750, %759 : vector<8x128xf32>
    %c2_i32_448 = arith.constant 2 : i32
    %761 = tpu.dynamic_rotate %661 by %c2_i32_448 dim 1 : vector<8x128xf32>, i32 -> vector<8x128xf32>
    %c10_449 = arith.constant 10 : index
    %c0_450 = arith.constant 0 : index
    %c0_451 = arith.constant 0 : index
    %762 = vector.load %arg3[%c10_449, %c0_450, %c0_451] : memref<25x1x128xf32, #tpu.memory_space<vmem>>, vector<1x1x128xf32>
    %763 = vector.shape_cast %762 : vector<1x1x128xf32> to vector<1x128xf32>
    %764 = vector.broadcast %763 : vector<1x128xf32> to vector<8x128xf32>
    %765 = arith.mulf %761, %764 : vector<8x128xf32>
    %c10_452 = arith.constant 10 : index
    %c0_453 = arith.constant 0 : index
    %c0_454 = arith.constant 0 : index
    %766 = vector.load %arg13[%c10_452, %c0_453, %c0_454] : memref<25x8x1xf32, #tpu.memory_space<vmem>>, vector<1x8x1xf32>
    %767 = vector.shape_cast %766 : vector<1x8x1xf32> to vector<8x1xf32>
    %768 = vector.broadcast %767 : vector<8x1xf32> to vector<8x128xf32>
    %769 = arith.mulf %765, %768 : vector<8x128xf32>
    %770 = arith.addf %760, %769 : vector<8x128xf32>
    %c1_i32_455 = arith.constant 1 : i32
    %771 = tpu.dynamic_rotate %661 by %c1_i32_455 dim 1 : vector<8x128xf32>, i32 -> vector<8x128xf32>
    %c11_456 = arith.constant 11 : index
    %c0_457 = arith.constant 0 : index
    %c0_458 = arith.constant 0 : index
    %772 = vector.load %arg3[%c11_456, %c0_457, %c0_458] : memref<25x1x128xf32, #tpu.memory_space<vmem>>, vector<1x1x128xf32>
    %773 = vector.shape_cast %772 : vector<1x1x128xf32> to vector<1x128xf32>
    %774 = vector.broadcast %773 : vector<1x128xf32> to vector<8x128xf32>
    %775 = arith.mulf %771, %774 : vector<8x128xf32>
    %c11_459 = arith.constant 11 : index
    %c0_460 = arith.constant 0 : index
    %c0_461 = arith.constant 0 : index
    %776 = vector.load %arg13[%c11_459, %c0_460, %c0_461] : memref<25x8x1xf32, #tpu.memory_space<vmem>>, vector<1x8x1xf32>
    %777 = vector.shape_cast %776 : vector<1x8x1xf32> to vector<8x1xf32>
    %778 = vector.broadcast %777 : vector<8x1xf32> to vector<8x128xf32>
    %779 = arith.mulf %775, %778 : vector<8x128xf32>
    %780 = arith.addf %770, %779 : vector<8x128xf32>
    %c12_462 = arith.constant 12 : index
    %c0_463 = arith.constant 0 : index
    %c0_464 = arith.constant 0 : index
    %781 = vector.load %arg3[%c12_462, %c0_463, %c0_464] : memref<25x1x128xf32, #tpu.memory_space<vmem>>, vector<1x1x128xf32>
    %782 = vector.shape_cast %781 : vector<1x1x128xf32> to vector<1x128xf32>
    %783 = vector.broadcast %782 : vector<1x128xf32> to vector<8x128xf32>
    %784 = arith.mulf %661, %783 : vector<8x128xf32>
    %c12_465 = arith.constant 12 : index
    %c0_466 = arith.constant 0 : index
    %c0_467 = arith.constant 0 : index
    %785 = vector.load %arg13[%c12_465, %c0_466, %c0_467] : memref<25x8x1xf32, #tpu.memory_space<vmem>>, vector<1x8x1xf32>
    %786 = vector.shape_cast %785 : vector<1x8x1xf32> to vector<8x1xf32>
    %787 = vector.broadcast %786 : vector<8x1xf32> to vector<8x128xf32>
    %788 = arith.mulf %784, %787 : vector<8x128xf32>
    %789 = arith.addf %780, %788 : vector<8x128xf32>
    %c127_i32_468 = arith.constant 127 : i32
    %790 = tpu.dynamic_rotate %661 by %c127_i32_468 dim 1 : vector<8x128xf32>, i32 -> vector<8x128xf32>
    %c13_469 = arith.constant 13 : index
    %c0_470 = arith.constant 0 : index
    %c0_471 = arith.constant 0 : index
    %791 = vector.load %arg3[%c13_469, %c0_470, %c0_471] : memref<25x1x128xf32, #tpu.memory_space<vmem>>, vector<1x1x128xf32>
    %792 = vector.shape_cast %791 : vector<1x1x128xf32> to vector<1x128xf32>
    %793 = vector.broadcast %792 : vector<1x128xf32> to vector<8x128xf32>
    %794 = arith.mulf %790, %793 : vector<8x128xf32>
    %c13_472 = arith.constant 13 : index
    %c0_473 = arith.constant 0 : index
    %c0_474 = arith.constant 0 : index
    %795 = vector.load %arg13[%c13_472, %c0_473, %c0_474] : memref<25x8x1xf32, #tpu.memory_space<vmem>>, vector<1x8x1xf32>
    %796 = vector.shape_cast %795 : vector<1x8x1xf32> to vector<8x1xf32>
    %797 = vector.broadcast %796 : vector<8x1xf32> to vector<8x128xf32>
    %798 = arith.mulf %794, %797 : vector<8x128xf32>
    %799 = arith.addf %789, %798 : vector<8x128xf32>
    %c126_i32_475 = arith.constant 126 : i32
    %800 = tpu.dynamic_rotate %661 by %c126_i32_475 dim 1 : vector<8x128xf32>, i32 -> vector<8x128xf32>
    %c14_476 = arith.constant 14 : index
    %c0_477 = arith.constant 0 : index
    %c0_478 = arith.constant 0 : index
    %801 = vector.load %arg3[%c14_476, %c0_477, %c0_478] : memref<25x1x128xf32, #tpu.memory_space<vmem>>, vector<1x1x128xf32>
    %802 = vector.shape_cast %801 : vector<1x1x128xf32> to vector<1x128xf32>
    %803 = vector.broadcast %802 : vector<1x128xf32> to vector<8x128xf32>
    %804 = arith.mulf %800, %803 : vector<8x128xf32>
    %c14_479 = arith.constant 14 : index
    %c0_480 = arith.constant 0 : index
    %c0_481 = arith.constant 0 : index
    %805 = vector.load %arg13[%c14_479, %c0_480, %c0_481] : memref<25x8x1xf32, #tpu.memory_space<vmem>>, vector<1x8x1xf32>
    %806 = vector.shape_cast %805 : vector<1x8x1xf32> to vector<8x1xf32>
    %807 = vector.broadcast %806 : vector<8x1xf32> to vector<8x128xf32>
    %808 = arith.mulf %804, %807 : vector<8x128xf32>
    %809 = arith.addf %799, %808 : vector<8x128xf32>
    %c122_i32_482 = arith.constant 122 : i32
    %810 = tpu.dynamic_rotate %661 by %c122_i32_482 dim 1 : vector<8x128xf32>, i32 -> vector<8x128xf32>
    %c15_483 = arith.constant 15 : index
    %c0_484 = arith.constant 0 : index
    %c0_485 = arith.constant 0 : index
    %811 = vector.load %arg3[%c15_483, %c0_484, %c0_485] : memref<25x1x128xf32, #tpu.memory_space<vmem>>, vector<1x1x128xf32>
    %812 = vector.shape_cast %811 : vector<1x1x128xf32> to vector<1x128xf32>
    %813 = vector.broadcast %812 : vector<1x128xf32> to vector<8x128xf32>
    %814 = arith.mulf %810, %813 : vector<8x128xf32>
    %c15_486 = arith.constant 15 : index
    %c0_487 = arith.constant 0 : index
    %c0_488 = arith.constant 0 : index
    %815 = vector.load %arg13[%c15_486, %c0_487, %c0_488] : memref<25x8x1xf32, #tpu.memory_space<vmem>>, vector<1x8x1xf32>
    %816 = vector.shape_cast %815 : vector<1x8x1xf32> to vector<8x1xf32>
    %817 = vector.broadcast %816 : vector<8x1xf32> to vector<8x128xf32>
    %818 = arith.mulf %814, %817 : vector<8x128xf32>
    %819 = arith.addf %809, %818 : vector<8x128xf32>
    %c121_i32_489 = arith.constant 121 : i32
    %820 = tpu.dynamic_rotate %661 by %c121_i32_489 dim 1 : vector<8x128xf32>, i32 -> vector<8x128xf32>
    %c16_490 = arith.constant 16 : index
    %c0_491 = arith.constant 0 : index
    %c0_492 = arith.constant 0 : index
    %821 = vector.load %arg3[%c16_490, %c0_491, %c0_492] : memref<25x1x128xf32, #tpu.memory_space<vmem>>, vector<1x1x128xf32>
    %822 = vector.shape_cast %821 : vector<1x1x128xf32> to vector<1x128xf32>
    %823 = vector.broadcast %822 : vector<1x128xf32> to vector<8x128xf32>
    %824 = arith.mulf %820, %823 : vector<8x128xf32>
    %c16_493 = arith.constant 16 : index
    %c0_494 = arith.constant 0 : index
    %c0_495 = arith.constant 0 : index
    %825 = vector.load %arg13[%c16_493, %c0_494, %c0_495] : memref<25x8x1xf32, #tpu.memory_space<vmem>>, vector<1x8x1xf32>
    %826 = vector.shape_cast %825 : vector<1x8x1xf32> to vector<8x1xf32>
    %827 = vector.broadcast %826 : vector<8x1xf32> to vector<8x128xf32>
    %828 = arith.mulf %824, %827 : vector<8x128xf32>
    %829 = arith.addf %819, %828 : vector<8x128xf32>
    %c120_i32_496 = arith.constant 120 : i32
    %830 = tpu.dynamic_rotate %661 by %c120_i32_496 dim 1 : vector<8x128xf32>, i32 -> vector<8x128xf32>
    %c17_497 = arith.constant 17 : index
    %c0_498 = arith.constant 0 : index
    %c0_499 = arith.constant 0 : index
    %831 = vector.load %arg3[%c17_497, %c0_498, %c0_499] : memref<25x1x128xf32, #tpu.memory_space<vmem>>, vector<1x1x128xf32>
    %832 = vector.shape_cast %831 : vector<1x1x128xf32> to vector<1x128xf32>
    %833 = vector.broadcast %832 : vector<1x128xf32> to vector<8x128xf32>
    %834 = arith.mulf %830, %833 : vector<8x128xf32>
    %c17_500 = arith.constant 17 : index
    %c0_501 = arith.constant 0 : index
    %c0_502 = arith.constant 0 : index
    %835 = vector.load %arg13[%c17_500, %c0_501, %c0_502] : memref<25x8x1xf32, #tpu.memory_space<vmem>>, vector<1x8x1xf32>
    %836 = vector.shape_cast %835 : vector<1x8x1xf32> to vector<8x1xf32>
    %837 = vector.broadcast %836 : vector<8x1xf32> to vector<8x128xf32>
    %838 = arith.mulf %834, %837 : vector<8x128xf32>
    %839 = arith.addf %829, %838 : vector<8x128xf32>
    %c119_i32_503 = arith.constant 119 : i32
    %840 = tpu.dynamic_rotate %661 by %c119_i32_503 dim 1 : vector<8x128xf32>, i32 -> vector<8x128xf32>
    %c18_504 = arith.constant 18 : index
    %c0_505 = arith.constant 0 : index
    %c0_506 = arith.constant 0 : index
    %841 = vector.load %arg3[%c18_504, %c0_505, %c0_506] : memref<25x1x128xf32, #tpu.memory_space<vmem>>, vector<1x1x128xf32>
    %842 = vector.shape_cast %841 : vector<1x1x128xf32> to vector<1x128xf32>
    %843 = vector.broadcast %842 : vector<1x128xf32> to vector<8x128xf32>
    %844 = arith.mulf %840, %843 : vector<8x128xf32>
    %c18_507 = arith.constant 18 : index
    %c0_508 = arith.constant 0 : index
    %c0_509 = arith.constant 0 : index
    %845 = vector.load %arg13[%c18_507, %c0_508, %c0_509] : memref<25x8x1xf32, #tpu.memory_space<vmem>>, vector<1x8x1xf32>
    %846 = vector.shape_cast %845 : vector<1x8x1xf32> to vector<8x1xf32>
    %847 = vector.broadcast %846 : vector<8x1xf32> to vector<8x128xf32>
    %848 = arith.mulf %844, %847 : vector<8x128xf32>
    %849 = arith.addf %839, %848 : vector<8x128xf32>
    %c118_i32_510 = arith.constant 118 : i32
    %850 = tpu.dynamic_rotate %661 by %c118_i32_510 dim 1 : vector<8x128xf32>, i32 -> vector<8x128xf32>
    %c19_511 = arith.constant 19 : index
    %c0_512 = arith.constant 0 : index
    %c0_513 = arith.constant 0 : index
    %851 = vector.load %arg3[%c19_511, %c0_512, %c0_513] : memref<25x1x128xf32, #tpu.memory_space<vmem>>, vector<1x1x128xf32>
    %852 = vector.shape_cast %851 : vector<1x1x128xf32> to vector<1x128xf32>
    %853 = vector.broadcast %852 : vector<1x128xf32> to vector<8x128xf32>
    %854 = arith.mulf %850, %853 : vector<8x128xf32>
    %c19_514 = arith.constant 19 : index
    %c0_515 = arith.constant 0 : index
    %c0_516 = arith.constant 0 : index
    %855 = vector.load %arg13[%c19_514, %c0_515, %c0_516] : memref<25x8x1xf32, #tpu.memory_space<vmem>>, vector<1x8x1xf32>
    %856 = vector.shape_cast %855 : vector<1x8x1xf32> to vector<8x1xf32>
    %857 = vector.broadcast %856 : vector<8x1xf32> to vector<8x128xf32>
    %858 = arith.mulf %854, %857 : vector<8x128xf32>
    %859 = arith.addf %849, %858 : vector<8x128xf32>
    %c114_i32_517 = arith.constant 114 : i32
    %860 = tpu.dynamic_rotate %661 by %c114_i32_517 dim 1 : vector<8x128xf32>, i32 -> vector<8x128xf32>
    %c20_518 = arith.constant 20 : index
    %c0_519 = arith.constant 0 : index
    %c0_520 = arith.constant 0 : index
    %861 = vector.load %arg3[%c20_518, %c0_519, %c0_520] : memref<25x1x128xf32, #tpu.memory_space<vmem>>, vector<1x1x128xf32>
    %862 = vector.shape_cast %861 : vector<1x1x128xf32> to vector<1x128xf32>
    %863 = vector.broadcast %862 : vector<1x128xf32> to vector<8x128xf32>
    %864 = arith.mulf %860, %863 : vector<8x128xf32>
    %c20_521 = arith.constant 20 : index
    %c0_522 = arith.constant 0 : index
    %c0_523 = arith.constant 0 : index
    %865 = vector.load %arg13[%c20_521, %c0_522, %c0_523] : memref<25x8x1xf32, #tpu.memory_space<vmem>>, vector<1x8x1xf32>
    %866 = vector.shape_cast %865 : vector<1x8x1xf32> to vector<8x1xf32>
    %867 = vector.broadcast %866 : vector<8x1xf32> to vector<8x128xf32>
    %868 = arith.mulf %864, %867 : vector<8x128xf32>
    %869 = arith.addf %859, %868 : vector<8x128xf32>
    %c113_i32_524 = arith.constant 113 : i32
    %870 = tpu.dynamic_rotate %661 by %c113_i32_524 dim 1 : vector<8x128xf32>, i32 -> vector<8x128xf32>
    %c21_525 = arith.constant 21 : index
    %c0_526 = arith.constant 0 : index
    %c0_527 = arith.constant 0 : index
    %871 = vector.load %arg3[%c21_525, %c0_526, %c0_527] : memref<25x1x128xf32, #tpu.memory_space<vmem>>, vector<1x1x128xf32>
    %872 = vector.shape_cast %871 : vector<1x1x128xf32> to vector<1x128xf32>
    %873 = vector.broadcast %872 : vector<1x128xf32> to vector<8x128xf32>
    %874 = arith.mulf %870, %873 : vector<8x128xf32>
    %c21_528 = arith.constant 21 : index
    %c0_529 = arith.constant 0 : index
    %c0_530 = arith.constant 0 : index
    %875 = vector.load %arg13[%c21_528, %c0_529, %c0_530] : memref<25x8x1xf32, #tpu.memory_space<vmem>>, vector<1x8x1xf32>
    %876 = vector.shape_cast %875 : vector<1x8x1xf32> to vector<8x1xf32>
    %877 = vector.broadcast %876 : vector<8x1xf32> to vector<8x128xf32>
    %878 = arith.mulf %874, %877 : vector<8x128xf32>
    %879 = arith.addf %869, %878 : vector<8x128xf32>
    %c112_i32_531 = arith.constant 112 : i32
    %880 = tpu.dynamic_rotate %661 by %c112_i32_531 dim 1 : vector<8x128xf32>, i32 -> vector<8x128xf32>
    %c22_532 = arith.constant 22 : index
    %c0_533 = arith.constant 0 : index
    %c0_534 = arith.constant 0 : index
    %881 = vector.load %arg3[%c22_532, %c0_533, %c0_534] : memref<25x1x128xf32, #tpu.memory_space<vmem>>, vector<1x1x128xf32>
    %882 = vector.shape_cast %881 : vector<1x1x128xf32> to vector<1x128xf32>
    %883 = vector.broadcast %882 : vector<1x128xf32> to vector<8x128xf32>
    %884 = arith.mulf %880, %883 : vector<8x128xf32>
    %c22_535 = arith.constant 22 : index
    %c0_536 = arith.constant 0 : index
    %c0_537 = arith.constant 0 : index
    %885 = vector.load %arg13[%c22_535, %c0_536, %c0_537] : memref<25x8x1xf32, #tpu.memory_space<vmem>>, vector<1x8x1xf32>
    %886 = vector.shape_cast %885 : vector<1x8x1xf32> to vector<8x1xf32>
    %887 = vector.broadcast %886 : vector<8x1xf32> to vector<8x128xf32>
    %888 = arith.mulf %884, %887 : vector<8x128xf32>
    %889 = arith.addf %879, %888 : vector<8x128xf32>
    %c111_i32_538 = arith.constant 111 : i32
    %890 = tpu.dynamic_rotate %661 by %c111_i32_538 dim 1 : vector<8x128xf32>, i32 -> vector<8x128xf32>
    %c23_539 = arith.constant 23 : index
    %c0_540 = arith.constant 0 : index
    %c0_541 = arith.constant 0 : index
    %891 = vector.load %arg3[%c23_539, %c0_540, %c0_541] : memref<25x1x128xf32, #tpu.memory_space<vmem>>, vector<1x1x128xf32>
    %892 = vector.shape_cast %891 : vector<1x1x128xf32> to vector<1x128xf32>
    %893 = vector.broadcast %892 : vector<1x128xf32> to vector<8x128xf32>
    %894 = arith.mulf %890, %893 : vector<8x128xf32>
    %c23_542 = arith.constant 23 : index
    %c0_543 = arith.constant 0 : index
    %c0_544 = arith.constant 0 : index
    %895 = vector.load %arg13[%c23_542, %c0_543, %c0_544] : memref<25x8x1xf32, #tpu.memory_space<vmem>>, vector<1x8x1xf32>
    %896 = vector.shape_cast %895 : vector<1x8x1xf32> to vector<8x1xf32>
    %897 = vector.broadcast %896 : vector<8x1xf32> to vector<8x128xf32>
    %898 = arith.mulf %894, %897 : vector<8x128xf32>
    %899 = arith.addf %889, %898 : vector<8x128xf32>
    %c110_i32_545 = arith.constant 110 : i32
    %900 = tpu.dynamic_rotate %661 by %c110_i32_545 dim 1 : vector<8x128xf32>, i32 -> vector<8x128xf32>
    %c24_546 = arith.constant 24 : index
    %c0_547 = arith.constant 0 : index
    %c0_548 = arith.constant 0 : index
    %901 = vector.load %arg3[%c24_546, %c0_547, %c0_548] : memref<25x1x128xf32, #tpu.memory_space<vmem>>, vector<1x1x128xf32>
    %902 = vector.shape_cast %901 : vector<1x1x128xf32> to vector<1x128xf32>
    %903 = vector.broadcast %902 : vector<1x128xf32> to vector<8x128xf32>
    %904 = arith.mulf %900, %903 : vector<8x128xf32>
    %c24_549 = arith.constant 24 : index
    %c0_550 = arith.constant 0 : index
    %c0_551 = arith.constant 0 : index
    %905 = vector.load %arg13[%c24_549, %c0_550, %c0_551] : memref<25x8x1xf32, #tpu.memory_space<vmem>>, vector<1x8x1xf32>
    %906 = vector.shape_cast %905 : vector<1x8x1xf32> to vector<8x1xf32>
    %907 = vector.broadcast %906 : vector<8x1xf32> to vector<8x128xf32>
    %908 = arith.mulf %904, %907 : vector<8x128xf32>
    %909 = arith.addf %899, %908 : vector<8x128xf32>
    %c0_552 = arith.constant 0 : index
    %c0_553 = arith.constant 0 : index
    %910 = vector.load %arg14[%c0_552, %c0_553] : memref<8x8xf32, #tpu.memory_space<vmem>>, vector<8x8xf32>
    %cst_554 = arith.constant dense<0.000000e+00> : vector<8x128xf32>
    %911 = tpu.matmul %910, %909, %cst_554 {dimension_numbers = #tpu.dot_dimension_numbers<[1], [0], [0], [1], [0, 0, 1, 1], [], []>} : vector<8x8xf32>, vector<8x128xf32>, vector<8x128xf32> -> vector<8x128xf32>
    %cst_555 = arith.constant dense<0.000000e+00> : vector<8xf32>
    %912 = vector.multi_reduction <add>, %911, %cst_555 [1] : vector<8x128xf32> to vector<8xf32>
    %913 = vector.shape_cast %912 : vector<8xf32> to vector<8x1xf32>
    %cst_556 = arith.constant 1.280000e+02 : f32
    %914 = vector.broadcast %cst_556 : f32 to vector<8x1xf32>
    %915 = arith.divf %913, %914 : vector<8x1xf32>
    %916 = vector.broadcast %915 : vector<8x1xf32> to vector<8x128xf32>
    %917 = arith.subf %911, %916 : vector<8x128xf32>
    %918 = arith.mulf %917, %917 : vector<8x128xf32>
    %cst_557 = arith.constant dense<0.000000e+00> : vector<8xf32>
    %919 = vector.multi_reduction <add>, %918, %cst_557 [1] : vector<8x128xf32> to vector<8xf32>
    %920 = vector.shape_cast %919 : vector<8xf32> to vector<8x1xf32>
    %cst_558 = arith.constant 1.280000e+02 : f32
    %921 = vector.broadcast %cst_558 : f32 to vector<8x1xf32>
    %922 = arith.divf %920, %921 : vector<8x1xf32>
    %cst_559 = arith.constant 9.99999974E-6 : f32
    %923 = vector.broadcast %cst_559 : f32 to vector<8x1xf32>
    %924 = arith.addf %922, %923 : vector<8x1xf32>
    %925 = math.rsqrt %924 : vector<8x1xf32>
    %926 = vector.broadcast %925 : vector<8x1xf32> to vector<8x128xf32>
    %927 = arith.mulf %917, %926 : vector<8x128xf32>
    %cst_560 = arith.constant 0.000000e+00 : f32
    %928 = vector.broadcast %cst_560 : f32 to vector<8x128xf32>
    %929 = arith.maximumf %0, %928 : vector<8x128xf32>
    %c18_i32_561 = arith.constant 18 : i32
    %930 = tpu.dynamic_rotate %929 by %c18_i32_561 dim 1 : vector<8x128xf32>, i32 -> vector<8x128xf32>
    %c0_562 = arith.constant 0 : index
    %c0_563 = arith.constant 0 : index
    %c0_564 = arith.constant 0 : index
    %931 = vector.load %arg4[%c0_562, %c0_563, %c0_564] : memref<9x1x128xf32, #tpu.memory_space<vmem>>, vector<1x1x128xf32>
    %932 = vector.shape_cast %931 : vector<1x1x128xf32> to vector<1x128xf32>
    %933 = vector.broadcast %932 : vector<1x128xf32> to vector<8x128xf32>
    %934 = arith.mulf %930, %933 : vector<8x128xf32>
    %c0_565 = arith.constant 0 : index
    %c0_566 = arith.constant 0 : index
    %c0_567 = arith.constant 0 : index
    %935 = vector.load %arg15[%c0_565, %c0_566, %c0_567] : memref<9x8x1xf32, #tpu.memory_space<vmem>>, vector<1x8x1xf32>
    %936 = vector.shape_cast %935 : vector<1x8x1xf32> to vector<8x1xf32>
    %937 = vector.broadcast %936 : vector<8x1xf32> to vector<8x128xf32>
    %938 = arith.mulf %934, %937 : vector<8x128xf32>
    %c16_i32_568 = arith.constant 16 : i32
    %939 = tpu.dynamic_rotate %929 by %c16_i32_568 dim 1 : vector<8x128xf32>, i32 -> vector<8x128xf32>
    %c1_569 = arith.constant 1 : index
    %c0_570 = arith.constant 0 : index
    %c0_571 = arith.constant 0 : index
    %940 = vector.load %arg4[%c1_569, %c0_570, %c0_571] : memref<9x1x128xf32, #tpu.memory_space<vmem>>, vector<1x1x128xf32>
    %941 = vector.shape_cast %940 : vector<1x1x128xf32> to vector<1x128xf32>
    %942 = vector.broadcast %941 : vector<1x128xf32> to vector<8x128xf32>
    %943 = arith.mulf %939, %942 : vector<8x128xf32>
    %c1_572 = arith.constant 1 : index
    %c0_573 = arith.constant 0 : index
    %c0_574 = arith.constant 0 : index
    %944 = vector.load %arg15[%c1_572, %c0_573, %c0_574] : memref<9x8x1xf32, #tpu.memory_space<vmem>>, vector<1x8x1xf32>
    %945 = vector.shape_cast %944 : vector<1x8x1xf32> to vector<8x1xf32>
    %946 = vector.broadcast %945 : vector<8x1xf32> to vector<8x128xf32>
    %947 = arith.mulf %943, %946 : vector<8x128xf32>
    %948 = arith.addf %938, %947 : vector<8x128xf32>
    %c14_i32_575 = arith.constant 14 : i32
    %949 = tpu.dynamic_rotate %929 by %c14_i32_575 dim 1 : vector<8x128xf32>, i32 -> vector<8x128xf32>
    %c2_576 = arith.constant 2 : index
    %c0_577 = arith.constant 0 : index
    %c0_578 = arith.constant 0 : index
    %950 = vector.load %arg4[%c2_576, %c0_577, %c0_578] : memref<9x1x128xf32, #tpu.memory_space<vmem>>, vector<1x1x128xf32>
    %951 = vector.shape_cast %950 : vector<1x1x128xf32> to vector<1x128xf32>
    %952 = vector.broadcast %951 : vector<1x128xf32> to vector<8x128xf32>
    %953 = arith.mulf %949, %952 : vector<8x128xf32>
    %c2_579 = arith.constant 2 : index
    %c0_580 = arith.constant 0 : index
    %c0_581 = arith.constant 0 : index
    %954 = vector.load %arg15[%c2_579, %c0_580, %c0_581] : memref<9x8x1xf32, #tpu.memory_space<vmem>>, vector<1x8x1xf32>
    %955 = vector.shape_cast %954 : vector<1x8x1xf32> to vector<8x1xf32>
    %956 = vector.broadcast %955 : vector<8x1xf32> to vector<8x128xf32>
    %957 = arith.mulf %953, %956 : vector<8x128xf32>
    %958 = arith.addf %948, %957 : vector<8x128xf32>
    %c2_i32_582 = arith.constant 2 : i32
    %959 = tpu.dynamic_rotate %929 by %c2_i32_582 dim 1 : vector<8x128xf32>, i32 -> vector<8x128xf32>
    %c3_583 = arith.constant 3 : index
    %c0_584 = arith.constant 0 : index
    %c0_585 = arith.constant 0 : index
    %960 = vector.load %arg4[%c3_583, %c0_584, %c0_585] : memref<9x1x128xf32, #tpu.memory_space<vmem>>, vector<1x1x128xf32>
    %961 = vector.shape_cast %960 : vector<1x1x128xf32> to vector<1x128xf32>
    %962 = vector.broadcast %961 : vector<1x128xf32> to vector<8x128xf32>
    %963 = arith.mulf %959, %962 : vector<8x128xf32>
    %c3_586 = arith.constant 3 : index
    %c0_587 = arith.constant 0 : index
    %c0_588 = arith.constant 0 : index
    %964 = vector.load %arg15[%c3_586, %c0_587, %c0_588] : memref<9x8x1xf32, #tpu.memory_space<vmem>>, vector<1x8x1xf32>
    %965 = vector.shape_cast %964 : vector<1x8x1xf32> to vector<8x1xf32>
    %966 = vector.broadcast %965 : vector<8x1xf32> to vector<8x128xf32>
    %967 = arith.mulf %963, %966 : vector<8x128xf32>
    %968 = arith.addf %958, %967 : vector<8x128xf32>
    %c4_589 = arith.constant 4 : index
    %c0_590 = arith.constant 0 : index
    %c0_591 = arith.constant 0 : index
    %969 = vector.load %arg4[%c4_589, %c0_590, %c0_591] : memref<9x1x128xf32, #tpu.memory_space<vmem>>, vector<1x1x128xf32>
    %970 = vector.shape_cast %969 : vector<1x1x128xf32> to vector<1x128xf32>
    %971 = vector.broadcast %970 : vector<1x128xf32> to vector<8x128xf32>
    %972 = arith.mulf %929, %971 : vector<8x128xf32>
    %c4_592 = arith.constant 4 : index
    %c0_593 = arith.constant 0 : index
    %c0_594 = arith.constant 0 : index
    %973 = vector.load %arg15[%c4_592, %c0_593, %c0_594] : memref<9x8x1xf32, #tpu.memory_space<vmem>>, vector<1x8x1xf32>
    %974 = vector.shape_cast %973 : vector<1x8x1xf32> to vector<8x1xf32>
    %975 = vector.broadcast %974 : vector<8x1xf32> to vector<8x128xf32>
    %976 = arith.mulf %972, %975 : vector<8x128xf32>
    %977 = arith.addf %968, %976 : vector<8x128xf32>
    %c126_i32_595 = arith.constant 126 : i32
    %978 = tpu.dynamic_rotate %929 by %c126_i32_595 dim 1 : vector<8x128xf32>, i32 -> vector<8x128xf32>
    %c5_596 = arith.constant 5 : index
    %c0_597 = arith.constant 0 : index
    %c0_598 = arith.constant 0 : index
    %979 = vector.load %arg4[%c5_596, %c0_597, %c0_598] : memref<9x1x128xf32, #tpu.memory_space<vmem>>, vector<1x1x128xf32>
    %980 = vector.shape_cast %979 : vector<1x1x128xf32> to vector<1x128xf32>
    %981 = vector.broadcast %980 : vector<1x128xf32> to vector<8x128xf32>
    %982 = arith.mulf %978, %981 : vector<8x128xf32>
    %c5_599 = arith.constant 5 : index
    %c0_600 = arith.constant 0 : index
    %c0_601 = arith.constant 0 : index
    %983 = vector.load %arg15[%c5_599, %c0_600, %c0_601] : memref<9x8x1xf32, #tpu.memory_space<vmem>>, vector<1x8x1xf32>
    %984 = vector.shape_cast %983 : vector<1x8x1xf32> to vector<8x1xf32>
    %985 = vector.broadcast %984 : vector<8x1xf32> to vector<8x128xf32>
    %986 = arith.mulf %982, %985 : vector<8x128xf32>
    %987 = arith.addf %977, %986 : vector<8x128xf32>
    %c114_i32_602 = arith.constant 114 : i32
    %988 = tpu.dynamic_rotate %929 by %c114_i32_602 dim 1 : vector<8x128xf32>, i32 -> vector<8x128xf32>
    %c6_603 = arith.constant 6 : index
    %c0_604 = arith.constant 0 : index
    %c0_605 = arith.constant 0 : index
    %989 = vector.load %arg4[%c6_603, %c0_604, %c0_605] : memref<9x1x128xf32, #tpu.memory_space<vmem>>, vector<1x1x128xf32>
    %990 = vector.shape_cast %989 : vector<1x1x128xf32> to vector<1x128xf32>
    %991 = vector.broadcast %990 : vector<1x128xf32> to vector<8x128xf32>
    %992 = arith.mulf %988, %991 : vector<8x128xf32>
    %c6_606 = arith.constant 6 : index
    %c0_607 = arith.constant 0 : index
    %c0_608 = arith.constant 0 : index
    %993 = vector.load %arg15[%c6_606, %c0_607, %c0_608] : memref<9x8x1xf32, #tpu.memory_space<vmem>>, vector<1x8x1xf32>
    %994 = vector.shape_cast %993 : vector<1x8x1xf32> to vector<8x1xf32>
    %995 = vector.broadcast %994 : vector<8x1xf32> to vector<8x128xf32>
    %996 = arith.mulf %992, %995 : vector<8x128xf32>
    %997 = arith.addf %987, %996 : vector<8x128xf32>
    %c112_i32_609 = arith.constant 112 : i32
    %998 = tpu.dynamic_rotate %929 by %c112_i32_609 dim 1 : vector<8x128xf32>, i32 -> vector<8x128xf32>
    %c7_610 = arith.constant 7 : index
    %c0_611 = arith.constant 0 : index
    %c0_612 = arith.constant 0 : index
    %999 = vector.load %arg4[%c7_610, %c0_611, %c0_612] : memref<9x1x128xf32, #tpu.memory_space<vmem>>, vector<1x1x128xf32>
    %1000 = vector.shape_cast %999 : vector<1x1x128xf32> to vector<1x128xf32>
    %1001 = vector.broadcast %1000 : vector<1x128xf32> to vector<8x128xf32>
    %1002 = arith.mulf %998, %1001 : vector<8x128xf32>
    %c7_613 = arith.constant 7 : index
    %c0_614 = arith.constant 0 : index
    %c0_615 = arith.constant 0 : index
    %1003 = vector.load %arg15[%c7_613, %c0_614, %c0_615] : memref<9x8x1xf32, #tpu.memory_space<vmem>>, vector<1x8x1xf32>
    %1004 = vector.shape_cast %1003 : vector<1x8x1xf32> to vector<8x1xf32>
    %1005 = vector.broadcast %1004 : vector<8x1xf32> to vector<8x128xf32>
    %1006 = arith.mulf %1002, %1005 : vector<8x128xf32>
    %1007 = arith.addf %997, %1006 : vector<8x128xf32>
    %c110_i32_616 = arith.constant 110 : i32
    %1008 = tpu.dynamic_rotate %929 by %c110_i32_616 dim 1 : vector<8x128xf32>, i32 -> vector<8x128xf32>
    %c8_617 = arith.constant 8 : index
    %c0_618 = arith.constant 0 : index
    %c0_619 = arith.constant 0 : index
    %1009 = vector.load %arg4[%c8_617, %c0_618, %c0_619] : memref<9x1x128xf32, #tpu.memory_space<vmem>>, vector<1x1x128xf32>
    %1010 = vector.shape_cast %1009 : vector<1x1x128xf32> to vector<1x128xf32>
    %1011 = vector.broadcast %1010 : vector<1x128xf32> to vector<8x128xf32>
    %1012 = arith.mulf %1008, %1011 : vector<8x128xf32>
    %c8_620 = arith.constant 8 : index
    %c0_621 = arith.constant 0 : index
    %c0_622 = arith.constant 0 : index
    %1013 = vector.load %arg15[%c8_620, %c0_621, %c0_622] : memref<9x8x1xf32, #tpu.memory_space<vmem>>, vector<1x8x1xf32>
    %1014 = vector.shape_cast %1013 : vector<1x8x1xf32> to vector<8x1xf32>
    %1015 = vector.broadcast %1014 : vector<8x1xf32> to vector<8x128xf32>
    %1016 = arith.mulf %1012, %1015 : vector<8x128xf32>
    %1017 = arith.addf %1007, %1016 : vector<8x128xf32>
    %c0_623 = arith.constant 0 : index
    %c0_624 = arith.constant 0 : index
    %1018 = vector.load %arg16[%c0_623, %c0_624] : memref<8x8xf32, #tpu.memory_space<vmem>>, vector<8x8xf32>
    %cst_625 = arith.constant dense<0.000000e+00> : vector<8x128xf32>
    %1019 = tpu.matmul %1018, %1017, %cst_625 {dimension_numbers = #tpu.dot_dimension_numbers<[1], [0], [0], [1], [0, 0, 1, 1], [], []>} : vector<8x8xf32>, vector<8x128xf32>, vector<8x128xf32> -> vector<8x128xf32>
    %cst_626 = arith.constant dense<0.000000e+00> : vector<8xf32>
    %1020 = vector.multi_reduction <add>, %1019, %cst_626 [1] : vector<8x128xf32> to vector<8xf32>
    %1021 = vector.shape_cast %1020 : vector<8xf32> to vector<8x1xf32>
    %cst_627 = arith.constant 1.280000e+02 : f32
    %1022 = vector.broadcast %cst_627 : f32 to vector<8x1xf32>
    %1023 = arith.divf %1021, %1022 : vector<8x1xf32>
    %1024 = vector.broadcast %1023 : vector<8x1xf32> to vector<8x128xf32>
    %1025 = arith.subf %1019, %1024 : vector<8x128xf32>
    %1026 = arith.mulf %1025, %1025 : vector<8x128xf32>
    %cst_628 = arith.constant dense<0.000000e+00> : vector<8xf32>
    %1027 = vector.multi_reduction <add>, %1026, %cst_628 [1] : vector<8x128xf32> to vector<8xf32>
    %1028 = vector.shape_cast %1027 : vector<8xf32> to vector<8x1xf32>
    %cst_629 = arith.constant 1.280000e+02 : f32
    %1029 = vector.broadcast %cst_629 : f32 to vector<8x1xf32>
    %1030 = arith.divf %1028, %1029 : vector<8x1xf32>
    %cst_630 = arith.constant 9.99999974E-6 : f32
    %1031 = vector.broadcast %cst_630 : f32 to vector<8x1xf32>
    %1032 = arith.addf %1030, %1031 : vector<8x1xf32>
    %1033 = math.rsqrt %1032 : vector<8x1xf32>
    %1034 = vector.broadcast %1033 : vector<8x1xf32> to vector<8x128xf32>
    %1035 = arith.mulf %1025, %1034 : vector<8x128xf32>
    %cst_631 = arith.constant 0.000000e+00 : f32
    %1036 = vector.broadcast %cst_631 : f32 to vector<8x128xf32>
    %1037 = arith.maximumf %0, %1036 : vector<8x128xf32>
    %c36_i32 = arith.constant 36 : i32
    %1038 = tpu.dynamic_rotate %1037 by %c36_i32 dim 1 : vector<8x128xf32>, i32 -> vector<8x128xf32>
    %c0_632 = arith.constant 0 : index
    %c0_633 = arith.constant 0 : index
    %c0_634 = arith.constant 0 : index
    %1039 = vector.load %arg5[%c0_632, %c0_633, %c0_634] : memref<25x1x128xf32, #tpu.memory_space<vmem>>, vector<1x1x128xf32>
    %1040 = vector.shape_cast %1039 : vector<1x1x128xf32> to vector<1x128xf32>
    %1041 = vector.broadcast %1040 : vector<1x128xf32> to vector<8x128xf32>
    %1042 = arith.mulf %1038, %1041 : vector<8x128xf32>
    %c0_635 = arith.constant 0 : index
    %c0_636 = arith.constant 0 : index
    %c0_637 = arith.constant 0 : index
    %1043 = vector.load %arg17[%c0_635, %c0_636, %c0_637] : memref<25x8x1xf32, #tpu.memory_space<vmem>>, vector<1x8x1xf32>
    %1044 = vector.shape_cast %1043 : vector<1x8x1xf32> to vector<8x1xf32>
    %1045 = vector.broadcast %1044 : vector<8x1xf32> to vector<8x128xf32>
    %1046 = arith.mulf %1042, %1045 : vector<8x128xf32>
    %c34_i32 = arith.constant 34 : i32
    %1047 = tpu.dynamic_rotate %1037 by %c34_i32 dim 1 : vector<8x128xf32>, i32 -> vector<8x128xf32>
    %c1_638 = arith.constant 1 : index
    %c0_639 = arith.constant 0 : index
    %c0_640 = arith.constant 0 : index
    %1048 = vector.load %arg5[%c1_638, %c0_639, %c0_640] : memref<25x1x128xf32, #tpu.memory_space<vmem>>, vector<1x1x128xf32>
    %1049 = vector.shape_cast %1048 : vector<1x1x128xf32> to vector<1x128xf32>
    %1050 = vector.broadcast %1049 : vector<1x128xf32> to vector<8x128xf32>
    %1051 = arith.mulf %1047, %1050 : vector<8x128xf32>
    %c1_641 = arith.constant 1 : index
    %c0_642 = arith.constant 0 : index
    %c0_643 = arith.constant 0 : index
    %1052 = vector.load %arg17[%c1_641, %c0_642, %c0_643] : memref<25x8x1xf32, #tpu.memory_space<vmem>>, vector<1x8x1xf32>
    %1053 = vector.shape_cast %1052 : vector<1x8x1xf32> to vector<8x1xf32>
    %1054 = vector.broadcast %1053 : vector<8x1xf32> to vector<8x128xf32>
    %1055 = arith.mulf %1051, %1054 : vector<8x128xf32>
    %1056 = arith.addf %1046, %1055 : vector<8x128xf32>
    %c32_i32 = arith.constant 32 : i32
    %1057 = tpu.dynamic_rotate %1037 by %c32_i32 dim 1 : vector<8x128xf32>, i32 -> vector<8x128xf32>
    %c2_644 = arith.constant 2 : index
    %c0_645 = arith.constant 0 : index
    %c0_646 = arith.constant 0 : index
    %1058 = vector.load %arg5[%c2_644, %c0_645, %c0_646] : memref<25x1x128xf32, #tpu.memory_space<vmem>>, vector<1x1x128xf32>
    %1059 = vector.shape_cast %1058 : vector<1x1x128xf32> to vector<1x128xf32>
    %1060 = vector.broadcast %1059 : vector<1x128xf32> to vector<8x128xf32>
    %1061 = arith.mulf %1057, %1060 : vector<8x128xf32>
    %c2_647 = arith.constant 2 : index
    %c0_648 = arith.constant 0 : index
    %c0_649 = arith.constant 0 : index
    %1062 = vector.load %arg17[%c2_647, %c0_648, %c0_649] : memref<25x8x1xf32, #tpu.memory_space<vmem>>, vector<1x8x1xf32>
    %1063 = vector.shape_cast %1062 : vector<1x8x1xf32> to vector<8x1xf32>
    %1064 = vector.broadcast %1063 : vector<8x1xf32> to vector<8x128xf32>
    %1065 = arith.mulf %1061, %1064 : vector<8x128xf32>
    %1066 = arith.addf %1056, %1065 : vector<8x128xf32>
    %c30_i32 = arith.constant 30 : i32
    %1067 = tpu.dynamic_rotate %1037 by %c30_i32 dim 1 : vector<8x128xf32>, i32 -> vector<8x128xf32>
    %c3_650 = arith.constant 3 : index
    %c0_651 = arith.constant 0 : index
    %c0_652 = arith.constant 0 : index
    %1068 = vector.load %arg5[%c3_650, %c0_651, %c0_652] : memref<25x1x128xf32, #tpu.memory_space<vmem>>, vector<1x1x128xf32>
    %1069 = vector.shape_cast %1068 : vector<1x1x128xf32> to vector<1x128xf32>
    %1070 = vector.broadcast %1069 : vector<1x128xf32> to vector<8x128xf32>
    %1071 = arith.mulf %1067, %1070 : vector<8x128xf32>
    %c3_653 = arith.constant 3 : index
    %c0_654 = arith.constant 0 : index
    %c0_655 = arith.constant 0 : index
    %1072 = vector.load %arg17[%c3_653, %c0_654, %c0_655] : memref<25x8x1xf32, #tpu.memory_space<vmem>>, vector<1x8x1xf32>
    %1073 = vector.shape_cast %1072 : vector<1x8x1xf32> to vector<8x1xf32>
    %1074 = vector.broadcast %1073 : vector<8x1xf32> to vector<8x128xf32>
    %1075 = arith.mulf %1071, %1074 : vector<8x128xf32>
    %1076 = arith.addf %1066, %1075 : vector<8x128xf32>
    %c28_i32 = arith.constant 28 : i32
    %1077 = tpu.dynamic_rotate %1037 by %c28_i32 dim 1 : vector<8x128xf32>, i32 -> vector<8x128xf32>
    %c4_656 = arith.constant 4 : index
    %c0_657 = arith.constant 0 : index
    %c0_658 = arith.constant 0 : index
    %1078 = vector.load %arg5[%c4_656, %c0_657, %c0_658] : memref<25x1x128xf32, #tpu.memory_space<vmem>>, vector<1x1x128xf32>
    %1079 = vector.shape_cast %1078 : vector<1x1x128xf32> to vector<1x128xf32>
    %1080 = vector.broadcast %1079 : vector<1x128xf32> to vector<8x128xf32>
    %1081 = arith.mulf %1077, %1080 : vector<8x128xf32>
    %c4_659 = arith.constant 4 : index
    %c0_660 = arith.constant 0 : index
    %c0_661 = arith.constant 0 : index
    %1082 = vector.load %arg17[%c4_659, %c0_660, %c0_661] : memref<25x8x1xf32, #tpu.memory_space<vmem>>, vector<1x8x1xf32>
    %1083 = vector.shape_cast %1082 : vector<1x8x1xf32> to vector<8x1xf32>
    %1084 = vector.broadcast %1083 : vector<8x1xf32> to vector<8x128xf32>
    %1085 = arith.mulf %1081, %1084 : vector<8x128xf32>
    %1086 = arith.addf %1076, %1085 : vector<8x128xf32>
    %c20_i32 = arith.constant 20 : i32
    %1087 = tpu.dynamic_rotate %1037 by %c20_i32 dim 1 : vector<8x128xf32>, i32 -> vector<8x128xf32>
    %c5_662 = arith.constant 5 : index
    %c0_663 = arith.constant 0 : index
    %c0_664 = arith.constant 0 : index
    %1088 = vector.load %arg5[%c5_662, %c0_663, %c0_664] : memref<25x1x128xf32, #tpu.memory_space<vmem>>, vector<1x1x128xf32>
    %1089 = vector.shape_cast %1088 : vector<1x1x128xf32> to vector<1x128xf32>
    %1090 = vector.broadcast %1089 : vector<1x128xf32> to vector<8x128xf32>
    %1091 = arith.mulf %1087, %1090 : vector<8x128xf32>
    %c5_665 = arith.constant 5 : index
    %c0_666 = arith.constant 0 : index
    %c0_667 = arith.constant 0 : index
    %1092 = vector.load %arg17[%c5_665, %c0_666, %c0_667] : memref<25x8x1xf32, #tpu.memory_space<vmem>>, vector<1x8x1xf32>
    %1093 = vector.shape_cast %1092 : vector<1x8x1xf32> to vector<8x1xf32>
    %1094 = vector.broadcast %1093 : vector<8x1xf32> to vector<8x128xf32>
    %1095 = arith.mulf %1091, %1094 : vector<8x128xf32>
    %1096 = arith.addf %1086, %1095 : vector<8x128xf32>
    %c18_i32_668 = arith.constant 18 : i32
    %1097 = tpu.dynamic_rotate %1037 by %c18_i32_668 dim 1 : vector<8x128xf32>, i32 -> vector<8x128xf32>
    %c6_669 = arith.constant 6 : index
    %c0_670 = arith.constant 0 : index
    %c0_671 = arith.constant 0 : index
    %1098 = vector.load %arg5[%c6_669, %c0_670, %c0_671] : memref<25x1x128xf32, #tpu.memory_space<vmem>>, vector<1x1x128xf32>
    %1099 = vector.shape_cast %1098 : vector<1x1x128xf32> to vector<1x128xf32>
    %1100 = vector.broadcast %1099 : vector<1x128xf32> to vector<8x128xf32>
    %1101 = arith.mulf %1097, %1100 : vector<8x128xf32>
    %c6_672 = arith.constant 6 : index
    %c0_673 = arith.constant 0 : index
    %c0_674 = arith.constant 0 : index
    %1102 = vector.load %arg17[%c6_672, %c0_673, %c0_674] : memref<25x8x1xf32, #tpu.memory_space<vmem>>, vector<1x8x1xf32>
    %1103 = vector.shape_cast %1102 : vector<1x8x1xf32> to vector<8x1xf32>
    %1104 = vector.broadcast %1103 : vector<8x1xf32> to vector<8x128xf32>
    %1105 = arith.mulf %1101, %1104 : vector<8x128xf32>
    %1106 = arith.addf %1096, %1105 : vector<8x128xf32>
    %c16_i32_675 = arith.constant 16 : i32
    %1107 = tpu.dynamic_rotate %1037 by %c16_i32_675 dim 1 : vector<8x128xf32>, i32 -> vector<8x128xf32>
    %c7_676 = arith.constant 7 : index
    %c0_677 = arith.constant 0 : index
    %c0_678 = arith.constant 0 : index
    %1108 = vector.load %arg5[%c7_676, %c0_677, %c0_678] : memref<25x1x128xf32, #tpu.memory_space<vmem>>, vector<1x1x128xf32>
    %1109 = vector.shape_cast %1108 : vector<1x1x128xf32> to vector<1x128xf32>
    %1110 = vector.broadcast %1109 : vector<1x128xf32> to vector<8x128xf32>
    %1111 = arith.mulf %1107, %1110 : vector<8x128xf32>
    %c7_679 = arith.constant 7 : index
    %c0_680 = arith.constant 0 : index
    %c0_681 = arith.constant 0 : index
    %1112 = vector.load %arg17[%c7_679, %c0_680, %c0_681] : memref<25x8x1xf32, #tpu.memory_space<vmem>>, vector<1x8x1xf32>
    %1113 = vector.shape_cast %1112 : vector<1x8x1xf32> to vector<8x1xf32>
    %1114 = vector.broadcast %1113 : vector<8x1xf32> to vector<8x128xf32>
    %1115 = arith.mulf %1111, %1114 : vector<8x128xf32>
    %1116 = arith.addf %1106, %1115 : vector<8x128xf32>
    %c14_i32_682 = arith.constant 14 : i32
    %1117 = tpu.dynamic_rotate %1037 by %c14_i32_682 dim 1 : vector<8x128xf32>, i32 -> vector<8x128xf32>
    %c8_683 = arith.constant 8 : index
    %c0_684 = arith.constant 0 : index
    %c0_685 = arith.constant 0 : index
    %1118 = vector.load %arg5[%c8_683, %c0_684, %c0_685] : memref<25x1x128xf32, #tpu.memory_space<vmem>>, vector<1x1x128xf32>
    %1119 = vector.shape_cast %1118 : vector<1x1x128xf32> to vector<1x128xf32>
    %1120 = vector.broadcast %1119 : vector<1x128xf32> to vector<8x128xf32>
    %1121 = arith.mulf %1117, %1120 : vector<8x128xf32>
    %c8_686 = arith.constant 8 : index
    %c0_687 = arith.constant 0 : index
    %c0_688 = arith.constant 0 : index
    %1122 = vector.load %arg17[%c8_686, %c0_687, %c0_688] : memref<25x8x1xf32, #tpu.memory_space<vmem>>, vector<1x8x1xf32>
    %1123 = vector.shape_cast %1122 : vector<1x8x1xf32> to vector<8x1xf32>
    %1124 = vector.broadcast %1123 : vector<8x1xf32> to vector<8x128xf32>
    %1125 = arith.mulf %1121, %1124 : vector<8x128xf32>
    %1126 = arith.addf %1116, %1125 : vector<8x128xf32>
    %c12_i32 = arith.constant 12 : i32
    %1127 = tpu.dynamic_rotate %1037 by %c12_i32 dim 1 : vector<8x128xf32>, i32 -> vector<8x128xf32>
    %c9_689 = arith.constant 9 : index
    %c0_690 = arith.constant 0 : index
    %c0_691 = arith.constant 0 : index
    %1128 = vector.load %arg5[%c9_689, %c0_690, %c0_691] : memref<25x1x128xf32, #tpu.memory_space<vmem>>, vector<1x1x128xf32>
    %1129 = vector.shape_cast %1128 : vector<1x1x128xf32> to vector<1x128xf32>
    %1130 = vector.broadcast %1129 : vector<1x128xf32> to vector<8x128xf32>
    %1131 = arith.mulf %1127, %1130 : vector<8x128xf32>
    %c9_692 = arith.constant 9 : index
    %c0_693 = arith.constant 0 : index
    %c0_694 = arith.constant 0 : index
    %1132 = vector.load %arg17[%c9_692, %c0_693, %c0_694] : memref<25x8x1xf32, #tpu.memory_space<vmem>>, vector<1x8x1xf32>
    %1133 = vector.shape_cast %1132 : vector<1x8x1xf32> to vector<8x1xf32>
    %1134 = vector.broadcast %1133 : vector<8x1xf32> to vector<8x128xf32>
    %1135 = arith.mulf %1131, %1134 : vector<8x128xf32>
    %1136 = arith.addf %1126, %1135 : vector<8x128xf32>
    %c4_i32 = arith.constant 4 : i32
    %1137 = tpu.dynamic_rotate %1037 by %c4_i32 dim 1 : vector<8x128xf32>, i32 -> vector<8x128xf32>
    %c10_695 = arith.constant 10 : index
    %c0_696 = arith.constant 0 : index
    %c0_697 = arith.constant 0 : index
    %1138 = vector.load %arg5[%c10_695, %c0_696, %c0_697] : memref<25x1x128xf32, #tpu.memory_space<vmem>>, vector<1x1x128xf32>
    %1139 = vector.shape_cast %1138 : vector<1x1x128xf32> to vector<1x128xf32>
    %1140 = vector.broadcast %1139 : vector<1x128xf32> to vector<8x128xf32>
    %1141 = arith.mulf %1137, %1140 : vector<8x128xf32>
    %c10_698 = arith.constant 10 : index
    %c0_699 = arith.constant 0 : index
    %c0_700 = arith.constant 0 : index
    %1142 = vector.load %arg17[%c10_698, %c0_699, %c0_700] : memref<25x8x1xf32, #tpu.memory_space<vmem>>, vector<1x8x1xf32>
    %1143 = vector.shape_cast %1142 : vector<1x8x1xf32> to vector<8x1xf32>
    %1144 = vector.broadcast %1143 : vector<8x1xf32> to vector<8x128xf32>
    %1145 = arith.mulf %1141, %1144 : vector<8x128xf32>
    %1146 = arith.addf %1136, %1145 : vector<8x128xf32>
    %c2_i32_701 = arith.constant 2 : i32
    %1147 = tpu.dynamic_rotate %1037 by %c2_i32_701 dim 1 : vector<8x128xf32>, i32 -> vector<8x128xf32>
    %c11_702 = arith.constant 11 : index
    %c0_703 = arith.constant 0 : index
    %c0_704 = arith.constant 0 : index
    %1148 = vector.load %arg5[%c11_702, %c0_703, %c0_704] : memref<25x1x128xf32, #tpu.memory_space<vmem>>, vector<1x1x128xf32>
    %1149 = vector.shape_cast %1148 : vector<1x1x128xf32> to vector<1x128xf32>
    %1150 = vector.broadcast %1149 : vector<1x128xf32> to vector<8x128xf32>
    %1151 = arith.mulf %1147, %1150 : vector<8x128xf32>
    %c11_705 = arith.constant 11 : index
    %c0_706 = arith.constant 0 : index
    %c0_707 = arith.constant 0 : index
    %1152 = vector.load %arg17[%c11_705, %c0_706, %c0_707] : memref<25x8x1xf32, #tpu.memory_space<vmem>>, vector<1x8x1xf32>
    %1153 = vector.shape_cast %1152 : vector<1x8x1xf32> to vector<8x1xf32>
    %1154 = vector.broadcast %1153 : vector<8x1xf32> to vector<8x128xf32>
    %1155 = arith.mulf %1151, %1154 : vector<8x128xf32>
    %1156 = arith.addf %1146, %1155 : vector<8x128xf32>
    %c12_708 = arith.constant 12 : index
    %c0_709 = arith.constant 0 : index
    %c0_710 = arith.constant 0 : index
    %1157 = vector.load %arg5[%c12_708, %c0_709, %c0_710] : memref<25x1x128xf32, #tpu.memory_space<vmem>>, vector<1x1x128xf32>
    %1158 = vector.shape_cast %1157 : vector<1x1x128xf32> to vector<1x128xf32>
    %1159 = vector.broadcast %1158 : vector<1x128xf32> to vector<8x128xf32>
    %1160 = arith.mulf %1037, %1159 : vector<8x128xf32>
    %c12_711 = arith.constant 12 : index
    %c0_712 = arith.constant 0 : index
    %c0_713 = arith.constant 0 : index
    %1161 = vector.load %arg17[%c12_711, %c0_712, %c0_713] : memref<25x8x1xf32, #tpu.memory_space<vmem>>, vector<1x8x1xf32>
    %1162 = vector.shape_cast %1161 : vector<1x8x1xf32> to vector<8x1xf32>
    %1163 = vector.broadcast %1162 : vector<8x1xf32> to vector<8x128xf32>
    %1164 = arith.mulf %1160, %1163 : vector<8x128xf32>
    %1165 = arith.addf %1156, %1164 : vector<8x128xf32>
    %c126_i32_714 = arith.constant 126 : i32
    %1166 = tpu.dynamic_rotate %1037 by %c126_i32_714 dim 1 : vector<8x128xf32>, i32 -> vector<8x128xf32>
    %c13_715 = arith.constant 13 : index
    %c0_716 = arith.constant 0 : index
    %c0_717 = arith.constant 0 : index
    %1167 = vector.load %arg5[%c13_715, %c0_716, %c0_717] : memref<25x1x128xf32, #tpu.memory_space<vmem>>, vector<1x1x128xf32>
    %1168 = vector.shape_cast %1167 : vector<1x1x128xf32> to vector<1x128xf32>
    %1169 = vector.broadcast %1168 : vector<1x128xf32> to vector<8x128xf32>
    %1170 = arith.mulf %1166, %1169 : vector<8x128xf32>
    %c13_718 = arith.constant 13 : index
    %c0_719 = arith.constant 0 : index
    %c0_720 = arith.constant 0 : index
    %1171 = vector.load %arg17[%c13_718, %c0_719, %c0_720] : memref<25x8x1xf32, #tpu.memory_space<vmem>>, vector<1x8x1xf32>
    %1172 = vector.shape_cast %1171 : vector<1x8x1xf32> to vector<8x1xf32>
    %1173 = vector.broadcast %1172 : vector<8x1xf32> to vector<8x128xf32>
    %1174 = arith.mulf %1170, %1173 : vector<8x128xf32>
    %1175 = arith.addf %1165, %1174 : vector<8x128xf32>
    %c124_i32 = arith.constant 124 : i32
    %1176 = tpu.dynamic_rotate %1037 by %c124_i32 dim 1 : vector<8x128xf32>, i32 -> vector<8x128xf32>
    %c14_721 = arith.constant 14 : index
    %c0_722 = arith.constant 0 : index
    %c0_723 = arith.constant 0 : index
    %1177 = vector.load %arg5[%c14_721, %c0_722, %c0_723] : memref<25x1x128xf32, #tpu.memory_space<vmem>>, vector<1x1x128xf32>
    %1178 = vector.shape_cast %1177 : vector<1x1x128xf32> to vector<1x128xf32>
    %1179 = vector.broadcast %1178 : vector<1x128xf32> to vector<8x128xf32>
    %1180 = arith.mulf %1176, %1179 : vector<8x128xf32>
    %c14_724 = arith.constant 14 : index
    %c0_725 = arith.constant 0 : index
    %c0_726 = arith.constant 0 : index
    %1181 = vector.load %arg17[%c14_724, %c0_725, %c0_726] : memref<25x8x1xf32, #tpu.memory_space<vmem>>, vector<1x8x1xf32>
    %1182 = vector.shape_cast %1181 : vector<1x8x1xf32> to vector<8x1xf32>
    %1183 = vector.broadcast %1182 : vector<8x1xf32> to vector<8x128xf32>
    %1184 = arith.mulf %1180, %1183 : vector<8x128xf32>
    %1185 = arith.addf %1175, %1184 : vector<8x128xf32>
    %c116_i32 = arith.constant 116 : i32
    %1186 = tpu.dynamic_rotate %1037 by %c116_i32 dim 1 : vector<8x128xf32>, i32 -> vector<8x128xf32>
    %c15_727 = arith.constant 15 : index
    %c0_728 = arith.constant 0 : index
    %c0_729 = arith.constant 0 : index
    %1187 = vector.load %arg5[%c15_727, %c0_728, %c0_729] : memref<25x1x128xf32, #tpu.memory_space<vmem>>, vector<1x1x128xf32>
    %1188 = vector.shape_cast %1187 : vector<1x1x128xf32> to vector<1x128xf32>
    %1189 = vector.broadcast %1188 : vector<1x128xf32> to vector<8x128xf32>
    %1190 = arith.mulf %1186, %1189 : vector<8x128xf32>
    %c15_730 = arith.constant 15 : index
    %c0_731 = arith.constant 0 : index
    %c0_732 = arith.constant 0 : index
    %1191 = vector.load %arg17[%c15_730, %c0_731, %c0_732] : memref<25x8x1xf32, #tpu.memory_space<vmem>>, vector<1x8x1xf32>
    %1192 = vector.shape_cast %1191 : vector<1x8x1xf32> to vector<8x1xf32>
    %1193 = vector.broadcast %1192 : vector<8x1xf32> to vector<8x128xf32>
    %1194 = arith.mulf %1190, %1193 : vector<8x128xf32>
    %1195 = arith.addf %1185, %1194 : vector<8x128xf32>
    %c114_i32_733 = arith.constant 114 : i32
    %1196 = tpu.dynamic_rotate %1037 by %c114_i32_733 dim 1 : vector<8x128xf32>, i32 -> vector<8x128xf32>
    %c16_734 = arith.constant 16 : index
    %c0_735 = arith.constant 0 : index
    %c0_736 = arith.constant 0 : index
    %1197 = vector.load %arg5[%c16_734, %c0_735, %c0_736] : memref<25x1x128xf32, #tpu.memory_space<vmem>>, vector<1x1x128xf32>
    %1198 = vector.shape_cast %1197 : vector<1x1x128xf32> to vector<1x128xf32>
    %1199 = vector.broadcast %1198 : vector<1x128xf32> to vector<8x128xf32>
    %1200 = arith.mulf %1196, %1199 : vector<8x128xf32>
    %c16_737 = arith.constant 16 : index
    %c0_738 = arith.constant 0 : index
    %c0_739 = arith.constant 0 : index
    %1201 = vector.load %arg17[%c16_737, %c0_738, %c0_739] : memref<25x8x1xf32, #tpu.memory_space<vmem>>, vector<1x8x1xf32>
    %1202 = vector.shape_cast %1201 : vector<1x8x1xf32> to vector<8x1xf32>
    %1203 = vector.broadcast %1202 : vector<8x1xf32> to vector<8x128xf32>
    %1204 = arith.mulf %1200, %1203 : vector<8x128xf32>
    %1205 = arith.addf %1195, %1204 : vector<8x128xf32>
    %c112_i32_740 = arith.constant 112 : i32
    %1206 = tpu.dynamic_rotate %1037 by %c112_i32_740 dim 1 : vector<8x128xf32>, i32 -> vector<8x128xf32>
    %c17_741 = arith.constant 17 : index
    %c0_742 = arith.constant 0 : index
    %c0_743 = arith.constant 0 : index
    %1207 = vector.load %arg5[%c17_741, %c0_742, %c0_743] : memref<25x1x128xf32, #tpu.memory_space<vmem>>, vector<1x1x128xf32>
    %1208 = vector.shape_cast %1207 : vector<1x1x128xf32> to vector<1x128xf32>
    %1209 = vector.broadcast %1208 : vector<1x128xf32> to vector<8x128xf32>
    %1210 = arith.mulf %1206, %1209 : vector<8x128xf32>
    %c17_744 = arith.constant 17 : index
    %c0_745 = arith.constant 0 : index
    %c0_746 = arith.constant 0 : index
    %1211 = vector.load %arg17[%c17_744, %c0_745, %c0_746] : memref<25x8x1xf32, #tpu.memory_space<vmem>>, vector<1x8x1xf32>
    %1212 = vector.shape_cast %1211 : vector<1x8x1xf32> to vector<8x1xf32>
    %1213 = vector.broadcast %1212 : vector<8x1xf32> to vector<8x128xf32>
    %1214 = arith.mulf %1210, %1213 : vector<8x128xf32>
    %1215 = arith.addf %1205, %1214 : vector<8x128xf32>
    %c110_i32_747 = arith.constant 110 : i32
    %1216 = tpu.dynamic_rotate %1037 by %c110_i32_747 dim 1 : vector<8x128xf32>, i32 -> vector<8x128xf32>
    %c18_748 = arith.constant 18 : index
    %c0_749 = arith.constant 0 : index
    %c0_750 = arith.constant 0 : index
    %1217 = vector.load %arg5[%c18_748, %c0_749, %c0_750] : memref<25x1x128xf32, #tpu.memory_space<vmem>>, vector<1x1x128xf32>
    %1218 = vector.shape_cast %1217 : vector<1x1x128xf32> to vector<1x128xf32>
    %1219 = vector.broadcast %1218 : vector<1x128xf32> to vector<8x128xf32>
    %1220 = arith.mulf %1216, %1219 : vector<8x128xf32>
    %c18_751 = arith.constant 18 : index
    %c0_752 = arith.constant 0 : index
    %c0_753 = arith.constant 0 : index
    %1221 = vector.load %arg17[%c18_751, %c0_752, %c0_753] : memref<25x8x1xf32, #tpu.memory_space<vmem>>, vector<1x8x1xf32>
    %1222 = vector.shape_cast %1221 : vector<1x8x1xf32> to vector<8x1xf32>
    %1223 = vector.broadcast %1222 : vector<8x1xf32> to vector<8x128xf32>
    %1224 = arith.mulf %1220, %1223 : vector<8x128xf32>
    %1225 = arith.addf %1215, %1224 : vector<8x128xf32>
    %c108_i32 = arith.constant 108 : i32
    %1226 = tpu.dynamic_rotate %1037 by %c108_i32 dim 1 : vector<8x128xf32>, i32 -> vector<8x128xf32>
    %c19_754 = arith.constant 19 : index
    %c0_755 = arith.constant 0 : index
    %c0_756 = arith.constant 0 : index
    %1227 = vector.load %arg5[%c19_754, %c0_755, %c0_756] : memref<25x1x128xf32, #tpu.memory_space<vmem>>, vector<1x1x128xf32>
    %1228 = vector.shape_cast %1227 : vector<1x1x128xf32> to vector<1x128xf32>
    %1229 = vector.broadcast %1228 : vector<1x128xf32> to vector<8x128xf32>
    %1230 = arith.mulf %1226, %1229 : vector<8x128xf32>
    %c19_757 = arith.constant 19 : index
    %c0_758 = arith.constant 0 : index
    %c0_759 = arith.constant 0 : index
    %1231 = vector.load %arg17[%c19_757, %c0_758, %c0_759] : memref<25x8x1xf32, #tpu.memory_space<vmem>>, vector<1x8x1xf32>
    %1232 = vector.shape_cast %1231 : vector<1x8x1xf32> to vector<8x1xf32>
    %1233 = vector.broadcast %1232 : vector<8x1xf32> to vector<8x128xf32>
    %1234 = arith.mulf %1230, %1233 : vector<8x128xf32>
    %1235 = arith.addf %1225, %1234 : vector<8x128xf32>
    %c100_i32 = arith.constant 100 : i32
    %1236 = tpu.dynamic_rotate %1037 by %c100_i32 dim 1 : vector<8x128xf32>, i32 -> vector<8x128xf32>
    %c20_760 = arith.constant 20 : index
    %c0_761 = arith.constant 0 : index
    %c0_762 = arith.constant 0 : index
    %1237 = vector.load %arg5[%c20_760, %c0_761, %c0_762] : memref<25x1x128xf32, #tpu.memory_space<vmem>>, vector<1x1x128xf32>
    %1238 = vector.shape_cast %1237 : vector<1x1x128xf32> to vector<1x128xf32>
    %1239 = vector.broadcast %1238 : vector<1x128xf32> to vector<8x128xf32>
    %1240 = arith.mulf %1236, %1239 : vector<8x128xf32>
    %c20_763 = arith.constant 20 : index
    %c0_764 = arith.constant 0 : index
    %c0_765 = arith.constant 0 : index
    %1241 = vector.load %arg17[%c20_763, %c0_764, %c0_765] : memref<25x8x1xf32, #tpu.memory_space<vmem>>, vector<1x8x1xf32>
    %1242 = vector.shape_cast %1241 : vector<1x8x1xf32> to vector<8x1xf32>
    %1243 = vector.broadcast %1242 : vector<8x1xf32> to vector<8x128xf32>
    %1244 = arith.mulf %1240, %1243 : vector<8x128xf32>
    %1245 = arith.addf %1235, %1244 : vector<8x128xf32>
    %c98_i32 = arith.constant 98 : i32
    %1246 = tpu.dynamic_rotate %1037 by %c98_i32 dim 1 : vector<8x128xf32>, i32 -> vector<8x128xf32>
    %c21_766 = arith.constant 21 : index
    %c0_767 = arith.constant 0 : index
    %c0_768 = arith.constant 0 : index
    %1247 = vector.load %arg5[%c21_766, %c0_767, %c0_768] : memref<25x1x128xf32, #tpu.memory_space<vmem>>, vector<1x1x128xf32>
    %1248 = vector.shape_cast %1247 : vector<1x1x128xf32> to vector<1x128xf32>
    %1249 = vector.broadcast %1248 : vector<1x128xf32> to vector<8x128xf32>
    %1250 = arith.mulf %1246, %1249 : vector<8x128xf32>
    %c21_769 = arith.constant 21 : index
    %c0_770 = arith.constant 0 : index
    %c0_771 = arith.constant 0 : index
    %1251 = vector.load %arg17[%c21_769, %c0_770, %c0_771] : memref<25x8x1xf32, #tpu.memory_space<vmem>>, vector<1x8x1xf32>
    %1252 = vector.shape_cast %1251 : vector<1x8x1xf32> to vector<8x1xf32>
    %1253 = vector.broadcast %1252 : vector<8x1xf32> to vector<8x128xf32>
    %1254 = arith.mulf %1250, %1253 : vector<8x128xf32>
    %1255 = arith.addf %1245, %1254 : vector<8x128xf32>
    %c96_i32 = arith.constant 96 : i32
    %1256 = tpu.dynamic_rotate %1037 by %c96_i32 dim 1 : vector<8x128xf32>, i32 -> vector<8x128xf32>
    %c22_772 = arith.constant 22 : index
    %c0_773 = arith.constant 0 : index
    %c0_774 = arith.constant 0 : index
    %1257 = vector.load %arg5[%c22_772, %c0_773, %c0_774] : memref<25x1x128xf32, #tpu.memory_space<vmem>>, vector<1x1x128xf32>
    %1258 = vector.shape_cast %1257 : vector<1x1x128xf32> to vector<1x128xf32>
    %1259 = vector.broadcast %1258 : vector<1x128xf32> to vector<8x128xf32>
    %1260 = arith.mulf %1256, %1259 : vector<8x128xf32>
    %c22_775 = arith.constant 22 : index
    %c0_776 = arith.constant 0 : index
    %c0_777 = arith.constant 0 : index
    %1261 = vector.load %arg17[%c22_775, %c0_776, %c0_777] : memref<25x8x1xf32, #tpu.memory_space<vmem>>, vector<1x8x1xf32>
    %1262 = vector.shape_cast %1261 : vector<1x8x1xf32> to vector<8x1xf32>
    %1263 = vector.broadcast %1262 : vector<8x1xf32> to vector<8x128xf32>
    %1264 = arith.mulf %1260, %1263 : vector<8x128xf32>
    %1265 = arith.addf %1255, %1264 : vector<8x128xf32>
    %c94_i32 = arith.constant 94 : i32
    %1266 = tpu.dynamic_rotate %1037 by %c94_i32 dim 1 : vector<8x128xf32>, i32 -> vector<8x128xf32>
    %c23_778 = arith.constant 23 : index
    %c0_779 = arith.constant 0 : index
    %c0_780 = arith.constant 0 : index
    %1267 = vector.load %arg5[%c23_778, %c0_779, %c0_780] : memref<25x1x128xf32, #tpu.memory_space<vmem>>, vector<1x1x128xf32>
    %1268 = vector.shape_cast %1267 : vector<1x1x128xf32> to vector<1x128xf32>
    %1269 = vector.broadcast %1268 : vector<1x128xf32> to vector<8x128xf32>
    %1270 = arith.mulf %1266, %1269 : vector<8x128xf32>
    %c23_781 = arith.constant 23 : index
    %c0_782 = arith.constant 0 : index
    %c0_783 = arith.constant 0 : index
    %1271 = vector.load %arg17[%c23_781, %c0_782, %c0_783] : memref<25x8x1xf32, #tpu.memory_space<vmem>>, vector<1x8x1xf32>
    %1272 = vector.shape_cast %1271 : vector<1x8x1xf32> to vector<8x1xf32>
    %1273 = vector.broadcast %1272 : vector<8x1xf32> to vector<8x128xf32>
    %1274 = arith.mulf %1270, %1273 : vector<8x128xf32>
    %1275 = arith.addf %1265, %1274 : vector<8x128xf32>
    %c92_i32 = arith.constant 92 : i32
    %1276 = tpu.dynamic_rotate %1037 by %c92_i32 dim 1 : vector<8x128xf32>, i32 -> vector<8x128xf32>
    %c24_784 = arith.constant 24 : index
    %c0_785 = arith.constant 0 : index
    %c0_786 = arith.constant 0 : index
    %1277 = vector.load %arg5[%c24_784, %c0_785, %c0_786] : memref<25x1x128xf32, #tpu.memory_space<vmem>>, vector<1x1x128xf32>
    %1278 = vector.shape_cast %1277 : vector<1x1x128xf32> to vector<1x128xf32>
    %1279 = vector.broadcast %1278 : vector<1x128xf32> to vector<8x128xf32>
    %1280 = arith.mulf %1276, %1279 : vector<8x128xf32>
    %c24_787 = arith.constant 24 : index
    %c0_788 = arith.constant 0 : index
    %c0_789 = arith.constant 0 : index
    %1281 = vector.load %arg17[%c24_787, %c0_788, %c0_789] : memref<25x8x1xf32, #tpu.memory_space<vmem>>, vector<1x8x1xf32>
    %1282 = vector.shape_cast %1281 : vector<1x8x1xf32> to vector<8x1xf32>
    %1283 = vector.broadcast %1282 : vector<8x1xf32> to vector<8x128xf32>
    %1284 = arith.mulf %1280, %1283 : vector<8x128xf32>
    %1285 = arith.addf %1275, %1284 : vector<8x128xf32>
    %c0_790 = arith.constant 0 : index
    %c0_791 = arith.constant 0 : index
    %1286 = vector.load %arg18[%c0_790, %c0_791] : memref<8x8xf32, #tpu.memory_space<vmem>>, vector<8x8xf32>
    %cst_792 = arith.constant dense<0.000000e+00> : vector<8x128xf32>
    %1287 = tpu.matmul %1286, %1285, %cst_792 {dimension_numbers = #tpu.dot_dimension_numbers<[1], [0], [0], [1], [0, 0, 1, 1], [], []>} : vector<8x8xf32>, vector<8x128xf32>, vector<8x128xf32> -> vector<8x128xf32>
    %cst_793 = arith.constant dense<0.000000e+00> : vector<8xf32>
    %1288 = vector.multi_reduction <add>, %1287, %cst_793 [1] : vector<8x128xf32> to vector<8xf32>
    %1289 = vector.shape_cast %1288 : vector<8xf32> to vector<8x1xf32>
    %cst_794 = arith.constant 1.280000e+02 : f32
    %1290 = vector.broadcast %cst_794 : f32 to vector<8x1xf32>
    %1291 = arith.divf %1289, %1290 : vector<8x1xf32>
    %1292 = vector.broadcast %1291 : vector<8x1xf32> to vector<8x128xf32>
    %1293 = arith.subf %1287, %1292 : vector<8x128xf32>
    %1294 = arith.mulf %1293, %1293 : vector<8x128xf32>
    %cst_795 = arith.constant dense<0.000000e+00> : vector<8xf32>
    %1295 = vector.multi_reduction <add>, %1294, %cst_795 [1] : vector<8x128xf32> to vector<8xf32>
    %1296 = vector.shape_cast %1295 : vector<8xf32> to vector<8x1xf32>
    %cst_796 = arith.constant 1.280000e+02 : f32
    %1297 = vector.broadcast %cst_796 : f32 to vector<8x1xf32>
    %1298 = arith.divf %1296, %1297 : vector<8x1xf32>
    %cst_797 = arith.constant 9.99999974E-6 : f32
    %1299 = vector.broadcast %cst_797 : f32 to vector<8x1xf32>
    %1300 = arith.addf %1298, %1299 : vector<8x1xf32>
    %1301 = math.rsqrt %1300 : vector<8x1xf32>
    %1302 = vector.broadcast %1301 : vector<8x1xf32> to vector<8x128xf32>
    %1303 = arith.mulf %1293, %1302 : vector<8x128xf32>
    %c1_798 = arith.constant 1 : index
    %1304 = memref.load %arg0[%c1_798] : memref<8xf32, #tpu.memory_space<smem>>
    %1305 = vector.broadcast %1304 : f32 to vector<8x128xf32>
    %1306 = arith.mulf %1305, %104 : vector<8x128xf32>
    %c2_799 = arith.constant 2 : index
    %1307 = memref.load %arg0[%c2_799] : memref<8xf32, #tpu.memory_space<smem>>
    %1308 = vector.broadcast %1307 : f32 to vector<8x128xf32>
    %1309 = arith.mulf %1308, %175 : vector<8x128xf32>
    %1310 = arith.addf %1306, %1309 : vector<8x128xf32>
    %c4_800 = arith.constant 4 : index
    %1311 = memref.load %arg0[%c4_800] : memref<8xf32, #tpu.memory_space<smem>>
    %1312 = vector.broadcast %1311 : f32 to vector<8x128xf32>
    %1313 = arith.mulf %1312, %391 : vector<8x128xf32>
    %1314 = arith.addf %1310, %1313 : vector<8x128xf32>
    %c5_801 = arith.constant 5 : index
    %1315 = memref.load %arg0[%c5_801] : memref<8xf32, #tpu.memory_space<smem>>
    %1316 = vector.broadcast %1315 : f32 to vector<8x128xf32>
    %1317 = arith.mulf %1316, %927 : vector<8x128xf32>
    %1318 = arith.addf %1314, %1317 : vector<8x128xf32>
    %c6_802 = arith.constant 6 : index
    %1319 = memref.load %arg0[%c6_802] : memref<8xf32, #tpu.memory_space<smem>>
    %1320 = vector.broadcast %1319 : f32 to vector<8x128xf32>
    %1321 = arith.mulf %1320, %1035 : vector<8x128xf32>
    %1322 = arith.addf %1318, %1321 : vector<8x128xf32>
    %c7_803 = arith.constant 7 : index
    %1323 = memref.load %arg0[%c7_803] : memref<8xf32, #tpu.memory_space<smem>>
    %1324 = vector.broadcast %1323 : f32 to vector<8x128xf32>
    %1325 = arith.mulf %1324, %1303 : vector<8x128xf32>
    %1326 = arith.addf %1322, %1325 : vector<8x128xf32>
    %c0_804 = arith.constant 0 : index
    %c0_805 = arith.constant 0 : index
    %1327 = vector.load %arg19[%c0_804, %c0_805] : memref<8x128xf32, #tpu.memory_space<vmem>>, vector<8x128xf32>
    tpu.vector_store %arg19[%c0_804, %c0_805], %1326 {strides = array<i32>} : memref<8x128xf32, #tpu.memory_space<vmem>>, vector<8x128xf32>,
    return
  }
}

module attributes {stable_mosaic.version = 11 : i64} {
  func.func @_sum_kernel(%arg0: memref<8x128xf32, #tpu.memory_space<vmem>>, %arg1: memref<8x128xf32, #tpu.memory_space<vmem>>, %arg2: memref<8x128xf32, #tpu.memory_space<vmem>>, %arg3: memref<8x128xf32, #tpu.memory_space<vmem>>) attributes {dimension_semantics = [], scalar_prefetch = 0 : i64, scratch_operands = 0 : i64, tpu.core_type = #tpu.core_type<tc>} {
    %c0 = arith.constant 0 : index
    %c0_0 = arith.constant 0 : index
    %0 = vector.load %arg0[%c0, %c0_0] : memref<8x128xf32, #tpu.memory_space<vmem>>, vector<8x128xf32>
    %c0_1 = arith.constant 0 : index
    %c0_2 = arith.constant 0 : index
    %1 = vector.load %arg1[%c0_1, %c0_2] : memref<8x128xf32, #tpu.memory_space<vmem>>, vector<8x128xf32>
    %2 = arith.addf %0, %1 : vector<8x128xf32>
    %c0_3 = arith.constant 0 : index
    %c0_4 = arith.constant 0 : index
    %3 = vector.load %arg2[%c0_3, %c0_4] : memref<8x128xf32, #tpu.memory_space<vmem>>, vector<8x128xf32>
    %4 = arith.addf %2, %3 : vector<8x128xf32>
    %c0_5 = arith.constant 0 : index
    %c0_6 = arith.constant 0 : index
    %5 = vector.load %arg3[%c0_5, %c0_6] : memref<8x128xf32, #tpu.memory_space<vmem>>, vector<8x128xf32>
    tpu.vector_store %arg3[%c0_5, %c0_6], %4 {strides = array<i32>} : memref<8x128xf32, #tpu.memory_space<vmem>>, vector<8x128xf32>,
    return
  }
}

</mosaic_0001>

<llo_original>
// kernel: cell_forward.9
$region0: #{cell_forward.9}
  #allocation0 [shape = 'u32[]', space=smem, size = 0x4, offset = 0x4, fixed_abs, tag = 'smem constant byte address 0x4 - core index']
  #allocation1 [shape = 'u32[72,128]{1,0:T(1,128)}', space=vmem, size = 0x9000, scoped, tag = 'internal scratch']
  %s0 = inlined_call_operand.vmem [shape: f32[16,128], index: 0, kind: input, shape index: {}]
  %s1 = inlined_call_operand.vmem [shape: f32[8,16], index: 1, kind: input, shape index: {}]
  %s2 = inlined_call_operand.vmem [shape: f32[8,128], index: 2, kind: output, shape index: {}]
  %s3 = sld [smem:[#allocation0]]
  $region18: #{cell_forward.9} parent=0
    _
  %s5 = ssub.s32 1, %s3
  %s6 = scalar_select 0, %s5, %s3
  // Predicated region
  $region2: #{cell_forward.9} parent=0 // pred_check
    _
  $region3: #{cell_forward.9} parent=0 // pred_check_branch
    %8 = sbr.rel (0) target = $region5
  $region4: #{cell_forward.9} parent=0 // pred_region
    _
  $region5: #{cell_forward.9} parent=0 // pred_fallthru
    _
  // Predicated region
  $region6: #{cell_forward.9} parent=0 // pred_check
    _
  $region7: #{cell_forward.9} parent=0 // pred_check_branch
    %10 = sbr.rel (0) target = $region9
  $region8: #{cell_forward.9} parent=0 // pred_region
    _
  $region9: #{cell_forward.9} parent=0 // pred_fallthru
    _
  %v11 = vld [vmem:[%s0] sm:$0xff]
  %v12 = vld [vmem:[%s0 + $0x8] sm:$0xff]
  %v13 = vmax.f32 %v11, 0.0
  %v14 = vmax.f32 %v12, 0.0
  %v15 = vld [vmem:[%s1] sm:$0xff]
  %vm16 = vcmask 130048
  %v18 = vsel %vm16, %v15, 0
  %20 = vmatpush.msra.mxu0 0.0
  %21 = vmatpush.msra.mxu0 0.0
  %22 = vmatpush.msra.mxu0 0.0
  %23 = vmatpush.msra.mxu0 0.0
  %24 = vmatpush.msra.mxu0 0.0
  %25 = vmatpush.msra.mxu0 0.0
  %26 = vmatpush.msra.mxu0 0.0
  %27 = vmatpush.msra.mxu0 0.0
  %28 = vmatpush.msra.mxu0 0.0
  %29 = vmatpush.msra.mxu0 0.0
  %30 = vmatpush.msra.mxu0 0.0
  %31 = vmatpush.msra.mxu0 0.0
  %32 = vmatpush.msra.mxu0 0.0
  %33 = vmatpush.msra.mxu0 0.0
  %34 = vmatpush.msra.mxu0 %v14
  %35 = vmatpush.msra.mxu0 %v13
  %36 = vmatmul.f32.gmra.mxu0 %v18
  %v37 = vpop.f32.mrf.mxu0
  %v38 = vadd.f32 0.0, %v37
  %39 = vdwg.mxu0
  %40 = vadd.xlane.f32.xlu0 %v38
  %v41 = vpop.xlane.xlu0 %40
  %v42 = vrcp.pop 128.0
  %v43 = vmul.f32 128.0, %v42
  %v44 = vsub.f32 1.0, %v43
  %v45 = vmul.f32 %v42, %v44
  %v46 = vadd.f32 %v42, %v45
  %vm47 = vweird.f32 %v42
  %v48 = vsel %vm47, %v42, %v46
  %v49 = vmul.f32 %v41, %v48
  %v50 = vsub.f32 %v38, %v49
  %v51 = vmul.f32 %v50, %v50
  %52 = vadd.xlane.f32.xlu0 %v51
  %v53 = vpop.xlane.xlu0 %52
  %v54 = vmul.f32 %v53, %v48
  %v55 = vadd.f32 %v54, 1e-05
  %v56 = vrsqrt.pop %v55
  %v57 = vmul.f32 %v56, %v55
  %v58 = vmul.f32 %v57, %v56
  %v59 = vmul.f32 0.5, %v58
  %v60 = vsub.f32 1.5, %v59
  %v61 = vmul.f32 %v56, %v60
  %vm62 = vweird.f32 %v55
  %vm63 = vweird.f32 %v56
  %vm64 = vmor %vm62, %vm63
  %v65 = vsel %vm64, %v56, %v61
  %v66 = vmul.f32 %v50, %v65
  %67 = vst [vmem:[%s2] sm:$0xff] %v66
  // Predicated region
  $region10: #{cell_forward.9} parent=0 // pred_check
    _
  $region11: #{cell_forward.9} parent=0 // pred_check_branch
    %69 = sbr.rel (0) target = $region13
  $region12: #{cell_forward.9} parent=0 // pred_region
    _
  $region13: #{cell_forward.9} parent=0 // pred_fallthru
    _
  // Predicated region
  $region14: #{cell_forward.9} parent=0 // pred_check
    _
  $region15: #{cell_forward.9} parent=0 // pred_check_branch
    %71 = sbr.rel (0) target = $region17
  $region16: #{cell_forward.9} parent=0 // pred_region
    _
  $region17: #{cell_forward.9} parent=0 // pred_fallthru
    _

// kernel: cell_forward.13
$region0: #{cell_forward.13}
  #allocation0 [shape = 'u32[]', space=smem, size = 0x4, offset = 0x4, fixed_abs, tag = 'smem constant byte address 0x4 - core index']
  #allocation1 [shape = 'u32[72,128]{1,0:T(1,128)}', space=vmem, size = 0x9000, scoped, tag = 'internal scratch']
  %s0 = inlined_call_operand.vmem [shape: f32[8,128], index: 0, kind: input, shape index: {}]
  %s1 = inlined_call_operand.vmem [shape: f32[8,128], index: 1, kind: input, shape index: {}]
  %s2 = inlined_call_operand.vmem [shape: f32[8,128], index: 2, kind: output, shape index: {}]
  %s3 = sld [smem:[#allocation0]]
  $region18: #{cell_forward.13} parent=0
    _
  %s5 = ssub.s32 1, %s3
  %s6 = scalar_select 0, %s5, %s3
  // Predicated region
  $region2: #{cell_forward.13} parent=0 // pred_check
    _
  $region3: #{cell_forward.13} parent=0 // pred_check_branch
    %8 = sbr.rel (0) target = $region5
  $region4: #{cell_forward.13} parent=0 // pred_region
    _
  $region5: #{cell_forward.13} parent=0 // pred_fallthru
    _
  // Predicated region
  $region6: #{cell_forward.13} parent=0 // pred_check
    _
  $region7: #{cell_forward.13} parent=0 // pred_check_branch
    %10 = sbr.rel (0) target = $region9
  $region8: #{cell_forward.13} parent=0 // pred_region
    _
  $region9: #{cell_forward.13} parent=0 // pred_fallthru
    _
  %v11 = vld [vmem:[%s0] sm:$0xff]
  %v12 = vld [vmem:[%s1] sm:$0xff]
  %v13 = vadd.f32 %v11, %v12
  %14 = vst [vmem:[%s2] sm:$0xff] %v13
  // Predicated region
  $region10: #{cell_forward.13} parent=0 // pred_check
    _
  $region11: #{cell_forward.13} parent=0 // pred_check_branch
    %16 = sbr.rel (0) target = $region13
  $region12: #{cell_forward.13} parent=0 // pred_region
    _
  $region13: #{cell_forward.13} parent=0 // pred_fallthru
    _
  // Predicated region
  $region14: #{cell_forward.13} parent=0 // pred_check
    _
  $region15: #{cell_forward.13} parent=0 // pred_check_branch
    %18 = sbr.rel (0) target = $region17
  $region16: #{cell_forward.13} parent=0 // pred_region
    _
  $region17: #{cell_forward.13} parent=0 // pred_fallthru
    _

// kernel: cell_forward.17
$region0: #{cell_forward.17}
  #allocation0 [shape = 'u32[]', space=smem, size = 0x4, offset = 0x4, fixed_abs, tag = 'smem constant byte address 0x4 - core index']
  #allocation1 [shape = 'u32[72,128]{1,0:T(1,128)}', space=vmem, size = 0x9000, scoped, tag = 'internal scratch']
  %s0 = inlined_call_operand.vmem [shape: f32[8,128], index: 0, kind: input, shape index: {}]
  %s1 = inlined_call_operand.vmem [shape: f32[8,128], index: 1, kind: input, shape index: {}]
  %s2 = inlined_call_operand.vmem [shape: f32[8,128], index: 2, kind: input, shape index: {}]
  %s3 = inlined_call_operand.vmem [shape: f32[8,128], index: 3, kind: output, shape index: {}]
  %s4 = sld [smem:[#allocation0]]
  $region22: #{cell_forward.17} parent=0
    _
  %s6 = ssub.s32 1, %s4
  %s7 = scalar_select 0, %s6, %s4
  // Predicated region
  $region2: #{cell_forward.17} parent=0 // pred_check
    _
  $region3: #{cell_forward.17} parent=0 // pred_check_branch
    %9 = sbr.rel (0) target = $region5
  $region4: #{cell_forward.17} parent=0 // pred_region
    _
  $region5: #{cell_forward.17} parent=0 // pred_fallthru
    _
  // Predicated region
  $region6: #{cell_forward.17} parent=0 // pred_check
    _
  $region7: #{cell_forward.17} parent=0 // pred_check_branch
    %11 = sbr.rel (0) target = $region9
  $region8: #{cell_forward.17} parent=0 // pred_region
    _
  $region9: #{cell_forward.17} parent=0 // pred_fallthru
    _
  // Predicated region
  $region10: #{cell_forward.17} parent=0 // pred_check
    _
  $region11: #{cell_forward.17} parent=0 // pred_check_branch
    %13 = sbr.rel (0) target = $region13
  $region12: #{cell_forward.17} parent=0 // pred_region
    _
  $region13: #{cell_forward.17} parent=0 // pred_fallthru
    _
  %v14 = vld [vmem:[%s0] sm:$0xff]
  %v15 = vld [vmem:[%s1] sm:$0xff]
  %v16 = vadd.f32 %v14, %v15
  %v17 = vld [vmem:[%s2] sm:$0xff]
  %v18 = vadd.f32 %v16, %v17
  %19 = vst [vmem:[%s3] sm:$0xff] %v18
  // Predicated region
  $region14: #{cell_forward.17} parent=0 // pred_check
    _
  $region15: #{cell_forward.17} parent=0 // pred_check_branch
    %21 = sbr.rel (0) target = $region17
  $region16: #{cell_forward.17} parent=0 // pred_region
    _
  $region17: #{cell_forward.17} parent=0 // pred_fallthru
    _
  // Predicated region
  $region18: #{cell_forward.17} parent=0 // pred_check
    _
  $region19: #{cell_forward.17} parent=0 // pred_check_branch
    %23 = sbr.rel (0) target = $region21
  $region20: #{cell_forward.17} parent=0 // pred_region
    _
  $region21: #{cell_forward.17} parent=0 // pred_fallthru
    _

// kernel: cell_forward.11
$region0: #{cell_forward.11}
  #allocation0 [shape = 'u32[]', space=smem, size = 0x4, offset = 0x4, fixed_abs, tag = 'smem constant byte address 0x4 - core index']
  #allocation1 [shape = 'u32[72,128]{1,0:T(1,128)}', space=vmem, size = 0x9000, scoped, tag = 'internal scratch']
  %s0 = inlined_call_operand.vmem [shape: f32[8], index: 0, kind: input, shape index: {}]
  %s1 = inlined_call_operand.vmem [shape: f32[8,128], index: 1, kind: input, shape index: {}]
  %s2 = inlined_call_operand.vmem [shape: f32[9,1,128], index: 2, kind: input, shape index: {}]
  %s3 = inlined_call_operand.vmem [shape: f32[25,1,128], index: 3, kind: input, shape index: {}]
  %s4 = inlined_call_operand.vmem [shape: f32[9,1,128], index: 4, kind: input, shape index: {}]
  %s5 = inlined_call_operand.vmem [shape: f32[25,1,128], index: 5, kind: input, shape index: {}]
  %s6 = inlined_call_operand.vmem [shape: f32[1,128], index: 6, kind: input, shape index: {}]
  %s7 = inlined_call_operand.vmem [shape: f32[9,8,1], index: 7, kind: input, shape index: {}]
  %s8 = inlined_call_operand.vmem [shape: f32[8,8], index: 8, kind: input, shape index: {}]
  %s9 = inlined_call_operand.vmem [shape: f32[9,8,1], index: 9, kind: input, shape index: {}]
  %s10 = inlined_call_operand.vmem [shape: f32[8,8], index: 10, kind: input, shape index: {}]
  %s11 = inlined_call_operand.vmem [shape: f32[25,8,1], index: 11, kind: input, shape index: {}]
  %s12 = inlined_call_operand.vmem [shape: f32[8,8], index: 12, kind: input, shape index: {}]
  %s13 = inlined_call_operand.vmem [shape: f32[25,8,1], index: 13, kind: input, shape index: {}]
  %s14 = inlined_call_operand.vmem [shape: f32[8,8], index: 14, kind: input, shape index: {}]
  %s15 = inlined_call_operand.vmem [shape: f32[9,8,1], index: 15, kind: input, shape index: {}]
  %s16 = inlined_call_operand.vmem [shape: f32[8,8], index: 16, kind: input, shape index: {}]
  %s17 = inlined_call_operand.vmem [shape: f32[25,8,1], index: 17, kind: input, shape index: {}]
  %s18 = inlined_call_operand.vmem [shape: f32[8,8], index: 18, kind: input, shape index: {}]
  %s19 = inlined_call_operand.vmem [shape: f32[8,128], index: 19, kind: output, shape index: {}]
  %s20 = sld [smem:[#allocation0]]
  $region90: #{cell_forward.11} parent=0
    _
  %s22 = ssub.s32 1, %s20
  %s23 = scalar_select 0, %s22, %s20
  $region1: #{cell_forward.11} parent=0
    #allocation2 [shape = 'u8[512]{0}', space=smem, size = 0x200, scoped, tag = 'input window, operand 0, single buffered']
    #allocation3 [shape = 's32[1]{0}', space=sflag, size = 0x4, scoped, tag = 'scoped memory for cell_forward.11']
    %24 = vsyncpa [#allocation3], 0
    // Predicated region
    $region2: #{cell_forward.11} parent=1 // pred_check
      _
    $region3: #{cell_forward.11} parent=1 // pred_check_branch
      %26 = sbr.rel (0) target = $region5
    $region4: #{cell_forward.11} parent=1 // pred_region
      %28 = vsyncadd [#allocation3], 0
      %s30 = sshll.u32 %s0, 4
      %s31 = int_to_ptr.vmem [resolvable:$true] %s30
      %33 = dma.vmem_to_smem %s31, 16, [#allocation2], [#allocation3]
    $region5: #{cell_forward.11} parent=1 // pred_fallthru
      _
    // Predicated region
    $region6: #{cell_forward.11} parent=1 // pred_check
      _
    $region7: #{cell_forward.11} parent=1 // pred_check_branch
      %35 = sbr.rel (0) target = $region9
    $region8: #{cell_forward.11} parent=1 // pred_region
      _
    $region9: #{cell_forward.11} parent=1 // pred_fallthru
      _
    // Predicated region
    $region10: #{cell_forward.11} parent=1 // pred_check
      _
    $region11: #{cell_forward.11} parent=1 // pred_check_branch
      %37 = sbr.rel (0) target = $region13
    $region12: #{cell_forward.11} parent=1 // pred_region
      _
    $region13: #{cell_forward.11} parent=1 // pred_fallthru
      _
    // Predicated region
    $region14: #{cell_forward.11} parent=1 // pred_check
      _
    $region15: #{cell_forward.11} parent=1 // pred_check_branch
      %39 = sbr.rel (0) target = $region17
    $region16: #{cell_forward.11} parent=1 // pred_region
      _
    $region17: #{cell_forward.11} parent=1 // pred_fallthru
      _
    // Predicated region
    $region18: #{cell_forward.11} parent=1 // pred_check
      _
    $region19: #{cell_forward.11} parent=1 // pred_check_branch
      %41 = sbr.rel (0) target = $region21
    $region20: #{cell_forward.11} parent=1 // pred_region
      _
    $region21: #{cell_forward.11} parent=1 // pred_fallthru
      _
    // Predicated region
    $region22: #{cell_forward.11} parent=1 // pred_check
      _
    $region23: #{cell_forward.11} parent=1 // pred_check_branch
      %43 = sbr.rel (0) target = $region25
    $region24: #{cell_forward.11} parent=1 // pred_region
      _
    $region25: #{cell_forward.11} parent=1 // pred_fallthru
      _
    // Predicated region
    $region26: #{cell_forward.11} parent=1 // pred_check
      _
    $region27: #{cell_forward.11} parent=1 // pred_check_branch
      %45 = sbr.rel (0) target = $region29
    $region28: #{cell_forward.11} parent=1 // pred_region
      _
    $region29: #{cell_forward.11} parent=1 // pred_fallthru
      _
    // Predicated region
    $region30: #{cell_forward.11} parent=1 // pred_check
      _
    $region31: #{cell_forward.11} parent=1 // pred_check_branch
      %47 = sbr.rel (0) target = $region33
    $region32: #{cell_forward.11} parent=1 // pred_region
      _
    $region33: #{cell_forward.11} parent=1 // pred_fallthru
      _
    // Predicated region
    $region34: #{cell_forward.11} parent=1 // pred_check
      _
    $region35: #{cell_forward.11} parent=1 // pred_check_branch
      %49 = sbr.rel (0) target = $region37
    $region36: #{cell_forward.11} parent=1 // pred_region
      _
    $region37: #{cell_forward.11} parent=1 // pred_fallthru
      _
    // Predicated region
    $region38: #{cell_forward.11} parent=1 // pred_check
      _
    $region39: #{cell_forward.11} parent=1 // pred_check_branch
      %51 = sbr.rel (0) target = $region41
    $region40: #{cell_forward.11} parent=1 // pred_region
      _
    $region41: #{cell_forward.11} parent=1 // pred_fallthru
      _
    // Predicated region
    $region42: #{cell_forward.11} parent=1 // pred_check
      _
    $region43: #{cell_forward.11} parent=1 // pred_check_branch
      %53 = sbr.rel (0) target = $region45
    $region44: #{cell_forward.11} parent=1 // pred_region
      _
    $region45: #{cell_forward.11} parent=1 // pred_fallthru
      _
    // Predicated region
    $region46: #{cell_forward.11} parent=1 // pred_check
      _
    $region47: #{cell_forward.11} parent=1 // pred_check_branch
      %55 = sbr.rel (0) target = $region49
    $region48: #{cell_forward.11} parent=1 // pred_region
      _
    $region49: #{cell_forward.11} parent=1 // pred_fallthru
      _
    // Predicated region
    $region50: #{cell_forward.11} parent=1 // pred_check
      _
    $region51: #{cell_forward.11} parent=1 // pred_check_branch
      %57 = sbr.rel (0) target = $region53
    $region52: #{cell_forward.11} parent=1 // pred_region
      _
    $region53: #{cell_forward.11} parent=1 // pred_fallthru
      _
    // Predicated region
    $region54: #{cell_forward.11} parent=1 // pred_check
      _
    $region55: #{cell_forward.11} parent=1 // pred_check_branch
      %59 = sbr.rel (0) target = $region57
    $region56: #{cell_forward.11} parent=1 // pred_region
      _
    $region57: #{cell_forward.11} parent=1 // pred_fallthru
      _
    // Predicated region
    $region58: #{cell_forward.11} parent=1 // pred_check
      _
    $region59: #{cell_forward.11} parent=1 // pred_check_branch
      %61 = sbr.rel (0) target = $region61
    $region60: #{cell_forward.11} parent=1 // pred_region
      _
    $region61: #{cell_forward.11} parent=1 // pred_fallthru
      _
    // Predicated region
    $region62: #{cell_forward.11} parent=1 // pred_check
      _
    $region63: #{cell_forward.11} parent=1 // pred_check_branch
      %63 = sbr.rel (0) target = $region65
    $region64: #{cell_forward.11} parent=1 // pred_region
      _
    $region65: #{cell_forward.11} parent=1 // pred_fallthru
      _
    // Predicated region
    $region66: #{cell_forward.11} parent=1 // pred_check
      _
    $region67: #{cell_forward.11} parent=1 // pred_check_branch
      %65 = sbr.rel (0) target = $region69
    $region68: #{cell_forward.11} parent=1 // pred_region
      _
    $region69: #{cell_forward.11} parent=1 // pred_fallthru
      _
    // Predicated region
    $region70: #{cell_forward.11} parent=1 // pred_check
      _
    $region71: #{cell_forward.11} parent=1 // pred_check_branch
      %67 = sbr.rel (0) target = $region73
    $region72: #{cell_forward.11} parent=1 // pred_region
      _
    $region73: #{cell_forward.11} parent=1 // pred_fallthru
      _
    // Predicated region
    $region74: #{cell_forward.11} parent=1 // pred_check
      _
    $region75: #{cell_forward.11} parent=1 // pred_check_branch
      %69 = sbr.rel (0) target = $region77
    $region76: #{cell_forward.11} parent=1 // pred_region
      _
    $region77: #{cell_forward.11} parent=1 // pred_fallthru
      _
    // Predicated region
    $region78: #{cell_forward.11} parent=1 // pred_check
      _
    $region79: #{cell_forward.11} parent=1 // pred_check_branch
      %71 = sbr.rel (0) target = $region81
    $region80: #{cell_forward.11} parent=1 // pred_region
      %73 = dma.done [#allocation3], 16
    $region81: #{cell_forward.11} parent=1 // pred_fallthru
      _
    %74 = sfence
    %v75 = vld [vmem:[%s1] sm:$0xff]
    %76 = vrot.lane.b32.xlu0 %v75, 9
    %v77 = vpop.permute.xlu0 %76
    %v78 = vld [vmem:[%s2] sm:$0x1]
    %v79 = vsub.f32 %v78, 1.0
    %v80 = vmul.f32 %v79, 1e+30
    %v82 = vperm.slane %v80, 0
    %v84 = vadd.f32 %v77, %v82
    %85 = vrot.lane.b32.xlu0 %v75, 8
    %v86 = vpop.permute.xlu0 %85
    %s87 = scalar_lea.vmem %s2, 1
    %v88 = vld [vmem:[%s87] sm:$0x1]
    %v89 = vsub.f32 %v88, 1.0
    %v90 = vmul.f32 %v89, 1e+30
    %v92 = vperm.slane %v90, 0
    %v94 = vadd.f32 %v86, %v92
    %v95 = vmax.f32 %v84, %v94
    %96 = vrot.lane.b32.xlu0 %v75, 7
    %v97 = vpop.permute.xlu0 %96
    %s98 = scalar_lea.vmem %s2, 2
    %v99 = vld [vmem:[%s98] sm:$0x1]
    %v100 = vsub.f32 %v99, 1.0
    %v101 = vmul.f32 %v100, 1e+30
    %v103 = vperm.slane %v101, 0
    %v105 = vadd.f32 %v97, %v103
    %v106 = vmax.f32 %v95, %v105
    %107 = vrot.lane.b32.xlu0 %v75, 1
    %v108 = vpop.permute.xlu0 %107
    %s109 = scalar_lea.vmem %s2, 3
    %v110 = vld [vmem:[%s109] sm:$0x1]
    %v111 = vsub.f32 %v110, 1.0
    %v112 = vmul.f32 %v111, 1e+30
    %v114 = vperm.slane %v112, 0
    %v116 = vadd.f32 %v108, %v114
    %v117 = vmax.f32 %v106, %v116
    %s118 = scalar_lea.vmem %s2, 4
    %v119 = vld [vmem:[%s118] sm:$0x1]
    %v120 = vsub.f32 %v119, 1.0
    %v121 = vmul.f32 %v120, 1e+30
    %v123 = vperm.slane %v121, 0
    %v125 = vadd.f32 %v75, %v123
    %v126 = vmax.f32 %v117, %v125
    %127 = vrot.lane.b32.xlu0 %v75, 127
    %v128 = vpop.permute.xlu0 %127
    %s129 = scalar_lea.vmem %s2, 5
    %v130 = vld [vmem:[%s129] sm:$0x1]
    %v131 = vsub.f32 %v130, 1.0
    %v132 = vmul.f32 %v131, 1e+30
    %v134 = vperm.slane %v132, 0
    %v136 = vadd.f32 %v128, %v134
    %v137 = vmax.f32 %v126, %v136
    %138 = vrot.lane.b32.xlu0 %v75, 121
    %v139 = vpop.permute.xlu0 %138
    %s140 = scalar_lea.vmem %s2, 6
    %v141 = vld [vmem:[%s140] sm:$0x1]
    %v142 = vsub.f32 %v141, 1.0
    %v143 = vmul.f32 %v142, 1e+30
    %v145 = vperm.slane %v143, 0
    %v147 = vadd.f32 %v139, %v145
    %v148 = vmax.f32 %v137, %v147
    %149 = vrot.lane.b32.xlu0 %v75, 120
    %v150 = vpop.permute.xlu0 %149
    %s151 = scalar_lea.vmem %s2, 7
    %v152 = vld [vmem:[%s151] sm:$0x1]
    %v153 = vsub.f32 %v152, 1.0
    %v154 = vmul.f32 %v153, 1e+30
    %v156 = vperm.slane %v154, 0
    %v158 = vadd.f32 %v150, %v156
    %v159 = vmax.f32 %v148, %v158
    %160 = vrot.lane.b32.xlu0 %v75, 119
    %v161 = vpop.permute.xlu0 %160
    %s162 = scalar_lea.vmem %s2, 8
    %v163 = vld [vmem:[%s162] sm:$0x1]
    %v164 = vsub.f32 %v163, 1.0
    %v165 = vmul.f32 %v164, 1e+30
    %v167 = vperm.slane %v165, 0
    %v169 = vadd.f32 %v161, %v167
    %v170 = vmax.f32 %v159, %v169
    %171 = vadd.xlane.f32.xlu0 %v170
    %v172 = vpop.xlane.xlu0 %171
    %v173 = vrcp.pop 128.0
    %v174 = vmul.f32 128.0, %v173
    %v175 = vsub.f32 1.0, %v174
    %v176 = vmul.f32 %v173, %v175
    %v177 = vadd.f32 %v173, %v176
    %vm178 = vweird.f32 %v173
    %v179 = vsel %vm178, %v173, %v177
    %v180 = vmul.f32 %v172, %v179
    %v181 = vsub.f32 %v170, %v180
    %v182 = vmul.f32 %v181, %v181
    %183 = vadd.xlane.f32.xlu0 %v182
    %v184 = vpop.xlane.xlu0 %183
    %v185 = vmul.f32 %v184, %v179
    %v186 = vadd.f32 %v185, 1e-05
    %v187 = vrsqrt.pop %v186
    %v188 = vmul.f32 %v187, %v186
    %v189 = vmul.f32 %v188, %v187
    %v190 = vmul.f32 0.5, %v189
    %v191 = vsub.f32 1.5, %v190
    %v192 = vmul.f32 %v187, %v191
    %vm193 = vweird.f32 %v186
    %vm194 = vweird.f32 %v187
    %vm195 = vmor %vm193, %vm194
    %v196 = vsel %vm195, %v187, %v192
    %v197 = vmul.f32 %v181, %v196
    %v199 = vperm.slane %v78, 0
    %v201 = vmul.f32 %v77, %v199
    %v203 = vperm.slane %v88, 0
    %v205 = vmul.f32 %v86, %v203
    %v206 = vadd.f32 %v201, %v205
    %v208 = vperm.slane %v99, 0
    %v210 = vmul.f32 %v97, %v208
    %v211 = vadd.f32 %v206, %v210
    %v213 = vperm.slane %v110, 0
    %v215 = vmul.f32 %v108, %v213
    %v216 = vadd.f32 %v211, %v215
    %v218 = vperm.slane %v119, 0
    %v220 = vmul.f32 %v75, %v218
    %v221 = vadd.f32 %v216, %v220
    %v223 = vperm.slane %v130, 0
    %v225 = vmul.f32 %v128, %v223
    %v226 = vadd.f32 %v221, %v225
    %v228 = vperm.slane %v141, 0
    %v230 = vmul.f32 %v139, %v228
    %v231 = vadd.f32 %v226, %v230
    %v233 = vperm.slane %v152, 0
    %v235 = vmul.f32 %v150, %v233
    %v236 = vadd.f32 %v231, %v235
    %v238 = vperm.slane %v163, 0
    %v240 = vmul.f32 %v161, %v238
    %v241 = vadd.f32 %v236, %v240
    %v242 = vld [vmem:[%s6] sm:$0x1]
    %v244 = vperm.slane %v242, 0
    %v246 = vmul.f32 %v241, %v244
    %247 = vadd.xlane.f32.xlu0 %v246
    %v248 = vpop.xlane.xlu0 %247
    %v249 = vmul.f32 %v248, %v179
    %v250 = vsub.f32 %v246, %v249
    %v251 = vmul.f32 %v250, %v250
    %252 = vadd.xlane.f32.xlu0 %v251
    %v253 = vpop.xlane.xlu0 %252
    %v254 = vmul.f32 %v253, %v179
    %v255 = vadd.f32 %v254, 1e-05
    %v256 = vrsqrt.pop %v255
    %v257 = vmul.f32 %v256, %v255
    %v258 = vmul.f32 %v257, %v256
    %v259 = vmul.f32 0.5, %v258
    %v260 = vsub.f32 1.5, %v259
    %v261 = vmul.f32 %v256, %v260
    %vm262 = vweird.f32 %v255
    %vm263 = vweird.f32 %v256
    %vm264 = vmor %vm262, %vm263
    %v265 = vsel %vm264, %v256, %v261
    %v266 = vmul.f32 %v250, %v265
    %v267 = vmax.f32 %v75, 0.0
    %268 = vrot.lane.b32.xlu0 %v267, 9
    %v269 = vpop.permute.xlu0 %268
    %v270 = vmul.f32 %v269, %v199
    %v271 = vld [vmem:[%s7] sm:$0xff]
    %273 = vset.pattern.permute.xlu0 0
    %274 = vperm.xlu0 %273, %v271
    %v275 = vpop.permute.xlu0 %274
    %v277 = vmul.f32 %v270, %v275
    %278 = vrot.lane.b32.xlu0 %v267, 8
    %v279 = vpop.permute.xlu0 %278
    %v280 = vmul.f32 %v279, %v203
    %s281 = scalar_lea.vmem %s7, 8
    %v282 = vld [vmem:[%s281] sm:$0xff]
    %284 = vset.pattern.permute.xlu0 0
    %285 = vperm.xlu0 %284, %v282
    %v286 = vpop.permute.xlu0 %285
    %v288 = vmul.f32 %v280, %v286
    %v289 = vadd.f32 %v277, %v288
    %290 = vrot.lane.b32.xlu0 %v267, 7
    %v291 = vpop.permute.xlu0 %290
    %v292 = vmul.f32 %v291, %v208
    %s293 = scalar_lea.vmem %s7, 16
    %v294 = vld [vmem:[%s293] sm:$0xff]
    %296 = vset.pattern.permute.xlu0 0
    %297 = vperm.xlu0 %296, %v294
    %v298 = vpop.permute.xlu0 %297
    %v300 = vmul.f32 %v292, %v298
    %v301 = vadd.f32 %v289, %v300
    %302 = vrot.lane.b32.xlu0 %v267, 1
    %v303 = vpop.permute.xlu0 %302
    %v304 = vmul.f32 %v303, %v213
    %s305 = scalar_lea.vmem %s7, 24
    %v306 = vld [vmem:[%s305] sm:$0xff]
    %308 = vset.pattern.permute.xlu0 0
    %309 = vperm.xlu0 %308, %v306
    %v310 = vpop.permute.xlu0 %309
    %v312 = vmul.f32 %v304, %v310
    %v313 = vadd.f32 %v301, %v312
    %v314 = vmul.f32 %v267, %v218
    %s315 = scalar_lea.vmem %s7, 32
    %v316 = vld [vmem:[%s315] sm:$0xff]
    %318 = vset.pattern.permute.xlu0 0
    %319 = vperm.xlu0 %318, %v316
    %v320 = vpop.permute.xlu0 %319
    %v322 = vmul.f32 %v314, %v320
    %v323 = vadd.f32 %v313, %v322
    %324 = vrot.lane.b32.xlu0 %v267, 127
    %v325 = vpop.permute.xlu0 %324
    %v326 = vmul.f32 %v325, %v223
    %s327 = scalar_lea.vmem %s7, 40
    %v328 = vld [vmem:[%s327] sm:$0xff]
    %330 = vset.pattern.permute.xlu0 0
    %331 = vperm.xlu0 %330, %v328
    %v332 = vpop.permute.xlu0 %331
    %v334 = vmul.f32 %v326, %v332
    %v335 = vadd.f32 %v323, %v334
    %336 = vrot.lane.b32.xlu0 %v267, 121
    %v337 = vpop.permute.xlu0 %336
    %v338 = vmul.f32 %v337, %v228
    %s339 = scalar_lea.vmem %s7, 48
    %v340 = vld [vmem:[%s339] sm:$0xff]
    %342 = vset.pattern.permute.xlu0 0
    %343 = vperm.xlu0 %342, %v340
    %v344 = vpop.permute.xlu0 %343
    %v346 = vmul.f32 %v338, %v344
    %v347 = vadd.f32 %v335, %v346
    %348 = vrot.lane.b32.xlu0 %v267, 120
    %v349 = vpop.permute.xlu0 %348
    %v350 = vmul.f32 %v349, %v233
    %s351 = scalar_lea.vmem %s7, 56
    %v352 = vld [vmem:[%s351] sm:$0xff]
    %354 = vset.pattern.permute.xlu0 0
    %355 = vperm.xlu0 %354, %v352
    %v356 = vpop.permute.xlu0 %355
    %v358 = vmul.f32 %v350, %v356
    %v359 = vadd.f32 %v347, %v358
    %360 = vrot.lane.b32.xlu0 %v267, 119
    %v361 = vpop.permute.xlu0 %360
    %v362 = vmul.f32 %v361, %v238
    %s363 = scalar_lea.vmem %s7, 64
    %v364 = vld [vmem:[%s363] sm:$0xff]
    %366 = vset.pattern.permute.xlu0 0
    %367 = vperm.xlu0 %366, %v364
    %v368 = vpop.permute.xlu0 %367
    %v370 = vmul.f32 %v362, %v368
    %v371 = vadd.f32 %v359, %v370
    %v372 = vld [vmem:[%s8] sm:$0xff]
    %vm373 = vcmask 64512
    %v375 = vsel %vm373, %v372, 0
    %377 = vmatpush.msra.mxu0 0.0
    %378 = vmatpush.msra.mxu0 0.0
    %379 = vmatpush.msra.mxu0 0.0
    %380 = vmatpush.msra.mxu0 0.0
    %381 = vmatpush.msra.mxu0 0.0
    %382 = vmatpush.msra.mxu0 0.0
    %383 = vmatpush.msra.mxu0 0.0
    %384 = vmatpush.msra.mxu0 0.0
    %385 = vmatpush.msra.mxu0 0.0
    %386 = vmatpush.msra.mxu0 0.0
    %387 = vmatpush.msra.mxu0 0.0
    %388 = vmatpush.msra.mxu0 0.0
    %389 = vmatpush.msra.mxu0 0.0
    %390 = vmatpush.msra.mxu0 0.0
    %391 = vmatpush.msra.mxu0 0.0
    %392 = vmatpush.msra.mxu0 %v371
    %393 = vmatmul.f32.gmra.mxu0 %v375
    %v394 = vpop.f32.mrf.mxu0
    %v395 = vadd.f32 0.0, %v394
    %396 = vdwg.mxu0
    %397 = vadd.xlane.f32.xlu0 %v395
    %v398 = vpop.xlane.xlu0 %397
    %v399 = vmul.f32 %v398, %v179
    %v400 = vsub.f32 %v395, %v399
    %v401 = vmul.f32 %v400, %v400
    %402 = vadd.xlane.f32.xlu0 %v401
    %v403 = vpop.xlane.xlu0 %402
    %v404 = vmul.f32 %v403, %v179
    %v405 = vadd.f32 %v404, 1e-05
    %v406 = vrsqrt.pop %v405
    %v407 = vmul.f32 %v406, %v405
    %v408 = vmul.f32 %v407, %v406
    %v409 = vmul.f32 0.5, %v408
    %v410 = vsub.f32 1.5, %v409
    %v411 = vmul.f32 %v406, %v410
    %vm412 = vweird.f32 %v405
    %vm413 = vweird.f32 %v406
    %vm414 = vmor %vm412, %vm413
    %v415 = vsel %vm414, %v406, %v411
    %v416 = vmul.f32 %v400, %v415
    %v417 = vmax.f32 %v416, 0.0
    %418 = vrot.lane.b32.xlu0 %v417, 9
    %v419 = vpop.permute.xlu0 %418
    %v420 = vmul.f32 %v419, %v199
    %v421 = vld [vmem:[%s9] sm:$0xff]
    %423 = vset.pattern.permute.xlu0 0
    %424 = vperm.xlu0 %423, %v421
    %v425 = vpop.permute.xlu0 %424
    %v427 = vmul.f32 %v420, %v425
    %428 = vrot.lane.b32.xlu0 %v417, 8
    %v429 = vpop.permute.xlu0 %428
    %v430 = vmul.f32 %v429, %v203
    %s431 = scalar_lea.vmem %s9, 8
    %v432 = vld [vmem:[%s431] sm:$0xff]
    %434 = vset.pattern.permute.xlu0 0
    %435 = vperm.xlu0 %434, %v432
    %v436 = vpop.permute.xlu0 %435
    %v438 = vmul.f32 %v430, %v436
    %v439 = vadd.f32 %v427, %v438
    %440 = vrot.lane.b32.xlu0 %v417, 7
    %v441 = vpop.permute.xlu0 %440
    %v442 = vmul.f32 %v441, %v208
    %s443 = scalar_lea.vmem %s9, 16
    %v444 = vld [vmem:[%s443] sm:$0xff]
    %446 = vset.pattern.permute.xlu0 0
    %447 = vperm.xlu0 %446, %v444
    %v448 = vpop.permute.xlu0 %447
    %v450 = vmul.f32 %v442, %v448
    %v451 = vadd.f32 %v439, %v450
    %452 = vrot.lane.b32.xlu0 %v417, 1
    %v453 = vpop.permute.xlu0 %452
    %v454 = vmul.f32 %v453, %v213
    %s455 = scalar_lea.vmem %s9, 24
    %v456 = vld [vmem:[%s455] sm:$0xff]
    %458 = vset.pattern.permute.xlu0 0
    %459 = vperm.xlu0 %458, %v456
    %v460 = vpop.permute.xlu0 %459
    %v462 = vmul.f32 %v454, %v460
    %v463 = vadd.f32 %v451, %v462
    %v464 = vmul.f32 %v417, %v218
    %s465 = scalar_lea.vmem %s9, 32
    %v466 = vld [vmem:[%s465] sm:$0xff]
    %468 = vset.pattern.permute.xlu0 0
    %469 = vperm.xlu0 %468, %v466
    %v470 = vpop.permute.xlu0 %469
    %v472 = vmul.f32 %v464, %v470
    %v473 = vadd.f32 %v463, %v472
    %474 = vrot.lane.b32.xlu0 %v417, 127
    %v475 = vpop.permute.xlu0 %474
    %v476 = vmul.f32 %v475, %v223
    %s477 = scalar_lea.vmem %s9, 40
    %v478 = vld [vmem:[%s477] sm:$0xff]
    %480 = vset.pattern.permute.xlu0 0
    %481 = vperm.xlu0 %480, %v478
    %v482 = vpop.permute.xlu0 %481
    %v484 = vmul.f32 %v476, %v482
    %v485 = vadd.f32 %v473, %v484
    %486 = vrot.lane.b32.xlu0 %v417, 121
    %v487 = vpop.permute.xlu0 %486
    %v488 = vmul.f32 %v487, %v228
    %s489 = scalar_lea.vmem %s9, 48
    %v490 = vld [vmem:[%s489] sm:$0xff]
    %492 = vset.pattern.permute.xlu0 0
    %493 = vperm.xlu0 %492, %v490
    %v494 = vpop.permute.xlu0 %493
    %v496 = vmul.f32 %v488, %v494
    %v497 = vadd.f32 %v485, %v496
    %498 = vrot.lane.b32.xlu0 %v417, 120
    %v499 = vpop.permute.xlu0 %498
    %v500 = vmul.f32 %v499, %v233
    %s501 = scalar_lea.vmem %s9, 56
    %v502 = vld [vmem:[%s501] sm:$0xff]
    %504 = vset.pattern.permute.xlu0 0
    %505 = vperm.xlu0 %504, %v502
    %v506 = vpop.permute.xlu0 %505
    %v508 = vmul.f32 %v500, %v506
    %v509 = vadd.f32 %v497, %v508
    %510 = vrot.lane.b32.xlu0 %v417, 119
    %v511 = vpop.permute.xlu0 %510
    %v512 = vmul.f32 %v511, %v238
    %s513 = scalar_lea.vmem %s9, 64
    %v514 = vld [vmem:[%s513] sm:$0xff]
    %516 = vset.pattern.permute.xlu0 0
    %517 = vperm.xlu0 %516, %v514
    %v518 = vpop.permute.xlu0 %517
    %v520 = vmul.f32 %v512, %v518
    %v521 = vadd.f32 %v509, %v520
    %v522 = vld [vmem:[%s10] sm:$0xff]
    %v524 = vsel %vm373, %v522, 0
    %526 = vmatpush.msra.mxu0 0.0
    %527 = vmatpush.msra.mxu0 0.0
    %528 = vmatpush.msra.mxu0 0.0
    %529 = vmatpush.msra.mxu0 0.0
    %530 = vmatpush.msra.mxu0 0.0
    %531 = vmatpush.msra.mxu0 0.0
    %532 = vmatpush.msra.mxu0 0.0
    %533 = vmatpush.msra.mxu0 0.0
    %534 = vmatpush.msra.mxu0 0.0
    %535 = vmatpush.msra.mxu0 0.0
    %536 = vmatpush.msra.mxu0 0.0
    %537 = vmatpush.msra.mxu0 0.0
    %538 = vmatpush.msra.mxu0 0.0
    %539 = vmatpush.msra.mxu0 0.0
    %540 = vmatpush.msra.mxu0 0.0
    %541 = vmatpush.msra.mxu0 %v521
    %542 = vmatmul.f32.gmra.mxu0 %v524
    %v543 = vpop.f32.mrf.mxu0
    %v544 = vadd.f32 0.0, %v543
    %545 = vdwg.mxu0
    %546 = vadd.xlane.f32.xlu0 %v544
    %v547 = vpop.xlane.xlu0 %546
    %v548 = vmul.f32 %v547, %v179
    %v549 = vsub.f32 %v544, %v548
    %v550 = vmul.f32 %v549, %v549
    %551 = vadd.xlane.f32.xlu0 %v550
    %v552 = vpop.xlane.xlu0 %551
    %v553 = vmul.f32 %v552, %v179
    %v554 = vadd.f32 %v553, 1e-05
    %v555 = vrsqrt.pop %v554
    %v556 = vmul.f32 %v555, %v554
    %v557 = vmul.f32 %v556, %v555
    %v558 = vmul.f32 0.5, %v557
    %v559 = vsub.f32 1.5, %v558
    %v560 = vmul.f32 %v555, %v559
    %vm561 = vweird.f32 %v554
    %vm562 = vweird.f32 %v555
    %vm563 = vmor %vm561, %vm562
    %v564 = vsel %vm563, %v555, %v560
    %v565 = vmul.f32 %v549, %v564
    %566 = vrot.lane.b32.xlu0 %v267, 18
    %v567 = vpop.permute.xlu0 %566
    %v568 = vld [vmem:[%s3] sm:$0x1]
    %v570 = vperm.slane %v568, 0
    %v572 = vmul.f32 %v567, %v570
    %v573 = vld [vmem:[%s11] sm:$0xff]
    %575 = vset.pattern.permute.xlu0 0
    %576 = vperm.xlu0 %575, %v573
    %v577 = vpop.permute.xlu0 %576
    %v579 = vmul.f32 %v572, %v577
    %580 = vrot.lane.b32.xlu0 %v267, 17
    %v581 = vpop.permute.xlu0 %580
    %s582 = scalar_lea.vmem %s3, 1
    %v583 = vld [vmem:[%s582] sm:$0x1]
    %v585 = vperm.slane %v583, 0
    %v587 = vmul.f32 %v581, %v585
    %s588 = scalar_lea.vmem %s11, 8
    %v589 = vld [vmem:[%s588] sm:$0xff]
    %591 = vset.pattern.permute.xlu0 0
    %592 = vperm.xlu0 %591, %v589
    %v593 = vpop.permute.xlu0 %592
    %v595 = vmul.f32 %v587, %v593
    %v596 = vadd.f32 %v579, %v595
    %597 = vrot.lane.b32.xlu0 %v267, 16
    %v598 = vpop.permute.xlu0 %597
    %s599 = scalar_lea.vmem %s3, 2
    %v600 = vld [vmem:[%s599] sm:$0x1]
    %v602 = vperm.slane %v600, 0
    %v604 = vmul.f32 %v598, %v602
    %s605 = scalar_lea.vmem %s11, 16
    %v606 = vld [vmem:[%s605] sm:$0xff]
    %608 = vset.pattern.permute.xlu0 0
    %609 = vperm.xlu0 %608, %v606
    %v610 = vpop.permute.xlu0 %609
    %v612 = vmul.f32 %v604, %v610
    %v613 = vadd.f32 %v596, %v612
    %614 = vrot.lane.b32.xlu0 %v267, 15
    %v615 = vpop.permute.xlu0 %614
    %s616 = scalar_lea.vmem %s3, 3
    %v617 = vld [vmem:[%s616] sm:$0x1]
    %v619 = vperm.slane %v617, 0
    %v621 = vmul.f32 %v615, %v619
    %s622 = scalar_lea.vmem %s11, 24
    %v623 = vld [vmem:[%s622] sm:$0xff]
    %625 = vset.pattern.permute.xlu0 0
    %626 = vperm.xlu0 %625, %v623
    %v627 = vpop.permute.xlu0 %626
    %v629 = vmul.f32 %v621, %v627
    %v630 = vadd.f32 %v613, %v629
    %631 = vrot.lane.b32.xlu0 %v267, 14
    %v632 = vpop.permute.xlu0 %631
    %s633 = scalar_lea.vmem %s3, 4
    %v634 = vld [vmem:[%s633] sm:$0x1]
    %v636 = vperm.slane %v634, 0
    %v638 = vmul.f32 %v632, %v636
    %s639 = scalar_lea.vmem %s11, 32
    %v640 = vld [vmem:[%s639] sm:$0xff]
    %642 = vset.pattern.permute.xlu0 0
    %643 = vperm.xlu0 %642, %v640
    %v644 = vpop.permute.xlu0 %643
    %v646 = vmul.f32 %v638, %v644
    %v647 = vadd.f32 %v630, %v646
    %648 = vrot.lane.b32.xlu0 %v267, 10
    %v649 = vpop.permute.xlu0 %648
    %s650 = scalar_lea.vmem %s3, 5
    %v651 = vld [vmem:[%s650] sm:$0x1]
    %v653 = vperm.slane %v651, 0
    %v655 = vmul.f32 %v649, %v653
    %s656 = scalar_lea.vmem %s11, 40
    %v657 = vld [vmem:[%s656] sm:$0xff]
    %659 = vset.pattern.permute.xlu0 0
    %660 = vperm.xlu0 %659, %v657
    %v661 = vpop.permute.xlu0 %660
    %v663 = vmul.f32 %v655, %v661
    %v664 = vadd.f32 %v647, %v663
    %s665 = scalar_lea.vmem %s3, 6
    %v666 = vld [vmem:[%s665] sm:$0x1]
    %v668 = vperm.slane %v666, 0
    %v670 = vmul.f32 %v269, %v668
    %s671 = scalar_lea.vmem %s11, 48
    %v672 = vld [vmem:[%s671] sm:$0xff]
    %674 = vset.pattern.permute.xlu0 0
    %675 = vperm.xlu0 %674, %v672
    %v676 = vpop.permute.xlu0 %675
    %v678 = vmul.f32 %v670, %v676
    %v679 = vadd.f32 %v664, %v678
    %s680 = scalar_lea.vmem %s3, 7
    %v681 = vld [vmem:[%s680] sm:$0x1]
    %v683 = vperm.slane %v681, 0
    %v685 = vmul.f32 %v279, %v683
    %s686 = scalar_lea.vmem %s11, 56
    %v687 = vld [vmem:[%s686] sm:$0xff]
    %689 = vset.pattern.permute.xlu0 0
    %690 = vperm.xlu0 %689, %v687
    %v691 = vpop.permute.xlu0 %690
    %v693 = vmul.f32 %v685, %v691
    %v694 = vadd.f32 %v679, %v693
    %s695 = scalar_lea.vmem %s3, 8
    %v696 = vld [vmem:[%s695] sm:$0x1]
    %v698 = vperm.slane %v696, 0
    %v700 = vmul.f32 %v291, %v698
    %s701 = scalar_lea.vmem %s11, 64
    %v702 = vld [vmem:[%s701] sm:$0xff]
    %704 = vset.pattern.permute.xlu0 0
    %705 = vperm.xlu0 %704, %v702
    %v706 = vpop.permute.xlu0 %705
    %v708 = vmul.f32 %v700, %v706
    %v709 = vadd.f32 %v694, %v708
    %710 = vrot.lane.b32.xlu0 %v267, 6
    %v711 = vpop.permute.xlu0 %710
    %s712 = scalar_lea.vmem %s3, 9
    %v713 = vld [vmem:[%s712] sm:$0x1]
    %v715 = vperm.slane %v713, 0
    %v717 = vmul.f32 %v711, %v715
    %s718 = scalar_lea.vmem %s11, 72
    %v719 = vld [vmem:[%s718] sm:$0xff]
    %721 = vset.pattern.permute.xlu0 0
    %722 = vperm.xlu0 %721, %v719
    %v723 = vpop.permute.xlu0 %722
    %v725 = vmul.f32 %v717, %v723
    %v726 = vadd.f32 %v709, %v725
    %727 = vrot.lane.b32.xlu0 %v267, 2
    %v728 = vpop.permute.xlu0 %727
    %s729 = scalar_lea.vmem %s3, 10
    %v730 = vld [vmem:[%s729] sm:$0x1]
    %v732 = vperm.slane %v730, 0
    %v734 = vmul.f32 %v728, %v732
    %s735 = scalar_lea.vmem %s11, 80
    %v736 = vld [vmem:[%s735] sm:$0xff]
    %738 = vset.pattern.permute.xlu0 0
    %739 = vperm.xlu0 %738, %v736
    %v740 = vpop.permute.xlu0 %739
    %v742 = vmul.f32 %v734, %v740
    %v743 = vadd.f32 %v726, %v742
    %s744 = scalar_lea.vmem %s3, 11
    %v745 = vld [vmem:[%s744] sm:$0x1]
    %v747 = vperm.slane %v745, 0
    %v749 = vmul.f32 %v303, %v747
    %s750 = scalar_lea.vmem %s11, 88
    %v751 = vld [vmem:[%s750] sm:$0xff]
    %753 = vset.pattern.permute.xlu0 0
    %754 = vperm.xlu0 %753, %v751
    %v755 = vpop.permute.xlu0 %754
    %v757 = vmul.f32 %v749, %v755
    %v758 = vadd.f32 %v743, %v757
    %s759 = scalar_lea.vmem %s3, 12
    %v760 = vld [vmem:[%s759] sm:$0x1]
    %v762 = vperm.slane %v760, 0
    %v764 = vmul.f32 %v267, %v762
    %s765 = scalar_lea.vmem %s11, 96
    %v766 = vld [vmem:[%s765] sm:$0xff]
    %768 = vset.pattern.permute.xlu0 0
    %769 = vperm.xlu0 %768, %v766
    %v770 = vpop.permute.xlu0 %769
    %v772 = vmul.f32 %v764, %v770
    %v773 = vadd.f32 %v758, %v772
    %s774 = scalar_lea.vmem %s3, 13
    %v775 = vld [vmem:[%s774] sm:$0x1]
    %v777 = vperm.slane %v775, 0
    %v779 = vmul.f32 %v325, %v777
    %s780 = scalar_lea.vmem %s11, 104
    %v781 = vld [vmem:[%s780] sm:$0xff]
    %783 = vset.pattern.permute.xlu0 0
    %784 = vperm.xlu0 %783, %v781
    %v785 = vpop.permute.xlu0 %784
    %v787 = vmul.f32 %v779, %v785
    %v788 = vadd.f32 %v773, %v787
    %789 = vrot.lane.b32.xlu0 %v267, 126
    %v790 = vpop.permute.xlu0 %789
    %s791 = scalar_lea.vmem %s3, 14
    %v792 = vld [vmem:[%s791] sm:$0x1]
    %v794 = vperm.slane %v792, 0
    %v796 = vmul.f32 %v790, %v794
    %s797 = scalar_lea.vmem %s11, 112
    %v798 = vld [vmem:[%s797] sm:$0xff]
    %800 = vset.pattern.permute.xlu0 0
    %801 = vperm.xlu0 %800, %v798
    %v802 = vpop.permute.xlu0 %801
    %v804 = vmul.f32 %v796, %v802
    %v805 = vadd.f32 %v788, %v804
    %806 = vrot.lane.b32.xlu0 %v267, 122
    %v807 = vpop.permute.xlu0 %806
    %s808 = scalar_lea.vmem %s3, 15
    %v809 = vld [vmem:[%s808] sm:$0x1]
    %v811 = vperm.slane %v809, 0
    %v813 = vmul.f32 %v807, %v811
    %s814 = scalar_lea.vmem %s11, 120
    %v815 = vld [vmem:[%s814] sm:$0xff]
    %817 = vset.pattern.permute.xlu0 0
    %818 = vperm.xlu0 %817, %v815
    %v819 = vpop.permute.xlu0 %818
    %v821 = vmul.f32 %v813, %v819
    %v822 = vadd.f32 %v805, %v821
    %s823 = scalar_lea.vmem %s3, 16
    %v824 = vld [vmem:[%s823] sm:$0x1]
    %v826 = vperm.slane %v824, 0
    %v828 = vmul.f32 %v337, %v826
    %s829 = scalar_lea.vmem %s11, 128
    %v830 = vld [vmem:[%s829] sm:$0xff]
    %832 = vset.pattern.permute.xlu0 0
    %833 = vperm.xlu0 %832, %v830
    %v834 = vpop.permute.xlu0 %833
    %v836 = vmul.f32 %v828, %v834
    %v837 = vadd.f32 %v822, %v836
    %s838 = scalar_lea.vmem %s3, 17
    %v839 = vld [vmem:[%s838] sm:$0x1]
    %v841 = vperm.slane %v839, 0
    %v843 = vmul.f32 %v349, %v841
    %s844 = scalar_lea.vmem %s11, 136
    %v845 = vld [vmem:[%s844] sm:$0xff]
    %847 = vset.pattern.permute.xlu0 0
    %848 = vperm.xlu0 %847, %v845
    %v849 = vpop.permute.xlu0 %848
    %v851 = vmul.f32 %v843, %v849
    %v852 = vadd.f32 %v837, %v851
    %s853 = scalar_lea.vmem %s3, 18
    %v854 = vld [vmem:[%s853] sm:$0x1]
    %v856 = vperm.slane %v854, 0
    %v858 = vmul.f32 %v361, %v856
    %s859 = scalar_lea.vmem %s11, 144
    %v860 = vld [vmem:[%s859] sm:$0xff]
    %862 = vset.pattern.permute.xlu0 0
    %863 = vperm.xlu0 %862, %v860
    %v864 = vpop.permute.xlu0 %863
    %v866 = vmul.f32 %v858, %v864
    %v867 = vadd.f32 %v852, %v866
    %868 = vrot.lane.b32.xlu0 %v267, 118
    %v869 = vpop.permute.xlu0 %868
    %s870 = scalar_lea.vmem %s3, 19
    %v871 = vld [vmem:[%s870] sm:$0x1]
    %v873 = vperm.slane %v871, 0
    %v875 = vmul.f32 %v869, %v873
    %s876 = scalar_lea.vmem %s11, 152
    %v877 = vld [vmem:[%s876] sm:$0xff]
    %879 = vset.pattern.permute.xlu0 0
    %880 = vperm.xlu0 %879, %v877
    %v881 = vpop.permute.xlu0 %880
    %v883 = vmul.f32 %v875, %v881
    %v884 = vadd.f32 %v867, %v883
    %885 = vrot.lane.b32.xlu0 %v267, 114
    %v886 = vpop.permute.xlu0 %885
    %s887 = scalar_lea.vmem %s3, 20
    %v888 = vld [vmem:[%s887] sm:$0x1]
    %v890 = vperm.slane %v888, 0
    %v892 = vmul.f32 %v886, %v890
    %s893 = scalar_lea.vmem %s11, 160
    %v894 = vld [vmem:[%s893] sm:$0xff]
    %896 = vset.pattern.permute.xlu0 0
    %897 = vperm.xlu0 %896, %v894
    %v898 = vpop.permute.xlu0 %897
    %v900 = vmul.f32 %v892, %v898
    %v901 = vadd.f32 %v884, %v900
    %902 = vrot.lane.b32.xlu0 %v267, 113
    %v903 = vpop.permute.xlu0 %902
    %s904 = scalar_lea.vmem %s3, 21
    %v905 = vld [vmem:[%s904] sm:$0x1]
    %v907 = vperm.slane %v905, 0
    %v909 = vmul.f32 %v903, %v907
    %s910 = scalar_lea.vmem %s11, 168
    %v911 = vld [vmem:[%s910] sm:$0xff]
    %913 = vset.pattern.permute.xlu0 0
    %914 = vperm.xlu0 %913, %v911
    %v915 = vpop.permute.xlu0 %914
    %v917 = vmul.f32 %v909, %v915
    %v918 = vadd.f32 %v901, %v917
    %919 = vrot.lane.b32.xlu0 %v267, 112
    %v920 = vpop.permute.xlu0 %919
    %s921 = scalar_lea.vmem %s3, 22
    %v922 = vld [vmem:[%s921] sm:$0x1]
    %v924 = vperm.slane %v922, 0
    %v926 = vmul.f32 %v920, %v924
    %s927 = scalar_lea.vmem %s11, 176
    %v928 = vld [vmem:[%s927] sm:$0xff]
    %930 = vset.pattern.permute.xlu0 0
    %931 = vperm.xlu0 %930, %v928
    %v932 = vpop.permute.xlu0 %931
    %v934 = vmul.f32 %v926, %v932
    %v935 = vadd.f32 %v918, %v934
    %936 = vrot.lane.b32.xlu0 %v267, 111
    %v937 = vpop.permute.xlu0 %936
    %s938 = scalar_lea.vmem %s3, 23
    %v939 = vld [vmem:[%s938] sm:$0x1]
    %v941 = vperm.slane %v939, 0
    %v943 = vmul.f32 %v937, %v941
    %s944 = scalar_lea.vmem %s11, 184
    %v945 = vld [vmem:[%s944] sm:$0xff]
    %947 = vset.pattern.permute.xlu0 0
    %948 = vperm.xlu0 %947, %v945
    %v949 = vpop.permute.xlu0 %948
    %v951 = vmul.f32 %v943, %v949
    %v952 = vadd.f32 %v935, %v951
    %953 = vrot.lane.b32.xlu0 %v267, 110
    %v954 = vpop.permute.xlu0 %953
    %s955 = scalar_lea.vmem %s3, 24
    %v956 = vld [vmem:[%s955] sm:$0x1]
    %v958 = vperm.slane %v956, 0
    %v960 = vmul.f32 %v954, %v958
    %s961 = scalar_lea.vmem %s11, 192
    %v962 = vld [vmem:[%s961] sm:$0xff]
    %964 = vset.pattern.permute.xlu0 0
    %965 = vperm.xlu0 %964, %v962
    %v966 = vpop.permute.xlu0 %965
    %v968 = vmul.f32 %v960, %v966
    %v969 = vadd.f32 %v952, %v968
    %v970 = vld [vmem:[%s12] sm:$0xff]
    %v972 = vsel %vm373, %v970, 0
    %974 = vmatpush.msra.mxu0 0.0
    %975 = vmatpush.msra.mxu0 0.0
    %976 = vmatpush.msra.mxu0 0.0
    %977 = vmatpush.msra.mxu0 0.0
    %978 = vmatpush.msra.mxu0 0.0
    %979 = vmatpush.msra.mxu0 0.0
    %980 = vmatpush.msra.mxu0 0.0
    %981 = vmatpush.msra.mxu0 0.0
    %982 = vmatpush.msra.mxu0 0.0
    %983 = vmatpush.msra.mxu0 0.0
    %984 = vmatpush.msra.mxu0 0.0
    %985 = vmatpush.msra.mxu0 0.0
    %986 = vmatpush.msra.mxu0 0.0
    %987 = vmatpush.msra.mxu0 0.0
    %988 = vmatpush.msra.mxu0 0.0
    %989 = vmatpush.msra.mxu0 %v969
    %990 = vmatmul.f32.gmra.mxu0 %v972
    %v991 = vpop.f32.mrf.mxu0
    %v992 = vadd.f32 0.0, %v991
    %993 = vdwg.mxu0
    %994 = vadd.xlane.f32.xlu0 %v992
    %v995 = vpop.xlane.xlu0 %994
    %v996 = vmul.f32 %v995, %v179
    %v997 = vsub.f32 %v992, %v996
    %v998 = vmul.f32 %v997, %v997
    %999 = vadd.xlane.f32.xlu0 %v998
    %v1000 = vpop.xlane.xlu0 %999
    %v1001 = vmul.f32 %v1000, %v179
    %v1002 = vadd.f32 %v1001, 1e-05
    %v1003 = vrsqrt.pop %v1002
    %v1004 = vmul.f32 %v1003, %v1002
    %v1005 = vmul.f32 %v1004, %v1003
    %v1006 = vmul.f32 0.5, %v1005
    %v1007 = vsub.f32 1.5, %v1006
    %v1008 = vmul.f32 %v1003, %v1007
    %vm1009 = vweird.f32 %v1002
    %vm1010 = vweird.f32 %v1003
    %vm1011 = vmor %vm1009, %vm1010
    %v1012 = vsel %vm1011, %v1003, %v1008
    %v1013 = vmul.f32 %v997, %v1012
    %v1014 = vmax.f32 %v1013, 0.0
    %1015 = vrot.lane.b32.xlu0 %v1014, 18
    %v1016 = vpop.permute.xlu0 %1015
    %v1017 = vmul.f32 %v1016, %v570
    %v1018 = vld [vmem:[%s13] sm:$0xff]
    %1020 = vset.pattern.permute.xlu0 0
    %1021 = vperm.xlu0 %1020, %v1018
    %v1022 = vpop.permute.xlu0 %1021
    %v1024 = vmul.f32 %v1017, %v1022
    %1025 = vrot.lane.b32.xlu0 %v1014, 17
    %v1026 = vpop.permute.xlu0 %1025
    %v1027 = vmul.f32 %v1026, %v585
    %s1028 = scalar_lea.vmem %s13, 8
    %v1029 = vld [vmem:[%s1028] sm:$0xff]
    %1031 = vset.pattern.permute.xlu0 0
    %1032 = vperm.xlu0 %1031, %v1029
    %v1033 = vpop.permute.xlu0 %1032
    %v1035 = vmul.f32 %v1027, %v1033
    %v1036 = vadd.f32 %v1024, %v1035
    %1037 = vrot.lane.b32.xlu0 %v1014, 16
    %v1038 = vpop.permute.xlu0 %1037
    %v1039 = vmul.f32 %v1038, %v602
    %s1040 = scalar_lea.vmem %s13, 16
    %v1041 = vld [vmem:[%s1040] sm:$0xff]
    %1043 = vset.pattern.permute.xlu0 0
    %1044 = vperm.xlu0 %1043, %v1041
    %v1045 = vpop.permute.xlu0 %1044
    %v1047 = vmul.f32 %v1039, %v1045
    %v1048 = vadd.f32 %v1036, %v1047
    %1049 = vrot.lane.b32.xlu0 %v1014, 15
    %v1050 = vpop.permute.xlu0 %1049
    %v1051 = vmul.f32 %v1050, %v619
    %s1052 = scalar_lea.vmem %s13, 24
    %v1053 = vld [vmem:[%s1052] sm:$0xff]
    %1055 = vset.pattern.permute.xlu0 0
    %1056 = vperm.xlu0 %1055, %v1053
    %v1057 = vpop.permute.xlu0 %1056
    %v1059 = vmul.f32 %v1051, %v1057
    %v1060 = vadd.f32 %v1048, %v1059
    %1061 = vrot.lane.b32.xlu0 %v1014, 14
    %v1062 = vpop.permute.xlu0 %1061
    %v1063 = vmul.f32 %v1062, %v636
    %s1064 = scalar_lea.vmem %s13, 32
    %v1065 = vld [vmem:[%s1064] sm:$0xff]
    %1067 = vset.pattern.permute.xlu0 0
    %1068 = vperm.xlu0 %1067, %v1065
    %v1069 = vpop.permute.xlu0 %1068
    %v1071 = vmul.f32 %v1063, %v1069
    %v1072 = vadd.f32 %v1060, %v1071
    %1073 = vrot.lane.b32.xlu0 %v1014, 10
    %v1074 = vpop.permute.xlu0 %1073
    %v1075 = vmul.f32 %v1074, %v653
    %s1076 = scalar_lea.vmem %s13, 40
    %v1077 = vld [vmem:[%s1076] sm:$0xff]
    %1079 = vset.pattern.permute.xlu0 0
    %1080 = vperm.xlu0 %1079, %v1077
    %v1081 = vpop.permute.xlu0 %1080
    %v1083 = vmul.f32 %v1075, %v1081
    %v1084 = vadd.f32 %v1072, %v1083
    %1085 = vrot.lane.b32.xlu0 %v1014, 9
    %v1086 = vpop.permute.xlu0 %1085
    %v1087 = vmul.f32 %v1086, %v668
    %s1088 = scalar_lea.vmem %s13, 48
    %v1089 = vld [vmem:[%s1088] sm:$0xff]
    %1091 = vset.pattern.permute.xlu0 0
    %1092 = vperm.xlu0 %1091, %v1089
    %v1093 = vpop.permute.xlu0 %1092
    %v1095 = vmul.f32 %v1087, %v1093
    %v1096 = vadd.f32 %v1084, %v1095
    %1097 = vrot.lane.b32.xlu0 %v1014, 8
    %v1098 = vpop.permute.xlu0 %1097
    %v1099 = vmul.f32 %v1098, %v683
    %s1100 = scalar_lea.vmem %s13, 56
    %v1101 = vld [vmem:[%s1100] sm:$0xff]
    %1103 = vset.pattern.permute.xlu0 0
    %1104 = vperm.xlu0 %1103, %v1101
    %v1105 = vpop.permute.xlu0 %1104
    %v1107 = vmul.f32 %v1099, %v1105
    %v1108 = vadd.f32 %v1096, %v1107
    %1109 = vrot.lane.b32.xlu0 %v1014, 7
    %v1110 = vpop.permute.xlu0 %1109
    %v1111 = vmul.f32 %v1110, %v698
    %s1112 = scalar_lea.vmem %s13, 64
    %v1113 = vld [vmem:[%s1112] sm:$0xff]
    %1115 = vset.pattern.permute.xlu0 0
    %1116 = vperm.xlu0 %1115, %v1113
    %v1117 = vpop.permute.xlu0 %1116
    %v1119 = vmul.f32 %v1111, %v1117
    %v1120 = vadd.f32 %v1108, %v1119
    %1121 = vrot.lane.b32.xlu0 %v1014, 6
    %v1122 = vpop.permute.xlu0 %1121
    %v1123 = vmul.f32 %v1122, %v715
    %s1124 = scalar_lea.vmem %s13, 72
    %v1125 = vld [vmem:[%s1124] sm:$0xff]
    %1127 = vset.pattern.permute.xlu0 0
    %1128 = vperm.xlu0 %1127, %v1125
    %v1129 = vpop.permute.xlu0 %1128
    %v1131 = vmul.f32 %v1123, %v1129
    %v1132 = vadd.f32 %v1120, %v1131
    %1133 = vrot.lane.b32.xlu0 %v1014, 2
    %v1134 = vpop.permute.xlu0 %1133
    %v1135 = vmul.f32 %v1134, %v732
    %s1136 = scalar_lea.vmem %s13, 80
    %v1137 = vld [vmem:[%s1136] sm:$0xff]
    %1139 = vset.pattern.permute.xlu0 0
    %1140 = vperm.xlu0 %1139, %v1137
    %v1141 = vpop.permute.xlu0 %1140
    %v1143 = vmul.f32 %v1135, %v1141
    %v1144 = vadd.f32 %v1132, %v1143
    %1145 = vrot.lane.b32.xlu0 %v1014, 1
    %v1146 = vpop.permute.xlu0 %1145
    %v1147 = vmul.f32 %v1146, %v747
    %s1148 = scalar_lea.vmem %s13, 88
    %v1149 = vld [vmem:[%s1148] sm:$0xff]
    %1151 = vset.pattern.permute.xlu0 0
    %1152 = vperm.xlu0 %1151, %v1149
    %v1153 = vpop.permute.xlu0 %1152
    %v1155 = vmul.f32 %v1147, %v1153
    %v1156 = vadd.f32 %v1144, %v1155
    %v1157 = vmul.f32 %v1014, %v762
    %s1158 = scalar_lea.vmem %s13, 96
    %v1159 = vld [vmem:[%s1158] sm:$0xff]
    %1161 = vset.pattern.permute.xlu0 0
    %1162 = vperm.xlu0 %1161, %v1159
    %v1163 = vpop.permute.xlu0 %1162
    %v1165 = vmul.f32 %v1157, %v1163
    %v1166 = vadd.f32 %v1156, %v1165
    %1167 = vrot.lane.b32.xlu0 %v1014, 127
    %v1168 = vpop.permute.xlu0 %1167
    %v1169 = vmul.f32 %v1168, %v777
    %s1170 = scalar_lea.vmem %s13, 104
    %v1171 = vld [vmem:[%s1170] sm:$0xff]
    %1173 = vset.pattern.permute.xlu0 0
    %1174 = vperm.xlu0 %1173, %v1171
    %v1175 = vpop.permute.xlu0 %1174
    %v1177 = vmul.f32 %v1169, %v1175
    %v1178 = vadd.f32 %v1166, %v1177
    %1179 = vrot.lane.b32.xlu0 %v1014, 126
    %v1180 = vpop.permute.xlu0 %1179
    %v1181 = vmul.f32 %v1180, %v794
    %s1182 = scalar_lea.vmem %s13, 112
    %v1183 = vld [vmem:[%s1182] sm:$0xff]
    %1185 = vset.pattern.permute.xlu0 0
    %1186 = vperm.xlu0 %1185, %v1183
    %v1187 = vpop.permute.xlu0 %1186
    %v1189 = vmul.f32 %v1181, %v1187
    %v1190 = vadd.f32 %v1178, %v1189
    %1191 = vrot.lane.b32.xlu0 %v1014, 122
    %v1192 = vpop.permute.xlu0 %1191
    %v1193 = vmul.f32 %v1192, %v811
    %s1194 = scalar_lea.vmem %s13, 120
    %v1195 = vld [vmem:[%s1194] sm:$0xff]
    %1197 = vset.pattern.permute.xlu0 0
    %1198 = vperm.xlu0 %1197, %v1195
    %v1199 = vpop.permute.xlu0 %1198
    %v1201 = vmul.f32 %v1193, %v1199
    %v1202 = vadd.f32 %v1190, %v1201
    %1203 = vrot.lane.b32.xlu0 %v1014, 121
    %v1204 = vpop.permute.xlu0 %1203
    %v1205 = vmul.f32 %v1204, %v826
    %s1206 = scalar_lea.vmem %s13, 128
    %v1207 = vld [vmem:[%s1206] sm:$0xff]
    %1209 = vset.pattern.permute.xlu0 0
    %1210 = vperm.xlu0 %1209, %v1207
    %v1211 = vpop.permute.xlu0 %1210
    %v1213 = vmul.f32 %v1205, %v1211
    %v1214 = vadd.f32 %v1202, %v1213
    %1215 = vrot.lane.b32.xlu0 %v1014, 120
    %v1216 = vpop.permute.xlu0 %1215
    %v1217 = vmul.f32 %v1216, %v841
    %s1218 = scalar_lea.vmem %s13, 136
    %v1219 = vld [vmem:[%s1218] sm:$0xff]
    %1221 = vset.pattern.permute.xlu0 0
    %1222 = vperm.xlu0 %1221, %v1219
    %v1223 = vpop.permute.xlu0 %1222
    %v1225 = vmul.f32 %v1217, %v1223
    %v1226 = vadd.f32 %v1214, %v1225
    %1227 = vrot.lane.b32.xlu0 %v1014, 119
    %v1228 = vpop.permute.xlu0 %1227
    %v1229 = vmul.f32 %v1228, %v856
    %s1230 = scalar_lea.vmem %s13, 144
    %v1231 = vld [vmem:[%s1230] sm:$0xff]
    %1233 = vset.pattern.permute.xlu0 0
    %1234 = vperm.xlu0 %1233, %v1231
    %v1235 = vpop.permute.xlu0 %1234
    %v1237 = vmul.f32 %v1229, %v1235
    %v1238 = vadd.f32 %v1226, %v1237
    %1239 = vrot.lane.b32.xlu0 %v1014, 118
    %v1240 = vpop.permute.xlu0 %1239
    %v1241 = vmul.f32 %v1240, %v873
    %s1242 = scalar_lea.vmem %s13, 152
    %v1243 = vld [vmem:[%s1242] sm:$0xff]
    %1245 = vset.pattern.permute.xlu0 0
    %1246 = vperm.xlu0 %1245, %v1243
    %v1247 = vpop.permute.xlu0 %1246
    %v1249 = vmul.f32 %v1241, %v1247
    %v1250 = vadd.f32 %v1238, %v1249
    %1251 = vrot.lane.b32.xlu0 %v1014, 114
    %v1252 = vpop.permute.xlu0 %1251
    %v1253 = vmul.f32 %v1252, %v890
    %s1254 = scalar_lea.vmem %s13, 160
    %v1255 = vld [vmem:[%s1254] sm:$0xff]
    %1257 = vset.pattern.permute.xlu0 0
    %1258 = vperm.xlu0 %1257, %v1255
    %v1259 = vpop.permute.xlu0 %1258
    %v1261 = vmul.f32 %v1253, %v1259
    %v1262 = vadd.f32 %v1250, %v1261
    %1263 = vrot.lane.b32.xlu0 %v1014, 113
    %v1264 = vpop.permute.xlu0 %1263
    %v1265 = vmul.f32 %v1264, %v907
    %s1266 = scalar_lea.vmem %s13, 168
    %v1267 = vld [vmem:[%s1266] sm:$0xff]
    %1269 = vset.pattern.permute.xlu0 0
    %1270 = vperm.xlu0 %1269, %v1267
    %v1271 = vpop.permute.xlu0 %1270
    %v1273 = vmul.f32 %v1265, %v1271
    %v1274 = vadd.f32 %v1262, %v1273
    %1275 = vrot.lane.b32.xlu0 %v1014, 112
    %v1276 = vpop.permute.xlu0 %1275
    %v1277 = vmul.f32 %v1276, %v924
    %s1278 = scalar_lea.vmem %s13, 176
    %v1279 = vld [vmem:[%s1278] sm:$0xff]
    %1281 = vset.pattern.permute.xlu0 0
    %1282 = vperm.xlu0 %1281, %v1279
    %v1283 = vpop.permute.xlu0 %1282
    %v1285 = vmul.f32 %v1277, %v1283
    %v1286 = vadd.f32 %v1274, %v1285
    %1287 = vrot.lane.b32.xlu0 %v1014, 111
    %v1288 = vpop.permute.xlu0 %1287
    %v1289 = vmul.f32 %v1288, %v941
    %s1290 = scalar_lea.vmem %s13, 184
    %v1291 = vld [vmem:[%s1290] sm:$0xff]
    %1293 = vset.pattern.permute.xlu0 0
    %1294 = vperm.xlu0 %1293, %v1291
    %v1295 = vpop.permute.xlu0 %1294
    %v1297 = vmul.f32 %v1289, %v1295
    %v1298 = vadd.f32 %v1286, %v1297
    %1299 = vrot.lane.b32.xlu0 %v1014, 110
    %v1300 = vpop.permute.xlu0 %1299
    %v1301 = vmul.f32 %v1300, %v958
    %s1302 = scalar_lea.vmem %s13, 192
    %v1303 = vld [vmem:[%s1302] sm:$0xff]
    %1305 = vset.pattern.permute.xlu0 0
    %1306 = vperm.xlu0 %1305, %v1303
    %v1307 = vpop.permute.xlu0 %1306
    %v1309 = vmul.f32 %v1301, %v1307
    %v1310 = vadd.f32 %v1298, %v1309
    %v1311 = vld [vmem:[%s14] sm:$0xff]
    %v1313 = vsel %vm373, %v1311, 0
    %1315 = vmatpush.msra.mxu0 0.0
    %1316 = vmatpush.msra.mxu0 0.0
    %1317 = vmatpush.msra.mxu0 0.0
    %1318 = vmatpush.msra.mxu0 0.0
    %1319 = vmatpush.msra.mxu0 0.0
    %1320 = vmatpush.msra.mxu0 0.0
    %1321 = vmatpush.msra.mxu0 0.0
    %1322 = vmatpush.msra.mxu0 0.0
    %1323 = vmatpush.msra.mxu0 0.0
    %1324 = vmatpush.msra.mxu0 0.0
    %1325 = vmatpush.msra.mxu0 0.0
    %1326 = vmatpush.msra.mxu0 0.0
    %1327 = vmatpush.msra.mxu0 0.0
    %1328 = vmatpush.msra.mxu0 0.0
    %1329 = vmatpush.msra.mxu0 0.0
    %1330 = vmatpush.msra.mxu0 %v1310
    %1331 = vmatmul.f32.gmra.mxu0 %v1313
    %v1332 = vpop.f32.mrf.mxu0
    %v1333 = vadd.f32 0.0, %v1332
    %1334 = vdwg.mxu0
    %1335 = vadd.xlane.f32.xlu0 %v1333
    %v1336 = vpop.xlane.xlu0 %1335
    %v1337 = vmul.f32 %v1336, %v179
    %v1338 = vsub.f32 %v1333, %v1337
    %v1339 = vmul.f32 %v1338, %v1338
    %1340 = vadd.xlane.f32.xlu0 %v1339
    %v1341 = vpop.xlane.xlu0 %1340
    %v1342 = vmul.f32 %v1341, %v179
    %v1343 = vadd.f32 %v1342, 1e-05
    %v1344 = vrsqrt.pop %v1343
    %v1345 = vmul.f32 %v1344, %v1343
    %v1346 = vmul.f32 %v1345, %v1344
    %v1347 = vmul.f32 0.5, %v1346
    %v1348 = vsub.f32 1.5, %v1347
    %v1349 = vmul.f32 %v1344, %v1348
    %vm1350 = vweird.f32 %v1343
    %vm1351 = vweird.f32 %v1344
    %vm1352 = vmor %vm1350, %vm1351
    %v1353 = vsel %vm1352, %v1344, %v1349
    %v1354 = vmul.f32 %v1338, %v1353
    %v1355 = vld [vmem:[%s4] sm:$0x1]
    %v1357 = vperm.slane %v1355, 0
    %v1359 = vmul.f32 %v567, %v1357
    %v1360 = vld [vmem:[%s15] sm:$0xff]
    %1362 = vset.pattern.permute.xlu0 0
    %1363 = vperm.xlu0 %1362, %v1360
    %v1364 = vpop.permute.xlu0 %1363
    %v1366 = vmul.f32 %v1359, %v1364
    %s1367 = scalar_lea.vmem %s4, 1
    %v1368 = vld [vmem:[%s1367] sm:$0x1]
    %v1370 = vperm.slane %v1368, 0
    %v1372 = vmul.f32 %v598, %v1370
    %s1373 = scalar_lea.vmem %s15, 8
    %v1374 = vld [vmem:[%s1373] sm:$0xff]
    %1376 = vset.pattern.permute.xlu0 0
    %1377 = vperm.xlu0 %1376, %v1374
    %v1378 = vpop.permute.xlu0 %1377
    %v1380 = vmul.f32 %v1372, %v1378
    %v1381 = vadd.f32 %v1366, %v1380
    %s1382 = scalar_lea.vmem %s4, 2
    %v1383 = vld [vmem:[%s1382] sm:$0x1]
    %v1385 = vperm.slane %v1383, 0
    %v1387 = vmul.f32 %v632, %v1385
    %s1388 = scalar_lea.vmem %s15, 16
    %v1389 = vld [vmem:[%s1388] sm:$0xff]
    %1391 = vset.pattern.permute.xlu0 0
    %1392 = vperm.xlu0 %1391, %v1389
    %v1393 = vpop.permute.xlu0 %1392
    %v1395 = vmul.f32 %v1387, %v1393
    %v1396 = vadd.f32 %v1381, %v1395
    %s1397 = scalar_lea.vmem %s4, 3
    %v1398 = vld [vmem:[%s1397] sm:$0x1]
    %v1400 = vperm.slane %v1398, 0
    %v1402 = vmul.f32 %v728, %v1400
    %s1403 = scalar_lea.vmem %s15, 24
    %v1404 = vld [vmem:[%s1403] sm:$0xff]
    %1406 = vset.pattern.permute.xlu0 0
    %1407 = vperm.xlu0 %1406, %v1404
    %v1408 = vpop.permute.xlu0 %1407
    %v1410 = vmul.f32 %v1402, %v1408
    %v1411 = vadd.f32 %v1396, %v1410
    %s1412 = scalar_lea.vmem %s4, 4
    %v1413 = vld [vmem:[%s1412] sm:$0x1]
    %v1415 = vperm.slane %v1413, 0
    %v1417 = vmul.f32 %v267, %v1415
    %s1418 = scalar_lea.vmem %s15, 32
    %v1419 = vld [vmem:[%s1418] sm:$0xff]
    %1421 = vset.pattern.permute.xlu0 0
    %1422 = vperm.xlu0 %1421, %v1419
    %v1423 = vpop.permute.xlu0 %1422
    %v1425 = vmul.f32 %v1417, %v1423
    %v1426 = vadd.f32 %v1411, %v1425
    %s1427 = scalar_lea.vmem %s4, 5
    %v1428 = vld [vmem:[%s1427] sm:$0x1]
    %v1430 = vperm.slane %v1428, 0
    %v1432 = vmul.f32 %v790, %v1430
    %s1433 = scalar_lea.vmem %s15, 40
    %v1434 = vld [vmem:[%s1433] sm:$0xff]
    %1436 = vset.pattern.permute.xlu0 0
    %1437 = vperm.xlu0 %1436, %v1434
    %v1438 = vpop.permute.xlu0 %1437
    %v1440 = vmul.f32 %v1432, %v1438
    %v1441 = vadd.f32 %v1426, %v1440
    %s1442 = scalar_lea.vmem %s4, 6
    %v1443 = vld [vmem:[%s1442] sm:$0x1]
    %v1445 = vperm.slane %v1443, 0
    %v1447 = vmul.f32 %v886, %v1445
    %s1448 = scalar_lea.vmem %s15, 48
    %v1449 = vld [vmem:[%s1448] sm:$0xff]
    %1451 = vset.pattern.permute.xlu0 0
    %1452 = vperm.xlu0 %1451, %v1449
    %v1453 = vpop.permute.xlu0 %1452
    %v1455 = vmul.f32 %v1447, %v1453
    %v1456 = vadd.f32 %v1441, %v1455
    %s1457 = scalar_lea.vmem %s4, 7
    %v1458 = vld [vmem:[%s1457] sm:$0x1]
    %v1460 = vperm.slane %v1458, 0
    %v1462 = vmul.f32 %v920, %v1460
    %s1463 = scalar_lea.vmem %s15, 56
    %v1464 = vld [vmem:[%s1463] sm:$0xff]
    %1466 = vset.pattern.permute.xlu0 0
    %1467 = vperm.xlu0 %1466, %v1464
    %v1468 = vpop.permute.xlu0 %1467
    %v1470 = vmul.f32 %v1462, %v1468
    %v1471 = vadd.f32 %v1456, %v1470
    %s1472 = scalar_lea.vmem %s4, 8
    %v1473 = vld [vmem:[%s1472] sm:$0x1]
    %v1475 = vperm.slane %v1473, 0
    %v1477 = vmul.f32 %v954, %v1475
    %s1478 = scalar_lea.vmem %s15, 64
    %v1479 = vld [vmem:[%s1478] sm:$0xff]
    %1481 = vset.pattern.permute.xlu0 0
    %1482 = vperm.xlu0 %1481, %v1479
    %v1483 = vpop.permute.xlu0 %1482
    %v1485 = vmul.f32 %v1477, %v1483
    %v1486 = vadd.f32 %v1471, %v1485
    %v1487 = vld [vmem:[%s16] sm:$0xff]
    %v1489 = vsel %vm373, %v1487, 0
    %1491 = vmatpush.msra.mxu0 0.0
    %1492 = vmatpush.msra.mxu0 0.0
    %1493 = vmatpush.msra.mxu0 0.0
    %1494 = vmatpush.msra.mxu0 0.0
    %1495 = vmatpush.msra.mxu0 0.0
    %1496 = vmatpush.msra.mxu0 0.0
    %1497 = vmatpush.msra.mxu0 0.0
    %1498 = vmatpush.msra.mxu0 0.0
    %1499 = vmatpush.msra.mxu0 0.0
    %1500 = vmatpush.msra.mxu0 0.0
    %1501 = vmatpush.msra.mxu0 0.0
    %1502 = vmatpush.msra.mxu0 0.0
    %1503 = vmatpush.msra.mxu0 0.0
    %1504 = vmatpush.msra.mxu0 0.0
    %1505 = vmatpush.msra.mxu0 0.0
    %1506 = vmatpush.msra.mxu0 %v1486
    %1507 = vmatmul.f32.gmra.mxu0 %v1489
    %v1508 = vpop.f32.mrf.mxu0
    %v1509 = vadd.f32 0.0, %v1508
    %1510 = vdwg.mxu0
    %1511 = vadd.xlane.f32.xlu0 %v1509
    %v1512 = vpop.xlane.xlu0 %1511
    %v1513 = vmul.f32 %v1512, %v179
    %v1514 = vsub.f32 %v1509, %v1513
    %v1515 = vmul.f32 %v1514, %v1514
    %1516 = vadd.xlane.f32.xlu0 %v1515
    %v1517 = vpop.xlane.xlu0 %1516
    %v1518 = vmul.f32 %v1517, %v179
    %v1519 = vadd.f32 %v1518, 1e-05
    %v1520 = vrsqrt.pop %v1519
    %v1521 = vmul.f32 %v1520, %v1519
    %v1522 = vmul.f32 %v1521, %v1520
    %v1523 = vmul.f32 0.5, %v1522
    %v1524 = vsub.f32 1.5, %v1523
    %v1525 = vmul.f32 %v1520, %v1524
    %vm1526 = vweird.f32 %v1519
    %vm1527 = vweird.f32 %v1520
    %vm1528 = vmor %vm1526, %vm1527
    %v1529 = vsel %vm1528, %v1520, %v1525
    %v1530 = vmul.f32 %v1514, %v1529
    %1531 = vrot.lane.b32.xlu0 %v267, 36
    %v1532 = vpop.permute.xlu0 %1531
    %v1533 = vld [vmem:[%s5] sm:$0x1]
    %v1535 = vperm.slane %v1533, 0
    %v1537 = vmul.f32 %v1532, %v1535
    %v1538 = vld [vmem:[%s17] sm:$0xff]
    %1540 = vset.pattern.permute.xlu0 0
    %1541 = vperm.xlu0 %1540, %v1538
    %v1542 = vpop.permute.xlu0 %1541
    %v1544 = vmul.f32 %v1537, %v1542
    %1545 = vrot.lane.b32.xlu0 %v267, 34
    %v1546 = vpop.permute.xlu0 %1545
    %s1547 = scalar_lea.vmem %s5, 1
    %v1548 = vld [vmem:[%s1547] sm:$0x1]
    %v1550 = vperm.slane %v1548, 0
    %v1552 = vmul.f32 %v1546, %v1550
    %s1553 = scalar_lea.vmem %s17, 8
    %v1554 = vld [vmem:[%s1553] sm:$0xff]
    %1556 = vset.pattern.permute.xlu0 0
    %1557 = vperm.xlu0 %1556, %v1554
    %v1558 = vpop.permute.xlu0 %1557
    %v1560 = vmul.f32 %v1552, %v1558
    %v1561 = vadd.f32 %v1544, %v1560
    %1562 = vrot.lane.b32.xlu0 %v267, 32
    %v1563 = vpop.permute.xlu0 %1562
    %s1564 = scalar_lea.vmem %s5, 2
    %v1565 = vld [vmem:[%s1564] sm:$0x1]
    %v1567 = vperm.slane %v1565, 0
    %v1569 = vmul.f32 %v1563, %v1567
    %s1570 = scalar_lea.vmem %s17, 16
    %v1571 = vld [vmem:[%s1570] sm:$0xff]
    %1573 = vset.pattern.permute.xlu0 0
    %1574 = vperm.xlu0 %1573, %v1571
    %v1575 = vpop.permute.xlu0 %1574
    %v1577 = vmul.f32 %v1569, %v1575
    %v1578 = vadd.f32 %v1561, %v1577
    %1579 = vrot.lane.b32.xlu0 %v267, 30
    %v1580 = vpop.permute.xlu0 %1579
    %s1581 = scalar_lea.vmem %s5, 3
    %v1582 = vld [vmem:[%s1581] sm:$0x1]
    %v1584 = vperm.slane %v1582, 0
    %v1586 = vmul.f32 %v1580, %v1584
    %s1587 = scalar_lea.vmem %s17, 24
    %v1588 = vld [vmem:[%s1587] sm:$0xff]
    %1590 = vset.pattern.permute.xlu0 0
    %1591 = vperm.xlu0 %1590, %v1588
    %v1592 = vpop.permute.xlu0 %1591
    %v1594 = vmul.f32 %v1586, %v1592
    %v1595 = vadd.f32 %v1578, %v1594
    %1596 = vrot.lane.b32.xlu0 %v267, 28
    %v1597 = vpop.permute.xlu0 %1596
    %s1598 = scalar_lea.vmem %s5, 4
    %v1599 = vld [vmem:[%s1598] sm:$0x1]
    %v1601 = vperm.slane %v1599, 0
    %v1603 = vmul.f32 %v1597, %v1601
    %s1604 = scalar_lea.vmem %s17, 32
    %v1605 = vld [vmem:[%s1604] sm:$0xff]
    %1607 = vset.pattern.permute.xlu0 0
    %1608 = vperm.xlu0 %1607, %v1605
    %v1609 = vpop.permute.xlu0 %1608
    %v1611 = vmul.f32 %v1603, %v1609
    %v1612 = vadd.f32 %v1595, %v1611
    %1613 = vrot.lane.b32.xlu0 %v267, 20
    %v1614 = vpop.permute.xlu0 %1613
    %s1615 = scalar_lea.vmem %s5, 5
    %v1616 = vld [vmem:[%s1615] sm:$0x1]
    %v1618 = vperm.slane %v1616, 0
    %v1620 = vmul.f32 %v1614, %v1618
    %s1621 = scalar_lea.vmem %s17, 40
    %v1622 = vld [vmem:[%s1621] sm:$0xff]
    %1624 = vset.pattern.permute.xlu0 0
    %1625 = vperm.xlu0 %1624, %v1622
    %v1626 = vpop.permute.xlu0 %1625
    %v1628 = vmul.f32 %v1620, %v1626
    %v1629 = vadd.f32 %v1612, %v1628
    %s1630 = scalar_lea.vmem %s5, 6
    %v1631 = vld [vmem:[%s1630] sm:$0x1]
    %v1633 = vperm.slane %v1631, 0
    %v1635 = vmul.f32 %v567, %v1633
    %s1636 = scalar_lea.vmem %s17, 48
    %v1637 = vld [vmem:[%s1636] sm:$0xff]
    %1639 = vset.pattern.permute.xlu0 0
    %1640 = vperm.xlu0 %1639, %v1637
    %v1641 = vpop.permute.xlu0 %1640
    %v1643 = vmul.f32 %v1635, %v1641
    %v1644 = vadd.f32 %v1629, %v1643
    %s1645 = scalar_lea.vmem %s5, 7
    %v1646 = vld [vmem:[%s1645] sm:$0x1]
    %v1648 = vperm.slane %v1646, 0
    %v1650 = vmul.f32 %v598, %v1648
    %s1651 = scalar_lea.vmem %s17, 56
    %v1652 = vld [vmem:[%s1651] sm:$0xff]
    %1654 = vset.pattern.permute.xlu0 0
    %1655 = vperm.xlu0 %1654, %v1652
    %v1656 = vpop.permute.xlu0 %1655
    %v1658 = vmul.f32 %v1650, %v1656
    %v1659 = vadd.f32 %v1644, %v1658
    %s1660 = scalar_lea.vmem %s5, 8
    %v1661 = vld [vmem:[%s1660] sm:$0x1]
    %v1663 = vperm.slane %v1661, 0
    %v1665 = vmul.f32 %v632, %v1663
    %s1666 = scalar_lea.vmem %s17, 64
    %v1667 = vld [vmem:[%s1666] sm:$0xff]
    %1669 = vset.pattern.permute.xlu0 0
    %1670 = vperm.xlu0 %1669, %v1667
    %v1671 = vpop.permute.xlu0 %1670
    %v1673 = vmul.f32 %v1665, %v1671
    %v1674 = vadd.f32 %v1659, %v1673
    %1675 = vrot.lane.b32.xlu0 %v267, 12
    %v1676 = vpop.permute.xlu0 %1675
    %s1677 = scalar_lea.vmem %s5, 9
    %v1678 = vld [vmem:[%s1677] sm:$0x1]
    %v1680 = vperm.slane %v1678, 0
    %v1682 = vmul.f32 %v1676, %v1680
    %s1683 = scalar_lea.vmem %s17, 72
    %v1684 = vld [vmem:[%s1683] sm:$0xff]
    %1686 = vset.pattern.permute.xlu0 0
    %1687 = vperm.xlu0 %1686, %v1684
    %v1688 = vpop.permute.xlu0 %1687
    %v1690 = vmul.f32 %v1682, %v1688
    %v1691 = vadd.f32 %v1674, %v1690
    %1692 = vrot.lane.b32.xlu0 %v267, 4
    %v1693 = vpop.permute.xlu0 %1692
    %s1694 = scalar_lea.vmem %s5, 10
    %v1695 = vld [vmem:[%s1694] sm:$0x1]
    %v1697 = vperm.slane %v1695, 0
    %v1699 = vmul.f32 %v1693, %v1697
    %s1700 = scalar_lea.vmem %s17, 80
    %v1701 = vld [vmem:[%s1700] sm:$0xff]
    %1703 = vset.pattern.permute.xlu0 0
    %1704 = vperm.xlu0 %1703, %v1701
    %v1705 = vpop.permute.xlu0 %1704
    %v1707 = vmul.f32 %v1699, %v1705
    %v1708 = vadd.f32 %v1691, %v1707
    %s1709 = scalar_lea.vmem %s5, 11
    %v1710 = vld [vmem:[%s1709] sm:$0x1]
    %v1712 = vperm.slane %v1710, 0
    %v1714 = vmul.f32 %v728, %v1712
    %s1715 = scalar_lea.vmem %s17, 88
    %v1716 = vld [vmem:[%s1715] sm:$0xff]
    %1718 = vset.pattern.permute.xlu0 0
    %1719 = vperm.xlu0 %1718, %v1716
    %v1720 = vpop.permute.xlu0 %1719
    %v1722 = vmul.f32 %v1714, %v1720
    %v1723 = vadd.f32 %v1708, %v1722
    %s1724 = scalar_lea.vmem %s5, 12
    %v1725 = vld [vmem:[%s1724] sm:$0x1]
    %v1727 = vperm.slane %v1725, 0
    %v1729 = vmul.f32 %v267, %v1727
    %s1730 = scalar_lea.vmem %s17, 96
    %v1731 = vld [vmem:[%s1730] sm:$0xff]
    %1733 = vset.pattern.permute.xlu0 0
    %1734 = vperm.xlu0 %1733, %v1731
    %v1735 = vpop.permute.xlu0 %1734
    %v1737 = vmul.f32 %v1729, %v1735
    %v1738 = vadd.f32 %v1723, %v1737
    %s1739 = scalar_lea.vmem %s5, 13
    %v1740 = vld [vmem:[%s1739] sm:$0x1]
    %v1742 = vperm.slane %v1740, 0
    %v1744 = vmul.f32 %v790, %v1742
    %s1745 = scalar_lea.vmem %s17, 104
    %v1746 = vld [vmem:[%s1745] sm:$0xff]
    %1748 = vset.pattern.permute.xlu0 0
    %1749 = vperm.xlu0 %1748, %v1746
    %v1750 = vpop.permute.xlu0 %1749
    %v1752 = vmul.f32 %v1744, %v1750
    %v1753 = vadd.f32 %v1738, %v1752
    %1754 = vrot.lane.b32.xlu0 %v267, 124
    %v1755 = vpop.permute.xlu0 %1754
    %s1756 = scalar_lea.vmem %s5, 14
    %v1757 = vld [vmem:[%s1756] sm:$0x1]
    %v1759 = vperm.slane %v1757, 0
    %v1761 = vmul.f32 %v1755, %v1759
    %s1762 = scalar_lea.vmem %s17, 112
    %v1763 = vld [vmem:[%s1762] sm:$0xff]
    %1765 = vset.pattern.permute.xlu0 0
    %1766 = vperm.xlu0 %1765, %v1763
    %v1767 = vpop.permute.xlu0 %1766
    %v1769 = vmul.f32 %v1761, %v1767
    %v1770 = vadd.f32 %v1753, %v1769
    %1771 = vrot.lane.b32.xlu0 %v267, 116
    %v1772 = vpop.permute.xlu0 %1771
    %s1773 = scalar_lea.vmem %s5, 15
    %v1774 = vld [vmem:[%s1773] sm:$0x1]
    %v1776 = vperm.slane %v1774, 0
    %v1778 = vmul.f32 %v1772, %v1776
    %s1779 = scalar_lea.vmem %s17, 120
    %v1780 = vld [vmem:[%s1779] sm:$0xff]
    %1782 = vset.pattern.permute.xlu0 0
    %1783 = vperm.xlu0 %1782, %v1780
    %v1784 = vpop.permute.xlu0 %1783
    %v1786 = vmul.f32 %v1778, %v1784
    %v1787 = vadd.f32 %v1770, %v1786
    %s1788 = scalar_lea.vmem %s5, 16
    %v1789 = vld [vmem:[%s1788] sm:$0x1]
    %v1791 = vperm.slane %v1789, 0
    %v1793 = vmul.f32 %v886, %v1791
    %s1794 = scalar_lea.vmem %s17, 128
    %v1795 = vld [vmem:[%s1794] sm:$0xff]
    %1797 = vset.pattern.permute.xlu0 0
    %1798 = vperm.xlu0 %1797, %v1795
    %v1799 = vpop.permute.xlu0 %1798
    %v1801 = vmul.f32 %v1793, %v1799
    %v1802 = vadd.f32 %v1787, %v1801
    %s1803 = scalar_lea.vmem %s5, 17
    %v1804 = vld [vmem:[%s1803] sm:$0x1]
    %v1806 = vperm.slane %v1804, 0
    %v1808 = vmul.f32 %v920, %v1806
    %s1809 = scalar_lea.vmem %s17, 136
    %v1810 = vld [vmem:[%s1809] sm:$0xff]
    %1812 = vset.pattern.permute.xlu0 0
    %1813 = vperm.xlu0 %1812, %v1810
    %v1814 = vpop.permute.xlu0 %1813
    %v1816 = vmul.f32 %v1808, %v1814
    %v1817 = vadd.f32 %v1802, %v1816
    %s1818 = scalar_lea.vmem %s5, 18
    %v1819 = vld [vmem:[%s1818] sm:$0x1]
    %v1821 = vperm.slane %v1819, 0
    %v1823 = vmul.f32 %v954, %v1821
    %s1824 = scalar_lea.vmem %s17, 144
    %v1825 = vld [vmem:[%s1824] sm:$0xff]
    %1827 = vset.pattern.permute.xlu0 0
    %1828 = vperm.xlu0 %1827, %v1825
    %v1829 = vpop.permute.xlu0 %1828
    %v1831 = vmul.f32 %v1823, %v1829
    %v1832 = vadd.f32 %v1817, %v1831
    %1833 = vrot.lane.b32.xlu0 %v267, 108
    %v1834 = vpop.permute.xlu0 %1833
    %s1835 = scalar_lea.vmem %s5, 19
    %v1836 = vld [vmem:[%s1835] sm:$0x1]
    %v1838 = vperm.slane %v1836, 0
    %v1840 = vmul.f32 %v1834, %v1838
    %s1841 = scalar_lea.vmem %s17, 152
    %v1842 = vld [vmem:[%s1841] sm:$0xff]
    %1844 = vset.pattern.permute.xlu0 0
    %1845 = vperm.xlu0 %1844, %v1842
    %v1846 = vpop.permute.xlu0 %1845
    %v1848 = vmul.f32 %v1840, %v1846
    %v1849 = vadd.f32 %v1832, %v1848
    %1850 = vrot.lane.b32.xlu0 %v267, 100
    %v1851 = vpop.permute.xlu0 %1850
    %s1852 = scalar_lea.vmem %s5, 20
    %v1853 = vld [vmem:[%s1852] sm:$0x1]
    %v1855 = vperm.slane %v1853, 0
    %v1857 = vmul.f32 %v1851, %v1855
    %s1858 = scalar_lea.vmem %s17, 160
    %v1859 = vld [vmem:[%s1858] sm:$0xff]
    %1861 = vset.pattern.permute.xlu0 0
    %1862 = vperm.xlu0 %1861, %v1859
    %v1863 = vpop.permute.xlu0 %1862
    %v1865 = vmul.f32 %v1857, %v1863
    %v1866 = vadd.f32 %v1849, %v1865
    %1867 = vrot.lane.b32.xlu0 %v267, 98
    %v1868 = vpop.permute.xlu0 %1867
    %s1869 = scalar_lea.vmem %s5, 21
    %v1870 = vld [vmem:[%s1869] sm:$0x1]
    %v1872 = vperm.slane %v1870, 0
    %v1874 = vmul.f32 %v1868, %v1872
    %s1875 = scalar_lea.vmem %s17, 168
    %v1876 = vld [vmem:[%s1875] sm:$0xff]
    %1878 = vset.pattern.permute.xlu0 0
    %1879 = vperm.xlu0 %1878, %v1876
    %v1880 = vpop.permute.xlu0 %1879
    %v1882 = vmul.f32 %v1874, %v1880
    %v1883 = vadd.f32 %v1866, %v1882
    %1884 = vrot.lane.b32.xlu0 %v267, 96
    %v1885 = vpop.permute.xlu0 %1884
    %s1886 = scalar_lea.vmem %s5, 22
    %v1887 = vld [vmem:[%s1886] sm:$0x1]
    %v1889 = vperm.slane %v1887, 0
    %v1891 = vmul.f32 %v1885, %v1889
    %s1892 = scalar_lea.vmem %s17, 176
    %v1893 = vld [vmem:[%s1892] sm:$0xff]
    %1895 = vset.pattern.permute.xlu0 0
    %1896 = vperm.xlu0 %1895, %v1893
    %v1897 = vpop.permute.xlu0 %1896
    %v1899 = vmul.f32 %v1891, %v1897
    %v1900 = vadd.f32 %v1883, %v1899
    %1901 = vrot.lane.b32.xlu0 %v267, 94
    %v1902 = vpop.permute.xlu0 %1901
    %s1903 = scalar_lea.vmem %s5, 23
    %v1904 = vld [vmem:[%s1903] sm:$0x1]
    %v1906 = vperm.slane %v1904, 0
    %v1908 = vmul.f32 %v1902, %v1906
    %s1909 = scalar_lea.vmem %s17, 184
    %v1910 = vld [vmem:[%s1909] sm:$0xff]
    %1912 = vset.pattern.permute.xlu0 0
    %1913 = vperm.xlu0 %1912, %v1910
    %v1914 = vpop.permute.xlu0 %1913
    %v1916 = vmul.f32 %v1908, %v1914
    %v1917 = vadd.f32 %v1900, %v1916
    %1918 = vrot.lane.b32.xlu0 %v267, 92
    %v1919 = vpop.permute.xlu0 %1918
    %s1920 = scalar_lea.vmem %s5, 24
    %v1921 = vld [vmem:[%s1920] sm:$0x1]
    %v1923 = vperm.slane %v1921, 0
    %v1925 = vmul.f32 %v1919, %v1923
    %s1926 = scalar_lea.vmem %s17, 192
    %v1927 = vld [vmem:[%s1926] sm:$0xff]
    %1929 = vset.pattern.permute.xlu0 0
    %1930 = vperm.xlu0 %1929, %v1927
    %v1931 = vpop.permute.xlu0 %1930
    %v1933 = vmul.f32 %v1925, %v1931
    %v1934 = vadd.f32 %v1917, %v1933
    %v1935 = vld [vmem:[%s18] sm:$0xff]
    %v1937 = vsel %vm373, %v1935, 0
    %1939 = vmatpush.msra.mxu0 0.0
    %1940 = vmatpush.msra.mxu0 0.0
    %1941 = vmatpush.msra.mxu0 0.0
    %1942 = vmatpush.msra.mxu0 0.0
    %1943 = vmatpush.msra.mxu0 0.0
    %1944 = vmatpush.msra.mxu0 0.0
    %1945 = vmatpush.msra.mxu0 0.0
    %1946 = vmatpush.msra.mxu0 0.0
    %1947 = vmatpush.msra.mxu0 0.0
    %1948 = vmatpush.msra.mxu0 0.0
    %1949 = vmatpush.msra.mxu0 0.0
    %1950 = vmatpush.msra.mxu0 0.0
    %1951 = vmatpush.msra.mxu0 0.0
    %1952 = vmatpush.msra.mxu0 0.0
    %1953 = vmatpush.msra.mxu0 0.0
    %1954 = vmatpush.msra.mxu0 %v1934
    %1955 = vmatmul.f32.gmra.mxu0 %v1937
    %v1956 = vpop.f32.mrf.mxu0
    %v1957 = vadd.f32 0.0, %v1956
    %1958 = vdwg.mxu0
    %1959 = vadd.xlane.f32.xlu0 %v1957
    %v1960 = vpop.xlane.xlu0 %1959
    %v1961 = vmul.f32 %v1960, %v179
    %v1962 = vsub.f32 %v1957, %v1961
    %v1963 = vmul.f32 %v1962, %v1962
    %1964 = vadd.xlane.f32.xlu0 %v1963
    %v1965 = vpop.xlane.xlu0 %1964
    %v1966 = vmul.f32 %v1965, %v179
    %v1967 = vadd.f32 %v1966, 1e-05
    %v1968 = vrsqrt.pop %v1967
    %v1969 = vmul.f32 %v1968, %v1967
    %v1970 = vmul.f32 %v1969, %v1968
    %v1971 = vmul.f32 0.5, %v1970
    %v1972 = vsub.f32 1.5, %v1971
    %v1973 = vmul.f32 %v1968, %v1972
    %vm1974 = vweird.f32 %v1967
    %vm1975 = vweird.f32 %v1968
    %vm1976 = vmor %vm1974, %vm1975
    %v1977 = vsel %vm1976, %v1968, %v1973
    %v1978 = vmul.f32 %v1962, %v1977
    %s1979 = sld [smem:[#allocation2 + $0x1]]
    %v1980 = vstv %s1979
    %v1981 = vmul.f32 %v1980, %v197
    %s1982 = sld [smem:[#allocation2 + $0x2]]
    %v1983 = vstv %s1982
    %v1984 = vmul.f32 %v1983, %v266
    %v1985 = vadd.f32 %v1981, %v1984
    %s1986 = sld [smem:[#allocation2 + $0x4]]
    %v1987 = vstv %s1986
    %v1988 = vmul.f32 %v1987, %v565
    %v1989 = vadd.f32 %v1985, %v1988
    %s1990 = sld [smem:[#allocation2 + $0x5]]
    %v1991 = vstv %s1990
    %v1992 = vmul.f32 %v1991, %v1354
    %v1993 = vadd.f32 %v1989, %v1992
    %s1994 = sld [smem:[#allocation2 + $0x6]]
    %v1995 = vstv %s1994
    %v1996 = vmul.f32 %v1995, %v1530
    %v1997 = vadd.f32 %v1993, %v1996
    %s1998 = sld [smem:[#allocation2 + $0x7]]
    %v1999 = vstv %s1998
    %v2000 = vmul.f32 %v1999, %v1978
    %v2001 = vadd.f32 %v1997, %v2000
    %s2002 = sld [smem:[#allocation2 + $0x3]]
    %v2003 = vstv %s2002
    %v2004 = vmul.f32 %v2003, %v75
    %v2005 = vadd.f32 %v2001, %v2004
    %2006 = vst [vmem:[%s19] sm:$0xff] %v2005
    // Predicated region
    $region82: #{cell_forward.11} parent=1 // pred_check
      _
    $region83: #{cell_forward.11} parent=1 // pred_check_branch
      %2008 = sbr.rel (0) target = $region85
    $region84: #{cell_forward.11} parent=1 // pred_region
      _
    $region85: #{cell_forward.11} parent=1 // pred_fallthru
      _
    // Predicated region
    $region86: #{cell_forward.11} parent=1 // pred_check
      _
    $region87: #{cell_forward.11} parent=1 // pred_check_branch
      %2010 = sbr.rel (0) target = $region89
    $region88: #{cell_forward.11} parent=1 // pred_region
      _
    $region89: #{cell_forward.11} parent=1 // pred_fallthru
      _
    %2011 = vsyncpa [#allocation3], 1

// kernel: cell_forward.16
$region0: #{cell_forward.16}
  #allocation0 [shape = 'u32[]', space=smem, size = 0x4, offset = 0x4, fixed_abs, tag = 'smem constant byte address 0x4 - core index']
  #allocation1 [shape = 'u32[72,128]{1,0:T(1,128)}', space=vmem, size = 0x9000, scoped, tag = 'internal scratch']
  %s0 = inlined_call_operand.vmem [shape: f32[8], index: 0, kind: input, shape index: {}]
  %s1 = inlined_call_operand.vmem [shape: f32[8,128], index: 1, kind: input, shape index: {}]
  %s2 = inlined_call_operand.vmem [shape: f32[9,1,128], index: 2, kind: input, shape index: {}]
  %s3 = inlined_call_operand.vmem [shape: f32[25,1,128], index: 3, kind: input, shape index: {}]
  %s4 = inlined_call_operand.vmem [shape: f32[9,1,128], index: 4, kind: input, shape index: {}]
  %s5 = inlined_call_operand.vmem [shape: f32[25,1,128], index: 5, kind: input, shape index: {}]
  %s6 = inlined_call_operand.vmem [shape: f32[1,128], index: 6, kind: input, shape index: {}]
  %s7 = inlined_call_operand.vmem [shape: f32[9,8,1], index: 7, kind: input, shape index: {}]
  %s8 = inlined_call_operand.vmem [shape: f32[8,8], index: 8, kind: input, shape index: {}]
  %s9 = inlined_call_operand.vmem [shape: f32[9,8,1], index: 9, kind: input, shape index: {}]
  %s10 = inlined_call_operand.vmem [shape: f32[8,8], index: 10, kind: input, shape index: {}]
  %s11 = inlined_call_operand.vmem [shape: f32[25,8,1], index: 11, kind: input, shape index: {}]
  %s12 = inlined_call_operand.vmem [shape: f32[8,8], index: 12, kind: input, shape index: {}]
  %s13 = inlined_call_operand.vmem [shape: f32[25,8,1], index: 13, kind: input, shape index: {}]
  %s14 = inlined_call_operand.vmem [shape: f32[8,8], index: 14, kind: input, shape index: {}]
  %s15 = inlined_call_operand.vmem [shape: f32[9,8,1], index: 15, kind: input, shape index: {}]
  %s16 = inlined_call_operand.vmem [shape: f32[8,8], index: 16, kind: input, shape index: {}]
  %s17 = inlined_call_operand.vmem [shape: f32[25,8,1], index: 17, kind: input, shape index: {}]
  %s18 = inlined_call_operand.vmem [shape: f32[8,8], index: 18, kind: input, shape index: {}]
  %s19 = inlined_call_operand.vmem [shape: f32[8,128], index: 19, kind: output, shape index: {}]
  %s20 = sld [smem:[#allocation0]]
  $region90: #{cell_forward.16} parent=0
    _
  %s22 = ssub.s32 1, %s20
  %s23 = scalar_select 0, %s22, %s20
  $region1: #{cell_forward.16} parent=0
    #allocation2 [shape = 'u8[512]{0}', space=smem, size = 0x200, scoped, tag = 'input window, operand 0, single buffered']
    #allocation3 [shape = 's32[1]{0}', space=sflag, size = 0x4, scoped, tag = 'scoped memory for cell_forward.16']
    %24 = vsyncpa [#allocation3], 0
    // Predicated region
    $region2: #{cell_forward.16} parent=1 // pred_check
      _
    $region3: #{cell_forward.16} parent=1 // pred_check_branch
      %26 = sbr.rel (0) target = $region5
    $region4: #{cell_forward.16} parent=1 // pred_region
      %28 = vsyncadd [#allocation3], 0
      %s30 = sshll.u32 %s0, 4
      %s31 = int_to_ptr.vmem [resolvable:$true] %s30
      %33 = dma.vmem_to_smem %s31, 16, [#allocation2], [#allocation3]
    $region5: #{cell_forward.16} parent=1 // pred_fallthru
      _
    // Predicated region
    $region6: #{cell_forward.16} parent=1 // pred_check
      _
    $region7: #{cell_forward.16} parent=1 // pred_check_branch
      %35 = sbr.rel (0) target = $region9
    $region8: #{cell_forward.16} parent=1 // pred_region
      _
    $region9: #{cell_forward.16} parent=1 // pred_fallthru
      _
    // Predicated region
    $region10: #{cell_forward.16} parent=1 // pred_check
      _
    $region11: #{cell_forward.16} parent=1 // pred_check_branch
      %37 = sbr.rel (0) target = $region13
    $region12: #{cell_forward.16} parent=1 // pred_region
      _
    $region13: #{cell_forward.16} parent=1 // pred_fallthru
      _
    // Predicated region
    $region14: #{cell_forward.16} parent=1 // pred_check
      _
    $region15: #{cell_forward.16} parent=1 // pred_check_branch
      %39 = sbr.rel (0) target = $region17
    $region16: #{cell_forward.16} parent=1 // pred_region
      _
    $region17: #{cell_forward.16} parent=1 // pred_fallthru
      _
    // Predicated region
    $region18: #{cell_forward.16} parent=1 // pred_check
      _
    $region19: #{cell_forward.16} parent=1 // pred_check_branch
      %41 = sbr.rel (0) target = $region21
    $region20: #{cell_forward.16} parent=1 // pred_region
      _
    $region21: #{cell_forward.16} parent=1 // pred_fallthru
      _
    // Predicated region
    $region22: #{cell_forward.16} parent=1 // pred_check
      _
    $region23: #{cell_forward.16} parent=1 // pred_check_branch
      %43 = sbr.rel (0) target = $region25
    $region24: #{cell_forward.16} parent=1 // pred_region
      _
    $region25: #{cell_forward.16} parent=1 // pred_fallthru
      _
    // Predicated region
    $region26: #{cell_forward.16} parent=1 // pred_check
      _
    $region27: #{cell_forward.16} parent=1 // pred_check_branch
      %45 = sbr.rel (0) target = $region29
    $region28: #{cell_forward.16} parent=1 // pred_region
      _
    $region29: #{cell_forward.16} parent=1 // pred_fallthru
      _
    // Predicated region
    $region30: #{cell_forward.16} parent=1 // pred_check
      _
    $region31: #{cell_forward.16} parent=1 // pred_check_branch
      %47 = sbr.rel (0) target = $region33
    $region32: #{cell_forward.16} parent=1 // pred_region
      _
    $region33: #{cell_forward.16} parent=1 // pred_fallthru
      _
    // Predicated region
    $region34: #{cell_forward.16} parent=1 // pred_check
      _
    $region35: #{cell_forward.16} parent=1 // pred_check_branch
      %49 = sbr.rel (0) target = $region37
    $region36: #{cell_forward.16} parent=1 // pred_region
      _
    $region37: #{cell_forward.16} parent=1 // pred_fallthru
      _
    // Predicated region
    $region38: #{cell_forward.16} parent=1 // pred_check
      _
    $region39: #{cell_forward.16} parent=1 // pred_check_branch
      %51 = sbr.rel (0) target = $region41
    $region40: #{cell_forward.16} parent=1 // pred_region
      _
    $region41: #{cell_forward.16} parent=1 // pred_fallthru
      _
    // Predicated region
    $region42: #{cell_forward.16} parent=1 // pred_check
      _
    $region43: #{cell_forward.16} parent=1 // pred_check_branch
      %53 = sbr.rel (0) target = $region45
    $region44: #{cell_forward.16} parent=1 // pred_region
      _
    $region45: #{cell_forward.16} parent=1 // pred_fallthru
      _
    // Predicated region
    $region46: #{cell_forward.16} parent=1 // pred_check
      _
    $region47: #{cell_forward.16} parent=1 // pred_check_branch
      %55 = sbr.rel (0) target = $region49
    $region48: #{cell_forward.16} parent=1 // pred_region
      _
    $region49: #{cell_forward.16} parent=1 // pred_fallthru
      _
    // Predicated region
    $region50: #{cell_forward.16} parent=1 // pred_check
      _
    $region51: #{cell_forward.16} parent=1 // pred_check_branch
      %57 = sbr.rel (0) target = $region53
    $region52: #{cell_forward.16} parent=1 // pred_region
      _
    $region53: #{cell_forward.16} parent=1 // pred_fallthru
      _
    // Predicated region
    $region54: #{cell_forward.16} parent=1 // pred_check
      _
    $region55: #{cell_forward.16} parent=1 // pred_check_branch
      %59 = sbr.rel (0) target = $region57
    $region56: #{cell_forward.16} parent=1 // pred_region
      _
    $region57: #{cell_forward.16} parent=1 // pred_fallthru
      _
    // Predicated region
    $region58: #{cell_forward.16} parent=1 // pred_check
      _
    $region59: #{cell_forward.16} parent=1 // pred_check_branch
      %61 = sbr.rel (0) target = $region61
    $region60: #{cell_forward.16} parent=1 // pred_region
      _
    $region61: #{cell_forward.16} parent=1 // pred_fallthru
      _
    // Predicated region
    $region62: #{cell_forward.16} parent=1 // pred_check
      _
    $region63: #{cell_forward.16} parent=1 // pred_check_branch
      %63 = sbr.rel (0) target = $region65
    $region64: #{cell_forward.16} parent=1 // pred_region
      _
    $region65: #{cell_forward.16} parent=1 // pred_fallthru
      _
    // Predicated region
    $region66: #{cell_forward.16} parent=1 // pred_check
      _
    $region67: #{cell_forward.16} parent=1 // pred_check_branch
      %65 = sbr.rel (0) target = $region69
    $region68: #{cell_forward.16} parent=1 // pred_region
      _
    $region69: #{cell_forward.16} parent=1 // pred_fallthru
      _
    // Predicated region
    $region70: #{cell_forward.16} parent=1 // pred_check
      _
    $region71: #{cell_forward.16} parent=1 // pred_check_branch
      %67 = sbr.rel (0) target = $region73
    $region72: #{cell_forward.16} parent=1 // pred_region
      _
    $region73: #{cell_forward.16} parent=1 // pred_fallthru
      _
    // Predicated region
    $region74: #{cell_forward.16} parent=1 // pred_check
      _
    $region75: #{cell_forward.16} parent=1 // pred_check_branch
      %69 = sbr.rel (0) target = $region77
    $region76: #{cell_forward.16} parent=1 // pred_region
      _
    $region77: #{cell_forward.16} parent=1 // pred_fallthru
      _
    // Predicated region
    $region78: #{cell_forward.16} parent=1 // pred_check
      _
    $region79: #{cell_forward.16} parent=1 // pred_check_branch
      %71 = sbr.rel (0) target = $region81
    $region80: #{cell_forward.16} parent=1 // pred_region
      %73 = dma.done [#allocation3], 16
    $region81: #{cell_forward.16} parent=1 // pred_fallthru
      _
    %74 = sfence
    %v75 = vld [vmem:[%s1] sm:$0xff]
    %76 = vrot.lane.b32.xlu0 %v75, 9
    %v77 = vpop.permute.xlu0 %76
    %v78 = vld [vmem:[%s2] sm:$0x1]
    %v79 = vsub.f32 %v78, 1.0
    %v80 = vmul.f32 %v79, 1e+30
    %v82 = vperm.slane %v80, 0
    %v84 = vadd.f32 %v77, %v82
    %85 = vrot.lane.b32.xlu0 %v75, 8
    %v86 = vpop.permute.xlu0 %85
    %s87 = scalar_lea.vmem %s2, 1
    %v88 = vld [vmem:[%s87] sm:$0x1]
    %v89 = vsub.f32 %v88, 1.0
    %v90 = vmul.f32 %v89, 1e+30
    %v92 = vperm.slane %v90, 0
    %v94 = vadd.f32 %v86, %v92
    %v95 = vmax.f32 %v84, %v94
    %96 = vrot.lane.b32.xlu0 %v75, 7
    %v97 = vpop.permute.xlu0 %96
    %s98 = scalar_lea.vmem %s2, 2
    %v99 = vld [vmem:[%s98] sm:$0x1]
    %v100 = vsub.f32 %v99, 1.0
    %v101 = vmul.f32 %v100, 1e+30
    %v103 = vperm.slane %v101, 0
    %v105 = vadd.f32 %v97, %v103
    %v106 = vmax.f32 %v95, %v105
    %107 = vrot.lane.b32.xlu0 %v75, 1
    %v108 = vpop.permute.xlu0 %107
    %s109 = scalar_lea.vmem %s2, 3
    %v110 = vld [vmem:[%s109] sm:$0x1]
    %v111 = vsub.f32 %v110, 1.0
    %v112 = vmul.f32 %v111, 1e+30
    %v114 = vperm.slane %v112, 0
    %v116 = vadd.f32 %v108, %v114
    %v117 = vmax.f32 %v106, %v116
    %s118 = scalar_lea.vmem %s2, 4
    %v119 = vld [vmem:[%s118] sm:$0x1]
    %v120 = vsub.f32 %v119, 1.0
    %v121 = vmul.f32 %v120, 1e+30
    %v123 = vperm.slane %v121, 0
    %v125 = vadd.f32 %v75, %v123
    %v126 = vmax.f32 %v117, %v125
    %127 = vrot.lane.b32.xlu0 %v75, 127
    %v128 = vpop.permute.xlu0 %127
    %s129 = scalar_lea.vmem %s2, 5
    %v130 = vld [vmem:[%s129] sm:$0x1]
    %v131 = vsub.f32 %v130, 1.0
    %v132 = vmul.f32 %v131, 1e+30
    %v134 = vperm.slane %v132, 0
    %v136 = vadd.f32 %v128, %v134
    %v137 = vmax.f32 %v126, %v136
    %138 = vrot.lane.b32.xlu0 %v75, 121
    %v139 = vpop.permute.xlu0 %138
    %s140 = scalar_lea.vmem %s2, 6
    %v141 = vld [vmem:[%s140] sm:$0x1]
    %v142 = vsub.f32 %v141, 1.0
    %v143 = vmul.f32 %v142, 1e+30
    %v145 = vperm.slane %v143, 0
    %v147 = vadd.f32 %v139, %v145
    %v148 = vmax.f32 %v137, %v147
    %149 = vrot.lane.b32.xlu0 %v75, 120
    %v150 = vpop.permute.xlu0 %149
    %s151 = scalar_lea.vmem %s2, 7
    %v152 = vld [vmem:[%s151] sm:$0x1]
    %v153 = vsub.f32 %v152, 1.0
    %v154 = vmul.f32 %v153, 1e+30
    %v156 = vperm.slane %v154, 0
    %v158 = vadd.f32 %v150, %v156
    %v159 = vmax.f32 %v148, %v158
    %160 = vrot.lane.b32.xlu0 %v75, 119
    %v161 = vpop.permute.xlu0 %160
    %s162 = scalar_lea.vmem %s2, 8
    %v163 = vld [vmem:[%s162] sm:$0x1]
    %v164 = vsub.f32 %v163, 1.0
    %v165 = vmul.f32 %v164, 1e+30
    %v167 = vperm.slane %v165, 0
    %v169 = vadd.f32 %v161, %v167
    %v170 = vmax.f32 %v159, %v169
    %171 = vadd.xlane.f32.xlu0 %v170
    %v172 = vpop.xlane.xlu0 %171
    %v173 = vrcp.pop 128.0
    %v174 = vmul.f32 128.0, %v173
    %v175 = vsub.f32 1.0, %v174
    %v176 = vmul.f32 %v173, %v175
    %v177 = vadd.f32 %v173, %v176
    %vm178 = vweird.f32 %v173
    %v179 = vsel %vm178, %v173, %v177
    %v180 = vmul.f32 %v172, %v179
    %v181 = vsub.f32 %v170, %v180
    %v182 = vmul.f32 %v181, %v181
    %183 = vadd.xlane.f32.xlu0 %v182
    %v184 = vpop.xlane.xlu0 %183
    %v185 = vmul.f32 %v184, %v179
    %v186 = vadd.f32 %v185, 1e-05
    %v187 = vrsqrt.pop %v186
    %v188 = vmul.f32 %v187, %v186
    %v189 = vmul.f32 %v188, %v187
    %v190 = vmul.f32 0.5, %v189
    %v191 = vsub.f32 1.5, %v190
    %v192 = vmul.f32 %v187, %v191
    %vm193 = vweird.f32 %v186
    %vm194 = vweird.f32 %v187
    %vm195 = vmor %vm193, %vm194
    %v196 = vsel %vm195, %v187, %v192
    %v197 = vmul.f32 %v181, %v196
    %v199 = vperm.slane %v78, 0
    %v201 = vmul.f32 %v77, %v199
    %v203 = vperm.slane %v88, 0
    %v205 = vmul.f32 %v86, %v203
    %v206 = vadd.f32 %v201, %v205
    %v208 = vperm.slane %v99, 0
    %v210 = vmul.f32 %v97, %v208
    %v211 = vadd.f32 %v206, %v210
    %v213 = vperm.slane %v110, 0
    %v215 = vmul.f32 %v108, %v213
    %v216 = vadd.f32 %v211, %v215
    %v218 = vperm.slane %v119, 0
    %v220 = vmul.f32 %v75, %v218
    %v221 = vadd.f32 %v216, %v220
    %v223 = vperm.slane %v130, 0
    %v225 = vmul.f32 %v128, %v223
    %v226 = vadd.f32 %v221, %v225
    %v228 = vperm.slane %v141, 0
    %v230 = vmul.f32 %v139, %v228
    %v231 = vadd.f32 %v226, %v230
    %v233 = vperm.slane %v152, 0
    %v235 = vmul.f32 %v150, %v233
    %v236 = vadd.f32 %v231, %v235
    %v238 = vperm.slane %v163, 0
    %v240 = vmul.f32 %v161, %v238
    %v241 = vadd.f32 %v236, %v240
    %v242 = vld [vmem:[%s6] sm:$0x1]
    %v244 = vperm.slane %v242, 0
    %v246 = vmul.f32 %v241, %v244
    %247 = vadd.xlane.f32.xlu0 %v246
    %v248 = vpop.xlane.xlu0 %247
    %v249 = vmul.f32 %v248, %v179
    %v250 = vsub.f32 %v246, %v249
    %v251 = vmul.f32 %v250, %v250
    %252 = vadd.xlane.f32.xlu0 %v251
    %v253 = vpop.xlane.xlu0 %252
    %v254 = vmul.f32 %v253, %v179
    %v255 = vadd.f32 %v254, 1e-05
    %v256 = vrsqrt.pop %v255
    %v257 = vmul.f32 %v256, %v255
    %v258 = vmul.f32 %v257, %v256
    %v259 = vmul.f32 0.5, %v258
    %v260 = vsub.f32 1.5, %v259
    %v261 = vmul.f32 %v256, %v260
    %vm262 = vweird.f32 %v255
    %vm263 = vweird.f32 %v256
    %vm264 = vmor %vm262, %vm263
    %v265 = vsel %vm264, %v256, %v261
    %v266 = vmul.f32 %v250, %v265
    %v267 = vmax.f32 %v75, 0.0
    %268 = vrot.lane.b32.xlu0 %v267, 9
    %v269 = vpop.permute.xlu0 %268
    %v270 = vmul.f32 %v269, %v199
    %v271 = vld [vmem:[%s7] sm:$0xff]
    %273 = vset.pattern.permute.xlu0 0
    %274 = vperm.xlu0 %273, %v271
    %v275 = vpop.permute.xlu0 %274
    %v277 = vmul.f32 %v270, %v275
    %278 = vrot.lane.b32.xlu0 %v267, 8
    %v279 = vpop.permute.xlu0 %278
    %v280 = vmul.f32 %v279, %v203
    %s281 = scalar_lea.vmem %s7, 8
    %v282 = vld [vmem:[%s281] sm:$0xff]
    %284 = vset.pattern.permute.xlu0 0
    %285 = vperm.xlu0 %284, %v282
    %v286 = vpop.permute.xlu0 %285
    %v288 = vmul.f32 %v280, %v286
    %v289 = vadd.f32 %v277, %v288
    %290 = vrot.lane.b32.xlu0 %v267, 7
    %v291 = vpop.permute.xlu0 %290
    %v292 = vmul.f32 %v291, %v208
    %s293 = scalar_lea.vmem %s7, 16
    %v294 = vld [vmem:[%s293] sm:$0xff]
    %296 = vset.pattern.permute.xlu0 0
    %297 = vperm.xlu0 %296, %v294
    %v298 = vpop.permute.xlu0 %297
    %v300 = vmul.f32 %v292, %v298
    %v301 = vadd.f32 %v289, %v300
    %302 = vrot.lane.b32.xlu0 %v267, 1
    %v303 = vpop.permute.xlu0 %302
    %v304 = vmul.f32 %v303, %v213
    %s305 = scalar_lea.vmem %s7, 24
    %v306 = vld [vmem:[%s305] sm:$0xff]
    %308 = vset.pattern.permute.xlu0 0
    %309 = vperm.xlu0 %308, %v306
    %v310 = vpop.permute.xlu0 %309
    %v312 = vmul.f32 %v304, %v310
    %v313 = vadd.f32 %v301, %v312
    %v314 = vmul.f32 %v267, %v218
    %s315 = scalar_lea.vmem %s7, 32
    %v316 = vld [vmem:[%s315] sm:$0xff]
    %318 = vset.pattern.permute.xlu0 0
    %319 = vperm.xlu0 %318, %v316
    %v320 = vpop.permute.xlu0 %319
    %v322 = vmul.f32 %v314, %v320
    %v323 = vadd.f32 %v313, %v322
    %324 = vrot.lane.b32.xlu0 %v267, 127
    %v325 = vpop.permute.xlu0 %324
    %v326 = vmul.f32 %v325, %v223
    %s327 = scalar_lea.vmem %s7, 40
    %v328 = vld [vmem:[%s327] sm:$0xff]
    %330 = vset.pattern.permute.xlu0 0
    %331 = vperm.xlu0 %330, %v328
    %v332 = vpop.permute.xlu0 %331
    %v334 = vmul.f32 %v326, %v332
    %v335 = vadd.f32 %v323, %v334
    %336 = vrot.lane.b32.xlu0 %v267, 121
    %v337 = vpop.permute.xlu0 %336
    %v338 = vmul.f32 %v337, %v228
    %s339 = scalar_lea.vmem %s7, 48
    %v340 = vld [vmem:[%s339] sm:$0xff]
    %342 = vset.pattern.permute.xlu0 0
    %343 = vperm.xlu0 %342, %v340
    %v344 = vpop.permute.xlu0 %343
    %v346 = vmul.f32 %v338, %v344
    %v347 = vadd.f32 %v335, %v346
    %348 = vrot.lane.b32.xlu0 %v267, 120
    %v349 = vpop.permute.xlu0 %348
    %v350 = vmul.f32 %v349, %v233
    %s351 = scalar_lea.vmem %s7, 56
    %v352 = vld [vmem:[%s351] sm:$0xff]
    %354 = vset.pattern.permute.xlu0 0
    %355 = vperm.xlu0 %354, %v352
    %v356 = vpop.permute.xlu0 %355
    %v358 = vmul.f32 %v350, %v356
    %v359 = vadd.f32 %v347, %v358
    %360 = vrot.lane.b32.xlu0 %v267, 119
    %v361 = vpop.permute.xlu0 %360
    %v362 = vmul.f32 %v361, %v238
    %s363 = scalar_lea.vmem %s7, 64
    %v364 = vld [vmem:[%s363] sm:$0xff]
    %366 = vset.pattern.permute.xlu0 0
    %367 = vperm.xlu0 %366, %v364
    %v368 = vpop.permute.xlu0 %367
    %v370 = vmul.f32 %v362, %v368
    %v371 = vadd.f32 %v359, %v370
    %v372 = vld [vmem:[%s8] sm:$0xff]
    %vm373 = vcmask 64512
    %v375 = vsel %vm373, %v372, 0
    %377 = vmatpush.msra.mxu0 0.0
    %378 = vmatpush.msra.mxu0 0.0
    %379 = vmatpush.msra.mxu0 0.0
    %380 = vmatpush.msra.mxu0 0.0
    %381 = vmatpush.msra.mxu0 0.0
    %382 = vmatpush.msra.mxu0 0.0
    %383 = vmatpush.msra.mxu0 0.0
    %384 = vmatpush.msra.mxu0 0.0
    %385 = vmatpush.msra.mxu0 0.0
    %386 = vmatpush.msra.mxu0 0.0
    %387 = vmatpush.msra.mxu0 0.0
    %388 = vmatpush.msra.mxu0 0.0
    %389 = vmatpush.msra.mxu0 0.0
    %390 = vmatpush.msra.mxu0 0.0
    %391 = vmatpush.msra.mxu0 0.0
    %392 = vmatpush.msra.mxu0 %v371
    %393 = vmatmul.f32.gmra.mxu0 %v375
    %v394 = vpop.f32.mrf.mxu0
    %v395 = vadd.f32 0.0, %v394
    %396 = vdwg.mxu0
    %397 = vadd.xlane.f32.xlu0 %v395
    %v398 = vpop.xlane.xlu0 %397
    %v399 = vmul.f32 %v398, %v179
    %v400 = vsub.f32 %v395, %v399
    %v401 = vmul.f32 %v400, %v400
    %402 = vadd.xlane.f32.xlu0 %v401
    %v403 = vpop.xlane.xlu0 %402
    %v404 = vmul.f32 %v403, %v179
    %v405 = vadd.f32 %v404, 1e-05
    %v406 = vrsqrt.pop %v405
    %v407 = vmul.f32 %v406, %v405
    %v408 = vmul.f32 %v407, %v406
    %v409 = vmul.f32 0.5, %v408
    %v410 = vsub.f32 1.5, %v409
    %v411 = vmul.f32 %v406, %v410
    %vm412 = vweird.f32 %v405
    %vm413 = vweird.f32 %v406
    %vm414 = vmor %vm412, %vm413
    %v415 = vsel %vm414, %v406, %v411
    %v416 = vmul.f32 %v400, %v415
    %v417 = vmax.f32 %v416, 0.0
    %418 = vrot.lane.b32.xlu0 %v417, 9
    %v419 = vpop.permute.xlu0 %418
    %v420 = vmul.f32 %v419, %v199
    %v421 = vld [vmem:[%s9] sm:$0xff]
    %423 = vset.pattern.permute.xlu0 0
    %424 = vperm.xlu0 %423, %v421
    %v425 = vpop.permute.xlu0 %424
    %v427 = vmul.f32 %v420, %v425
    %428 = vrot.lane.b32.xlu0 %v417, 8
    %v429 = vpop.permute.xlu0 %428
    %v430 = vmul.f32 %v429, %v203
    %s431 = scalar_lea.vmem %s9, 8
    %v432 = vld [vmem:[%s431] sm:$0xff]
    %434 = vset.pattern.permute.xlu0 0
    %435 = vperm.xlu0 %434, %v432
    %v436 = vpop.permute.xlu0 %435
    %v438 = vmul.f32 %v430, %v436
    %v439 = vadd.f32 %v427, %v438
    %440 = vrot.lane.b32.xlu0 %v417, 7
    %v441 = vpop.permute.xlu0 %440
    %v442 = vmul.f32 %v441, %v208
    %s443 = scalar_lea.vmem %s9, 16
    %v444 = vld [vmem:[%s443] sm:$0xff]
    %446 = vset.pattern.permute.xlu0 0
    %447 = vperm.xlu0 %446, %v444
    %v448 = vpop.permute.xlu0 %447
    %v450 = vmul.f32 %v442, %v448
    %v451 = vadd.f32 %v439, %v450
    %452 = vrot.lane.b32.xlu0 %v417, 1
    %v453 = vpop.permute.xlu0 %452
    %v454 = vmul.f32 %v453, %v213
    %s455 = scalar_lea.vmem %s9, 24
    %v456 = vld [vmem:[%s455] sm:$0xff]
    %458 = vset.pattern.permute.xlu0 0
    %459 = vperm.xlu0 %458, %v456
    %v460 = vpop.permute.xlu0 %459
    %v462 = vmul.f32 %v454, %v460
    %v463 = vadd.f32 %v451, %v462
    %v464 = vmul.f32 %v417, %v218
    %s465 = scalar_lea.vmem %s9, 32
    %v466 = vld [vmem:[%s465] sm:$0xff]
    %468 = vset.pattern.permute.xlu0 0
    %469 = vperm.xlu0 %468, %v466
    %v470 = vpop.permute.xlu0 %469
    %v472 = vmul.f32 %v464, %v470
    %v473 = vadd.f32 %v463, %v472
    %474 = vrot.lane.b32.xlu0 %v417, 127
    %v475 = vpop.permute.xlu0 %474
    %v476 = vmul.f32 %v475, %v223
    %s477 = scalar_lea.vmem %s9, 40
    %v478 = vld [vmem:[%s477] sm:$0xff]
    %480 = vset.pattern.permute.xlu0 0
    %481 = vperm.xlu0 %480, %v478
    %v482 = vpop.permute.xlu0 %481
    %v484 = vmul.f32 %v476, %v482
    %v485 = vadd.f32 %v473, %v484
    %486 = vrot.lane.b32.xlu0 %v417, 121
    %v487 = vpop.permute.xlu0 %486
    %v488 = vmul.f32 %v487, %v228
    %s489 = scalar_lea.vmem %s9, 48
    %v490 = vld [vmem:[%s489] sm:$0xff]
    %492 = vset.pattern.permute.xlu0 0
    %493 = vperm.xlu0 %492, %v490
    %v494 = vpop.permute.xlu0 %493
    %v496 = vmul.f32 %v488, %v494
    %v497 = vadd.f32 %v485, %v496
    %498 = vrot.lane.b32.xlu0 %v417, 120
    %v499 = vpop.permute.xlu0 %498
    %v500 = vmul.f32 %v499, %v233
    %s501 = scalar_lea.vmem %s9, 56
    %v502 = vld [vmem:[%s501] sm:$0xff]
    %504 = vset.pattern.permute.xlu0 0
    %505 = vperm.xlu0 %504, %v502
    %v506 = vpop.permute.xlu0 %505
    %v508 = vmul.f32 %v500, %v506
    %v509 = vadd.f32 %v497, %v508
    %510 = vrot.lane.b32.xlu0 %v417, 119
    %v511 = vpop.permute.xlu0 %510
    %v512 = vmul.f32 %v511, %v238
    %s513 = scalar_lea.vmem %s9, 64
    %v514 = vld [vmem:[%s513] sm:$0xff]
    %516 = vset.pattern.permute.xlu0 0
    %517 = vperm.xlu0 %516, %v514
    %v518 = vpop.permute.xlu0 %517
    %v520 = vmul.f32 %v512, %v518
    %v521 = vadd.f32 %v509, %v520
    %v522 = vld [vmem:[%s10] sm:$0xff]
    %v524 = vsel %vm373, %v522, 0
    %526 = vmatpush.msra.mxu0 0.0
    %527 = vmatpush.msra.mxu0 0.0
    %528 = vmatpush.msra.mxu0 0.0
    %529 = vmatpush.msra.mxu0 0.0
    %530 = vmatpush.msra.mxu0 0.0
    %531 = vmatpush.msra.mxu0 0.0
    %532 = vmatpush.msra.mxu0 0.0
    %533 = vmatpush.msra.mxu0 0.0
    %534 = vmatpush.msra.mxu0 0.0
    %535 = vmatpush.msra.mxu0 0.0
    %536 = vmatpush.msra.mxu0 0.0
    %537 = vmatpush.msra.mxu0 0.0
    %538 = vmatpush.msra.mxu0 0.0
    %539 = vmatpush.msra.mxu0 0.0
    %540 = vmatpush.msra.mxu0 0.0
    %541 = vmatpush.msra.mxu0 %v521
    %542 = vmatmul.f32.gmra.mxu0 %v524
    %v543 = vpop.f32.mrf.mxu0
    %v544 = vadd.f32 0.0, %v543
    %545 = vdwg.mxu0
    %546 = vadd.xlane.f32.xlu0 %v544
    %v547 = vpop.xlane.xlu0 %546
    %v548 = vmul.f32 %v547, %v179
    %v549 = vsub.f32 %v544, %v548
    %v550 = vmul.f32 %v549, %v549
    %551 = vadd.xlane.f32.xlu0 %v550
    %v552 = vpop.xlane.xlu0 %551
    %v553 = vmul.f32 %v552, %v179
    %v554 = vadd.f32 %v553, 1e-05
    %v555 = vrsqrt.pop %v554
    %v556 = vmul.f32 %v555, %v554
    %v557 = vmul.f32 %v556, %v555
    %v558 = vmul.f32 0.5, %v557
    %v559 = vsub.f32 1.5, %v558
    %v560 = vmul.f32 %v555, %v559
    %vm561 = vweird.f32 %v554
    %vm562 = vweird.f32 %v555
    %vm563 = vmor %vm561, %vm562
    %v564 = vsel %vm563, %v555, %v560
    %v565 = vmul.f32 %v549, %v564
    %566 = vrot.lane.b32.xlu0 %v267, 18
    %v567 = vpop.permute.xlu0 %566
    %v568 = vld [vmem:[%s3] sm:$0x1]
    %v570 = vperm.slane %v568, 0
    %v572 = vmul.f32 %v567, %v570
    %v573 = vld [vmem:[%s11] sm:$0xff]
    %575 = vset.pattern.permute.xlu0 0
    %576 = vperm.xlu0 %575, %v573
    %v577 = vpop.permute.xlu0 %576
    %v579 = vmul.f32 %v572, %v577
    %580 = vrot.lane.b32.xlu0 %v267, 17
    %v581 = vpop.permute.xlu0 %580
    %s582 = scalar_lea.vmem %s3, 1
    %v583 = vld [vmem:[%s582] sm:$0x1]
    %v585 = vperm.slane %v583, 0
    %v587 = vmul.f32 %v581, %v585
    %s588 = scalar_lea.vmem %s11, 8
    %v589 = vld [vmem:[%s588] sm:$0xff]
    %591 = vset.pattern.permute.xlu0 0
    %592 = vperm.xlu0 %591, %v589
    %v593 = vpop.permute.xlu0 %592
    %v595 = vmul.f32 %v587, %v593
    %v596 = vadd.f32 %v579, %v595
    %597 = vrot.lane.b32.xlu0 %v267, 16
    %v598 = vpop.permute.xlu0 %597
    %s599 = scalar_lea.vmem %s3, 2
    %v600 = vld [vmem:[%s599] sm:$0x1]
    %v602 = vperm.slane %v600, 0
    %v604 = vmul.f32 %v598, %v602
    %s605 = scalar_lea.vmem %s11, 16
    %v606 = vld [vmem:[%s605] sm:$0xff]
    %608 = vset.pattern.permute.xlu0 0
    %609 = vperm.xlu0 %608, %v606
    %v610 = vpop.permute.xlu0 %609
    %v612 = vmul.f32 %v604, %v610
    %v613 = vadd.f32 %v596, %v612
    %614 = vrot.lane.b32.xlu0 %v267, 15
    %v615 = vpop.permute.xlu0 %614
    %s616 = scalar_lea.vmem %s3, 3
    %v617 = vld [vmem:[%s616] sm:$0x1]
    %v619 = vperm.slane %v617, 0
    %v621 = vmul.f32 %v615, %v619
    %s622 = scalar_lea.vmem %s11, 24
    %v623 = vld [vmem:[%s622] sm:$0xff]
    %625 = vset.pattern.permute.xlu0 0
    %626 = vperm.xlu0 %625, %v623
    %v627 = vpop.permute.xlu0 %626
    %v629 = vmul.f32 %v621, %v627
    %v630 = vadd.f32 %v613, %v629
    %631 = vrot.lane.b32.xlu0 %v267, 14
    %v632 = vpop.permute.xlu0 %631
    %s633 = scalar_lea.vmem %s3, 4
    %v634 = vld [vmem:[%s633] sm:$0x1]
    %v636 = vperm.slane %v634, 0
    %v638 = vmul.f32 %v632, %v636
    %s639 = scalar_lea.vmem %s11, 32
    %v640 = vld [vmem:[%s639] sm:$0xff]
    %642 = vset.pattern.permute.xlu0 0
    %643 = vperm.xlu0 %642, %v640
    %v644 = vpop.permute.xlu0 %643
    %v646 = vmul.f32 %v638, %v644
    %v647 = vadd.f32 %v630, %v646
    %648 = vrot.lane.b32.xlu0 %v267, 10
    %v649 = vpop.permute.xlu0 %648
    %s650 = scalar_lea.vmem %s3, 5
    %v651 = vld [vmem:[%s650] sm:$0x1]
    %v653 = vperm.slane %v651, 0
    %v655 = vmul.f32 %v649, %v653
    %s656 = scalar_lea.vmem %s11, 40
    %v657 = vld [vmem:[%s656] sm:$0xff]
    %659 = vset.pattern.permute.xlu0 0
    %660 = vperm.xlu0 %659, %v657
    %v661 = vpop.permute.xlu0 %660
    %v663 = vmul.f32 %v655, %v661
    %v664 = vadd.f32 %v647, %v663
    %s665 = scalar_lea.vmem %s3, 6
    %v666 = vld [vmem:[%s665] sm:$0x1]
    %v668 = vperm.slane %v666, 0
    %v670 = vmul.f32 %v269, %v668
    %s671 = scalar_lea.vmem %s11, 48
    %v672 = vld [vmem:[%s671] sm:$0xff]
    %674 = vset.pattern.permute.xlu0 0
    %675 = vperm.xlu0 %674, %v672
    %v676 = vpop.permute.xlu0 %675
    %v678 = vmul.f32 %v670, %v676
    %v679 = vadd.f32 %v664, %v678
    %s680 = scalar_lea.vmem %s3, 7
    %v681 = vld [vmem:[%s680] sm:$0x1]
    %v683 = vperm.slane %v681, 0
    %v685 = vmul.f32 %v279, %v683
    %s686 = scalar_lea.vmem %s11, 56
    %v687 = vld [vmem:[%s686] sm:$0xff]
    %689 = vset.pattern.permute.xlu0 0
    %690 = vperm.xlu0 %689, %v687
    %v691 = vpop.permute.xlu0 %690
    %v693 = vmul.f32 %v685, %v691
    %v694 = vadd.f32 %v679, %v693
    %s695 = scalar_lea.vmem %s3, 8
    %v696 = vld [vmem:[%s695] sm:$0x1]
    %v698 = vperm.slane %v696, 0
    %v700 = vmul.f32 %v291, %v698
    %s701 = scalar_lea.vmem %s11, 64
    %v702 = vld [vmem:[%s701] sm:$0xff]
    %704 = vset.pattern.permute.xlu0 0
    %705 = vperm.xlu0 %704, %v702
    %v706 = vpop.permute.xlu0 %705
    %v708 = vmul.f32 %v700, %v706
    %v709 = vadd.f32 %v694, %v708
    %710 = vrot.lane.b32.xlu0 %v267, 6
    %v711 = vpop.permute.xlu0 %710
    %s712 = scalar_lea.vmem %s3, 9
    %v713 = vld [vmem:[%s712] sm:$0x1]
    %v715 = vperm.slane %v713, 0
    %v717 = vmul.f32 %v711, %v715
    %s718 = scalar_lea.vmem %s11, 72
    %v719 = vld [vmem:[%s718] sm:$0xff]
    %721 = vset.pattern.permute.xlu0 0
    %722 = vperm.xlu0 %721, %v719
    %v723 = vpop.permute.xlu0 %722
    %v725 = vmul.f32 %v717, %v723
    %v726 = vadd.f32 %v709, %v725
    %727 = vrot.lane.b32.xlu0 %v267, 2
    %v728 = vpop.permute.xlu0 %727
    %s729 = scalar_lea.vmem %s3, 10
    %v730 = vld [vmem:[%s729] sm:$0x1]
    %v732 = vperm.slane %v730, 0
    %v734 = vmul.f32 %v728, %v732
    %s735 = scalar_lea.vmem %s11, 80
    %v736 = vld [vmem:[%s735] sm:$0xff]
    %738 = vset.pattern.permute.xlu0 0
    %739 = vperm.xlu0 %738, %v736
    %v740 = vpop.permute.xlu0 %739
    %v742 = vmul.f32 %v734, %v740
    %v743 = vadd.f32 %v726, %v742
    %s744 = scalar_lea.vmem %s3, 11
    %v745 = vld [vmem:[%s744] sm:$0x1]
    %v747 = vperm.slane %v745, 0
    %v749 = vmul.f32 %v303, %v747
    %s750 = scalar_lea.vmem %s11, 88
    %v751 = vld [vmem:[%s750] sm:$0xff]
    %753 = vset.pattern.permute.xlu0 0
    %754 = vperm.xlu0 %753, %v751
    %v755 = vpop.permute.xlu0 %754
    %v757 = vmul.f32 %v749, %v755
    %v758 = vadd.f32 %v743, %v757
    %s759 = scalar_lea.vmem %s3, 12
    %v760 = vld [vmem:[%s759] sm:$0x1]
    %v762 = vperm.slane %v760, 0
    %v764 = vmul.f32 %v267, %v762
    %s765 = scalar_lea.vmem %s11, 96
    %v766 = vld [vmem:[%s765] sm:$0xff]
    %768 = vset.pattern.permute.xlu0 0
    %769 = vperm.xlu0 %768, %v766
    %v770 = vpop.permute.xlu0 %769
    %v772 = vmul.f32 %v764, %v770
    %v773 = vadd.f32 %v758, %v772
    %s774 = scalar_lea.vmem %s3, 13
    %v775 = vld [vmem:[%s774] sm:$0x1]
    %v777 = vperm.slane %v775, 0
    %v779 = vmul.f32 %v325, %v777
    %s780 = scalar_lea.vmem %s11, 104
    %v781 = vld [vmem:[%s780] sm:$0xff]
    %783 = vset.pattern.permute.xlu0 0
    %784 = vperm.xlu0 %783, %v781
    %v785 = vpop.permute.xlu0 %784
    %v787 = vmul.f32 %v779, %v785
    %v788 = vadd.f32 %v773, %v787
    %789 = vrot.lane.b32.xlu0 %v267, 126
    %v790 = vpop.permute.xlu0 %789
    %s791 = scalar_lea.vmem %s3, 14
    %v792 = vld [vmem:[%s791] sm:$0x1]
    %v794 = vperm.slane %v792, 0
    %v796 = vmul.f32 %v790, %v794
    %s797 = scalar_lea.vmem %s11, 112
    %v798 = vld [vmem:[%s797] sm:$0xff]
    %800 = vset.pattern.permute.xlu0 0
    %801 = vperm.xlu0 %800, %v798
    %v802 = vpop.permute.xlu0 %801
    %v804 = vmul.f32 %v796, %v802
    %v805 = vadd.f32 %v788, %v804
    %806 = vrot.lane.b32.xlu0 %v267, 122
    %v807 = vpop.permute.xlu0 %806
    %s808 = scalar_lea.vmem %s3, 15
    %v809 = vld [vmem:[%s808] sm:$0x1]
    %v811 = vperm.slane %v809, 0
    %v813 = vmul.f32 %v807, %v811
    %s814 = scalar_lea.vmem %s11, 120
    %v815 = vld [vmem:[%s814] sm:$0xff]
    %817 = vset.pattern.permute.xlu0 0
    %818 = vperm.xlu0 %817, %v815
    %v819 = vpop.permute.xlu0 %818
    %v821 = vmul.f32 %v813, %v819
    %v822 = vadd.f32 %v805, %v821
    %s823 = scalar_lea.vmem %s3, 16
    %v824 = vld [vmem:[%s823] sm:$0x1]
    %v826 = vperm.slane %v824, 0
    %v828 = vmul.f32 %v337, %v826
    %s829 = scalar_lea.vmem %s11, 128
    %v830 = vld [vmem:[%s829] sm:$0xff]
    %832 = vset.pattern.permute.xlu0 0
    %833 = vperm.xlu0 %832, %v830
    %v834 = vpop.permute.xlu0 %833
    %v836 = vmul.f32 %v828, %v834
    %v837 = vadd.f32 %v822, %v836
    %s838 = scalar_lea.vmem %s3, 17
    %v839 = vld [vmem:[%s838] sm:$0x1]
    %v841 = vperm.slane %v839, 0
    %v843 = vmul.f32 %v349, %v841
    %s844 = scalar_lea.vmem %s11, 136
    %v845 = vld [vmem:[%s844] sm:$0xff]
    %847 = vset.pattern.permute.xlu0 0
    %848 = vperm.xlu0 %847, %v845
    %v849 = vpop.permute.xlu0 %848
    %v851 = vmul.f32 %v843, %v849
    %v852 = vadd.f32 %v837, %v851
    %s853 = scalar_lea.vmem %s3, 18
    %v854 = vld [vmem:[%s853] sm:$0x1]
    %v856 = vperm.slane %v854, 0
    %v858 = vmul.f32 %v361, %v856
    %s859 = scalar_lea.vmem %s11, 144
    %v860 = vld [vmem:[%s859] sm:$0xff]
    %862 = vset.pattern.permute.xlu0 0
    %863 = vperm.xlu0 %862, %v860
    %v864 = vpop.permute.xlu0 %863
    %v866 = vmul.f32 %v858, %v864
    %v867 = vadd.f32 %v852, %v866
    %868 = vrot.lane.b32.xlu0 %v267, 118
    %v869 = vpop.permute.xlu0 %868
    %s870 = scalar_lea.vmem %s3, 19
    %v871 = vld [vmem:[%s870] sm:$0x1]
    %v873 = vperm.slane %v871, 0
    %v875 = vmul.f32 %v869, %v873
    %s876 = scalar_lea.vmem %s11, 152
    %v877 = vld [vmem:[%s876] sm:$0xff]
    %879 = vset.pattern.permute.xlu0 0
    %880 = vperm.xlu0 %879, %v877
    %v881 = vpop.permute.xlu0 %880
    %v883 = vmul.f32 %v875, %v881
    %v884 = vadd.f32 %v867, %v883
    %885 = vrot.lane.b32.xlu0 %v267, 114
    %v886 = vpop.permute.xlu0 %885
    %s887 = scalar_lea.vmem %s3, 20
    %v888 = vld [vmem:[%s887] sm:$0x1]
    %v890 = vperm.slane %v888, 0
    %v892 = vmul.f32 %v886, %v890
    %s893 = scalar_lea.vmem %s11, 160
    %v894 = vld [vmem:[%s893] sm:$0xff]
    %896 = vset.pattern.permute.xlu0 0
    %897 = vperm.xlu0 %896, %v894
    %v898 = vpop.permute.xlu0 %897
    %v900 = vmul.f32 %v892, %v898
    %v901 = vadd.f32 %v884, %v900
    %902 = vrot.lane.b32.xlu0 %v267, 113
    %v903 = vpop.permute.xlu0 %902
    %s904 = scalar_lea.vmem %s3, 21
    %v905 = vld [vmem:[%s904] sm:$0x1]
    %v907 = vperm.slane %v905, 0
    %v909 = vmul.f32 %v903, %v907
    %s910 = scalar_lea.vmem %s11, 168
    %v911 = vld [vmem:[%s910] sm:$0xff]
    %913 = vset.pattern.permute.xlu0 0
    %914 = vperm.xlu0 %913, %v911
    %v915 = vpop.permute.xlu0 %914
    %v917 = vmul.f32 %v909, %v915
    %v918 = vadd.f32 %v901, %v917
    %919 = vrot.lane.b32.xlu0 %v267, 112
    %v920 = vpop.permute.xlu0 %919
    %s921 = scalar_lea.vmem %s3, 22
    %v922 = vld [vmem:[%s921] sm:$0x1]
    %v924 = vperm.slane %v922, 0
    %v926 = vmul.f32 %v920, %v924
    %s927 = scalar_lea.vmem %s11, 176
    %v928 = vld [vmem:[%s927] sm:$0xff]
    %930 = vset.pattern.permute.xlu0 0
    %931 = vperm.xlu0 %930, %v928
    %v932 = vpop.permute.xlu0 %931
    %v934 = vmul.f32 %v926, %v932
    %v935 = vadd.f32 %v918, %v934
    %936 = vrot.lane.b32.xlu0 %v267, 111
    %v937 = vpop.permute.xlu0 %936
    %s938 = scalar_lea.vmem %s3, 23
    %v939 = vld [vmem:[%s938] sm:$0x1]
    %v941 = vperm.slane %v939, 0
    %v943 = vmul.f32 %v937, %v941
    %s944 = scalar_lea.vmem %s11, 184
    %v945 = vld [vmem:[%s944] sm:$0xff]
    %947 = vset.pattern.permute.xlu0 0
    %948 = vperm.xlu0 %947, %v945
    %v949 = vpop.permute.xlu0 %948
    %v951 = vmul.f32 %v943, %v949
    %v952 = vadd.f32 %v935, %v951
    %953 = vrot.lane.b32.xlu0 %v267, 110
    %v954 = vpop.permute.xlu0 %953
    %s955 = scalar_lea.vmem %s3, 24
    %v956 = vld [vmem:[%s955] sm:$0x1]
    %v958 = vperm.slane %v956, 0
    %v960 = vmul.f32 %v954, %v958
    %s961 = scalar_lea.vmem %s11, 192
    %v962 = vld [vmem:[%s961] sm:$0xff]
    %964 = vset.pattern.permute.xlu0 0
    %965 = vperm.xlu0 %964, %v962
    %v966 = vpop.permute.xlu0 %965
    %v968 = vmul.f32 %v960, %v966
    %v969 = vadd.f32 %v952, %v968
    %v970 = vld [vmem:[%s12] sm:$0xff]
    %v972 = vsel %vm373, %v970, 0
    %974 = vmatpush.msra.mxu0 0.0
    %975 = vmatpush.msra.mxu0 0.0
    %976 = vmatpush.msra.mxu0 0.0
    %977 = vmatpush.msra.mxu0 0.0
    %978 = vmatpush.msra.mxu0 0.0
    %979 = vmatpush.msra.mxu0 0.0
    %980 = vmatpush.msra.mxu0 0.0
    %981 = vmatpush.msra.mxu0 0.0
    %982 = vmatpush.msra.mxu0 0.0
    %983 = vmatpush.msra.mxu0 0.0
    %984 = vmatpush.msra.mxu0 0.0
    %985 = vmatpush.msra.mxu0 0.0
    %986 = vmatpush.msra.mxu0 0.0
    %987 = vmatpush.msra.mxu0 0.0
    %988 = vmatpush.msra.mxu0 0.0
    %989 = vmatpush.msra.mxu0 %v969
    %990 = vmatmul.f32.gmra.mxu0 %v972
    %v991 = vpop.f32.mrf.mxu0
    %v992 = vadd.f32 0.0, %v991
    %993 = vdwg.mxu0
    %994 = vadd.xlane.f32.xlu0 %v992
    %v995 = vpop.xlane.xlu0 %994
    %v996 = vmul.f32 %v995, %v179
    %v997 = vsub.f32 %v992, %v996
    %v998 = vmul.f32 %v997, %v997
    %999 = vadd.xlane.f32.xlu0 %v998
    %v1000 = vpop.xlane.xlu0 %999
    %v1001 = vmul.f32 %v1000, %v179
    %v1002 = vadd.f32 %v1001, 1e-05
    %v1003 = vrsqrt.pop %v1002
    %v1004 = vmul.f32 %v1003, %v1002
    %v1005 = vmul.f32 %v1004, %v1003
    %v1006 = vmul.f32 0.5, %v1005
    %v1007 = vsub.f32 1.5, %v1006
    %v1008 = vmul.f32 %v1003, %v1007
    %vm1009 = vweird.f32 %v1002
    %vm1010 = vweird.f32 %v1003
    %vm1011 = vmor %vm1009, %vm1010
    %v1012 = vsel %vm1011, %v1003, %v1008
    %v1013 = vmul.f32 %v997, %v1012
    %v1014 = vmax.f32 %v1013, 0.0
    %1015 = vrot.lane.b32.xlu0 %v1014, 18
    %v1016 = vpop.permute.xlu0 %1015
    %v1017 = vmul.f32 %v1016, %v570
    %v1018 = vld [vmem:[%s13] sm:$0xff]
    %1020 = vset.pattern.permute.xlu0 0
    %1021 = vperm.xlu0 %1020, %v1018
    %v1022 = vpop.permute.xlu0 %1021
    %v1024 = vmul.f32 %v1017, %v1022
    %1025 = vrot.lane.b32.xlu0 %v1014, 17
    %v1026 = vpop.permute.xlu0 %1025
    %v1027 = vmul.f32 %v1026, %v585
    %s1028 = scalar_lea.vmem %s13, 8
    %v1029 = vld [vmem:[%s1028] sm:$0xff]
    %1031 = vset.pattern.permute.xlu0 0
    %1032 = vperm.xlu0 %1031, %v1029
    %v1033 = vpop.permute.xlu0 %1032
    %v1035 = vmul.f32 %v1027, %v1033
    %v1036 = vadd.f32 %v1024, %v1035
    %1037 = vrot.lane.b32.xlu0 %v1014, 16
    %v1038 = vpop.permute.xlu0 %1037
    %v1039 = vmul.f32 %v1038, %v602
    %s1040 = scalar_lea.vmem %s13, 16
    %v1041 = vld [vmem:[%s1040] sm:$0xff]
    %1043 = vset.pattern.permute.xlu0 0
    %1044 = vperm.xlu0 %1043, %v1041
    %v1045 = vpop.permute.xlu0 %1044
    %v1047 = vmul.f32 %v1039, %v1045
    %v1048 = vadd.f32 %v1036, %v1047
    %1049 = vrot.lane.b32.xlu0 %v1014, 15
    %v1050 = vpop.permute.xlu0 %1049
    %v1051 = vmul.f32 %v1050, %v619
    %s1052 = scalar_lea.vmem %s13, 24
    %v1053 = vld [vmem:[%s1052] sm:$0xff]
    %1055 = vset.pattern.permute.xlu0 0
    %1056 = vperm.xlu0 %1055, %v1053
    %v1057 = vpop.permute.xlu0 %1056
    %v1059 = vmul.f32 %v1051, %v1057
    %v1060 = vadd.f32 %v1048, %v1059
    %1061 = vrot.lane.b32.xlu0 %v1014, 14
    %v1062 = vpop.permute.xlu0 %1061
    %v1063 = vmul.f32 %v1062, %v636
    %s1064 = scalar_lea.vmem %s13, 32
    %v1065 = vld [vmem:[%s1064] sm:$0xff]
    %1067 = vset.pattern.permute.xlu0 0
    %1068 = vperm.xlu0 %1067, %v1065
    %v1069 = vpop.permute.xlu0 %1068
    %v1071 = vmul.f32 %v1063, %v1069
    %v1072 = vadd.f32 %v1060, %v1071
    %1073 = vrot.lane.b32.xlu0 %v1014, 10
    %v1074 = vpop.permute.xlu0 %1073
    %v1075 = vmul.f32 %v1074, %v653
    %s1076 = scalar_lea.vmem %s13, 40
    %v1077 = vld [vmem:[%s1076] sm:$0xff]
    %1079 = vset.pattern.permute.xlu0 0
    %1080 = vperm.xlu0 %1079, %v1077
    %v1081 = vpop.permute.xlu0 %1080
    %v1083 = vmul.f32 %v1075, %v1081
    %v1084 = vadd.f32 %v1072, %v1083
    %1085 = vrot.lane.b32.xlu0 %v1014, 9
    %v1086 = vpop.permute.xlu0 %1085
    %v1087 = vmul.f32 %v1086, %v668
    %s1088 = scalar_lea.vmem %s13, 48
    %v1089 = vld [vmem:[%s1088] sm:$0xff]
    %1091 = vset.pattern.permute.xlu0 0
    %1092 = vperm.xlu0 %1091, %v1089
    %v1093 = vpop.permute.xlu0 %1092
    %v1095 = vmul.f32 %v1087, %v1093
    %v1096 = vadd.f32 %v1084, %v1095
    %1097 = vrot.lane.b32.xlu0 %v1014, 8
    %v1098 = vpop.permute.xlu0 %1097
    %v1099 = vmul.f32 %v1098, %v683
    %s1100 = scalar_lea.vmem %s13, 56
    %v1101 = vld [vmem:[%s1100] sm:$0xff]
    %1103 = vset.pattern.permute.xlu0 0
    %1104 = vperm.xlu0 %1103, %v1101
    %v1105 = vpop.permute.xlu0 %1104
    %v1107 = vmul.f32 %v1099, %v1105
    %v1108 = vadd.f32 %v1096, %v1107
    %1109 = vrot.lane.b32.xlu0 %v1014, 7
    %v1110 = vpop.permute.xlu0 %1109
    %v1111 = vmul.f32 %v1110, %v698
    %s1112 = scalar_lea.vmem %s13, 64
    %v1113 = vld [vmem:[%s1112] sm:$0xff]
    %1115 = vset.pattern.permute.xlu0 0
    %1116 = vperm.xlu0 %1115, %v1113
    %v1117 = vpop.permute.xlu0 %1116
    %v1119 = vmul.f32 %v1111, %v1117
    %v1120 = vadd.f32 %v1108, %v1119
    %1121 = vrot.lane.b32.xlu0 %v1014, 6
    %v1122 = vpop.permute.xlu0 %1121
    %v1123 = vmul.f32 %v1122, %v715
    %s1124 = scalar_lea.vmem %s13, 72
    %v1125 = vld [vmem:[%s1124] sm:$0xff]
    %1127 = vset.pattern.permute.xlu0 0
    %1128 = vperm.xlu0 %1127, %v1125
    %v1129 = vpop.permute.xlu0 %1128
    %v1131 = vmul.f32 %v1123, %v1129
    %v1132 = vadd.f32 %v1120, %v1131
    %1133 = vrot.lane.b32.xlu0 %v1014, 2
    %v1134 = vpop.permute.xlu0 %1133
    %v1135 = vmul.f32 %v1134, %v732
    %s1136 = scalar_lea.vmem %s13, 80
    %v1137 = vld [vmem:[%s1136] sm:$0xff]
    %1139 = vset.pattern.permute.xlu0 0
    %1140 = vperm.xlu0 %1139, %v1137
    %v1141 = vpop.permute.xlu0 %1140
    %v1143 = vmul.f32 %v1135, %v1141
    %v1144 = vadd.f32 %v1132, %v1143
    %1145 = vrot.lane.b32.xlu0 %v1014, 1
    %v1146 = vpop.permute.xlu0 %1145
    %v1147 = vmul.f32 %v1146, %v747
    %s1148 = scalar_lea.vmem %s13, 88
    %v1149 = vld [vmem:[%s1148] sm:$0xff]
    %1151 = vset.pattern.permute.xlu0 0
    %1152 = vperm.xlu0 %1151, %v1149
    %v1153 = vpop.permute.xlu0 %1152
    %v1155 = vmul.f32 %v1147, %v1153
    %v1156 = vadd.f32 %v1144, %v1155
    %v1157 = vmul.f32 %v1014, %v762
    %s1158 = scalar_lea.vmem %s13, 96
    %v1159 = vld [vmem:[%s1158] sm:$0xff]
    %1161 = vset.pattern.permute.xlu0 0
    %1162 = vperm.xlu0 %1161, %v1159
    %v1163 = vpop.permute.xlu0 %1162
    %v1165 = vmul.f32 %v1157, %v1163
    %v1166 = vadd.f32 %v1156, %v1165
    %1167 = vrot.lane.b32.xlu0 %v1014, 127
    %v1168 = vpop.permute.xlu0 %1167
    %v1169 = vmul.f32 %v1168, %v777
    %s1170 = scalar_lea.vmem %s13, 104
    %v1171 = vld [vmem:[%s1170] sm:$0xff]
    %1173 = vset.pattern.permute.xlu0 0
    %1174 = vperm.xlu0 %1173, %v1171
    %v1175 = vpop.permute.xlu0 %1174
    %v1177 = vmul.f32 %v1169, %v1175
    %v1178 = vadd.f32 %v1166, %v1177
    %1179 = vrot.lane.b32.xlu0 %v1014, 126
    %v1180 = vpop.permute.xlu0 %1179
    %v1181 = vmul.f32 %v1180, %v794
    %s1182 = scalar_lea.vmem %s13, 112
    %v1183 = vld [vmem:[%s1182] sm:$0xff]
    %1185 = vset.pattern.permute.xlu0 0
    %1186 = vperm.xlu0 %1185, %v1183
    %v1187 = vpop.permute.xlu0 %1186
    %v1189 = vmul.f32 %v1181, %v1187
    %v1190 = vadd.f32 %v1178, %v1189
    %1191 = vrot.lane.b32.xlu0 %v1014, 122
    %v1192 = vpop.permute.xlu0 %1191
    %v1193 = vmul.f32 %v1192, %v811
    %s1194 = scalar_lea.vmem %s13, 120
    %v1195 = vld [vmem:[%s1194] sm:$0xff]
    %1197 = vset.pattern.permute.xlu0 0
    %1198 = vperm.xlu0 %1197, %v1195
    %v1199 = vpop.permute.xlu0 %1198
    %v1201 = vmul.f32 %v1193, %v1199
    %v1202 = vadd.f32 %v1190, %v1201
    %1203 = vrot.lane.b32.xlu0 %v1014, 121
    %v1204 = vpop.permute.xlu0 %1203
    %v1205 = vmul.f32 %v1204, %v826
    %s1206 = scalar_lea.vmem %s13, 128
    %v1207 = vld [vmem:[%s1206] sm:$0xff]
    %1209 = vset.pattern.permute.xlu0 0
    %1210 = vperm.xlu0 %1209, %v1207
    %v1211 = vpop.permute.xlu0 %1210
    %v1213 = vmul.f32 %v1205, %v1211
    %v1214 = vadd.f32 %v1202, %v1213
    %1215 = vrot.lane.b32.xlu0 %v1014, 120
    %v1216 = vpop.permute.xlu0 %1215
    %v1217 = vmul.f32 %v1216, %v841
    %s1218 = scalar_lea.vmem %s13, 136
    %v1219 = vld [vmem:[%s1218] sm:$0xff]
    %1221 = vset.pattern.permute.xlu0 0
    %1222 = vperm.xlu0 %1221, %v1219
    %v1223 = vpop.permute.xlu0 %1222
    %v1225 = vmul.f32 %v1217, %v1223
    %v1226 = vadd.f32 %v1214, %v1225
    %1227 = vrot.lane.b32.xlu0 %v1014, 119
    %v1228 = vpop.permute.xlu0 %1227
    %v1229 = vmul.f32 %v1228, %v856
    %s1230 = scalar_lea.vmem %s13, 144
    %v1231 = vld [vmem:[%s1230] sm:$0xff]
    %1233 = vset.pattern.permute.xlu0 0
    %1234 = vperm.xlu0 %1233, %v1231
    %v1235 = vpop.permute.xlu0 %1234
    %v1237 = vmul.f32 %v1229, %v1235
    %v1238 = vadd.f32 %v1226, %v1237
    %1239 = vrot.lane.b32.xlu0 %v1014, 118
    %v1240 = vpop.permute.xlu0 %1239
    %v1241 = vmul.f32 %v1240, %v873
    %s1242 = scalar_lea.vmem %s13, 152
    %v1243 = vld [vmem:[%s1242] sm:$0xff]
    %1245 = vset.pattern.permute.xlu0 0
    %1246 = vperm.xlu0 %1245, %v1243
    %v1247 = vpop.permute.xlu0 %1246
    %v1249 = vmul.f32 %v1241, %v1247
    %v1250 = vadd.f32 %v1238, %v1249
    %1251 = vrot.lane.b32.xlu0 %v1014, 114
    %v1252 = vpop.permute.xlu0 %1251
    %v1253 = vmul.f32 %v1252, %v890
    %s1254 = scalar_lea.vmem %s13, 160
    %v1255 = vld [vmem:[%s1254] sm:$0xff]
    %1257 = vset.pattern.permute.xlu0 0
    %1258 = vperm.xlu0 %1257, %v1255
    %v1259 = vpop.permute.xlu0 %1258
    %v1261 = vmul.f32 %v1253, %v1259
    %v1262 = vadd.f32 %v1250, %v1261
    %1263 = vrot.lane.b32.xlu0 %v1014, 113
    %v1264 = vpop.permute.xlu0 %1263
    %v1265 = vmul.f32 %v1264, %v907
    %s1266 = scalar_lea.vmem %s13, 168
    %v1267 = vld [vmem:[%s1266] sm:$0xff]
    %1269 = vset.pattern.permute.xlu0 0
    %1270 = vperm.xlu0 %1269, %v1267
    %v1271 = vpop.permute.xlu0 %1270
    %v1273 = vmul.f32 %v1265, %v1271
    %v1274 = vadd.f32 %v1262, %v1273
    %1275 = vrot.lane.b32.xlu0 %v1014, 112
    %v1276 = vpop.permute.xlu0 %1275
    %v1277 = vmul.f32 %v1276, %v924
    %s1278 = scalar_lea.vmem %s13, 176
    %v1279 = vld [vmem:[%s1278] sm:$0xff]
    %1281 = vset.pattern.permute.xlu0 0
    %1282 = vperm.xlu0 %1281, %v1279
    %v1283 = vpop.permute.xlu0 %1282
    %v1285 = vmul.f32 %v1277, %v1283
    %v1286 = vadd.f32 %v1274, %v1285
    %1287 = vrot.lane.b32.xlu0 %v1014, 111
    %v1288 = vpop.permute.xlu0 %1287
    %v1289 = vmul.f32 %v1288, %v941
    %s1290 = scalar_lea.vmem %s13, 184
    %v1291 = vld [vmem:[%s1290] sm:$0xff]
    %1293 = vset.pattern.permute.xlu0 0
    %1294 = vperm.xlu0 %1293, %v1291
    %v1295 = vpop.permute.xlu0 %1294
    %v1297 = vmul.f32 %v1289, %v1295
    %v1298 = vadd.f32 %v1286, %v1297
    %1299 = vrot.lane.b32.xlu0 %v1014, 110
    %v1300 = vpop.permute.xlu0 %1299
    %v1301 = vmul.f32 %v1300, %v958
    %s1302 = scalar_lea.vmem %s13, 192
    %v1303 = vld [vmem:[%s1302] sm:$0xff]
    %1305 = vset.pattern.permute.xlu0 0
    %1306 = vperm.xlu0 %1305, %v1303
    %v1307 = vpop.permute.xlu0 %1306
    %v1309 = vmul.f32 %v1301, %v1307
    %v1310 = vadd.f32 %v1298, %v1309
    %v1311 = vld [vmem:[%s14] sm:$0xff]
    %v1313 = vsel %vm373, %v1311, 0
    %1315 = vmatpush.msra.mxu0 0.0
    %1316 = vmatpush.msra.mxu0 0.0
    %1317 = vmatpush.msra.mxu0 0.0
    %1318 = vmatpush.msra.mxu0 0.0
    %1319 = vmatpush.msra.mxu0 0.0
    %1320 = vmatpush.msra.mxu0 0.0
    %1321 = vmatpush.msra.mxu0 0.0
    %1322 = vmatpush.msra.mxu0 0.0
    %1323 = vmatpush.msra.mxu0 0.0
    %1324 = vmatpush.msra.mxu0 0.0
    %1325 = vmatpush.msra.mxu0 0.0
    %1326 = vmatpush.msra.mxu0 0.0
    %1327 = vmatpush.msra.mxu0 0.0
    %1328 = vmatpush.msra.mxu0 0.0
    %1329 = vmatpush.msra.mxu0 0.0
    %1330 = vmatpush.msra.mxu0 %v1310
    %1331 = vmatmul.f32.gmra.mxu0 %v1313
    %v1332 = vpop.f32.mrf.mxu0
    %v1333 = vadd.f32 0.0, %v1332
    %1334 = vdwg.mxu0
    %1335 = vadd.xlane.f32.xlu0 %v1333
    %v1336 = vpop.xlane.xlu0 %1335
    %v1337 = vmul.f32 %v1336, %v179
    %v1338 = vsub.f32 %v1333, %v1337
    %v1339 = vmul.f32 %v1338, %v1338
    %1340 = vadd.xlane.f32.xlu0 %v1339
    %v1341 = vpop.xlane.xlu0 %1340
    %v1342 = vmul.f32 %v1341, %v179
    %v1343 = vadd.f32 %v1342, 1e-05
    %v1344 = vrsqrt.pop %v1343
    %v1345 = vmul.f32 %v1344, %v1343
    %v1346 = vmul.f32 %v1345, %v1344
    %v1347 = vmul.f32 0.5, %v1346
    %v1348 = vsub.f32 1.5, %v1347
    %v1349 = vmul.f32 %v1344, %v1348
    %vm1350 = vweird.f32 %v1343
    %vm1351 = vweird.f32 %v1344
    %vm1352 = vmor %vm1350, %vm1351
    %v1353 = vsel %vm1352, %v1344, %v1349
    %v1354 = vmul.f32 %v1338, %v1353
    %v1355 = vld [vmem:[%s4] sm:$0x1]
    %v1357 = vperm.slane %v1355, 0
    %v1359 = vmul.f32 %v567, %v1357
    %v1360 = vld [vmem:[%s15] sm:$0xff]
    %1362 = vset.pattern.permute.xlu0 0
    %1363 = vperm.xlu0 %1362, %v1360
    %v1364 = vpop.permute.xlu0 %1363
    %v1366 = vmul.f32 %v1359, %v1364
    %s1367 = scalar_lea.vmem %s4, 1
    %v1368 = vld [vmem:[%s1367] sm:$0x1]
    %v1370 = vperm.slane %v1368, 0
    %v1372 = vmul.f32 %v598, %v1370
    %s1373 = scalar_lea.vmem %s15, 8
    %v1374 = vld [vmem:[%s1373] sm:$0xff]
    %1376 = vset.pattern.permute.xlu0 0
    %1377 = vperm.xlu0 %1376, %v1374
    %v1378 = vpop.permute.xlu0 %1377
    %v1380 = vmul.f32 %v1372, %v1378
    %v1381 = vadd.f32 %v1366, %v1380
    %s1382 = scalar_lea.vmem %s4, 2
    %v1383 = vld [vmem:[%s1382] sm:$0x1]
    %v1385 = vperm.slane %v1383, 0
    %v1387 = vmul.f32 %v632, %v1385
    %s1388 = scalar_lea.vmem %s15, 16
    %v1389 = vld [vmem:[%s1388] sm:$0xff]
    %1391 = vset.pattern.permute.xlu0 0
    %1392 = vperm.xlu0 %1391, %v1389
    %v1393 = vpop.permute.xlu0 %1392
    %v1395 = vmul.f32 %v1387, %v1393
    %v1396 = vadd.f32 %v1381, %v1395
    %s1397 = scalar_lea.vmem %s4, 3
    %v1398 = vld [vmem:[%s1397] sm:$0x1]
    %v1400 = vperm.slane %v1398, 0
    %v1402 = vmul.f32 %v728, %v1400
    %s1403 = scalar_lea.vmem %s15, 24
    %v1404 = vld [vmem:[%s1403] sm:$0xff]
    %1406 = vset.pattern.permute.xlu0 0
    %1407 = vperm.xlu0 %1406, %v1404
    %v1408 = vpop.permute.xlu0 %1407
    %v1410 = vmul.f32 %v1402, %v1408
    %v1411 = vadd.f32 %v1396, %v1410
    %s1412 = scalar_lea.vmem %s4, 4
    %v1413 = vld [vmem:[%s1412] sm:$0x1]
    %v1415 = vperm.slane %v1413, 0
    %v1417 = vmul.f32 %v267, %v1415
    %s1418 = scalar_lea.vmem %s15, 32
    %v1419 = vld [vmem:[%s1418] sm:$0xff]
    %1421 = vset.pattern.permute.xlu0 0
    %1422 = vperm.xlu0 %1421, %v1419
    %v1423 = vpop.permute.xlu0 %1422
    %v1425 = vmul.f32 %v1417, %v1423
    %v1426 = vadd.f32 %v1411, %v1425
    %s1427 = scalar_lea.vmem %s4, 5
    %v1428 = vld [vmem:[%s1427] sm:$0x1]
    %v1430 = vperm.slane %v1428, 0
    %v1432 = vmul.f32 %v790, %v1430
    %s1433 = scalar_lea.vmem %s15, 40
    %v1434 = vld [vmem:[%s1433] sm:$0xff]
    %1436 = vset.pattern.permute.xlu0 0
    %1437 = vperm.xlu0 %1436, %v1434
    %v1438 = vpop.permute.xlu0 %1437
    %v1440 = vmul.f32 %v1432, %v1438
    %v1441 = vadd.f32 %v1426, %v1440
    %s1442 = scalar_lea.vmem %s4, 6
    %v1443 = vld [vmem:[%s1442] sm:$0x1]
    %v1445 = vperm.slane %v1443, 0
    %v1447 = vmul.f32 %v886, %v1445
    %s1448 = scalar_lea.vmem %s15, 48
    %v1449 = vld [vmem:[%s1448] sm:$0xff]
    %1451 = vset.pattern.permute.xlu0 0
    %1452 = vperm.xlu0 %1451, %v1449
    %v1453 = vpop.permute.xlu0 %1452
    %v1455 = vmul.f32 %v1447, %v1453
    %v1456 = vadd.f32 %v1441, %v1455
    %s1457 = scalar_lea.vmem %s4, 7
    %v1458 = vld [vmem:[%s1457] sm:$0x1]
    %v1460 = vperm.slane %v1458, 0
    %v1462 = vmul.f32 %v920, %v1460
    %s1463 = scalar_lea.vmem %s15, 56
    %v1464 = vld [vmem:[%s1463] sm:$0xff]
    %1466 = vset.pattern.permute.xlu0 0
    %1467 = vperm.xlu0 %1466, %v1464
    %v1468 = vpop.permute.xlu0 %1467
    %v1470 = vmul.f32 %v1462, %v1468
    %v1471 = vadd.f32 %v1456, %v1470
    %s1472 = scalar_lea.vmem %s4, 8
    %v1473 = vld [vmem:[%s1472] sm:$0x1]
    %v1475 = vperm.slane %v1473, 0
    %v1477 = vmul.f32 %v954, %v1475
    %s1478 = scalar_lea.vmem %s15, 64
    %v1479 = vld [vmem:[%s1478] sm:$0xff]
    %1481 = vset.pattern.permute.xlu0 0
    %1482 = vperm.xlu0 %1481, %v1479
    %v1483 = vpop.permute.xlu0 %1482
    %v1485 = vmul.f32 %v1477, %v1483
    %v1486 = vadd.f32 %v1471, %v1485
    %v1487 = vld [vmem:[%s16] sm:$0xff]
    %v1489 = vsel %vm373, %v1487, 0
    %1491 = vmatpush.msra.mxu0 0.0
    %1492 = vmatpush.msra.mxu0 0.0
    %1493 = vmatpush.msra.mxu0 0.0
    %1494 = vmatpush.msra.mxu0 0.0
    %1495 = vmatpush.msra.mxu0 0.0
    %1496 = vmatpush.msra.mxu0 0.0
    %1497 = vmatpush.msra.mxu0 0.0
    %1498 = vmatpush.msra.mxu0 0.0
    %1499 = vmatpush.msra.mxu0 0.0
    %1500 = vmatpush.msra.mxu0 0.0
    %1501 = vmatpush.msra.mxu0 0.0
    %1502 = vmatpush.msra.mxu0 0.0
    %1503 = vmatpush.msra.mxu0 0.0
    %1504 = vmatpush.msra.mxu0 0.0
    %1505 = vmatpush.msra.mxu0 0.0
    %1506 = vmatpush.msra.mxu0 %v1486
    %1507 = vmatmul.f32.gmra.mxu0 %v1489
    %v1508 = vpop.f32.mrf.mxu0
    %v1509 = vadd.f32 0.0, %v1508
    %1510 = vdwg.mxu0
    %1511 = vadd.xlane.f32.xlu0 %v1509
    %v1512 = vpop.xlane.xlu0 %1511
    %v1513 = vmul.f32 %v1512, %v179
    %v1514 = vsub.f32 %v1509, %v1513
    %v1515 = vmul.f32 %v1514, %v1514
    %1516 = vadd.xlane.f32.xlu0 %v1515
    %v1517 = vpop.xlane.xlu0 %1516
    %v1518 = vmul.f32 %v1517, %v179
    %v1519 = vadd.f32 %v1518, 1e-05
    %v1520 = vrsqrt.pop %v1519
    %v1521 = vmul.f32 %v1520, %v1519
    %v1522 = vmul.f32 %v1521, %v1520
    %v1523 = vmul.f32 0.5, %v1522
    %v1524 = vsub.f32 1.5, %v1523
    %v1525 = vmul.f32 %v1520, %v1524
    %vm1526 = vweird.f32 %v1519
    %vm1527 = vweird.f32 %v1520
    %vm1528 = vmor %vm1526, %vm1527
    %v1529 = vsel %vm1528, %v1520, %v1525
    %v1530 = vmul.f32 %v1514, %v1529
    %1531 = vrot.lane.b32.xlu0 %v267, 36
    %v1532 = vpop.permute.xlu0 %1531
    %v1533 = vld [vmem:[%s5] sm:$0x1]
    %v1535 = vperm.slane %v1533, 0
    %v1537 = vmul.f32 %v1532, %v1535
    %v1538 = vld [vmem:[%s17] sm:$0xff]
    %1540 = vset.pattern.permute.xlu0 0
    %1541 = vperm.xlu0 %1540, %v1538
    %v1542 = vpop.permute.xlu0 %1541
    %v1544 = vmul.f32 %v1537, %v1542
    %1545 = vrot.lane.b32.xlu0 %v267, 34
    %v1546 = vpop.permute.xlu0 %1545
    %s1547 = scalar_lea.vmem %s5, 1
    %v1548 = vld [vmem:[%s1547] sm:$0x1]
    %v1550 = vperm.slane %v1548, 0
    %v1552 = vmul.f32 %v1546, %v1550
    %s1553 = scalar_lea.vmem %s17, 8
    %v1554 = vld [vmem:[%s1553] sm:$0xff]
    %1556 = vset.pattern.permute.xlu0 0
    %1557 = vperm.xlu0 %1556, %v1554
    %v1558 = vpop.permute.xlu0 %1557
    %v1560 = vmul.f32 %v1552, %v1558
    %v1561 = vadd.f32 %v1544, %v1560
    %1562 = vrot.lane.b32.xlu0 %v267, 32
    %v1563 = vpop.permute.xlu0 %1562
    %s1564 = scalar_lea.vmem %s5, 2
    %v1565 = vld [vmem:[%s1564] sm:$0x1]
    %v1567 = vperm.slane %v1565, 0
    %v1569 = vmul.f32 %v1563, %v1567
    %s1570 = scalar_lea.vmem %s17, 16
    %v1571 = vld [vmem:[%s1570] sm:$0xff]
    %1573 = vset.pattern.permute.xlu0 0
    %1574 = vperm.xlu0 %1573, %v1571
    %v1575 = vpop.permute.xlu0 %1574
    %v1577 = vmul.f32 %v1569, %v1575
    %v1578 = vadd.f32 %v1561, %v1577
    %1579 = vrot.lane.b32.xlu0 %v267, 30
    %v1580 = vpop.permute.xlu0 %1579
    %s1581 = scalar_lea.vmem %s5, 3
    %v1582 = vld [vmem:[%s1581] sm:$0x1]
    %v1584 = vperm.slane %v1582, 0
    %v1586 = vmul.f32 %v1580, %v1584
    %s1587 = scalar_lea.vmem %s17, 24
    %v1588 = vld [vmem:[%s1587] sm:$0xff]
    %1590 = vset.pattern.permute.xlu0 0
    %1591 = vperm.xlu0 %1590, %v1588
    %v1592 = vpop.permute.xlu0 %1591
    %v1594 = vmul.f32 %v1586, %v1592
    %v1595 = vadd.f32 %v1578, %v1594
    %1596 = vrot.lane.b32.xlu0 %v267, 28
    %v1597 = vpop.permute.xlu0 %1596
    %s1598 = scalar_lea.vmem %s5, 4
    %v1599 = vld [vmem:[%s1598] sm:$0x1]
    %v1601 = vperm.slane %v1599, 0
    %v1603 = vmul.f32 %v1597, %v1601
    %s1604 = scalar_lea.vmem %s17, 32
    %v1605 = vld [vmem:[%s1604] sm:$0xff]
    %1607 = vset.pattern.permute.xlu0 0
    %1608 = vperm.xlu0 %1607, %v1605
    %v1609 = vpop.permute.xlu0 %1608
    %v1611 = vmul.f32 %v1603, %v1609
    %v1612 = vadd.f32 %v1595, %v1611
    %1613 = vrot.lane.b32.xlu0 %v267, 20
    %v1614 = vpop.permute.xlu0 %1613
    %s1615 = scalar_lea.vmem %s5, 5
    %v1616 = vld [vmem:[%s1615] sm:$0x1]
    %v1618 = vperm.slane %v1616, 0
    %v1620 = vmul.f32 %v1614, %v1618
    %s1621 = scalar_lea.vmem %s17, 40
    %v1622 = vld [vmem:[%s1621] sm:$0xff]
    %1624 = vset.pattern.permute.xlu0 0
    %1625 = vperm.xlu0 %1624, %v1622
    %v1626 = vpop.permute.xlu0 %1625
    %v1628 = vmul.f32 %v1620, %v1626
    %v1629 = vadd.f32 %v1612, %v1628
    %s1630 = scalar_lea.vmem %s5, 6
    %v1631 = vld [vmem:[%s1630] sm:$0x1]
    %v1633 = vperm.slane %v1631, 0
    %v1635 = vmul.f32 %v567, %v1633
    %s1636 = scalar_lea.vmem %s17, 48
    %v1637 = vld [vmem:[%s1636] sm:$0xff]
    %1639 = vset.pattern.permute.xlu0 0
    %1640 = vperm.xlu0 %1639, %v1637
    %v1641 = vpop.permute.xlu0 %1640
    %v1643 = vmul.f32 %v1635, %v1641
    %v1644 = vadd.f32 %v1629, %v1643
    %s1645 = scalar_lea.vmem %s5, 7
    %v1646 = vld [vmem:[%s1645] sm:$0x1]
    %v1648 = vperm.slane %v1646, 0
    %v1650 = vmul.f32 %v598, %v1648
    %s1651 = scalar_lea.vmem %s17, 56
    %v1652 = vld [vmem:[%s1651] sm:$0xff]
    %1654 = vset.pattern.permute.xlu0 0
    %1655 = vperm.xlu0 %1654, %v1652
    %v1656 = vpop.permute.xlu0 %1655
    %v1658 = vmul.f32 %v1650, %v1656
    %v1659 = vadd.f32 %v1644, %v1658
    %s1660 = scalar_lea.vmem %s5, 8
    %v1661 = vld [vmem:[%s1660] sm:$0x1]
    %v1663 = vperm.slane %v1661, 0
    %v1665 = vmul.f32 %v632, %v1663
    %s1666 = scalar_lea.vmem %s17, 64
    %v1667 = vld [vmem:[%s1666] sm:$0xff]
    %1669 = vset.pattern.permute.xlu0 0
    %1670 = vperm.xlu0 %1669, %v1667
    %v1671 = vpop.permute.xlu0 %1670
    %v1673 = vmul.f32 %v1665, %v1671
    %v1674 = vadd.f32 %v1659, %v1673
    %1675 = vrot.lane.b32.xlu0 %v267, 12
    %v1676 = vpop.permute.xlu0 %1675
    %s1677 = scalar_lea.vmem %s5, 9
    %v1678 = vld [vmem:[%s1677] sm:$0x1]
    %v1680 = vperm.slane %v1678, 0
    %v1682 = vmul.f32 %v1676, %v1680
    %s1683 = scalar_lea.vmem %s17, 72
    %v1684 = vld [vmem:[%s1683] sm:$0xff]
    %1686 = vset.pattern.permute.xlu0 0
    %1687 = vperm.xlu0 %1686, %v1684
    %v1688 = vpop.permute.xlu0 %1687
    %v1690 = vmul.f32 %v1682, %v1688
    %v1691 = vadd.f32 %v1674, %v1690
    %1692 = vrot.lane.b32.xlu0 %v267, 4
    %v1693 = vpop.permute.xlu0 %1692
    %s1694 = scalar_lea.vmem %s5, 10
    %v1695 = vld [vmem:[%s1694] sm:$0x1]
    %v1697 = vperm.slane %v1695, 0
    %v1699 = vmul.f32 %v1693, %v1697
    %s1700 = scalar_lea.vmem %s17, 80
    %v1701 = vld [vmem:[%s1700] sm:$0xff]
    %1703 = vset.pattern.permute.xlu0 0
    %1704 = vperm.xlu0 %1703, %v1701
    %v1705 = vpop.permute.xlu0 %1704
    %v1707 = vmul.f32 %v1699, %v1705
    %v1708 = vadd.f32 %v1691, %v1707
    %s1709 = scalar_lea.vmem %s5, 11
    %v1710 = vld [vmem:[%s1709] sm:$0x1]
    %v1712 = vperm.slane %v1710, 0
    %v1714 = vmul.f32 %v728, %v1712
    %s1715 = scalar_lea.vmem %s17, 88
    %v1716 = vld [vmem:[%s1715] sm:$0xff]
    %1718 = vset.pattern.permute.xlu0 0
    %1719 = vperm.xlu0 %1718, %v1716
    %v1720 = vpop.permute.xlu0 %1719
    %v1722 = vmul.f32 %v1714, %v1720
    %v1723 = vadd.f32 %v1708, %v1722
    %s1724 = scalar_lea.vmem %s5, 12
    %v1725 = vld [vmem:[%s1724] sm:$0x1]
    %v1727 = vperm.slane %v1725, 0
    %v1729 = vmul.f32 %v267, %v1727
    %s1730 = scalar_lea.vmem %s17, 96
    %v1731 = vld [vmem:[%s1730] sm:$0xff]
    %1733 = vset.pattern.permute.xlu0 0
    %1734 = vperm.xlu0 %1733, %v1731
    %v1735 = vpop.permute.xlu0 %1734
    %v1737 = vmul.f32 %v1729, %v1735
    %v1738 = vadd.f32 %v1723, %v1737
    %s1739 = scalar_lea.vmem %s5, 13
    %v1740 = vld [vmem:[%s1739] sm:$0x1]
    %v1742 = vperm.slane %v1740, 0
    %v1744 = vmul.f32 %v790, %v1742
    %s1745 = scalar_lea.vmem %s17, 104
    %v1746 = vld [vmem:[%s1745] sm:$0xff]
    %1748 = vset.pattern.permute.xlu0 0
    %1749 = vperm.xlu0 %1748, %v1746
    %v1750 = vpop.permute.xlu0 %1749
    %v1752 = vmul.f32 %v1744, %v1750
    %v1753 = vadd.f32 %v1738, %v1752
    %1754 = vrot.lane.b32.xlu0 %v267, 124
    %v1755 = vpop.permute.xlu0 %1754
    %s1756 = scalar_lea.vmem %s5, 14
    %v1757 = vld [vmem:[%s1756] sm:$0x1]
    %v1759 = vperm.slane %v1757, 0
    %v1761 = vmul.f32 %v1755, %v1759
    %s1762 = scalar_lea.vmem %s17, 112
    %v1763 = vld [vmem:[%s1762] sm:$0xff]
    %1765 = vset.pattern.permute.xlu0 0
    %1766 = vperm.xlu0 %1765, %v1763
    %v1767 = vpop.permute.xlu0 %1766
    %v1769 = vmul.f32 %v1761, %v1767
    %v1770 = vadd.f32 %v1753, %v1769
    %1771 = vrot.lane.b32.xlu0 %v267, 116
    %v1772 = vpop.permute.xlu0 %1771
    %s1773 = scalar_lea.vmem %s5, 15
    %v1774 = vld [vmem:[%s1773] sm:$0x1]
    %v1776 = vperm.slane %v1774, 0
    %v1778 = vmul.f32 %v1772, %v1776
    %s1779 = scalar_lea.vmem %s17, 120
    %v1780 = vld [vmem:[%s1779] sm:$0xff]
    %1782 = vset.pattern.permute.xlu0 0
    %1783 = vperm.xlu0 %1782, %v1780
    %v1784 = vpop.permute.xlu0 %1783
    %v1786 = vmul.f32 %v1778, %v1784
    %v1787 = vadd.f32 %v1770, %v1786
    %s1788 = scalar_lea.vmem %s5, 16
    %v1789 = vld [vmem:[%s1788] sm:$0x1]
    %v1791 = vperm.slane %v1789, 0
    %v1793 = vmul.f32 %v886, %v1791
    %s1794 = scalar_lea.vmem %s17, 128
    %v1795 = vld [vmem:[%s1794] sm:$0xff]
    %1797 = vset.pattern.permute.xlu0 0
    %1798 = vperm.xlu0 %1797, %v1795
    %v1799 = vpop.permute.xlu0 %1798
    %v1801 = vmul.f32 %v1793, %v1799
    %v1802 = vadd.f32 %v1787, %v1801
    %s1803 = scalar_lea.vmem %s5, 17
    %v1804 = vld [vmem:[%s1803] sm:$0x1]
    %v1806 = vperm.slane %v1804, 0
    %v1808 = vmul.f32 %v920, %v1806
    %s1809 = scalar_lea.vmem %s17, 136
    %v1810 = vld [vmem:[%s1809] sm:$0xff]
    %1812 = vset.pattern.permute.xlu0 0
    %1813 = vperm.xlu0 %1812, %v1810
    %v1814 = vpop.permute.xlu0 %1813
    %v1816 = vmul.f32 %v1808, %v1814
    %v1817 = vadd.f32 %v1802, %v1816
    %s1818 = scalar_lea.vmem %s5, 18
    %v1819 = vld [vmem:[%s1818] sm:$0x1]
    %v1821 = vperm.slane %v1819, 0
    %v1823 = vmul.f32 %v954, %v1821
    %s1824 = scalar_lea.vmem %s17, 144
    %v1825 = vld [vmem:[%s1824] sm:$0xff]
    %1827 = vset.pattern.permute.xlu0 0
    %1828 = vperm.xlu0 %1827, %v1825
    %v1829 = vpop.permute.xlu0 %1828
    %v1831 = vmul.f32 %v1823, %v1829
    %v1832 = vadd.f32 %v1817, %v1831
    %1833 = vrot.lane.b32.xlu0 %v267, 108
    %v1834 = vpop.permute.xlu0 %1833
    %s1835 = scalar_lea.vmem %s5, 19
    %v1836 = vld [vmem:[%s1835] sm:$0x1]
    %v1838 = vperm.slane %v1836, 0
    %v1840 = vmul.f32 %v1834, %v1838
    %s1841 = scalar_lea.vmem %s17, 152
    %v1842 = vld [vmem:[%s1841] sm:$0xff]
    %1844 = vset.pattern.permute.xlu0 0
    %1845 = vperm.xlu0 %1844, %v1842
    %v1846 = vpop.permute.xlu0 %1845
    %v1848 = vmul.f32 %v1840, %v1846
    %v1849 = vadd.f32 %v1832, %v1848
    %1850 = vrot.lane.b32.xlu0 %v267, 100
    %v1851 = vpop.permute.xlu0 %1850
    %s1852 = scalar_lea.vmem %s5, 20
    %v1853 = vld [vmem:[%s1852] sm:$0x1]
    %v1855 = vperm.slane %v1853, 0
    %v1857 = vmul.f32 %v1851, %v1855
    %s1858 = scalar_lea.vmem %s17, 160
    %v1859 = vld [vmem:[%s1858] sm:$0xff]
    %1861 = vset.pattern.permute.xlu0 0
    %1862 = vperm.xlu0 %1861, %v1859
    %v1863 = vpop.permute.xlu0 %1862
    %v1865 = vmul.f32 %v1857, %v1863
    %v1866 = vadd.f32 %v1849, %v1865
    %1867 = vrot.lane.b32.xlu0 %v267, 98
    %v1868 = vpop.permute.xlu0 %1867
    %s1869 = scalar_lea.vmem %s5, 21
    %v1870 = vld [vmem:[%s1869] sm:$0x1]
    %v1872 = vperm.slane %v1870, 0
    %v1874 = vmul.f32 %v1868, %v1872
    %s1875 = scalar_lea.vmem %s17, 168
    %v1876 = vld [vmem:[%s1875] sm:$0xff]
    %1878 = vset.pattern.permute.xlu0 0
    %1879 = vperm.xlu0 %1878, %v1876
    %v1880 = vpop.permute.xlu0 %1879
    %v1882 = vmul.f32 %v1874, %v1880
    %v1883 = vadd.f32 %v1866, %v1882
    %1884 = vrot.lane.b32.xlu0 %v267, 96
    %v1885 = vpop.permute.xlu0 %1884
    %s1886 = scalar_lea.vmem %s5, 22
    %v1887 = vld [vmem:[%s1886] sm:$0x1]
    %v1889 = vperm.slane %v1887, 0
    %v1891 = vmul.f32 %v1885, %v1889
    %s1892 = scalar_lea.vmem %s17, 176
    %v1893 = vld [vmem:[%s1892] sm:$0xff]
    %1895 = vset.pattern.permute.xlu0 0
    %1896 = vperm.xlu0 %1895, %v1893
    %v1897 = vpop.permute.xlu0 %1896
    %v1899 = vmul.f32 %v1891, %v1897
    %v1900 = vadd.f32 %v1883, %v1899
    %1901 = vrot.lane.b32.xlu0 %v267, 94
    %v1902 = vpop.permute.xlu0 %1901
    %s1903 = scalar_lea.vmem %s5, 23
    %v1904 = vld [vmem:[%s1903] sm:$0x1]
    %v1906 = vperm.slane %v1904, 0
    %v1908 = vmul.f32 %v1902, %v1906
    %s1909 = scalar_lea.vmem %s17, 184
    %v1910 = vld [vmem:[%s1909] sm:$0xff]
    %1912 = vset.pattern.permute.xlu0 0
    %1913 = vperm.xlu0 %1912, %v1910
    %v1914 = vpop.permute.xlu0 %1913
    %v1916 = vmul.f32 %v1908, %v1914
    %v1917 = vadd.f32 %v1900, %v1916
    %1918 = vrot.lane.b32.xlu0 %v267, 92
    %v1919 = vpop.permute.xlu0 %1918
    %s1920 = scalar_lea.vmem %s5, 24
    %v1921 = vld [vmem:[%s1920] sm:$0x1]
    %v1923 = vperm.slane %v1921, 0
    %v1925 = vmul.f32 %v1919, %v1923
    %s1926 = scalar_lea.vmem %s17, 192
    %v1927 = vld [vmem:[%s1926] sm:$0xff]
    %1929 = vset.pattern.permute.xlu0 0
    %1930 = vperm.xlu0 %1929, %v1927
    %v1931 = vpop.permute.xlu0 %1930
    %v1933 = vmul.f32 %v1925, %v1931
    %v1934 = vadd.f32 %v1917, %v1933
    %v1935 = vld [vmem:[%s18] sm:$0xff]
    %v1937 = vsel %vm373, %v1935, 0
    %1939 = vmatpush.msra.mxu0 0.0
    %1940 = vmatpush.msra.mxu0 0.0
    %1941 = vmatpush.msra.mxu0 0.0
    %1942 = vmatpush.msra.mxu0 0.0
    %1943 = vmatpush.msra.mxu0 0.0
    %1944 = vmatpush.msra.mxu0 0.0
    %1945 = vmatpush.msra.mxu0 0.0
    %1946 = vmatpush.msra.mxu0 0.0
    %1947 = vmatpush.msra.mxu0 0.0
    %1948 = vmatpush.msra.mxu0 0.0
    %1949 = vmatpush.msra.mxu0 0.0
    %1950 = vmatpush.msra.mxu0 0.0
    %1951 = vmatpush.msra.mxu0 0.0
    %1952 = vmatpush.msra.mxu0 0.0
    %1953 = vmatpush.msra.mxu0 0.0
    %1954 = vmatpush.msra.mxu0 %v1934
    %1955 = vmatmul.f32.gmra.mxu0 %v1937
    %v1956 = vpop.f32.mrf.mxu0
    %v1957 = vadd.f32 0.0, %v1956
    %1958 = vdwg.mxu0
    %1959 = vadd.xlane.f32.xlu0 %v1957
    %v1960 = vpop.xlane.xlu0 %1959
    %v1961 = vmul.f32 %v1960, %v179
    %v1962 = vsub.f32 %v1957, %v1961
    %v1963 = vmul.f32 %v1962, %v1962
    %1964 = vadd.xlane.f32.xlu0 %v1963
    %v1965 = vpop.xlane.xlu0 %1964
    %v1966 = vmul.f32 %v1965, %v179
    %v1967 = vadd.f32 %v1966, 1e-05
    %v1968 = vrsqrt.pop %v1967
    %v1969 = vmul.f32 %v1968, %v1967
    %v1970 = vmul.f32 %v1969, %v1968
    %v1971 = vmul.f32 0.5, %v1970
    %v1972 = vsub.f32 1.5, %v1971
    %v1973 = vmul.f32 %v1968, %v1972
    %vm1974 = vweird.f32 %v1967
    %vm1975 = vweird.f32 %v1968
    %vm1976 = vmor %vm1974, %vm1975
    %v1977 = vsel %vm1976, %v1968, %v1973
    %v1978 = vmul.f32 %v1962, %v1977
    %s1979 = sld [smem:[#allocation2 + $0x1]]
    %v1980 = vstv %s1979
    %v1981 = vmul.f32 %v1980, %v197
    %s1982 = sld [smem:[#allocation2 + $0x2]]
    %v1983 = vstv %s1982
    %v1984 = vmul.f32 %v1983, %v266
    %v1985 = vadd.f32 %v1981, %v1984
    %s1986 = sld [smem:[#allocation2 + $0x4]]
    %v1987 = vstv %s1986
    %v1988 = vmul.f32 %v1987, %v565
    %v1989 = vadd.f32 %v1985, %v1988
    %s1990 = sld [smem:[#allocation2 + $0x5]]
    %v1991 = vstv %s1990
    %v1992 = vmul.f32 %v1991, %v1354
    %v1993 = vadd.f32 %v1989, %v1992
    %s1994 = sld [smem:[#allocation2 + $0x6]]
    %v1995 = vstv %s1994
    %v1996 = vmul.f32 %v1995, %v1530
    %v1997 = vadd.f32 %v1993, %v1996
    %s1998 = sld [smem:[#allocation2 + $0x7]]
    %v1999 = vstv %s1998
    %v2000 = vmul.f32 %v1999, %v1978
    %v2001 = vadd.f32 %v1997, %v2000
    %2002 = vst [vmem:[%s19] sm:$0xff] %v2001
    // Predicated region
    $region82: #{cell_forward.16} parent=1 // pred_check
      _
    $region83: #{cell_forward.16} parent=1 // pred_check_branch
      %2004 = sbr.rel (0) target = $region85
    $region84: #{cell_forward.16} parent=1 // pred_region
      _
    $region85: #{cell_forward.16} parent=1 // pred_fallthru
      _
    // Predicated region
    $region86: #{cell_forward.16} parent=1 // pred_check
      _
    $region87: #{cell_forward.16} parent=1 // pred_check_branch
      %2006 = sbr.rel (0) target = $region89
    $region88: #{cell_forward.16} parent=1 // pred_region
      _
    $region89: #{cell_forward.16} parent=1 // pred_fallthru
      _
    %2007 = vsyncpa [#allocation3], 1

</llo_original>
